<compile_context>
chip_gen: v7x
topology: tpu7x:2x2x1
jax: 0.10.0
libtpu: 0.0.40
codegen_flags: <defaults>
</compile_context>

<pallas_src>
import math

import numpy as np
import jax
import jax.numpy as jnp
from jax import lax
from jax.experimental import pallas as pl
from jax.experimental.pallas import tpu as pltpu

# ---- small, TPU-granularity config for the GPT-2 Block ----
BATCH = 4                    # batch size
T = 128                      # sequence length (block_size)
C = 256                      # n_embd
N_HEAD = 2
HEAD_DIM = C // N_HEAD       # 128 -> lane-aligned head slices
BB = 2                       # batches per grid step -> grid = BATCH // BB = 2
LN_EPS = 1e-5


def _layernorm(h, gamma, beta):
    mu = jnp.mean(h, axis=-1, keepdims=True)
    var = jnp.mean((h - mu) ** 2, axis=-1, keepdims=True)
    return (h - mu) * lax.rsqrt(var + LN_EPS) * gamma + beta


def _gelu_tanh(x):
    # matches torch.nn.GELU(approximate='tanh')
    c = math.sqrt(2.0 / math.pi)
    return 0.5 * x * (1.0 + jnp.tanh(c * (x + 0.044715 * x * x * x)))


def block_kernel(x_ref, pv_ref, wa_ref, wpa_ref, wfc_ref, wpm_ref, o_ref):
    x = x_ref[...]                                   # (BB*T, C), lane-dense

    # packed per-channel params: one (8, 4C) slab
    g1 = pv_ref[0:1, :C]
    b1 = pv_ref[1:2, :C]
    g2 = pv_ref[2:3, :C]
    b2 = pv_ref[3:4, :C]
    bpa = pv_ref[4:5, :C]
    bpm = pv_ref[5:6, :C]
    ba = pv_ref[6:7, :3 * C]
    bfc = pv_ref[7:8, :]

    # ---- ln_1 + causal self-attention ----
    h = _layernorm(x, g1, b1)
    qkv = jnp.dot(h, wa_ref[...], preferred_element_type=jnp.float32) + ba   # (BB*T, 3C)

    scale = 1.0 / math.sqrt(HEAD_DIM)
    q = qkv[:, 0 * C:1 * C] * scale      # fold softmax scale into q once
    k = qkv[:, 1 * C:2 * C]
    v = qkv[:, 2 * C:3 * C]

    # Fold (head, batch) into one einsum batch axis. All slices below are
    # 128-sublane / 128-lane aligned -> pure vreg selection, no relayouts.
    def split_bh(t):                     # (BB*T, C) -> (N_HEAD*BB, T, HEAD_DIM)
        return jnp.stack(
            [t[bb * T:(bb + 1) * T, hh * HEAD_DIM:(hh + 1) * HEAD_DIM]
             for hh in range(N_HEAD) for bb in range(BB)],
            axis=0)

    qh, kh, vh = split_bh(q), split_bh(k), split_bh(v)
    NHB = N_HEAD * BB

    s = jnp.einsum('hqd,hkd->hqk', qh, kh,
                   preferred_element_type=jnp.float32)          # (NHB, T, T)
    rows = lax.broadcasted_iota(jnp.int32, (NHB, T, T), 1)
    cols = lax.broadcasted_iota(jnp.int32, (NHB, T, T), 2)
    s = jnp.where(rows >= cols, s, -1e30)                       # causal mask (finite)
    m = jnp.max(s, axis=-1, keepdims=True)
    p = jnp.exp(s - m)
    denom = jnp.sum(p, axis=-1, keepdims=True)
    p = p * pl.reciprocal(denom, approx=True)                   # EUP slot, ~free
    yh = jnp.einsum('hqk,hkd->hqd', p, vh,
                    preferred_element_type=jnp.float32)         # (NHB, T, HEAD_DIM)

    # merge heads back: (NHB, T, HD) -> (BB*T, C) (lane/sublane-aligned concats)
    y = jnp.concatenate(
        [jnp.concatenate([yh[hh * BB + bb] for hh in range(N_HEAD)], axis=-1)
         for bb in range(BB)],
        axis=0)                                                 # (BB*T, C)
    y = jnp.dot(y, wpa_ref[...], preferred_element_type=jnp.float32) + bpa

    x1 = x + y                                                  # residual 1

    # ---- ln_2 + MLP ----
    h2 = _layernorm(x1, g2, b2)
    f = jnp.dot(h2, wfc_ref[...], preferred_element_type=jnp.float32) + bfc  # (BB*T, 4C)
    f = _gelu_tanh(f)
    m2 = jnp.dot(f, wpm_ref[...], preferred_element_type=jnp.float32) + bpm  # (BB*T, C)

    o_ref[...] = x1 + m2                                        # residual 2


def _pack_params(g1, b1, ba, bpa, g2, b2, bfc, bpm):
    pv = jnp.zeros((8, 4 * C), jnp.float32)
    pv = pv.at[0, :C].set(g1)
    pv = pv.at[1, :C].set(b1)
    pv = pv.at[2, :C].set(g2)
    pv = pv.at[3, :C].set(b2)
    pv = pv.at[4, :C].set(bpa)
    pv = pv.at[5, :C].set(bpm)
    pv = pv.at[6, :3 * C].set(ba)
    pv = pv.at[7, :].set(bfc)
    return pv


@jax.jit
def block_forward(x, params):
    (g1, b1, wa, ba, wpa, bpa, g2, b2, wfc, bfc, wpm, bpm) = params
    Bsz = x.shape[0]
    assert x.shape == (Bsz, T, C) and Bsz % BB == 0
    n_steps = Bsz // BB

    pvec = _pack_params(g1, b1, ba, bpa, g2, b2, bfc, bpm)
    x2d = x.reshape(Bsz * T, C)          # lane-dense activation slab

    out2d = pl.pallas_call(
        block_kernel,
        out_shape=jax.ShapeDtypeStruct((Bsz * T, C), jnp.float32),
        grid_spec=pltpu.PrefetchScalarGridSpec(
            num_scalar_prefetch=0,
            grid=(n_steps,),
            in_specs=[
                pl.BlockSpec((BB * T, C), lambda i: (i, 0)),      # x slab
                pl.BlockSpec((8, 4 * C), lambda i: (0, 0)),       # packed LN/bias params
                pl.BlockSpec((C, 3 * C), lambda i: (0, 0)),       # c_attn W
                pl.BlockSpec((C, C), lambda i: (0, 0)),           # attn c_proj W
                pl.BlockSpec((C, 4 * C), lambda i: (0, 0)),       # mlp c_fc W
                pl.BlockSpec((4 * C, C), lambda i: (0, 0)),       # mlp c_proj W
            ],
            out_specs=pl.BlockSpec((BB * T, C), lambda i: (i, 0)),
        ),
        compiler_params=pltpu.CompilerParams(
            dimension_semantics=("parallel",)),   # 2 steps -> both TCs busy on v7x
    )(x2d, pvec, wa, wpa, wfc, wpm)
    return out2d.reshape(Bsz, T, C)


# ---- pure-JAX reference (mirrors the PyTorch Block forward exactly) ----
def block_reference(x, params):
    (g1, b1, wa, ba, wpa, bpa, g2, b2, wfc, bfc, wpm, bpm) = params
    Bsz = x.shape[0]

    def ln(h, g, b):
        mu = jnp.mean(h, axis=-1, keepdims=True)
        var = jnp.mean((h - mu) ** 2, axis=-1, keepdims=True)
        return (h - mu) / jnp.sqrt(var + LN_EPS) * g + b

    h = ln(x, g1, b1)
    qkv = h @ wa + ba
    q, k, v = jnp.split(qkv, 3, axis=-1)

    def heads(t):
        return t.reshape(Bsz, T, N_HEAD, HEAD_DIM).transpose(0, 2, 1, 3)

    q, k, v = heads(q), heads(k), heads(v)
    s = jnp.einsum('bhtd,bhsd->bhts', q, k) / math.sqrt(HEAD_DIM)
    mask = jnp.tril(jnp.ones((T, T), dtype=bool))
    s = jnp.where(mask, s, -jnp.inf)
    p = jax.nn.softmax(s, axis=-1)
    y = jnp.einsum('bhts,bhsd->bhtd', p, v)
    y = y.transpose(0, 2, 1, 3).reshape(Bsz, T, C)
    y = y @ wpa + bpa
    x1 = x + y

    h2 = ln(x1, g2, b2)
    f = h2 @ wfc + bfc
    cst = math.sqrt(2.0 / math.pi)
    f = 0.5 * f * (1.0 + jnp.tanh(cst * (f + 0.044715 * f ** 3)))
    m = f @ wpm + bpm
    return x1 + m


def init_params(key):
    ks = jax.random.split(key, 12)
    scale = 0.02
    g1 = 1.0 + 0.05 * jax.random.normal(ks[0], (C,), jnp.float32)
    b1 = 0.05 * jax.random.normal(ks[1], (C,), jnp.float32)
    wa = scale * jax.random.normal(ks[2], (C, 3 * C), jnp.float32)
    ba = scale * jax.random.normal(ks[3], (3 * C,), jnp.float32)
    wpa = scale * jax.random.normal(ks[4], (C, C), jnp.float32)
    bpa = scale * jax.random.normal(ks[5], (C,), jnp.float32)
    g2 = 1.0 + 0.05 * jax.random.normal(ks[6], (C,), jnp.float32)
    b2 = 0.05 * jax.random.normal(ks[7], (C,), jnp.float32)
    wfc = scale * jax.random.normal(ks[8], (C, 4 * C), jnp.float32)
    bfc = scale * jax.random.normal(ks[9], (4 * C,), jnp.float32)
    wpm = scale * jax.random.normal(ks[10], (4 * C, C), jnp.float32)
    bpm = scale * jax.random.normal(ks[11], (C,), jnp.float32)
    return (g1, b1, wa, ba, wpa, bpa, g2, b2, wfc, bfc, wpm, bpm)


if __name__ == "__main__":
    key = jax.random.PRNGKey(0)
    kx, kp = jax.random.split(key)
    x = jax.random.normal(kx, (BATCH, T, C), jnp.float32)
    params = init_params(kp)

    out = jax.block_until_ready(block_forward(x, params))

    ref = block_reference(x, params)
    # slightly loose tolerance: kernel uses the EUP approximate reciprocal for
    # the softmax denominator (per perf review), everything else is f32.
    np.testing.assert_allclose(np.asarray(out), np.asarray(ref), rtol=2e-3, atol=2e-3)

    print("KERNEL_OK")
</pallas_src>

<mosaic_0001>
module attributes {stable_mosaic.version = 11 : i64} {
  func.func @block_kernel(%arg0: i32, %arg1: memref<256x256xf32, #tpu.memory_space<vmem>>, %arg2: memref<8x1024xf32, #tpu.memory_space<vmem>>, %arg3: memref<256x768xf32, #tpu.memory_space<vmem>>, %arg4: memref<256x256xf32, #tpu.memory_space<vmem>>, %arg5: memref<256x1024xf32, #tpu.memory_space<vmem>>, %arg6: memref<1024x256xf32, #tpu.memory_space<vmem>>, %arg7: memref<256x256xf32, #tpu.memory_space<vmem>>) attributes {dimension_semantics = [#tpu.dimension_semantics<parallel>], iteration_bounds = array<i64: 2>, scalar_prefetch = 0 : i64, scratch_operands = 0 : i64, tpu.core_type = #tpu.core_type<tc>, window_params = [{transform_indices = @transform_0, window_bounds = array<i64: 256, 256>}, {pipeline_mode = #tpu.pipeline_mode<synchronous>, transform_indices = @transform_1, window_bounds = array<i64: 8, 1024>}, {pipeline_mode = #tpu.pipeline_mode<synchronous>, transform_indices = @transform_2, window_bounds = array<i64: 256, 768>}, {pipeline_mode = #tpu.pipeline_mode<synchronous>, transform_indices = @transform_3, window_bounds = array<i64: 256, 256>}, {pipeline_mode = #tpu.pipeline_mode<synchronous>, transform_indices = @transform_4, window_bounds = array<i64: 256, 1024>}, {pipeline_mode = #tpu.pipeline_mode<synchronous>, transform_indices = @transform_5, window_bounds = array<i64: 1024, 256>}, {transform_indices = @transform_6, window_bounds = array<i64: 256, 256>}]} {
    %c0 = arith.constant 0 : index
    %c0_0 = arith.constant 0 : index
    %0 = vector.load %arg1[%c0, %c0_0] : memref<256x256xf32, #tpu.memory_space<vmem>>, vector<256x256xf32>
    %c0_1 = arith.constant 0 : index
    %c0_2 = arith.constant 0 : index
    %1 = vector.load %arg2[%c0_1, %c0_2] : memref<8x1024xf32, #tpu.memory_space<vmem>>, vector<1x256xf32>
    %c1 = arith.constant 1 : index
    %c0_3 = arith.constant 0 : index
    %2 = vector.load %arg2[%c1, %c0_3] : memref<8x1024xf32, #tpu.memory_space<vmem>>, vector<1x256xf32>
    %c2 = arith.constant 2 : index
    %c0_4 = arith.constant 0 : index
    %3 = vector.load %arg2[%c2, %c0_4] : memref<8x1024xf32, #tpu.memory_space<vmem>>, vector<1x256xf32>
    %c3 = arith.constant 3 : index
    %c0_5 = arith.constant 0 : index
    %4 = vector.load %arg2[%c3, %c0_5] : memref<8x1024xf32, #tpu.memory_space<vmem>>, vector<1x256xf32>
    %c4 = arith.constant 4 : index
    %c0_6 = arith.constant 0 : index
    %5 = vector.load %arg2[%c4, %c0_6] : memref<8x1024xf32, #tpu.memory_space<vmem>>, vector<1x256xf32>
    %c5 = arith.constant 5 : index
    %c0_7 = arith.constant 0 : index
    %6 = vector.load %arg2[%c5, %c0_7] : memref<8x1024xf32, #tpu.memory_space<vmem>>, vector<1x256xf32>
    %c6 = arith.constant 6 : index
    %c0_8 = arith.constant 0 : index
    %7 = vector.load %arg2[%c6, %c0_8] : memref<8x1024xf32, #tpu.memory_space<vmem>>, vector<1x768xf32>
    %c7 = arith.constant 7 : index
    %c0_9 = arith.constant 0 : index
    %8 = vector.load %arg2[%c7, %c0_9] : memref<8x1024xf32, #tpu.memory_space<vmem>>, vector<1x1024xf32>
    %cst = arith.constant dense<0.000000e+00> : vector<256xf32>
    %9 = vector.multi_reduction <add>, %0, %cst [1] : vector<256x256xf32> to vector<256xf32>
    %10 = vector.shape_cast %9 : vector<256xf32> to vector<256x1xf32>
    %cst_10 = arith.constant 2.560000e+02 : f32
    %11 = vector.broadcast %cst_10 : f32 to vector<256x1xf32>
    %12 = arith.divf %10, %11 : vector<256x1xf32>
    %13 = vector.broadcast %12 : vector<256x1xf32> to vector<256x256xf32>
    %14 = arith.subf %0, %13 : vector<256x256xf32>
    %15 = arith.mulf %14, %14 : vector<256x256xf32>
    %cst_11 = arith.constant dense<0.000000e+00> : vector<256xf32>
    %16 = vector.multi_reduction <add>, %15, %cst_11 [1] : vector<256x256xf32> to vector<256xf32>
    %17 = vector.shape_cast %16 : vector<256xf32> to vector<256x1xf32>
    %cst_12 = arith.constant 2.560000e+02 : f32
    %18 = vector.broadcast %cst_12 : f32 to vector<256x1xf32>
    %19 = arith.divf %17, %18 : vector<256x1xf32>
    %20 = vector.broadcast %12 : vector<256x1xf32> to vector<256x256xf32>
    %21 = arith.subf %0, %20 : vector<256x256xf32>
    %cst_13 = arith.constant 9.99999974E-6 : f32
    %22 = vector.broadcast %cst_13 : f32 to vector<256x1xf32>
    %23 = arith.addf %19, %22 : vector<256x1xf32>
    %24 = math.rsqrt %23 : vector<256x1xf32>
    %25 = vector.broadcast %24 : vector<256x1xf32> to vector<256x256xf32>
    %26 = arith.mulf %21, %25 : vector<256x256xf32>
    %27 = vector.broadcast %1 : vector<1x256xf32> to vector<256x256xf32>
    %28 = arith.mulf %26, %27 : vector<256x256xf32>
    %29 = vector.broadcast %2 : vector<1x256xf32> to vector<256x256xf32>
    %30 = arith.addf %28, %29 : vector<256x256xf32>
    %c0_14 = arith.constant 0 : index
    %c0_15 = arith.constant 0 : index
    %31 = vector.load %arg3[%c0_14, %c0_15] : memref<256x768xf32, #tpu.memory_space<vmem>>, vector<256x768xf32>
    %cst_16 = arith.constant dense<0.000000e+00> : vector<256x768xf32>
    %32 = tpu.matmul %30, %31, %cst_16 {dimension_numbers = #tpu.dot_dimension_numbers<[1], [0], [0], [1], [0, 0, 1, 1], [], []>} : vector<256x256xf32>, vector<256x768xf32>, vector<256x768xf32> -> vector<256x768xf32>
    %33 = vector.broadcast %7 : vector<1x768xf32> to vector<256x768xf32>
    %34 = arith.addf %32, %33 : vector<256x768xf32>
    %35 = vector.extract_strided_slice %34 {offsets = [0, 0], sizes = [256, 256], strides = [1, 1]} : vector<256x768xf32> to vector<256x256xf32>
    %cst_17 = arith.constant 0.0883883461 : f32
    %36 = vector.broadcast %cst_17 : f32 to vector<256x256xf32>
    %37 = arith.mulf %35, %36 : vector<256x256xf32>
    %38 = vector.extract_strided_slice %34 {offsets = [0, 256], sizes = [256, 256], strides = [1, 1]} : vector<256x768xf32> to vector<256x256xf32>
    %39 = vector.extract_strided_slice %34 {offsets = [0, 512], sizes = [256, 256], strides = [1, 1]} : vector<256x768xf32> to vector<256x256xf32>
    %40 = vector.extract_strided_slice %37 {offsets = [0, 0], sizes = [128, 128], strides = [1, 1]} : vector<256x256xf32> to vector<128x128xf32>
    %41 = vector.extract_strided_slice %37 {offsets = [128, 0], sizes = [128, 128], strides = [1, 1]} : vector<256x256xf32> to vector<128x128xf32>
    %42 = vector.extract_strided_slice %37 {offsets = [0, 128], sizes = [128, 128], strides = [1, 1]} : vector<256x256xf32> to vector<128x128xf32>
    %43 = vector.extract_strided_slice %37 {offsets = [128, 128], sizes = [128, 128], strides = [1, 1]} : vector<256x256xf32> to vector<128x128xf32>
    %44 = vector.shape_cast %40 : vector<128x128xf32> to vector<1x128x128xf32>
    %45 = vector.shape_cast %41 : vector<128x128xf32> to vector<1x128x128xf32>
    %46 = vector.shape_cast %42 : vector<128x128xf32> to vector<1x128x128xf32>
    %47 = vector.shape_cast %43 : vector<128x128xf32> to vector<1x128x128xf32>
    %48 = tpu.concatenate %44, %45, %46, %47 in 0 : vector<1x128x128xf32>, vector<1x128x128xf32>, vector<1x128x128xf32>, vector<1x128x128xf32> -> vector<4x128x128xf32>
    %49 = vector.extract_strided_slice %38 {offsets = [0, 0], sizes = [128, 128], strides = [1, 1]} : vector<256x256xf32> to vector<128x128xf32>
    %50 = vector.extract_strided_slice %38 {offsets = [128, 0], sizes = [128, 128], strides = [1, 1]} : vector<256x256xf32> to vector<128x128xf32>
    %51 = vector.extract_strided_slice %38 {offsets = [0, 128], sizes = [128, 128], strides = [1, 1]} : vector<256x256xf32> to vector<128x128xf32>
    %52 = vector.extract_strided_slice %38 {offsets = [128, 128], sizes = [128, 128], strides = [1, 1]} : vector<256x256xf32> to vector<128x128xf32>
    %53 = vector.shape_cast %49 : vector<128x128xf32> to vector<1x128x128xf32>
    %54 = vector.shape_cast %50 : vector<128x128xf32> to vector<1x128x128xf32>
    %55 = vector.shape_cast %51 : vector<128x128xf32> to vector<1x128x128xf32>
    %56 = vector.shape_cast %52 : vector<128x128xf32> to vector<1x128x128xf32>
    %57 = tpu.concatenate %53, %54, %55, %56 in 0 : vector<1x128x128xf32>, vector<1x128x128xf32>, vector<1x128x128xf32>, vector<1x128x128xf32> -> vector<4x128x128xf32>
    %58 = vector.extract_strided_slice %39 {offsets = [0, 0], sizes = [128, 128], strides = [1, 1]} : vector<256x256xf32> to vector<128x128xf32>
    %59 = vector.extract_strided_slice %39 {offsets = [128, 0], sizes = [128, 128], strides = [1, 1]} : vector<256x256xf32> to vector<128x128xf32>
    %60 = vector.extract_strided_slice %39 {offsets = [0, 128], sizes = [128, 128], strides = [1, 1]} : vector<256x256xf32> to vector<128x128xf32>
    %61 = vector.extract_strided_slice %39 {offsets = [128, 128], sizes = [128, 128], strides = [1, 1]} : vector<256x256xf32> to vector<128x128xf32>
    %62 = vector.shape_cast %58 : vector<128x128xf32> to vector<1x128x128xf32>
    %63 = vector.shape_cast %59 : vector<128x128xf32> to vector<1x128x128xf32>
    %64 = vector.shape_cast %60 : vector<128x128xf32> to vector<1x128x128xf32>
    %65 = vector.shape_cast %61 : vector<128x128xf32> to vector<1x128x128xf32>
    %66 = tpu.concatenate %62, %63, %64, %65 in 0 : vector<1x128x128xf32>, vector<1x128x128xf32>, vector<1x128x128xf32>, vector<1x128x128xf32> -> vector<4x128x128xf32>
    "tpu.trace_start"() <{level = 10 : i32, message = "hqd,hkd->hqk"}> : () -> ()
    %cst_18 = arith.constant dense<0.000000e+00> : vector<4x128x128xf32>
    %67 = tpu.matmul %48, %57, %cst_18 {dimension_numbers = #tpu.dot_dimension_numbers<[2], [2], [1], [1], [0, 0, 0, 1, 1, 1], [0], [0]>} : vector<4x128x128xf32>, vector<4x128x128xf32>, vector<4x128x128xf32> -> vector<4x128x128xf32>
    "tpu.trace_stop"() : () -> ()
    %68 = tpu.iota {dimensions = array<i32: 1>} : vector<4x128x128xi32>
    %69 = tpu.iota {dimensions = array<i32: 2>} : vector<4x128x128xi32>
    %70 = arith.cmpi sge, %68, %69 : vector<4x128x128xi32>
    %cst_19 = arith.constant -1.000000e+30 : f32
    %71 = vector.broadcast %cst_19 : f32 to vector<4x128x128xf32>
    %72 = arith.select %70, %67, %71 : vector<4x128x128xi1>, vector<4x128x128xf32>
    %cst_20 = arith.constant dense<0xFF800000> : vector<4x128xf32>
    %73 = vector.multi_reduction <maximumf>, %72, %cst_20 [2] : vector<4x128x128xf32> to vector<4x128xf32>
    %74 = vector.shape_cast %73 : vector<4x128xf32> to vector<4x128x1xf32>
    %75 = vector.broadcast %74 : vector<4x128x1xf32> to vector<4x128x128xf32>
    %76 = arith.subf %72, %75 : vector<4x128x128xf32>
    %77 = math.exp %76 : vector<4x128x128xf32>
    %cst_21 = arith.constant dense<0.000000e+00> : vector<4x128xf32>
    %78 = vector.multi_reduction <add>, %77, %cst_21 [2] : vector<4x128x128xf32> to vector<4x128xf32>
    %79 = vector.shape_cast %78 : vector<4x128xf32> to vector<4x128x1xf32>
    %80 = tpu.reciprocal %79 {approx = true} : vector<4x128x1xf32> -> vector<4x128x1xf32>
    %81 = vector.broadcast %80 : vector<4x128x1xf32> to vector<4x128x128xf32>
    %82 = arith.mulf %77, %81 : vector<4x128x128xf32>
    "tpu.trace_start"() <{level = 10 : i32, message = "hqk,hkd->hqd"}> : () -> ()
    %cst_22 = arith.constant dense<0.000000e+00> : vector<4x128x128xf32>
    %83 = tpu.matmul %82, %66, %cst_22 {dimension_numbers = #tpu.dot_dimension_numbers<[2], [1], [1], [2], [0, 0, 0, 1, 1, 2], [0], [0]>} : vector<4x128x128xf32>, vector<4x128x128xf32>, vector<4x128x128xf32> -> vector<4x128x128xf32>
    "tpu.trace_stop"() : () -> ()
    %84 = vector.extract_strided_slice %83 {offsets = [0, 0, 0], sizes = [1, 128, 128], strides = [1, 1, 1]} : vector<4x128x128xf32> to vector<1x128x128xf32>
    %85 = vector.shape_cast %84 : vector<1x128x128xf32> to vector<128x128xf32>
    %86 = vector.extract_strided_slice %83 {offsets = [2, 0, 0], sizes = [1, 128, 128], strides = [1, 1, 1]} : vector<4x128x128xf32> to vector<1x128x128xf32>
    %87 = vector.shape_cast %86 : vector<1x128x128xf32> to vector<128x128xf32>
    %88 = tpu.concatenate %85, %87 in 1 : vector<128x128xf32>, vector<128x128xf32> -> vector<128x256xf32>
    %89 = vector.extract_strided_slice %83 {offsets = [1, 0, 0], sizes = [1, 128, 128], strides = [1, 1, 1]} : vector<4x128x128xf32> to vector<1x128x128xf32>
    %90 = vector.shape_cast %89 : vector<1x128x128xf32> to vector<128x128xf32>
    %91 = vector.extract_strided_slice %83 {offsets = [3, 0, 0], sizes = [1, 128, 128], strides = [1, 1, 1]} : vector<4x128x128xf32> to vector<1x128x128xf32>
    %92 = vector.shape_cast %91 : vector<1x128x128xf32> to vector<128x128xf32>
    %93 = tpu.concatenate %90, %92 in 1 : vector<128x128xf32>, vector<128x128xf32> -> vector<128x256xf32>
    %94 = tpu.concatenate %88, %93 in 0 : vector<128x256xf32>, vector<128x256xf32> -> vector<256x256xf32>
    %c0_23 = arith.constant 0 : index
    %c0_24 = arith.constant 0 : index
    %95 = vector.load %arg4[%c0_23, %c0_24] : memref<256x256xf32, #tpu.memory_space<vmem>>, vector<256x256xf32>
    %cst_25 = arith.constant dense<0.000000e+00> : vector<256x256xf32>
    %96 = tpu.matmul %94, %95, %cst_25 {dimension_numbers = #tpu.dot_dimension_numbers<[1], [0], [0], [1], [0, 0, 1, 1], [], []>} : vector<256x256xf32>, vector<256x256xf32>, vector<256x256xf32> -> vector<256x256xf32>
    %97 = vector.broadcast %5 : vector<1x256xf32> to vector<256x256xf32>
    %98 = arith.addf %96, %97 : vector<256x256xf32>
    %99 = arith.addf %0, %98 : vector<256x256xf32>
    %cst_26 = arith.constant dense<0.000000e+00> : vector<256xf32>
    %100 = vector.multi_reduction <add>, %99, %cst_26 [1] : vector<256x256xf32> to vector<256xf32>
    %101 = vector.shape_cast %100 : vector<256xf32> to vector<256x1xf32>
    %cst_27 = arith.constant 2.560000e+02 : f32
    %102 = vector.broadcast %cst_27 : f32 to vector<256x1xf32>
    %103 = arith.divf %101, %102 : vector<256x1xf32>
    %104 = vector.broadcast %103 : vector<256x1xf32> to vector<256x256xf32>
    %105 = arith.subf %99, %104 : vector<256x256xf32>
    %106 = arith.mulf %105, %105 : vector<256x256xf32>
    %cst_28 = arith.constant dense<0.000000e+00> : vector<256xf32>
    %107 = vector.multi_reduction <add>, %106, %cst_28 [1] : vector<256x256xf32> to vector<256xf32>
    %108 = vector.shape_cast %107 : vector<256xf32> to vector<256x1xf32>
    %cst_29 = arith.constant 2.560000e+02 : f32
    %109 = vector.broadcast %cst_29 : f32 to vector<256x1xf32>
    %110 = arith.divf %108, %109 : vector<256x1xf32>
    %111 = vector.broadcast %103 : vector<256x1xf32> to vector<256x256xf32>
    %112 = arith.subf %99, %111 : vector<256x256xf32>
    %cst_30 = arith.constant 9.99999974E-6 : f32
    %113 = vector.broadcast %cst_30 : f32 to vector<256x1xf32>
    %114 = arith.addf %110, %113 : vector<256x1xf32>
    %115 = math.rsqrt %114 : vector<256x1xf32>
    %116 = vector.broadcast %115 : vector<256x1xf32> to vector<256x256xf32>
    %117 = arith.mulf %112, %116 : vector<256x256xf32>
    %118 = vector.broadcast %3 : vector<1x256xf32> to vector<256x256xf32>
    %119 = arith.mulf %117, %118 : vector<256x256xf32>
    %120 = vector.broadcast %4 : vector<1x256xf32> to vector<256x256xf32>
    %121 = arith.addf %119, %120 : vector<256x256xf32>
    %c0_31 = arith.constant 0 : index
    %c0_32 = arith.constant 0 : index
    %122 = vector.load %arg5[%c0_31, %c0_32] : memref<256x1024xf32, #tpu.memory_space<vmem>>, vector<256x1024xf32>
    %cst_33 = arith.constant dense<0.000000e+00> : vector<256x1024xf32>
    %123 = tpu.matmul %121, %122, %cst_33 {dimension_numbers = #tpu.dot_dimension_numbers<[1], [0], [0], [1], [0, 0, 1, 1], [], []>} : vector<256x256xf32>, vector<256x1024xf32>, vector<256x1024xf32> -> vector<256x1024xf32>
    %124 = vector.broadcast %8 : vector<1x1024xf32> to vector<256x1024xf32>
    %125 = arith.addf %123, %124 : vector<256x1024xf32>
    %cst_34 = arith.constant 5.000000e-01 : f32
    %126 = vector.broadcast %cst_34 : f32 to vector<256x1024xf32>
    %127 = arith.mulf %126, %125 : vector<256x1024xf32>
    %cst_35 = arith.constant 4.471500e-02 : f32
    %128 = vector.broadcast %cst_35 : f32 to vector<256x1024xf32>
    %129 = arith.mulf %128, %125 : vector<256x1024xf32>
    %130 = arith.mulf %129, %125 : vector<256x1024xf32>
    %131 = arith.mulf %130, %125 : vector<256x1024xf32>
    %132 = arith.addf %125, %131 : vector<256x1024xf32>
    %cst_36 = arith.constant 0.797884583 : f32
    %133 = vector.broadcast %cst_36 : f32 to vector<256x1024xf32>
    %134 = arith.mulf %133, %132 : vector<256x1024xf32>
    %135 = math.tanh %134 : vector<256x1024xf32>
    %cst_37 = arith.constant 1.000000e+00 : f32
    %136 = vector.broadcast %cst_37 : f32 to vector<256x1024xf32>
    %137 = arith.addf %136, %135 : vector<256x1024xf32>
    %138 = arith.mulf %127, %137 : vector<256x1024xf32>
    %c0_38 = arith.constant 0 : index
    %c0_39 = arith.constant 0 : index
    %139 = vector.load %arg6[%c0_38, %c0_39] : memref<1024x256xf32, #tpu.memory_space<vmem>>, vector<1024x256xf32>
    %cst_40 = arith.constant dense<0.000000e+00> : vector<256x256xf32>
    %140 = tpu.matmul %138, %139, %cst_40 {dimension_numbers = #tpu.dot_dimension_numbers<[1], [0], [0], [1], [0, 0, 1, 1], [], []>} : vector<256x1024xf32>, vector<1024x256xf32>, vector<256x256xf32> -> vector<256x256xf32>
    %141 = vector.broadcast %6 : vector<1x256xf32> to vector<256x256xf32>
    %142 = arith.addf %140, %141 : vector<256x256xf32>
    %143 = arith.addf %99, %142 : vector<256x256xf32>
    %c0_41 = arith.constant 0 : index
    %c0_42 = arith.constant 0 : index
    %144 = vector.load %arg7[%c0_41, %c0_42] : memref<256x256xf32, #tpu.memory_space<vmem>>, vector<256x256xf32>
    tpu.vector_store %arg7[%c0_41, %c0_42], %143 {strides = array<i32>} : memref<256x256xf32, #tpu.memory_space<vmem>>, vector<256x256xf32>,
    return
  }
  func.func @transform_0(%arg0: i32) -> (i32, i32) {
    %c0_i32 = arith.constant 0 : i32
    %c0_i32_0 = arith.constant 0 : i32
    return %arg0, %c0_i32 : i32, i32
  }
  func.func @transform_1(%arg0: i32) -> (i32, i32) {
    %c0_i32 = arith.constant 0 : i32
    %c0_i32_0 = arith.constant 0 : i32
    %c0_i32_1 = arith.constant 0 : i32
    return %c0_i32, %c0_i32_0 : i32, i32
  }
  func.func @transform_2(%arg0: i32) -> (i32, i32) {
    %c0_i32 = arith.constant 0 : i32
    %c0_i32_0 = arith.constant 0 : i32
    %c0_i32_1 = arith.constant 0 : i32
    return %c0_i32, %c0_i32_0 : i32, i32
  }
  func.func @transform_3(%arg0: i32) -> (i32, i32) {
    %c0_i32 = arith.constant 0 : i32
    %c0_i32_0 = arith.constant 0 : i32
    %c0_i32_1 = arith.constant 0 : i32
    return %c0_i32, %c0_i32_0 : i32, i32
  }
  func.func @transform_4(%arg0: i32) -> (i32, i32) {
    %c0_i32 = arith.constant 0 : i32
    %c0_i32_0 = arith.constant 0 : i32
    %c0_i32_1 = arith.constant 0 : i32
    return %c0_i32, %c0_i32_0 : i32, i32
  }
  func.func @transform_5(%arg0: i32) -> (i32, i32) {
    %c0_i32 = arith.constant 0 : i32
    %c0_i32_0 = arith.constant 0 : i32
    %c0_i32_1 = arith.constant 0 : i32
    return %c0_i32, %c0_i32_0 : i32, i32
  }
  func.func @transform_6(%arg0: i32) -> (i32, i32) {
    %c0_i32 = arith.constant 0 : i32
    %c0_i32_0 = arith.constant 0 : i32
    return %arg0, %c0_i32 : i32, i32
  }
}

</mosaic_0001>

<llo_original>
// kernel: block_forward.1
$region0: #{block_forward.1}
  #allocation0 [shape = 'u32[]', space=smem, size = 0x4, offset = 0x4, fixed_abs, tag = 'smem constant byte address 0x4 - core index']
  #allocation1 [shape = 'u32[144,128]{1,0:T(1,128)}', space=vmem, size = 0x12000, scoped, tag = 'internal scratch']
  %s0 = inlined_call_operand.hbm [shape: f32[512,256], index: 0, kind: input, shape index: {}]
  %s1 = inlined_call_operand.vmem [shape: f32[8,1024], index: 1, kind: input, shape index: {}]
  %s2 = inlined_call_operand.hbm [shape: f32[256,768], index: 2, kind: input, shape index: {}]
  %s3 = inlined_call_operand.hbm [shape: f32[256,256], index: 3, kind: input, shape index: {}]
  %s4 = inlined_call_operand.hbm [shape: f32[256,1024], index: 4, kind: input, shape index: {}]
  %s5 = inlined_call_operand.hbm [shape: f32[1024,256], index: 5, kind: input, shape index: {}]
  %s6 = inlined_call_operand.hbm [shape: f32[512,256], index: 6, kind: output, shape index: {}]
  %s7 = sld [smem:[#allocation0]]
  $region77: #{block_forward.1} parent=0
    _
  %s9 = ssub.s32 1, %s7
  %s10 = scalar_select 0, %s9, %s7
  $region1: #{block_forward.1} parent=0
    #allocation2 [shape = 'u8[524288]{0}', space=vmem, size = 0x80000, scoped, tag = 'input window, operand 0']
    #allocation3 [shape = 's32[2]{0}', space=sflag, size = 0x8, scoped, tag = 'scoped memory for block_forward.1']
    #allocation4 [shape = 's32[2]{0}', space=sflag, size = 0x8, scoped, tag = 'scoped memory for block_forward.1']
    #allocation5 [shape = 'u8[786432]{0}', space=vmem, size = 0xc0000, scoped, tag = 'input window, operand 2, single buffered']
    #allocation6 [shape = 's32[1]{0}', space=sflag, size = 0x4, scoped, tag = 'scoped memory for block_forward.1']
    #allocation7 [shape = 'u8[262144]{0}', space=vmem, size = 0x40000, scoped, tag = 'input window, operand 3, single buffered']
    #allocation8 [shape = 'u8[1048576]{0}', space=vmem, size = 0x100000, scoped, tag = 'input window, operand 4, single buffered']
    #allocation9 [shape = 's32[1]{0}', space=sflag, size = 0x4, scoped, tag = 'scoped memory for block_forward.1']
    #allocation10 [shape = 'u8[1048576]{0}', space=vmem, size = 0x100000, scoped, tag = 'input window, operand 5, single buffered']
    #allocation11 [shape = 'u8[524288]{0}', space=vmem, size = 0x80000, scoped, tag = 'output window, operand 0']
    %11 = vsyncpa [#allocation3], 0
    %s12 = scalar_lea.sflag [#allocation3], 1
    %13 = vsyncpa %s12, 0
    %14 = vsyncpa [#allocation6], 0
    %15 = vsyncpa [#allocation9], 0
    %16 = vsyncpa [#allocation4], 0
    %s17 = scalar_lea.sflag [#allocation4], 1
    %18 = vsyncpa %s17, 0
    loop: start=0, step=1, limit=4
    $region2: #{block_forward.1} parent=1 // loop_pre_header
      _
    $region3: #{block_forward.1} parent=1 // loop_header
      %s20 = sphi 0, %s24
      %p21 = scmp.ge.s32.totalorder %s20, 4
      %s30 = sphi 0, %s32
      %s33 = sphi 0, %s30
      %s34 = sphi 0, %s33
      %s50 = sphi 0, %s34
      %s54 = sphi 0, %s54
      %s56 = sphi 0, %s54
      %s57 = sphi 0, %s56
      %s71 = sphi 0, %s57
      %s75 = sphi 0, %s75
      %s77 = sphi 0, %s75
      %s78 = sphi 0, %s77
      %s92 = sphi 0, %s78
      %s96 = sphi 0, %s96
      %s98 = sphi 0, %s96
      %s99 = sphi 0, %s98
      %s113 = sphi 0, %s99
      %s117 = sphi 0, %s117
      %s119 = sphi 0, %s117
      %s120 = sphi 0, %s119
      %s134 = sphi 0, %s120
      %s138 = sphi 0, %s138
      %s140 = sphi 0, %s138
      %s141 = sphi 0, %s140
      %s155 = sphi 0, %s141
      %s161 = sphi 0, %s163
      %s164 = sphi 0, %s161
      %s165 = sphi 0, %s164
      %s181 = sphi 0, %s165
    $region4: #{block_forward.1} parent=1 // loop_header_branch
      %23 = sbr.rel (%p21) target = $region8
    $region5: #{block_forward.1} parent=1 // loop_body
      %s25 = ssub.s32 %s20, 1
      %s26 = ssub.s32 %s20, 2
      %s27 = sadd.s32 %s20, 1
      %s28 = ssub.s32 %s20, %s27
      %p29 = scmp.eq.s32.totalorder %s28, 0
      %s31 = sadd.s32 %s30, 1
      %s32 = scalar_select %p29, %s30, %s31
      %p35 = pneg %p29
      %p36 = scmp.eq.s32.totalorder %s20, 1
      %p37 = por %p35, %p36
      %p38 = scmp.ne.s32.totalorder %s30, %s33
      %p39 = scmp.eq.s32.totalorder %s20, 0
      %p40 = por %p38, %p39
      %p41 = scmp.ne.s32.totalorder %s30, %s33
      %p42 = scmp.eq.s32.totalorder %s25, 1
      %p43 = por %p41, %p42
      %p44 = scmp.ne.s32.totalorder %s33, %s34
      %p45 = scmp.eq.s32.totalorder %s25, 0
      %p46 = por %p44, %p45
      %p47 = scmp.ne.s32.totalorder %s33, %s34
      %p48 = scmp.eq.s32.totalorder %s26, 1
      %p49 = por %p47, %p48
      %p51 = scmp.ne.s32.totalorder %s34, %s50
      %p52 = scmp.eq.s32.totalorder %s26, 0
      %p53 = por %p51, %p52
      %s55 = sadd.s32 %s54, 1
      %p58 = scmp.eq.s32.totalorder %s20, 1
      %p59 = scmp.ne.s32.totalorder %s54, %s56
      %p60 = scmp.eq.s32.totalorder %s20, 0
      %p61 = por %p59, %p60
      %p62 = scmp.ne.s32.totalorder %s54, %s56
      %p63 = scmp.eq.s32.totalorder %s25, 1
      %p64 = por %p62, %p63
      %p65 = scmp.ne.s32.totalorder %s56, %s57
      %p66 = scmp.eq.s32.totalorder %s25, 0
      %p67 = por %p65, %p66
      %p68 = scmp.ne.s32.totalorder %s56, %s57
      %p69 = scmp.eq.s32.totalorder %s26, 1
      %p70 = por %p68, %p69
      %p72 = scmp.ne.s32.totalorder %s57, %s71
      %p73 = scmp.eq.s32.totalorder %s26, 0
      %p74 = por %p72, %p73
      %s76 = sadd.s32 %s75, 1
      %p79 = scmp.eq.s32.totalorder %s20, 1
      %p80 = scmp.ne.s32.totalorder %s75, %s77
      %p81 = scmp.eq.s32.totalorder %s20, 0
      %p82 = por %p80, %p81
      %p83 = scmp.ne.s32.totalorder %s75, %s77
      %p84 = scmp.eq.s32.totalorder %s25, 1
      %p85 = por %p83, %p84
      %p86 = scmp.ne.s32.totalorder %s77, %s78
      %p87 = scmp.eq.s32.totalorder %s25, 0
      %p88 = por %p86, %p87
      %p89 = scmp.ne.s32.totalorder %s77, %s78
      %p90 = scmp.eq.s32.totalorder %s26, 1
      %p91 = por %p89, %p90
      %p93 = scmp.ne.s32.totalorder %s78, %s92
      %p94 = scmp.eq.s32.totalorder %s26, 0
      %p95 = por %p93, %p94
      %s97 = sadd.s32 %s96, 1
      %p100 = scmp.eq.s32.totalorder %s20, 1
      %p101 = scmp.ne.s32.totalorder %s96, %s98
      %p102 = scmp.eq.s32.totalorder %s20, 0
      %p103 = por %p101, %p102
      %p104 = scmp.ne.s32.totalorder %s96, %s98
      %p105 = scmp.eq.s32.totalorder %s25, 1
      %p106 = por %p104, %p105
      %p107 = scmp.ne.s32.totalorder %s98, %s99
      %p108 = scmp.eq.s32.totalorder %s25, 0
      %p109 = por %p107, %p108
      %p110 = scmp.ne.s32.totalorder %s98, %s99
      %p111 = scmp.eq.s32.totalorder %s26, 1
      %p112 = por %p110, %p111
      %p114 = scmp.ne.s32.totalorder %s99, %s113
      %p115 = scmp.eq.s32.totalorder %s26, 0
      %p116 = por %p114, %p115
      %s118 = sadd.s32 %s117, 1
      %p121 = scmp.eq.s32.totalorder %s20, 1
      %p122 = scmp.ne.s32.totalorder %s117, %s119
      %p123 = scmp.eq.s32.totalorder %s20, 0
      %p124 = por %p122, %p123
      %p125 = scmp.ne.s32.totalorder %s117, %s119
      %p126 = scmp.eq.s32.totalorder %s25, 1
      %p127 = por %p125, %p126
      %p128 = scmp.ne.s32.totalorder %s119, %s120
      %p129 = scmp.eq.s32.totalorder %s25, 0
      %p130 = por %p128, %p129
      %p131 = scmp.ne.s32.totalorder %s119, %s120
      %p132 = scmp.eq.s32.totalorder %s26, 1
      %p133 = por %p131, %p132
      %p135 = scmp.ne.s32.totalorder %s120, %s134
      %p136 = scmp.eq.s32.totalorder %s26, 0
      %p137 = por %p135, %p136
      %s139 = sadd.s32 %s138, 1
      %p142 = scmp.eq.s32.totalorder %s20, 1
      %p143 = scmp.ne.s32.totalorder %s138, %s140
      %p144 = scmp.eq.s32.totalorder %s20, 0
      %p145 = por %p143, %p144
      %p146 = scmp.ne.s32.totalorder %s138, %s140
      %p147 = scmp.eq.s32.totalorder %s25, 1
      %p148 = por %p146, %p147
      %p149 = scmp.ne.s32.totalorder %s140, %s141
      %p150 = scmp.eq.s32.totalorder %s25, 0
      %p151 = por %p149, %p150
      %p152 = scmp.ne.s32.totalorder %s140, %s141
      %p153 = scmp.eq.s32.totalorder %s26, 1
      %p154 = por %p152, %p153
      %p156 = scmp.ne.s32.totalorder %s141, %s155
      %p157 = scmp.eq.s32.totalorder %s26, 0
      %p158 = por %p156, %p157
      %s159 = ssub.s32 %s20, %s27
      %p160 = scmp.eq.s32.totalorder %s159, 0
      %s162 = sadd.s32 %s161, 1
      %s163 = scalar_select %p160, %s161, %s162
      %p166 = pneg %p160
      %p167 = scmp.eq.s32.totalorder %s20, 1
      %p168 = por %p166, %p167
      %p169 = scmp.ne.s32.totalorder %s161, %s164
      %p170 = scmp.eq.s32.totalorder %s20, 0
      %p171 = por %p169, %p170
      %p172 = scmp.ne.s32.totalorder %s161, %s164
      %p173 = scmp.eq.s32.totalorder %s25, 1
      %p174 = por %p172, %p173
      %p175 = scmp.ne.s32.totalorder %s164, %s165
      %p176 = scmp.eq.s32.totalorder %s25, 0
      %p177 = por %p175, %p176
      %p178 = scmp.ne.s32.totalorder %s164, %s165
      %p179 = scmp.eq.s32.totalorder %s26, 1
      %p180 = por %p178, %p179
      %p182 = scmp.ne.s32.totalorder %s165, %s181
      %p183 = scmp.eq.s32.totalorder %s26, 0
      %p184 = por %p182, %p183
      %p185 = scmp.le.s32.totalorder 1, %s20
      %p186 = scmp.lt.s32.totalorder %s20, 3
      %p187 = pnand %p185, %p186
      %p188 = pneg %p187
      // Predicated region
      $region9: #{block_forward.1} parent=5 // pred_check
        _
      $region10: #{block_forward.1} parent=5 // pred_check_branch
        %190 = sbr.rel (%p187) target = $region12
      $region11: #{block_forward.1} parent=5 // pred_region
        %s191 = ssub.s32 %s20, 1
        // Predicated region
        $region13: #{block_forward.1} parent=11 // pred_check
          %p192 = pneg %p67
        $region14: #{block_forward.1} parent=11 // pred_check_branch
          %194 = sbr.rel (%p192) target = $region16
        $region15: #{block_forward.1} parent=11 // pred_region
          _
        $region16: #{block_forward.1} parent=11 // pred_fallthru
          _
        // Predicated region
        $region17: #{block_forward.1} parent=11 // pred_check
          %p195 = pneg %p88
        $region18: #{block_forward.1} parent=11 // pred_check_branch
          %197 = sbr.rel (%p195) target = $region20
        $region19: #{block_forward.1} parent=11 // pred_region
          %s199 = ssub.s32 24576, 24576
          %200 = vsyncadd [#allocation6], %s199
          %s201 = sshll.u32 [#allocation5], 4
          %s202 = int_to_ptr.vmem [resolvable:$true] %s201
          %207 = dma.hbm_to_vmem [thread:$0]  %s2, 24576, %s202, [#allocation6], 768, 768, 48
        $region20: #{block_forward.1} parent=11 // pred_fallthru
          _
        // Predicated region
        $region21: #{block_forward.1} parent=11 // pred_check
          %p208 = pneg %p109
        $region22: #{block_forward.1} parent=11 // pred_check_branch
          %210 = sbr.rel (%p208) target = $region24
        $region23: #{block_forward.1} parent=11 // pred_region
          %s212 = ssub.s32 8192, 8192
          %213 = vsyncadd [#allocation6], %s212
          %s214 = sshll.u32 [#allocation7], 4
          %s215 = int_to_ptr.vmem [resolvable:$true] %s214
          %220 = dma.hbm_to_vmem [thread:$0]  %s3, 8192, %s215, [#allocation6], 256, 256, 16
        $region24: #{block_forward.1} parent=11 // pred_fallthru
          _
        // Predicated region
        $region25: #{block_forward.1} parent=11 // pred_check
          %p221 = pneg %p130
        $region26: #{block_forward.1} parent=11 // pred_check_branch
          %223 = sbr.rel (%p221) target = $region28
        $region27: #{block_forward.1} parent=11 // pred_region
          %s225 = ssub.s32 32768, 32768
          %226 = vsyncadd [#allocation9], %s225
          %s227 = sshll.u32 [#allocation8], 4
          %s228 = int_to_ptr.vmem [resolvable:$true] %s227
          %233 = dma.hbm_to_vmem [thread:$0]  %s4, 32768, %s228, [#allocation9], 1024, 1024, 64
        $region28: #{block_forward.1} parent=11 // pred_fallthru
          _
        // Predicated region
        $region29: #{block_forward.1} parent=11 // pred_check
          %p234 = pneg %p151
        $region30: #{block_forward.1} parent=11 // pred_check_branch
          %236 = sbr.rel (%p234) target = $region32
        $region31: #{block_forward.1} parent=11 // pred_region
          %s238 = ssub.s32 32768, 32768
          %239 = vsyncadd [#allocation9], %s238
          %s240 = sshll.u32 [#allocation10], 4
          %s241 = int_to_ptr.vmem [resolvable:$true] %s240
          %246 = dma.hbm_to_vmem [thread:$0]  %s5, 32768, %s241, [#allocation9], 256, 256, 16
        $region32: #{block_forward.1} parent=11 // pred_fallthru
          _
      $region12: #{block_forward.1} parent=5 // pred_fallthru
        _
      %p247 = scmp.lt.s32.totalorder %s20, 2
      // Predicated region
      $region33: #{block_forward.1} parent=5 // pred_check
        %p248 = pneg %p247
      $region34: #{block_forward.1} parent=5 // pred_check_branch
        %250 = sbr.rel (%p248) target = $region36
      $region35: #{block_forward.1} parent=5 // pred_region
        // Predicated region
        $region37: #{block_forward.1} parent=35 // pred_check
          %p251 = pneg %p40
        $region38: #{block_forward.1} parent=35 // pred_check_branch
          %253 = sbr.rel (%p251) target = $region40
        $region39: #{block_forward.1} parent=35 // pred_region
          %s254 = sand.u32 %s30, 1
          %s255 = scalar_lea.sflag [#allocation3], %s254
          %s256 = sand.u32 %s30, 1
          %s257 = smul.addr %s256, 512
          %s258 = scalar_lea.vmem [#allocation2], %s257
          %s259 = smul.u32 32, %s20
          %s261 = ssub.s32 8192, 8192
          %262 = vsyncadd %s255, %s261
          %s263 = smul.addr %s259, 2
          %s264 = smul.addr %s263, 128
          %s265 = scalar_lea.hbm %s0, %s264
          %s266 = sshll.u32 %s258, 4
          %s267 = int_to_ptr.vmem [resolvable:$true] %s266
          %272 = dma.hbm_to_vmem [thread:$0]  %s265, 8192, %s267, %s255, 256, 256, 16
        $region40: #{block_forward.1} parent=35 // pred_fallthru
          _
      $region36: #{block_forward.1} parent=5 // pred_fallthru
        _
      %p273 = scmp.le.s32.totalorder 1, %s20
      %p274 = scmp.lt.s32.totalorder %s20, 3
      %p275 = pnand %p273, %p274
      %p276 = pneg %p275
      // Predicated region
      $region41: #{block_forward.1} parent=5 // pred_check
        _
      $region42: #{block_forward.1} parent=5 // pred_check_branch
        %278 = sbr.rel (%p275) target = $region44
      $region43: #{block_forward.1} parent=5 // pred_region
        %s279 = ssub.s32 %s20, 1
        %s280 = sand.u32 %s33, 1
        %s281 = scalar_lea.sflag [#allocation3], %s280
        %s282 = sand.u32 %s33, 1
        %s283 = smul.addr %s282, 512
        %s284 = scalar_lea.vmem [#allocation2], %s283
        // Predicated region
        $region45: #{block_forward.1} parent=43 // pred_check
          %p285 = pneg %p46
        $region46: #{block_forward.1} parent=43 // pred_check_branch
          %287 = sbr.rel (%p285) target = $region48
        $region47: #{block_forward.1} parent=43 // pred_region
          %288 = dma.done %s281, 8192
        $region48: #{block_forward.1} parent=43 // pred_fallthru
          _
        // Predicated region
        $region49: #{block_forward.1} parent=43 // pred_check
          %p289 = pneg %p88
        $region50: #{block_forward.1} parent=43 // pred_check_branch
          %291 = sbr.rel (%p289) target = $region52
        $region51: #{block_forward.1} parent=43 // pred_region
          %292 = dma.done [#allocation6], 24576
        $region52: #{block_forward.1} parent=43 // pred_fallthru
          _
        // Predicated region
        $region53: #{block_forward.1} parent=43 // pred_check
          %p293 = pneg %p109
        $region54: #{block_forward.1} parent=43 // pred_check_branch
          %295 = sbr.rel (%p293) target = $region56
        $region55: #{block_forward.1} parent=43 // pred_region
          %296 = dma.done [#allocation6], 8192
        $region56: #{block_forward.1} parent=43 // pred_fallthru
          _
        // Predicated region
        $region57: #{block_forward.1} parent=43 // pred_check
          %p297 = pneg %p130
        $region58: #{block_forward.1} parent=43 // pred_check_branch
          %299 = sbr.rel (%p297) target = $region60
        $region59: #{block_forward.1} parent=43 // pred_region
          %300 = dma.done [#allocation9], 32768
        $region60: #{block_forward.1} parent=43 // pred_fallthru
          _
        // Predicated region
        $region61: #{block_forward.1} parent=43 // pred_check
          %p301 = pneg %p151
        $region62: #{block_forward.1} parent=43 // pred_check_branch
          %303 = sbr.rel (%p301) target = $region64
        $region63: #{block_forward.1} parent=43 // pred_region
          %304 = dma.done [#allocation9], 32768
        $region64: #{block_forward.1} parent=43 // pred_fallthru
          _
        %s305 = sand.u32 %s33, 1
        %s306 = scalar_lea.sflag [#allocation3], %s305
        %s307 = sand.u32 %s33, 1
        %s308 = smul.addr %s307, 512
        %s309 = scalar_lea.vmem [#allocation2], %s308
        %p310 = pneg %p46
        %p311 = pneg %p43
        %p312 = pneg %p67
        %p313 = pneg %p64
        %p314 = pneg %p88
        %p315 = pneg %p85
        %p316 = pneg %p109
        %p317 = pneg %p106
        %p318 = pneg %p130
        %p319 = pneg %p127
        %p320 = pneg %p151
        %p321 = pneg %p148
        %p322 = pneg %p177
        %p323 = pneg %p174
        %s324 = sand.u32 %s164, 1
        %s325 = scalar_lea.sflag [#allocation4], %s324
        %s326 = sand.u32 %s164, 1
        %s327 = smul.addr %s326, 512
        %s328 = scalar_lea.vmem [#allocation11], %s327
        %s329 = smul.u32 32, %s25
        %s330 = smul.u32 32, %s25
        %v331 = vld [vmem:[%s284] sm:$0xff]
        %v332 = vld [vmem:[%s284 + $0x8] sm:$0xff]
        %v333 = vld [vmem:[%s284 + $0x10] sm:$0xff]
        %v334 = vld [vmem:[%s284 + $0x18] sm:$0xff]
        %v335 = vld [vmem:[%s284 + $0x20] sm:$0xff]
        %v336 = vld [vmem:[%s284 + $0x28] sm:$0xff]
        %v337 = vld [vmem:[%s284 + $0x30] sm:$0xff]
        %v338 = vld [vmem:[%s284 + $0x38] sm:$0xff]
        %v339 = vld [vmem:[%s284 + $0x40] sm:$0xff]
        %v340 = vld [vmem:[%s284 + $0x48] sm:$0xff]
        %v341 = vld [vmem:[%s284 + $0x50] sm:$0xff]
        %v342 = vld [vmem:[%s284 + $0x58] sm:$0xff]
        %v343 = vld [vmem:[%s284 + $0x60] sm:$0xff]
        %v344 = vld [vmem:[%s284 + $0x68] sm:$0xff]
        %v345 = vld [vmem:[%s284 + $0x70] sm:$0xff]
        %v346 = vld [vmem:[%s284 + $0x78] sm:$0xff]
        %v347 = vld [vmem:[%s284 + $0x80] sm:$0xff]
        %v348 = vld [vmem:[%s284 + $0x88] sm:$0xff]
        %v349 = vld [vmem:[%s284 + $0x90] sm:$0xff]
        %v350 = vld [vmem:[%s284 + $0x98] sm:$0xff]
        %v351 = vld [vmem:[%s284 + $0xa0] sm:$0xff]
        %v352 = vld [vmem:[%s284 + $0xa8] sm:$0xff]
        %v353 = vld [vmem:[%s284 + $0xb0] sm:$0xff]
        %v354 = vld [vmem:[%s284 + $0xb8] sm:$0xff]
        %v355 = vld [vmem:[%s284 + $0xc0] sm:$0xff]
        %v356 = vld [vmem:[%s284 + $0xc8] sm:$0xff]
        %v357 = vld [vmem:[%s284 + $0xd0] sm:$0xff]
        %v358 = vld [vmem:[%s284 + $0xd8] sm:$0xff]
        %v359 = vld [vmem:[%s284 + $0xe0] sm:$0xff]
        %v360 = vld [vmem:[%s284 + $0xe8] sm:$0xff]
        %v361 = vld [vmem:[%s284 + $0xf0] sm:$0xff]
        %v362 = vld [vmem:[%s284 + $0xf8] sm:$0xff]
        %v363 = vld [vmem:[%s284 + $0x100] sm:$0xff]
        %v364 = vld [vmem:[%s284 + $0x108] sm:$0xff]
        %v365 = vld [vmem:[%s284 + $0x110] sm:$0xff]
        %v366 = vld [vmem:[%s284 + $0x118] sm:$0xff]
        %v367 = vld [vmem:[%s284 + $0x120] sm:$0xff]
        %v368 = vld [vmem:[%s284 + $0x128] sm:$0xff]
        %v369 = vld [vmem:[%s284 + $0x130] sm:$0xff]
        %v370 = vld [vmem:[%s284 + $0x138] sm:$0xff]
        %v371 = vld [vmem:[%s284 + $0x140] sm:$0xff]
        %v372 = vld [vmem:[%s284 + $0x148] sm:$0xff]
        %v373 = vld [vmem:[%s284 + $0x150] sm:$0xff]
        %v374 = vld [vmem:[%s284 + $0x158] sm:$0xff]
        %v375 = vld [vmem:[%s284 + $0x160] sm:$0xff]
        %v376 = vld [vmem:[%s284 + $0x168] sm:$0xff]
        %v377 = vld [vmem:[%s284 + $0x170] sm:$0xff]
        %v378 = vld [vmem:[%s284 + $0x178] sm:$0xff]
        %v379 = vld [vmem:[%s284 + $0x180] sm:$0xff]
        %v380 = vld [vmem:[%s284 + $0x188] sm:$0xff]
        %v381 = vld [vmem:[%s284 + $0x190] sm:$0xff]
        %v382 = vld [vmem:[%s284 + $0x198] sm:$0xff]
        %v383 = vld [vmem:[%s284 + $0x1a0] sm:$0xff]
        %v384 = vld [vmem:[%s284 + $0x1a8] sm:$0xff]
        %v385 = vld [vmem:[%s284 + $0x1b0] sm:$0xff]
        %v386 = vld [vmem:[%s284 + $0x1b8] sm:$0xff]
        %v387 = vld [vmem:[%s284 + $0x1c0] sm:$0xff]
        %v388 = vld [vmem:[%s284 + $0x1c8] sm:$0xff]
        %v389 = vld [vmem:[%s284 + $0x1d0] sm:$0xff]
        %v390 = vld [vmem:[%s284 + $0x1d8] sm:$0xff]
        %v391 = vld [vmem:[%s284 + $0x1e0] sm:$0xff]
        %v392 = vld [vmem:[%s284 + $0x1e8] sm:$0xff]
        %v393 = vld [vmem:[%s284 + $0x1f0] sm:$0xff]
        %v394 = vld [vmem:[%s284 + $0x1f8] sm:$0xff]
        %v395 = vld [vmem:[%s1] ss:$8 sm:$0x3]
        %s396 = scalar_lea.vmem %s1, 1
        %v397 = vld [vmem:[%s396] ss:$8 sm:$0x3]
        %s398 = scalar_lea.vmem %s1, 2
        %v399 = vld [vmem:[%s398] ss:$8 sm:$0x3]
        %s400 = scalar_lea.vmem %s1, 3
        %v401 = vld [vmem:[%s400] ss:$8 sm:$0x3]
        %s402 = scalar_lea.vmem %s1, 4
        %v403 = vld [vmem:[%s402] ss:$8 sm:$0x3]
        %s404 = scalar_lea.vmem %s1, 5
        %v405 = vld [vmem:[%s404] ss:$8 sm:$0x3]
        %s406 = scalar_lea.vmem %s1, 6
        %v407 = vld [vmem:[%s406] ss:$8 sm:$0xf]
        %v408 = vld [vmem:[%s406] ss:$8 sm:$0x30]
        %v409 = vor.u32 %v407, %v408
        %s410 = scalar_lea.vmem %s1, 7
        %v411 = vld [vmem:[%s410] ss:$8 sm:$0xf]
        %v412 = vld [vmem:[%s410] ss:$8 sm:$0xf0]
        %v413 = vor.u32 %v411, %v412
        %v414 = vadd.f32 %v331, %v332
        %415 = vadd.xlane.f32.xlu0 %v414
        %v416 = vpop.xlane.xlu0 %415
        %v417 = vadd.f32 %v333, %v334
        %418 = vadd.xlane.f32.xlu0 %v417
        %v419 = vpop.xlane.xlu0 %418
        %v420 = vadd.f32 %v335, %v336
        %421 = vadd.xlane.f32.xlu0 %v420
        %v422 = vpop.xlane.xlu0 %421
        %v423 = vadd.f32 %v337, %v338
        %424 = vadd.xlane.f32.xlu0 %v423
        %v425 = vpop.xlane.xlu0 %424
        %v426 = vadd.f32 %v339, %v340
        %427 = vadd.xlane.f32.xlu0 %v426
        %v428 = vpop.xlane.xlu0 %427
        %v429 = vadd.f32 %v341, %v342
        %430 = vadd.xlane.f32.xlu0 %v429
        %v431 = vpop.xlane.xlu0 %430
        %v432 = vadd.f32 %v343, %v344
        %433 = vadd.xlane.f32.xlu0 %v432
        %v434 = vpop.xlane.xlu0 %433
        %v435 = vadd.f32 %v345, %v346
        %436 = vadd.xlane.f32.xlu0 %v435
        %v437 = vpop.xlane.xlu0 %436
        %v438 = vadd.f32 %v347, %v348
        %439 = vadd.xlane.f32.xlu0 %v438
        %v440 = vpop.xlane.xlu0 %439
        %v441 = vadd.f32 %v349, %v350
        %442 = vadd.xlane.f32.xlu0 %v441
        %v443 = vpop.xlane.xlu0 %442
        %v444 = vadd.f32 %v351, %v352
        %445 = vadd.xlane.f32.xlu0 %v444
        %v446 = vpop.xlane.xlu0 %445
        %v447 = vadd.f32 %v353, %v354
        %448 = vadd.xlane.f32.xlu0 %v447
        %v449 = vpop.xlane.xlu0 %448
        %v450 = vadd.f32 %v355, %v356
        %451 = vadd.xlane.f32.xlu0 %v450
        %v452 = vpop.xlane.xlu0 %451
        %v453 = vadd.f32 %v357, %v358
        %454 = vadd.xlane.f32.xlu0 %v453
        %v455 = vpop.xlane.xlu0 %454
        %v456 = vadd.f32 %v359, %v360
        %457 = vadd.xlane.f32.xlu0 %v456
        %v458 = vpop.xlane.xlu0 %457
        %v459 = vadd.f32 %v361, %v362
        %460 = vadd.xlane.f32.xlu0 %v459
        %v461 = vpop.xlane.xlu0 %460
        %v462 = vadd.f32 %v363, %v364
        %463 = vadd.xlane.f32.xlu0 %v462
        %v464 = vpop.xlane.xlu0 %463
        %v465 = vadd.f32 %v365, %v366
        %466 = vadd.xlane.f32.xlu0 %v465
        %v467 = vpop.xlane.xlu0 %466
        %v468 = vadd.f32 %v367, %v368
        %469 = vadd.xlane.f32.xlu0 %v468
        %v470 = vpop.xlane.xlu0 %469
        %v471 = vadd.f32 %v369, %v370
        %472 = vadd.xlane.f32.xlu0 %v471
        %v473 = vpop.xlane.xlu0 %472
        %v474 = vadd.f32 %v371, %v372
        %475 = vadd.xlane.f32.xlu0 %v474
        %v476 = vpop.xlane.xlu0 %475
        %v477 = vadd.f32 %v373, %v374
        %478 = vadd.xlane.f32.xlu0 %v477
        %v479 = vpop.xlane.xlu0 %478
        %v480 = vadd.f32 %v375, %v376
        %481 = vadd.xlane.f32.xlu0 %v480
        %v482 = vpop.xlane.xlu0 %481
        %v483 = vadd.f32 %v377, %v378
        %484 = vadd.xlane.f32.xlu0 %v483
        %v485 = vpop.xlane.xlu0 %484
        %v486 = vadd.f32 %v379, %v380
        %487 = vadd.xlane.f32.xlu0 %v486
        %v488 = vpop.xlane.xlu0 %487
        %v489 = vadd.f32 %v381, %v382
        %490 = vadd.xlane.f32.xlu0 %v489
        %v491 = vpop.xlane.xlu0 %490
        %v492 = vadd.f32 %v383, %v384
        %493 = vadd.xlane.f32.xlu0 %v492
        %v494 = vpop.xlane.xlu0 %493
        %v495 = vadd.f32 %v385, %v386
        %496 = vadd.xlane.f32.xlu0 %v495
        %v497 = vpop.xlane.xlu0 %496
        %v498 = vadd.f32 %v387, %v388
        %499 = vadd.xlane.f32.xlu0 %v498
        %v500 = vpop.xlane.xlu0 %499
        %v501 = vadd.f32 %v389, %v390
        %502 = vadd.xlane.f32.xlu0 %v501
        %v503 = vpop.xlane.xlu0 %502
        %v504 = vadd.f32 %v391, %v392
        %505 = vadd.xlane.f32.xlu0 %v504
        %v506 = vpop.xlane.xlu0 %505
        %v507 = vadd.f32 %v393, %v394
        %508 = vadd.xlane.f32.xlu0 %v507
        %v509 = vpop.xlane.xlu0 %508
        %v510 = vrcp.pop 256.0
        %v511 = vmul.f32 %v416, %v510
        %v512 = vmul.f32 %v419, %v510
        %v513 = vmul.f32 %v422, %v510
        %v514 = vmul.f32 %v425, %v510
        %v515 = vmul.f32 %v428, %v510
        %v516 = vmul.f32 %v431, %v510
        %v517 = vmul.f32 %v434, %v510
        %v518 = vmul.f32 %v437, %v510
        %v519 = vmul.f32 %v440, %v510
        %v520 = vmul.f32 %v443, %v510
        %v521 = vmul.f32 %v446, %v510
        %v522 = vmul.f32 %v449, %v510
        %v523 = vmul.f32 %v452, %v510
        %v524 = vmul.f32 %v455, %v510
        %v525 = vmul.f32 %v458, %v510
        %v526 = vmul.f32 %v461, %v510
        %v527 = vmul.f32 %v464, %v510
        %v528 = vmul.f32 %v467, %v510
        %v529 = vmul.f32 %v470, %v510
        %v530 = vmul.f32 %v473, %v510
        %v531 = vmul.f32 %v476, %v510
        %v532 = vmul.f32 %v479, %v510
        %v533 = vmul.f32 %v482, %v510
        %v534 = vmul.f32 %v485, %v510
        %v535 = vmul.f32 %v488, %v510
        %v536 = vmul.f32 %v491, %v510
        %v537 = vmul.f32 %v494, %v510
        %v538 = vmul.f32 %v497, %v510
        %v539 = vmul.f32 %v500, %v510
        %v540 = vmul.f32 %v503, %v510
        %v541 = vmul.f32 %v506, %v510
        %v542 = vmul.f32 %v509, %v510
        %v543 = vsub.f32 %v331, %v511
        %v544 = vsub.f32 %v332, %v511
        %v545 = vsub.f32 %v333, %v512
        %v546 = vsub.f32 %v334, %v512
        %v547 = vsub.f32 %v335, %v513
        %v548 = vsub.f32 %v336, %v513
        %v549 = vsub.f32 %v337, %v514
        %v550 = vsub.f32 %v338, %v514
        %v551 = vsub.f32 %v339, %v515
        %v552 = vsub.f32 %v340, %v515
        %v553 = vsub.f32 %v341, %v516
        %v554 = vsub.f32 %v342, %v516
        %v555 = vsub.f32 %v343, %v517
        %v556 = vsub.f32 %v344, %v517
        %v557 = vsub.f32 %v345, %v518
        %v558 = vsub.f32 %v346, %v518
        %v559 = vsub.f32 %v347, %v519
        %v560 = vsub.f32 %v348, %v519
        %v561 = vsub.f32 %v349, %v520
        %v562 = vsub.f32 %v350, %v520
        %v563 = vsub.f32 %v351, %v521
        %v564 = vsub.f32 %v352, %v521
        %v565 = vsub.f32 %v353, %v522
        %v566 = vsub.f32 %v354, %v522
        %v567 = vsub.f32 %v355, %v523
        %v568 = vsub.f32 %v356, %v523
        %v569 = vsub.f32 %v357, %v524
        %v570 = vsub.f32 %v358, %v524
        %v571 = vsub.f32 %v359, %v525
        %v572 = vsub.f32 %v360, %v525
        %v573 = vsub.f32 %v361, %v526
        %v574 = vsub.f32 %v362, %v526
        %v575 = vsub.f32 %v363, %v527
        %v576 = vsub.f32 %v364, %v527
        %v577 = vsub.f32 %v365, %v528
        %v578 = vsub.f32 %v366, %v528
        %v579 = vsub.f32 %v367, %v529
        %v580 = vsub.f32 %v368, %v529
        %v581 = vsub.f32 %v369, %v530
        %v582 = vsub.f32 %v370, %v530
        %v583 = vsub.f32 %v371, %v531
        %v584 = vsub.f32 %v372, %v531
        %v585 = vsub.f32 %v373, %v532
        %v586 = vsub.f32 %v374, %v532
        %v587 = vsub.f32 %v375, %v533
        %v588 = vsub.f32 %v376, %v533
        %v589 = vsub.f32 %v377, %v534
        %v590 = vsub.f32 %v378, %v534
        %v591 = vsub.f32 %v379, %v535
        %v592 = vsub.f32 %v380, %v535
        %v593 = vsub.f32 %v381, %v536
        %v594 = vsub.f32 %v382, %v536
        %v595 = vsub.f32 %v383, %v537
        %v596 = vsub.f32 %v384, %v537
        %v597 = vsub.f32 %v385, %v538
        %v598 = vsub.f32 %v386, %v538
        %v599 = vsub.f32 %v387, %v539
        %v600 = vsub.f32 %v388, %v539
        %v601 = vsub.f32 %v389, %v540
        %v602 = vsub.f32 %v390, %v540
        %v603 = vsub.f32 %v391, %v541
        %v604 = vsub.f32 %v392, %v541
        %v605 = vsub.f32 %v393, %v542
        %v606 = vsub.f32 %v394, %v542
        %v607 = vmul.f32 %v543, %v543
        %v608 = vmul.f32 %v544, %v544
        %v609 = vmul.f32 %v545, %v545
        %v610 = vmul.f32 %v546, %v546
        %v611 = vmul.f32 %v547, %v547
        %v612 = vmul.f32 %v548, %v548
        %v613 = vmul.f32 %v549, %v549
        %v614 = vmul.f32 %v550, %v550
        %v615 = vmul.f32 %v551, %v551
        %v616 = vmul.f32 %v552, %v552
        %v617 = vmul.f32 %v553, %v553
        %v618 = vmul.f32 %v554, %v554
        %v619 = vmul.f32 %v555, %v555
        %v620 = vmul.f32 %v556, %v556
        %v621 = vmul.f32 %v557, %v557
        %v622 = vmul.f32 %v558, %v558
        %v623 = vmul.f32 %v559, %v559
        %v624 = vmul.f32 %v560, %v560
        %v625 = vmul.f32 %v561, %v561
        %v626 = vmul.f32 %v562, %v562
        %v627 = vmul.f32 %v563, %v563
        %v628 = vmul.f32 %v564, %v564
        %v629 = vmul.f32 %v565, %v565
        %v630 = vmul.f32 %v566, %v566
        %v631 = vmul.f32 %v567, %v567
        %v632 = vmul.f32 %v568, %v568
        %v633 = vmul.f32 %v569, %v569
        %v634 = vmul.f32 %v570, %v570
        %v635 = vmul.f32 %v571, %v571
        %v636 = vmul.f32 %v572, %v572
        %v637 = vmul.f32 %v573, %v573
        %v638 = vmul.f32 %v574, %v574
        %v639 = vmul.f32 %v575, %v575
        %v640 = vmul.f32 %v576, %v576
        %v641 = vmul.f32 %v577, %v577
        %v642 = vmul.f32 %v578, %v578
        %v643 = vmul.f32 %v579, %v579
        %v644 = vmul.f32 %v580, %v580
        %v645 = vmul.f32 %v581, %v581
        %v646 = vmul.f32 %v582, %v582
        %v647 = vmul.f32 %v583, %v583
        %v648 = vmul.f32 %v584, %v584
        %v649 = vmul.f32 %v585, %v585
        %v650 = vmul.f32 %v586, %v586
        %v651 = vmul.f32 %v587, %v587
        %v652 = vmul.f32 %v588, %v588
        %v653 = vmul.f32 %v589, %v589
        %v654 = vmul.f32 %v590, %v590
        %v655 = vmul.f32 %v591, %v591
        %v656 = vmul.f32 %v592, %v592
        %v657 = vmul.f32 %v593, %v593
        %v658 = vmul.f32 %v594, %v594
        %v659 = vmul.f32 %v595, %v595
        %v660 = vmul.f32 %v596, %v596
        %v661 = vmul.f32 %v597, %v597
        %v662 = vmul.f32 %v598, %v598
        %v663 = vmul.f32 %v599, %v599
        %v664 = vmul.f32 %v600, %v600
        %v665 = vmul.f32 %v601, %v601
        %v666 = vmul.f32 %v602, %v602
        %v667 = vmul.f32 %v603, %v603
        %v668 = vmul.f32 %v604, %v604
        %v669 = vmul.f32 %v605, %v605
        %v670 = vmul.f32 %v606, %v606
        %v671 = vadd.f32 %v607, %v608
        %672 = vadd.xlane.f32.xlu0 %v671
        %v673 = vpop.xlane.xlu0 %672
        %v674 = vadd.f32 %v609, %v610
        %675 = vadd.xlane.f32.xlu0 %v674
        %v676 = vpop.xlane.xlu0 %675
        %v677 = vadd.f32 %v611, %v612
        %678 = vadd.xlane.f32.xlu0 %v677
        %v679 = vpop.xlane.xlu0 %678
        %v680 = vadd.f32 %v613, %v614
        %681 = vadd.xlane.f32.xlu0 %v680
        %v682 = vpop.xlane.xlu0 %681
        %v683 = vadd.f32 %v615, %v616
        %684 = vadd.xlane.f32.xlu0 %v683
        %v685 = vpop.xlane.xlu0 %684
        %v686 = vadd.f32 %v617, %v618
        %687 = vadd.xlane.f32.xlu0 %v686
        %v688 = vpop.xlane.xlu0 %687
        %v689 = vadd.f32 %v619, %v620
        %690 = vadd.xlane.f32.xlu0 %v689
        %v691 = vpop.xlane.xlu0 %690
        %v692 = vadd.f32 %v621, %v622
        %693 = vadd.xlane.f32.xlu0 %v692
        %v694 = vpop.xlane.xlu0 %693
        %v695 = vadd.f32 %v623, %v624
        %696 = vadd.xlane.f32.xlu0 %v695
        %v697 = vpop.xlane.xlu0 %696
        %v698 = vadd.f32 %v625, %v626
        %699 = vadd.xlane.f32.xlu0 %v698
        %v700 = vpop.xlane.xlu0 %699
        %v701 = vadd.f32 %v627, %v628
        %702 = vadd.xlane.f32.xlu0 %v701
        %v703 = vpop.xlane.xlu0 %702
        %v704 = vadd.f32 %v629, %v630
        %705 = vadd.xlane.f32.xlu0 %v704
        %v706 = vpop.xlane.xlu0 %705
        %v707 = vadd.f32 %v631, %v632
        %708 = vadd.xlane.f32.xlu0 %v707
        %v709 = vpop.xlane.xlu0 %708
        %v710 = vadd.f32 %v633, %v634
        %711 = vadd.xlane.f32.xlu0 %v710
        %v712 = vpop.xlane.xlu0 %711
        %v713 = vadd.f32 %v635, %v636
        %714 = vadd.xlane.f32.xlu0 %v713
        %v715 = vpop.xlane.xlu0 %714
        %v716 = vadd.f32 %v637, %v638
        %717 = vadd.xlane.f32.xlu0 %v716
        %v718 = vpop.xlane.xlu0 %717
        %v719 = vadd.f32 %v639, %v640
        %720 = vadd.xlane.f32.xlu0 %v719
        %v721 = vpop.xlane.xlu0 %720
        %v722 = vadd.f32 %v641, %v642
        %723 = vadd.xlane.f32.xlu0 %v722
        %v724 = vpop.xlane.xlu0 %723
        %v725 = vadd.f32 %v643, %v644
        %726 = vadd.xlane.f32.xlu0 %v725
        %v727 = vpop.xlane.xlu0 %726
        %v728 = vadd.f32 %v645, %v646
        %729 = vadd.xlane.f32.xlu0 %v728
        %v730 = vpop.xlane.xlu0 %729
        %v731 = vadd.f32 %v647, %v648
        %732 = vadd.xlane.f32.xlu0 %v731
        %v733 = vpop.xlane.xlu0 %732
        %v734 = vadd.f32 %v649, %v650
        %735 = vadd.xlane.f32.xlu0 %v734
        %v736 = vpop.xlane.xlu0 %735
        %v737 = vadd.f32 %v651, %v652
        %738 = vadd.xlane.f32.xlu0 %v737
        %v739 = vpop.xlane.xlu0 %738
        %v740 = vadd.f32 %v653, %v654
        %741 = vadd.xlane.f32.xlu0 %v740
        %v742 = vpop.xlane.xlu0 %741
        %v743 = vadd.f32 %v655, %v656
        %744 = vadd.xlane.f32.xlu0 %v743
        %v745 = vpop.xlane.xlu0 %744
        %v746 = vadd.f32 %v657, %v658
        %747 = vadd.xlane.f32.xlu0 %v746
        %v748 = vpop.xlane.xlu0 %747
        %v749 = vadd.f32 %v659, %v660
        %750 = vadd.xlane.f32.xlu0 %v749
        %v751 = vpop.xlane.xlu0 %750
        %v752 = vadd.f32 %v661, %v662
        %753 = vadd.xlane.f32.xlu0 %v752
        %v754 = vpop.xlane.xlu0 %753
        %v755 = vadd.f32 %v663, %v664
        %756 = vadd.xlane.f32.xlu0 %v755
        %v757 = vpop.xlane.xlu0 %756
        %v758 = vadd.f32 %v665, %v666
        %759 = vadd.xlane.f32.xlu0 %v758
        %v760 = vpop.xlane.xlu0 %759
        %v761 = vadd.f32 %v667, %v668
        %762 = vadd.xlane.f32.xlu0 %v761
        %v763 = vpop.xlane.xlu0 %762
        %v764 = vadd.f32 %v669, %v670
        %765 = vadd.xlane.f32.xlu0 %v764
        %v766 = vpop.xlane.xlu0 %765
        %v767 = vmul.f32 %v673, %v510
        %v768 = vmul.f32 %v676, %v510
        %v769 = vmul.f32 %v679, %v510
        %v770 = vmul.f32 %v682, %v510
        %v771 = vmul.f32 %v685, %v510
        %v772 = vmul.f32 %v688, %v510
        %v773 = vmul.f32 %v691, %v510
        %v774 = vmul.f32 %v694, %v510
        %v775 = vmul.f32 %v697, %v510
        %v776 = vmul.f32 %v700, %v510
        %v777 = vmul.f32 %v703, %v510
        %v778 = vmul.f32 %v706, %v510
        %v779 = vmul.f32 %v709, %v510
        %v780 = vmul.f32 %v712, %v510
        %v781 = vmul.f32 %v715, %v510
        %v782 = vmul.f32 %v718, %v510
        %v783 = vmul.f32 %v721, %v510
        %v784 = vmul.f32 %v724, %v510
        %v785 = vmul.f32 %v727, %v510
        %v786 = vmul.f32 %v730, %v510
        %v787 = vmul.f32 %v733, %v510
        %v788 = vmul.f32 %v736, %v510
        %v789 = vmul.f32 %v739, %v510
        %v790 = vmul.f32 %v742, %v510
        %v791 = vmul.f32 %v745, %v510
        %v792 = vmul.f32 %v748, %v510
        %v793 = vmul.f32 %v751, %v510
        %v794 = vmul.f32 %v754, %v510
        %v795 = vmul.f32 %v757, %v510
        %v796 = vmul.f32 %v760, %v510
        %v797 = vmul.f32 %v763, %v510
        %v798 = vmul.f32 %v766, %v510
        %v799 = vadd.f32 %v767, 1e-05
        %v800 = vadd.f32 %v768, 1e-05
        %v801 = vadd.f32 %v769, 1e-05
        %v802 = vadd.f32 %v770, 1e-05
        %v803 = vadd.f32 %v771, 1e-05
        %v804 = vadd.f32 %v772, 1e-05
        %v805 = vadd.f32 %v773, 1e-05
        %v806 = vadd.f32 %v774, 1e-05
        %v807 = vadd.f32 %v775, 1e-05
        %v808 = vadd.f32 %v776, 1e-05
        %v809 = vadd.f32 %v777, 1e-05
        %v810 = vadd.f32 %v778, 1e-05
        %v811 = vadd.f32 %v779, 1e-05
        %v812 = vadd.f32 %v780, 1e-05
        %v813 = vadd.f32 %v781, 1e-05
        %v814 = vadd.f32 %v782, 1e-05
        %v815 = vadd.f32 %v783, 1e-05
        %v816 = vadd.f32 %v784, 1e-05
        %v817 = vadd.f32 %v785, 1e-05
        %v818 = vadd.f32 %v786, 1e-05
        %v819 = vadd.f32 %v787, 1e-05
        %v820 = vadd.f32 %v788, 1e-05
        %v821 = vadd.f32 %v789, 1e-05
        %v822 = vadd.f32 %v790, 1e-05
        %v823 = vadd.f32 %v791, 1e-05
        %v824 = vadd.f32 %v792, 1e-05
        %v825 = vadd.f32 %v793, 1e-05
        %v826 = vadd.f32 %v794, 1e-05
        %v827 = vadd.f32 %v795, 1e-05
        %v828 = vadd.f32 %v796, 1e-05
        %v829 = vadd.f32 %v797, 1e-05
        %v830 = vadd.f32 %v798, 1e-05
        %v831 = vrsqrt.pop %v799
        %v832 = vrsqrt.pop %v800
        %v833 = vrsqrt.pop %v801
        %v834 = vrsqrt.pop %v802
        %v835 = vrsqrt.pop %v803
        %v836 = vrsqrt.pop %v804
        %v837 = vrsqrt.pop %v805
        %v838 = vrsqrt.pop %v806
        %v839 = vrsqrt.pop %v807
        %v840 = vrsqrt.pop %v808
        %v841 = vrsqrt.pop %v809
        %v842 = vrsqrt.pop %v810
        %v843 = vrsqrt.pop %v811
        %v844 = vrsqrt.pop %v812
        %v845 = vrsqrt.pop %v813
        %v846 = vrsqrt.pop %v814
        %v847 = vrsqrt.pop %v815
        %v848 = vrsqrt.pop %v816
        %v849 = vrsqrt.pop %v817
        %v850 = vrsqrt.pop %v818
        %v851 = vrsqrt.pop %v819
        %v852 = vrsqrt.pop %v820
        %v853 = vrsqrt.pop %v821
        %v854 = vrsqrt.pop %v822
        %v855 = vrsqrt.pop %v823
        %v856 = vrsqrt.pop %v824
        %v857 = vrsqrt.pop %v825
        %v858 = vrsqrt.pop %v826
        %v859 = vrsqrt.pop %v827
        %v860 = vrsqrt.pop %v828
        %v861 = vrsqrt.pop %v829
        %v862 = vrsqrt.pop %v830
        %v863 = vmul.f32 %v543, %v831
        %v864 = vmul.f32 %v544, %v831
        %v865 = vmul.f32 %v545, %v832
        %v866 = vmul.f32 %v546, %v832
        %v867 = vmul.f32 %v547, %v833
        %v868 = vmul.f32 %v548, %v833
        %v869 = vmul.f32 %v549, %v834
        %v870 = vmul.f32 %v550, %v834
        %v871 = vmul.f32 %v551, %v835
        %v872 = vmul.f32 %v552, %v835
        %v873 = vmul.f32 %v553, %v836
        %v874 = vmul.f32 %v554, %v836
        %v875 = vmul.f32 %v555, %v837
        %v876 = vmul.f32 %v556, %v837
        %v877 = vmul.f32 %v557, %v838
        %v878 = vmul.f32 %v558, %v838
        %v879 = vmul.f32 %v559, %v839
        %v880 = vmul.f32 %v560, %v839
        %v881 = vmul.f32 %v561, %v840
        %v882 = vmul.f32 %v562, %v840
        %v883 = vmul.f32 %v563, %v841
        %v884 = vmul.f32 %v564, %v841
        %v885 = vmul.f32 %v565, %v842
        %v886 = vmul.f32 %v566, %v842
        %v887 = vmul.f32 %v567, %v843
        %v888 = vmul.f32 %v568, %v843
        %v889 = vmul.f32 %v569, %v844
        %v890 = vmul.f32 %v570, %v844
        %v891 = vmul.f32 %v571, %v845
        %v892 = vmul.f32 %v572, %v845
        %v893 = vmul.f32 %v573, %v846
        %v894 = vmul.f32 %v574, %v846
        %v895 = vmul.f32 %v575, %v847
        %v896 = vmul.f32 %v576, %v847
        %v897 = vmul.f32 %v577, %v848
        %v898 = vmul.f32 %v578, %v848
        %v899 = vmul.f32 %v579, %v849
        %v900 = vmul.f32 %v580, %v849
        %v901 = vmul.f32 %v581, %v850
        %v902 = vmul.f32 %v582, %v850
        %v903 = vmul.f32 %v583, %v851
        %v904 = vmul.f32 %v584, %v851
        %v905 = vmul.f32 %v585, %v852
        %v906 = vmul.f32 %v586, %v852
        %v907 = vmul.f32 %v587, %v853
        %v908 = vmul.f32 %v588, %v853
        %v909 = vmul.f32 %v589, %v854
        %v910 = vmul.f32 %v590, %v854
        %v911 = vmul.f32 %v591, %v855
        %v912 = vmul.f32 %v592, %v855
        %v913 = vmul.f32 %v593, %v856
        %v914 = vmul.f32 %v594, %v856
        %v915 = vmul.f32 %v595, %v857
        %v916 = vmul.f32 %v596, %v857
        %v917 = vmul.f32 %v597, %v858
        %v918 = vmul.f32 %v598, %v858
        %v919 = vmul.f32 %v599, %v859
        %v920 = vmul.f32 %v600, %v859
        %v921 = vmul.f32 %v601, %v860
        %v922 = vmul.f32 %v602, %v860
        %v923 = vmul.f32 %v603, %v861
        %v924 = vmul.f32 %v604, %v861
        %v925 = vmul.f32 %v605, %v862
        %v926 = vmul.f32 %v606, %v862
        %v928 = vlaneseq
        %v929 = vshrl.u32 %v928, 7
        %v930 = vsub.s32 0, %v929
        %v931 = vrot.slane %v395, %v930
        %v932 = vlaneseq
        %v933 = vshrl.u32 %v932, 7
        %v934 = vsub.s32 1, %v933
        %v935 = vrot.slane %v395, %v934
        %v938 = vmul.f32 %v863, %v931
        %v939 = vmul.f32 %v864, %v935
        %v940 = vmul.f32 %v865, %v931
        %v941 = vmul.f32 %v866, %v935
        %v942 = vmul.f32 %v867, %v931
        %v943 = vmul.f32 %v868, %v935
        %v944 = vmul.f32 %v869, %v931
        %v945 = vmul.f32 %v870, %v935
        %v946 = vmul.f32 %v871, %v931
        %v947 = vmul.f32 %v872, %v935
        %v948 = vmul.f32 %v873, %v931
        %v949 = vmul.f32 %v874, %v935
        %v950 = vmul.f32 %v875, %v931
        %v951 = vmul.f32 %v876, %v935
        %v952 = vmul.f32 %v877, %v931
        %v953 = vmul.f32 %v878, %v935
        %v954 = vmul.f32 %v879, %v931
        %v955 = vmul.f32 %v880, %v935
        %v956 = vmul.f32 %v881, %v931
        %v957 = vmul.f32 %v882, %v935
        %v958 = vmul.f32 %v883, %v931
        %v959 = vmul.f32 %v884, %v935
        %v960 = vmul.f32 %v885, %v931
        %v961 = vmul.f32 %v886, %v935
        %v962 = vmul.f32 %v887, %v931
        %v963 = vmul.f32 %v888, %v935
        %v964 = vmul.f32 %v889, %v931
        %v965 = vmul.f32 %v890, %v935
        %v966 = vmul.f32 %v891, %v931
        %v967 = vmul.f32 %v892, %v935
        %v968 = vmul.f32 %v893, %v931
        %v969 = vmul.f32 %v894, %v935
        %v970 = vmul.f32 %v895, %v931
        %v971 = vmul.f32 %v896, %v935
        %v972 = vmul.f32 %v897, %v931
        %v973 = vmul.f32 %v898, %v935
        %v974 = vmul.f32 %v899, %v931
        %v975 = vmul.f32 %v900, %v935
        %v976 = vmul.f32 %v901, %v931
        %v977 = vmul.f32 %v902, %v935
        %v978 = vmul.f32 %v903, %v931
        %v979 = vmul.f32 %v904, %v935
        %v980 = vmul.f32 %v905, %v931
        %v981 = vmul.f32 %v906, %v935
        %v982 = vmul.f32 %v907, %v931
        %v983 = vmul.f32 %v908, %v935
        %v984 = vmul.f32 %v909, %v931
        %v985 = vmul.f32 %v910, %v935
        %v986 = vmul.f32 %v911, %v931
        %v987 = vmul.f32 %v912, %v935
        %v988 = vmul.f32 %v913, %v931
        %v989 = vmul.f32 %v914, %v935
        %v990 = vmul.f32 %v915, %v931
        %v991 = vmul.f32 %v916, %v935
        %v992 = vmul.f32 %v917, %v931
        %v993 = vmul.f32 %v918, %v935
        %v994 = vmul.f32 %v919, %v931
        %v995 = vmul.f32 %v920, %v935
        %v996 = vmul.f32 %v921, %v931
        %v997 = vmul.f32 %v922, %v935
        %v998 = vmul.f32 %v923, %v931
        %v999 = vmul.f32 %v924, %v935
        %v1000 = vmul.f32 %v925, %v931
        %v1001 = vmul.f32 %v926, %v935
        %v1003 = vlaneseq
        %v1004 = vshrl.u32 %v1003, 7
        %v1005 = vsub.s32 0, %v1004
        %v1006 = vrot.slane %v397, %v1005
        %v1007 = vlaneseq
        %v1008 = vshrl.u32 %v1007, 7
        %v1009 = vsub.s32 1, %v1008
        %v1010 = vrot.slane %v397, %v1009
        %v1013 = vadd.f32 %v938, %v1006
        %v1014 = vadd.f32 %v939, %v1010
        %v1015 = vadd.f32 %v940, %v1006
        %v1016 = vadd.f32 %v941, %v1010
        %v1017 = vadd.f32 %v942, %v1006
        %v1018 = vadd.f32 %v943, %v1010
        %v1019 = vadd.f32 %v944, %v1006
        %v1020 = vadd.f32 %v945, %v1010
        %v1021 = vadd.f32 %v946, %v1006
        %v1022 = vadd.f32 %v947, %v1010
        %v1023 = vadd.f32 %v948, %v1006
        %v1024 = vadd.f32 %v949, %v1010
        %v1025 = vadd.f32 %v950, %v1006
        %v1026 = vadd.f32 %v951, %v1010
        %v1027 = vadd.f32 %v952, %v1006
        %v1028 = vadd.f32 %v953, %v1010
        %v1029 = vadd.f32 %v954, %v1006
        %v1030 = vadd.f32 %v955, %v1010
        %v1031 = vadd.f32 %v956, %v1006
        %v1032 = vadd.f32 %v957, %v1010
        %v1033 = vadd.f32 %v958, %v1006
        %v1034 = vadd.f32 %v959, %v1010
        %v1035 = vadd.f32 %v960, %v1006
        %v1036 = vadd.f32 %v961, %v1010
        %v1037 = vadd.f32 %v962, %v1006
        %v1038 = vadd.f32 %v963, %v1010
        %v1039 = vadd.f32 %v964, %v1006
        %v1040 = vadd.f32 %v965, %v1010
        %v1041 = vadd.f32 %v966, %v1006
        %v1042 = vadd.f32 %v967, %v1010
        %v1043 = vadd.f32 %v968, %v1006
        %v1044 = vadd.f32 %v969, %v1010
        %v1045 = vadd.f32 %v970, %v1006
        %v1046 = vadd.f32 %v971, %v1010
        %v1047 = vadd.f32 %v972, %v1006
        %v1048 = vadd.f32 %v973, %v1010
        %v1049 = vadd.f32 %v974, %v1006
        %v1050 = vadd.f32 %v975, %v1010
        %v1051 = vadd.f32 %v976, %v1006
        %v1052 = vadd.f32 %v977, %v1010
        %v1053 = vadd.f32 %v978, %v1006
        %v1054 = vadd.f32 %v979, %v1010
        %v1055 = vadd.f32 %v980, %v1006
        %v1056 = vadd.f32 %v981, %v1010
        %v1057 = vadd.f32 %v982, %v1006
        %v1058 = vadd.f32 %v983, %v1010
        %v1059 = vadd.f32 %v984, %v1006
        %v1060 = vadd.f32 %v985, %v1010
        %v1061 = vadd.f32 %v986, %v1006
        %v1062 = vadd.f32 %v987, %v1010
        %v1063 = vadd.f32 %v988, %v1006
        %v1064 = vadd.f32 %v989, %v1010
        %v1065 = vadd.f32 %v990, %v1006
        %v1066 = vadd.f32 %v991, %v1010
        %v1067 = vadd.f32 %v992, %v1006
        %v1068 = vadd.f32 %v993, %v1010
        %v1069 = vadd.f32 %v994, %v1006
        %v1070 = vadd.f32 %v995, %v1010
        %v1071 = vadd.f32 %v996, %v1006
        %v1072 = vadd.f32 %v997, %v1010
        %v1073 = vadd.f32 %v998, %v1006
        %v1074 = vadd.f32 %v999, %v1010
        %v1075 = vadd.f32 %v1000, %v1006
        %v1076 = vadd.f32 %v1001, %v1010
        %v1077 = vld [vmem:[#allocation5] sm:$0xff]
        %v1078 = vld [vmem:[#allocation5 + $0x8] sm:$0xff]
        %v1079 = vld [vmem:[#allocation5 + $0x10] sm:$0xff]
        %v1080 = vld [vmem:[#allocation5 + $0x18] sm:$0xff]
        %v1081 = vld [vmem:[#allocation5 + $0x20] sm:$0xff]
        %v1082 = vld [vmem:[#allocation5 + $0x28] sm:$0xff]
        %v1083 = vld [vmem:[#allocation5 + $0x30] sm:$0xff]
        %v1084 = vld [vmem:[#allocation5 + $0x38] sm:$0xff]
        %v1085 = vld [vmem:[#allocation5 + $0x40] sm:$0xff]
        %v1086 = vld [vmem:[#allocation5 + $0x48] sm:$0xff]
        %v1087 = vld [vmem:[#allocation5 + $0x50] sm:$0xff]
        %v1088 = vld [vmem:[#allocation5 + $0x58] sm:$0xff]
        %v1089 = vld [vmem:[#allocation5 + $0x60] sm:$0xff]
        %v1090 = vld [vmem:[#allocation5 + $0x68] sm:$0xff]
        %v1091 = vld [vmem:[#allocation5 + $0x70] sm:$0xff]
        %v1092 = vld [vmem:[#allocation5 + $0x78] sm:$0xff]
        %v1093 = vld [vmem:[#allocation5 + $0x80] sm:$0xff]
        %v1094 = vld [vmem:[#allocation5 + $0x88] sm:$0xff]
        %v1095 = vld [vmem:[#allocation5 + $0x90] sm:$0xff]
        %v1096 = vld [vmem:[#allocation5 + $0x98] sm:$0xff]
        %v1097 = vld [vmem:[#allocation5 + $0xa0] sm:$0xff]
        %v1098 = vld [vmem:[#allocation5 + $0xa8] sm:$0xff]
        %v1099 = vld [vmem:[#allocation5 + $0xb0] sm:$0xff]
        %v1100 = vld [vmem:[#allocation5 + $0xb8] sm:$0xff]
        %v1101 = vld [vmem:[#allocation5 + $0xc0] sm:$0xff]
        %v1102 = vld [vmem:[#allocation5 + $0xc8] sm:$0xff]
        %v1103 = vld [vmem:[#allocation5 + $0xd0] sm:$0xff]
        %v1104 = vld [vmem:[#allocation5 + $0xd8] sm:$0xff]
        %v1105 = vld [vmem:[#allocation5 + $0xe0] sm:$0xff]
        %v1106 = vld [vmem:[#allocation5 + $0xe8] sm:$0xff]
        %v1107 = vld [vmem:[#allocation5 + $0xf0] sm:$0xff]
        %v1108 = vld [vmem:[#allocation5 + $0xf8] sm:$0xff]
        %v1109 = vld [vmem:[#allocation5 + $0x100] sm:$0xff]
        %v1110 = vld [vmem:[#allocation5 + $0x108] sm:$0xff]
        %v1111 = vld [vmem:[#allocation5 + $0x110] sm:$0xff]
        %v1112 = vld [vmem:[#allocation5 + $0x118] sm:$0xff]
        %v1113 = vld [vmem:[#allocation5 + $0x120] sm:$0xff]
        %v1114 = vld [vmem:[#allocation5 + $0x128] sm:$0xff]
        %v1115 = vld [vmem:[#allocation5 + $0x130] sm:$0xff]
        %v1116 = vld [vmem:[#allocation5 + $0x138] sm:$0xff]
        %v1117 = vld [vmem:[#allocation5 + $0x140] sm:$0xff]
        %v1118 = vld [vmem:[#allocation5 + $0x148] sm:$0xff]
        %v1119 = vld [vmem:[#allocation5 + $0x150] sm:$0xff]
        %v1120 = vld [vmem:[#allocation5 + $0x158] sm:$0xff]
        %v1121 = vld [vmem:[#allocation5 + $0x160] sm:$0xff]
        %v1122 = vld [vmem:[#allocation5 + $0x168] sm:$0xff]
        %v1123 = vld [vmem:[#allocation5 + $0x170] sm:$0xff]
        %v1124 = vld [vmem:[#allocation5 + $0x178] sm:$0xff]
        %v1125 = vld [vmem:[#allocation5 + $0x180] sm:$0xff]
        %v1126 = vld [vmem:[#allocation5 + $0x188] sm:$0xff]
        %v1127 = vld [vmem:[#allocation5 + $0x190] sm:$0xff]
        %v1128 = vld [vmem:[#allocation5 + $0x198] sm:$0xff]
        %v1129 = vld [vmem:[#allocation5 + $0x1a0] sm:$0xff]
        %v1130 = vld [vmem:[#allocation5 + $0x1a8] sm:$0xff]
        %v1131 = vld [vmem:[#allocation5 + $0x1b0] sm:$0xff]
        %v1132 = vld [vmem:[#allocation5 + $0x1b8] sm:$0xff]
        %v1133 = vld [vmem:[#allocation5 + $0x1c0] sm:$0xff]
        %v1134 = vld [vmem:[#allocation5 + $0x1c8] sm:$0xff]
        %v1135 = vld [vmem:[#allocation5 + $0x1d0] sm:$0xff]
        %v1136 = vld [vmem:[#allocation5 + $0x1d8] sm:$0xff]
        %v1137 = vld [vmem:[#allocation5 + $0x1e0] sm:$0xff]
        %v1138 = vld [vmem:[#allocation5 + $0x1e8] sm:$0xff]
        %v1139 = vld [vmem:[#allocation5 + $0x1f0] sm:$0xff]
        %v1140 = vld [vmem:[#allocation5 + $0x1f8] sm:$0xff]
        %v1141 = vld [vmem:[#allocation5 + $0x200] sm:$0xff]
        %v1142 = vld [vmem:[#allocation5 + $0x208] sm:$0xff]
        %v1143 = vld [vmem:[#allocation5 + $0x210] sm:$0xff]
        %v1144 = vld [vmem:[#allocation5 + $0x218] sm:$0xff]
        %v1145 = vld [vmem:[#allocation5 + $0x220] sm:$0xff]
        %v1146 = vld [vmem:[#allocation5 + $0x228] sm:$0xff]
        %v1147 = vld [vmem:[#allocation5 + $0x230] sm:$0xff]
        %v1148 = vld [vmem:[#allocation5 + $0x238] sm:$0xff]
        %v1149 = vld [vmem:[#allocation5 + $0x240] sm:$0xff]
        %v1150 = vld [vmem:[#allocation5 + $0x248] sm:$0xff]
        %v1151 = vld [vmem:[#allocation5 + $0x250] sm:$0xff]
        %v1152 = vld [vmem:[#allocation5 + $0x258] sm:$0xff]
        %v1153 = vld [vmem:[#allocation5 + $0x260] sm:$0xff]
        %v1154 = vld [vmem:[#allocation5 + $0x268] sm:$0xff]
        %v1155 = vld [vmem:[#allocation5 + $0x270] sm:$0xff]
        %v1156 = vld [vmem:[#allocation5 + $0x278] sm:$0xff]
        %v1157 = vld [vmem:[#allocation5 + $0x280] sm:$0xff]
        %v1158 = vld [vmem:[#allocation5 + $0x288] sm:$0xff]
        %v1159 = vld [vmem:[#allocation5 + $0x290] sm:$0xff]
        %v1160 = vld [vmem:[#allocation5 + $0x298] sm:$0xff]
        %v1161 = vld [vmem:[#allocation5 + $0x2a0] sm:$0xff]
        %v1162 = vld [vmem:[#allocation5 + $0x2a8] sm:$0xff]
        %v1163 = vld [vmem:[#allocation5 + $0x2b0] sm:$0xff]
        %v1164 = vld [vmem:[#allocation5 + $0x2b8] sm:$0xff]
        %v1165 = vld [vmem:[#allocation5 + $0x2c0] sm:$0xff]
        %v1166 = vld [vmem:[#allocation5 + $0x2c8] sm:$0xff]
        %v1167 = vld [vmem:[#allocation5 + $0x2d0] sm:$0xff]
        %v1168 = vld [vmem:[#allocation5 + $0x2d8] sm:$0xff]
        %v1169 = vld [vmem:[#allocation5 + $0x2e0] sm:$0xff]
        %v1170 = vld [vmem:[#allocation5 + $0x2e8] sm:$0xff]
        %v1171 = vld [vmem:[#allocation5 + $0x2f0] sm:$0xff]
        %v1172 = vld [vmem:[#allocation5 + $0x2f8] sm:$0xff]
        %v1173 = vld [vmem:[#allocation5 + $0x300] sm:$0xff]
        %v1174 = vld [vmem:[#allocation5 + $0x308] sm:$0xff]
        %v1175 = vld [vmem:[#allocation5 + $0x310] sm:$0xff]
        %v1176 = vld [vmem:[#allocation5 + $0x318] sm:$0xff]
        %v1177 = vld [vmem:[#allocation5 + $0x320] sm:$0xff]
        %v1178 = vld [vmem:[#allocation5 + $0x328] sm:$0xff]
        %v1179 = vld [vmem:[#allocation5 + $0x330] sm:$0xff]
        %v1180 = vld [vmem:[#allocation5 + $0x338] sm:$0xff]
        %v1181 = vld [vmem:[#allocation5 + $0x340] sm:$0xff]
        %v1182 = vld [vmem:[#allocation5 + $0x348] sm:$0xff]
        %v1183 = vld [vmem:[#allocation5 + $0x350] sm:$0xff]
        %v1184 = vld [vmem:[#allocation5 + $0x358] sm:$0xff]
        %v1185 = vld [vmem:[#allocation5 + $0x360] sm:$0xff]
        %v1186 = vld [vmem:[#allocation5 + $0x368] sm:$0xff]
        %v1187 = vld [vmem:[#allocation5 + $0x370] sm:$0xff]
        %v1188 = vld [vmem:[#allocation5 + $0x378] sm:$0xff]
        %v1189 = vld [vmem:[#allocation5 + $0x380] sm:$0xff]
        %v1190 = vld [vmem:[#allocation5 + $0x388] sm:$0xff]
        %v1191 = vld [vmem:[#allocation5 + $0x390] sm:$0xff]
        %v1192 = vld [vmem:[#allocation5 + $0x398] sm:$0xff]
        %v1193 = vld [vmem:[#allocation5 + $0x3a0] sm:$0xff]
        %v1194 = vld [vmem:[#allocation5 + $0x3a8] sm:$0xff]
        %v1195 = vld [vmem:[#allocation5 + $0x3b0] sm:$0xff]
        %v1196 = vld [vmem:[#allocation5 + $0x3b8] sm:$0xff]
        %v1197 = vld [vmem:[#allocation5 + $0x3c0] sm:$0xff]
        %v1198 = vld [vmem:[#allocation5 + $0x3c8] sm:$0xff]
        %v1199 = vld [vmem:[#allocation5 + $0x3d0] sm:$0xff]
        %v1200 = vld [vmem:[#allocation5 + $0x3d8] sm:$0xff]
        %v1201 = vld [vmem:[#allocation5 + $0x3e0] sm:$0xff]
        %v1202 = vld [vmem:[#allocation5 + $0x3e8] sm:$0xff]
        %v1203 = vld [vmem:[#allocation5 + $0x3f0] sm:$0xff]
        %v1204 = vld [vmem:[#allocation5 + $0x3f8] sm:$0xff]
        %v1205 = vld [vmem:[#allocation5 + $0x400] sm:$0xff]
        %v1206 = vld [vmem:[#allocation5 + $0x408] sm:$0xff]
        %v1207 = vld [vmem:[#allocation5 + $0x410] sm:$0xff]
        %v1208 = vld [vmem:[#allocation5 + $0x418] sm:$0xff]
        %v1209 = vld [vmem:[#allocation5 + $0x420] sm:$0xff]
        %v1210 = vld [vmem:[#allocation5 + $0x428] sm:$0xff]
        %v1211 = vld [vmem:[#allocation5 + $0x430] sm:$0xff]
        %v1212 = vld [vmem:[#allocation5 + $0x438] sm:$0xff]
        %v1213 = vld [vmem:[#allocation5 + $0x440] sm:$0xff]
        %v1214 = vld [vmem:[#allocation5 + $0x448] sm:$0xff]
        %v1215 = vld [vmem:[#allocation5 + $0x450] sm:$0xff]
        %v1216 = vld [vmem:[#allocation5 + $0x458] sm:$0xff]
        %v1217 = vld [vmem:[#allocation5 + $0x460] sm:$0xff]
        %v1218 = vld [vmem:[#allocation5 + $0x468] sm:$0xff]
        %v1219 = vld [vmem:[#allocation5 + $0x470] sm:$0xff]
        %v1220 = vld [vmem:[#allocation5 + $0x478] sm:$0xff]
        %v1221 = vld [vmem:[#allocation5 + $0x480] sm:$0xff]
        %v1222 = vld [vmem:[#allocation5 + $0x488] sm:$0xff]
        %v1223 = vld [vmem:[#allocation5 + $0x490] sm:$0xff]
        %v1224 = vld [vmem:[#allocation5 + $0x498] sm:$0xff]
        %v1225 = vld [vmem:[#allocation5 + $0x4a0] sm:$0xff]
        %v1226 = vld [vmem:[#allocation5 + $0x4a8] sm:$0xff]
        %v1227 = vld [vmem:[#allocation5 + $0x4b0] sm:$0xff]
        %v1228 = vld [vmem:[#allocation5 + $0x4b8] sm:$0xff]
        %v1229 = vld [vmem:[#allocation5 + $0x4c0] sm:$0xff]
        %v1230 = vld [vmem:[#allocation5 + $0x4c8] sm:$0xff]
        %v1231 = vld [vmem:[#allocation5 + $0x4d0] sm:$0xff]
        %v1232 = vld [vmem:[#allocation5 + $0x4d8] sm:$0xff]
        %v1233 = vld [vmem:[#allocation5 + $0x4e0] sm:$0xff]
        %v1234 = vld [vmem:[#allocation5 + $0x4e8] sm:$0xff]
        %v1235 = vld [vmem:[#allocation5 + $0x4f0] sm:$0xff]
        %v1236 = vld [vmem:[#allocation5 + $0x4f8] sm:$0xff]
        %v1237 = vld [vmem:[#allocation5 + $0x500] sm:$0xff]
        %v1238 = vld [vmem:[#allocation5 + $0x508] sm:$0xff]
        %v1239 = vld [vmem:[#allocation5 + $0x510] sm:$0xff]
        %v1240 = vld [vmem:[#allocation5 + $0x518] sm:$0xff]
        %v1241 = vld [vmem:[#allocation5 + $0x520] sm:$0xff]
        %v1242 = vld [vmem:[#allocation5 + $0x528] sm:$0xff]
        %v1243 = vld [vmem:[#allocation5 + $0x530] sm:$0xff]
        %v1244 = vld [vmem:[#allocation5 + $0x538] sm:$0xff]
        %v1245 = vld [vmem:[#allocation5 + $0x540] sm:$0xff]
        %v1246 = vld [vmem:[#allocation5 + $0x548] sm:$0xff]
        %v1247 = vld [vmem:[#allocation5 + $0x550] sm:$0xff]
        %v1248 = vld [vmem:[#allocation5 + $0x558] sm:$0xff]
        %v1249 = vld [vmem:[#allocation5 + $0x560] sm:$0xff]
        %v1250 = vld [vmem:[#allocation5 + $0x568] sm:$0xff]
        %v1251 = vld [vmem:[#allocation5 + $0x570] sm:$0xff]
        %v1252 = vld [vmem:[#allocation5 + $0x578] sm:$0xff]
        %v1253 = vld [vmem:[#allocation5 + $0x580] sm:$0xff]
        %v1254 = vld [vmem:[#allocation5 + $0x588] sm:$0xff]
        %v1255 = vld [vmem:[#allocation5 + $0x590] sm:$0xff]
        %v1256 = vld [vmem:[#allocation5 + $0x598] sm:$0xff]
        %v1257 = vld [vmem:[#allocation5 + $0x5a0] sm:$0xff]
        %v1258 = vld [vmem:[#allocation5 + $0x5a8] sm:$0xff]
        %v1259 = vld [vmem:[#allocation5 + $0x5b0] sm:$0xff]
        %v1260 = vld [vmem:[#allocation5 + $0x5b8] sm:$0xff]
        %v1261 = vld [vmem:[#allocation5 + $0x5c0] sm:$0xff]
        %v1262 = vld [vmem:[#allocation5 + $0x5c8] sm:$0xff]
        %v1263 = vld [vmem:[#allocation5 + $0x5d0] sm:$0xff]
        %v1264 = vld [vmem:[#allocation5 + $0x5d8] sm:$0xff]
        %v1265 = vld [vmem:[#allocation5 + $0x5e0] sm:$0xff]
        %v1266 = vld [vmem:[#allocation5 + $0x5e8] sm:$0xff]
        %v1267 = vld [vmem:[#allocation5 + $0x5f0] sm:$0xff]
        %v1268 = vld [vmem:[#allocation5 + $0x5f8] sm:$0xff]
        %v1270 = vlaneseq
        %v1271 = vshrl.u32 %v1270, 7
        %v1272 = vsub.s32 0, %v1271
        %v1273 = vrot.slane %v409, %v1272
        %v1274 = vlaneseq
        %v1275 = vshrl.u32 %v1274, 7
        %v1276 = vsub.s32 1, %v1275
        %v1277 = vrot.slane %v409, %v1276
        %v1278 = vlaneseq
        %v1279 = vshrl.u32 %v1278, 7
        %v1280 = vsub.s32 2, %v1279
        %v1281 = vrot.slane %v409, %v1280
        %v1282 = vlaneseq
        %v1283 = vshrl.u32 %v1282, 7
        %v1284 = vsub.s32 3, %v1283
        %v1285 = vrot.slane %v409, %v1284
        %v1286 = vlaneseq
        %v1287 = vshrl.u32 %v1286, 7
        %v1288 = vsub.s32 4, %v1287
        %v1289 = vrot.slane %v409, %v1288
        %v1290 = vlaneseq
        %v1291 = vshrl.u32 %v1290, 7
        %v1292 = vsub.s32 5, %v1291
        %v1293 = vrot.slane %v409, %v1292
        %1300 = vmatprep.subr.mxu0 %v1078
        %1301 = vmatpush1.msra.mxu0 %v1077
        %1302 = vmatprep.subr.mxu0 %v1084
        %1303 = vmatpush1.msra.mxu0 %v1083
        %1304 = vmatprep.subr.mxu0 %v1090
        %1305 = vmatpush1.msra.mxu0 %v1089
        %1306 = vmatprep.subr.mxu0 %v1096
        %1307 = vmatpush1.msra.mxu0 %v1095
        %1308 = vmatprep.subr.mxu0 %v1102
        %1309 = vmatpush1.msra.mxu0 %v1101
        %1310 = vmatprep.subr.mxu0 %v1108
        %1311 = vmatpush1.msra.mxu0 %v1107
        %1312 = vmatprep.subr.mxu0 %v1114
        %1313 = vmatpush1.msra.mxu0 %v1113
        %1314 = vmatprep.subr.mxu0 %v1120
        %1315 = vmatpush1.msra.mxu0 %v1119
        %1316 = vmatprep.subr.mxu0 %v1126
        %1317 = vmatpush1.msra.mxu0 %v1125
        %1318 = vmatprep.subr.mxu0 %v1132
        %1319 = vmatpush1.msra.mxu0 %v1131
        %1320 = vmatprep.subr.mxu0 %v1138
        %1321 = vmatpush1.msra.mxu0 %v1137
        %1322 = vmatprep.subr.mxu0 %v1144
        %1323 = vmatpush1.msra.mxu0 %v1143
        %1324 = vmatprep.subr.mxu0 %v1150
        %1325 = vmatpush1.msra.mxu0 %v1149
        %1326 = vmatprep.subr.mxu0 %v1156
        %1327 = vmatpush1.msra.mxu0 %v1155
        %1328 = vmatprep.subr.mxu0 %v1162
        %1329 = vmatpush1.msra.mxu0 %v1161
        %1330 = vmatprep.subr.mxu0 %v1168
        %1331 = vmatpush1.msra.mxu0 %v1167
        %1332 = vmatprep.subr.mxu0 %v1174
        %1333 = vmatpush1.msra.mxu0 %v1173
        %1334 = vmatprep.subr.mxu0 %v1180
        %1335 = vmatpush1.msra.mxu0 %v1179
        %1336 = vmatprep.subr.mxu0 %v1186
        %1337 = vmatpush1.msra.mxu0 %v1185
        %1338 = vmatprep.subr.mxu0 %v1192
        %1339 = vmatpush1.msra.mxu0 %v1191
        %1340 = vmatprep.subr.mxu0 %v1198
        %1341 = vmatpush1.msra.mxu0 %v1197
        %1342 = vmatprep.subr.mxu0 %v1204
        %1343 = vmatpush1.msra.mxu0 %v1203
        %1344 = vmatprep.subr.mxu0 %v1210
        %1345 = vmatpush1.msra.mxu0 %v1209
        %1346 = vmatprep.subr.mxu0 %v1216
        %1347 = vmatpush1.msra.mxu0 %v1215
        %1348 = vmatprep.subr.mxu0 %v1222
        %1349 = vmatpush1.msra.mxu0 %v1221
        %1350 = vmatprep.subr.mxu0 %v1228
        %1351 = vmatpush1.msra.mxu0 %v1227
        %1352 = vmatprep.subr.mxu0 %v1234
        %1353 = vmatpush1.msra.mxu0 %v1233
        %1354 = vmatprep.subr.mxu0 %v1240
        %1355 = vmatpush1.msra.mxu0 %v1239
        %1356 = vmatprep.subr.mxu0 %v1246
        %1357 = vmatpush1.msra.mxu0 %v1245
        %1358 = vmatprep.subr.mxu0 %v1252
        %1359 = vmatpush1.msra.mxu0 %v1251
        %1360 = vmatprep.subr.mxu0 %v1258
        %1361 = vmatpush1.msra.mxu0 %v1257
        %1362 = vmatprep.subr.mxu0 %v1264
        %1363 = vmatpush1.msra.mxu0 %v1263
        %1364 = vmatprep.mubr.f32.mxu0 %v1014
        %1365 = vmatmul.mubr.f32.gmra.mrb[0].mxu0 %v1013
        %v1366 = vpop.f32.mrb[0].mxu0
        %v1367 = vadd.f32 %v1273, %v1366
        %v1368 = vpop.f32.mrb[0].mxu0
        %v1369 = vadd.f32 %v1277, %v1368
        %1370 = vmatprep.mubr.f32.mxu0 %v1016
        %1371 = vmatmul.mubr.f32.gmra.mrb[0].mxu0 %v1015
        %v1372 = vpop.f32.mrb[0].mxu0
        %v1373 = vadd.f32 %v1273, %v1372
        %v1374 = vpop.f32.mrb[0].mxu0
        %v1375 = vadd.f32 %v1277, %v1374
        %1376 = vmatprep.mubr.f32.mxu0 %v1018
        %1377 = vmatmul.mubr.f32.gmra.mrb[0].mxu0 %v1017
        %v1378 = vpop.f32.mrb[0].mxu0
        %v1379 = vadd.f32 %v1273, %v1378
        %v1380 = vpop.f32.mrb[0].mxu0
        %v1381 = vadd.f32 %v1277, %v1380
        %1382 = vmatprep.mubr.f32.mxu0 %v1020
        %1383 = vmatmul.mubr.f32.gmra.mrb[0].mxu0 %v1019
        %v1384 = vpop.f32.mrb[0].mxu0
        %v1385 = vadd.f32 %v1273, %v1384
        %v1386 = vpop.f32.mrb[0].mxu0
        %v1387 = vadd.f32 %v1277, %v1386
        %1388 = vmatprep.mubr.f32.mxu0 %v1022
        %1389 = vmatmul.mubr.f32.gmra.mrb[0].mxu0 %v1021
        %v1390 = vpop.f32.mrb[0].mxu0
        %v1391 = vadd.f32 %v1273, %v1390
        %v1392 = vpop.f32.mrb[0].mxu0
        %v1393 = vadd.f32 %v1277, %v1392
        %1394 = vmatprep.mubr.f32.mxu0 %v1024
        %1395 = vmatmul.mubr.f32.gmra.mrb[0].mxu0 %v1023
        %v1396 = vpop.f32.mrb[0].mxu0
        %v1397 = vadd.f32 %v1273, %v1396
        %v1398 = vpop.f32.mrb[0].mxu0
        %v1399 = vadd.f32 %v1277, %v1398
        %1400 = vmatprep.mubr.f32.mxu0 %v1026
        %1401 = vmatmul.mubr.f32.gmra.mrb[0].mxu0 %v1025
        %v1402 = vpop.f32.mrb[0].mxu0
        %v1403 = vadd.f32 %v1273, %v1402
        %v1404 = vpop.f32.mrb[0].mxu0
        %v1405 = vadd.f32 %v1277, %v1404
        %1406 = vmatprep.mubr.f32.mxu0 %v1028
        %1407 = vmatmul.mubr.f32.gmra.mrb[0].mxu0 %v1027
        %v1408 = vpop.f32.mrb[0].mxu0
        %v1409 = vadd.f32 %v1273, %v1408
        %v1410 = vpop.f32.mrb[0].mxu0
        %v1411 = vadd.f32 %v1277, %v1410
        %1412 = vmatprep.mubr.f32.mxu0 %v1030
        %1413 = vmatmul.mubr.f32.gmra.mrb[0].mxu0 %v1029
        %v1414 = vpop.f32.mrb[0].mxu0
        %v1415 = vadd.f32 %v1273, %v1414
        %v1416 = vpop.f32.mrb[0].mxu0
        %v1417 = vadd.f32 %v1277, %v1416
        %1418 = vmatprep.mubr.f32.mxu0 %v1032
        %1419 = vmatmul.mubr.f32.gmra.mrb[0].mxu0 %v1031
        %v1420 = vpop.f32.mrb[0].mxu0
        %v1421 = vadd.f32 %v1273, %v1420
        %v1422 = vpop.f32.mrb[0].mxu0
        %v1423 = vadd.f32 %v1277, %v1422
        %1424 = vmatprep.mubr.f32.mxu0 %v1034
        %1425 = vmatmul.mubr.f32.gmra.mrb[0].mxu0 %v1033
        %v1426 = vpop.f32.mrb[0].mxu0
        %v1427 = vadd.f32 %v1273, %v1426
        %v1428 = vpop.f32.mrb[0].mxu0
        %v1429 = vadd.f32 %v1277, %v1428
        %1430 = vmatprep.mubr.f32.mxu0 %v1036
        %1431 = vmatmul.mubr.f32.gmra.mrb[0].mxu0 %v1035
        %v1432 = vpop.f32.mrb[0].mxu0
        %v1433 = vadd.f32 %v1273, %v1432
        %v1434 = vpop.f32.mrb[0].mxu0
        %v1435 = vadd.f32 %v1277, %v1434
        %1436 = vmatprep.mubr.f32.mxu0 %v1038
        %1437 = vmatmul.mubr.f32.gmra.mrb[0].mxu0 %v1037
        %v1438 = vpop.f32.mrb[0].mxu0
        %v1439 = vadd.f32 %v1273, %v1438
        %v1440 = vpop.f32.mrb[0].mxu0
        %v1441 = vadd.f32 %v1277, %v1440
        %1442 = vmatprep.mubr.f32.mxu0 %v1040
        %1443 = vmatmul.mubr.f32.gmra.mrb[0].mxu0 %v1039
        %v1444 = vpop.f32.mrb[0].mxu0
        %v1445 = vadd.f32 %v1273, %v1444
        %v1446 = vpop.f32.mrb[0].mxu0
        %v1447 = vadd.f32 %v1277, %v1446
        %1448 = vmatprep.mubr.f32.mxu0 %v1042
        %1449 = vmatmul.mubr.f32.gmra.mrb[0].mxu0 %v1041
        %v1450 = vpop.f32.mrb[0].mxu0
        %v1451 = vadd.f32 %v1273, %v1450
        %v1452 = vpop.f32.mrb[0].mxu0
        %v1453 = vadd.f32 %v1277, %v1452
        %1454 = vmatprep.mubr.f32.mxu0 %v1044
        %1455 = vmatmul.mubr.f32.gmra.mrb[0].mxu0 %v1043
        %v1456 = vpop.f32.mrb[0].mxu0
        %v1457 = vadd.f32 %v1273, %v1456
        %v1458 = vpop.f32.mrb[0].mxu0
        %v1459 = vadd.f32 %v1277, %v1458
        %1460 = vmatprep.mubr.f32.mxu0 %v1046
        %1461 = vmatmul.mubr.f32.gmra.mrb[0].mxu0 %v1045
        %v1462 = vpop.f32.mrb[0].mxu0
        %v1463 = vadd.f32 %v1273, %v1462
        %v1464 = vpop.f32.mrb[0].mxu0
        %v1465 = vadd.f32 %v1277, %v1464
        %1466 = vmatprep.mubr.f32.mxu0 %v1048
        %1467 = vmatmul.mubr.f32.gmra.mrb[0].mxu0 %v1047
        %v1468 = vpop.f32.mrb[0].mxu0
        %v1469 = vadd.f32 %v1273, %v1468
        %v1470 = vpop.f32.mrb[0].mxu0
        %v1471 = vadd.f32 %v1277, %v1470
        %1472 = vmatprep.mubr.f32.mxu0 %v1050
        %1473 = vmatmul.mubr.f32.gmra.mrb[0].mxu0 %v1049
        %v1474 = vpop.f32.mrb[0].mxu0
        %v1475 = vadd.f32 %v1273, %v1474
        %v1476 = vpop.f32.mrb[0].mxu0
        %v1477 = vadd.f32 %v1277, %v1476
        %1478 = vmatprep.mubr.f32.mxu0 %v1052
        %1479 = vmatmul.mubr.f32.gmra.mrb[0].mxu0 %v1051
        %v1480 = vpop.f32.mrb[0].mxu0
        %v1481 = vadd.f32 %v1273, %v1480
        %v1482 = vpop.f32.mrb[0].mxu0
        %v1483 = vadd.f32 %v1277, %v1482
        %1484 = vmatprep.mubr.f32.mxu0 %v1054
        %1485 = vmatmul.mubr.f32.gmra.mrb[0].mxu0 %v1053
        %v1486 = vpop.f32.mrb[0].mxu0
        %v1487 = vadd.f32 %v1273, %v1486
        %v1488 = vpop.f32.mrb[0].mxu0
        %v1489 = vadd.f32 %v1277, %v1488
        %1490 = vmatprep.mubr.f32.mxu0 %v1056
        %1491 = vmatmul.mubr.f32.gmra.mrb[0].mxu0 %v1055
        %v1492 = vpop.f32.mrb[0].mxu0
        %v1493 = vadd.f32 %v1273, %v1492
        %v1494 = vpop.f32.mrb[0].mxu0
        %v1495 = vadd.f32 %v1277, %v1494
        %1496 = vmatprep.mubr.f32.mxu0 %v1058
        %1497 = vmatmul.mubr.f32.gmra.mrb[0].mxu0 %v1057
        %v1498 = vpop.f32.mrb[0].mxu0
        %v1499 = vadd.f32 %v1273, %v1498
        %v1500 = vpop.f32.mrb[0].mxu0
        %v1501 = vadd.f32 %v1277, %v1500
        %1502 = vmatprep.mubr.f32.mxu0 %v1060
        %1503 = vmatmul.mubr.f32.gmra.mrb[0].mxu0 %v1059
        %v1504 = vpop.f32.mrb[0].mxu0
        %v1505 = vadd.f32 %v1273, %v1504
        %v1506 = vpop.f32.mrb[0].mxu0
        %v1507 = vadd.f32 %v1277, %v1506
        %1508 = vmatprep.mubr.f32.mxu0 %v1062
        %1509 = vmatmul.mubr.f32.gmra.mrb[0].mxu0 %v1061
        %v1510 = vpop.f32.mrb[0].mxu0
        %v1511 = vadd.f32 %v1273, %v1510
        %v1512 = vpop.f32.mrb[0].mxu0
        %v1513 = vadd.f32 %v1277, %v1512
        %1514 = vmatprep.mubr.f32.mxu0 %v1064
        %1515 = vmatmul.mubr.f32.gmra.mrb[0].mxu0 %v1063
        %v1516 = vpop.f32.mrb[0].mxu0
        %v1517 = vadd.f32 %v1273, %v1516
        %v1518 = vpop.f32.mrb[0].mxu0
        %v1519 = vadd.f32 %v1277, %v1518
        %1520 = vmatprep.mubr.f32.mxu0 %v1066
        %1521 = vmatmul.mubr.f32.gmra.mrb[0].mxu0 %v1065
        %v1522 = vpop.f32.mrb[0].mxu0
        %v1523 = vadd.f32 %v1273, %v1522
        %v1524 = vpop.f32.mrb[0].mxu0
        %v1525 = vadd.f32 %v1277, %v1524
        %1526 = vmatprep.mubr.f32.mxu0 %v1068
        %1527 = vmatmul.mubr.f32.gmra.mrb[0].mxu0 %v1067
        %v1528 = vpop.f32.mrb[0].mxu0
        %v1529 = vadd.f32 %v1273, %v1528
        %v1530 = vpop.f32.mrb[0].mxu0
        %v1531 = vadd.f32 %v1277, %v1530
        %1532 = vmatprep.mubr.f32.mxu0 %v1070
        %1533 = vmatmul.mubr.f32.gmra.mrb[0].mxu0 %v1069
        %v1534 = vpop.f32.mrb[0].mxu0
        %v1535 = vadd.f32 %v1273, %v1534
        %v1536 = vpop.f32.mrb[0].mxu0
        %v1537 = vadd.f32 %v1277, %v1536
        %1538 = vmatprep.mubr.f32.mxu0 %v1072
        %1539 = vmatmul.mubr.f32.gmra.mrb[0].mxu0 %v1071
        %v1540 = vpop.f32.mrb[0].mxu0
        %v1541 = vadd.f32 %v1273, %v1540
        %v1542 = vpop.f32.mrb[0].mxu0
        %v1543 = vadd.f32 %v1277, %v1542
        %1544 = vmatprep.mubr.f32.mxu0 %v1074
        %1545 = vmatmul.mubr.f32.gmra.mrb[0].mxu0 %v1073
        %v1546 = vpop.f32.mrb[0].mxu0
        %v1547 = vadd.f32 %v1273, %v1546
        %v1548 = vpop.f32.mrb[0].mxu0
        %v1549 = vadd.f32 %v1277, %v1548
        %1550 = vmatprep.mubr.f32.mxu0 %v1076
        %1551 = vmatmul.mubr.f32.gmra.mrb[0].mxu0 %v1075
        %v1552 = vpop.f32.mrb[0].mxu0
        %v1553 = vadd.f32 %v1273, %v1552
        %v1554 = vpop.f32.mrb[0].mxu0
        %v1555 = vadd.f32 %v1277, %v1554
        %1556 = vdwg.mxu0
        %1557 = vmatprep.subr.mxu0 %v1080
        %1558 = vmatpush1.msra.mxu0 %v1079
        %1559 = vmatprep.subr.mxu0 %v1086
        %1560 = vmatpush1.msra.mxu0 %v1085
        %1561 = vmatprep.subr.mxu0 %v1092
        %1562 = vmatpush1.msra.mxu0 %v1091
        %1563 = vmatprep.subr.mxu0 %v1098
        %1564 = vmatpush1.msra.mxu0 %v1097
        %1565 = vmatprep.subr.mxu0 %v1104
        %1566 = vmatpush1.msra.mxu0 %v1103
        %1567 = vmatprep.subr.mxu0 %v1110
        %1568 = vmatpush1.msra.mxu0 %v1109
        %1569 = vmatprep.subr.mxu0 %v1116
        %1570 = vmatpush1.msra.mxu0 %v1115
        %1571 = vmatprep.subr.mxu0 %v1122
        %1572 = vmatpush1.msra.mxu0 %v1121
        %1573 = vmatprep.subr.mxu0 %v1128
        %1574 = vmatpush1.msra.mxu0 %v1127
        %1575 = vmatprep.subr.mxu0 %v1134
        %1576 = vmatpush1.msra.mxu0 %v1133
        %1577 = vmatprep.subr.mxu0 %v1140
        %1578 = vmatpush1.msra.mxu0 %v1139
        %1579 = vmatprep.subr.mxu0 %v1146
        %1580 = vmatpush1.msra.mxu0 %v1145
        %1581 = vmatprep.subr.mxu0 %v1152
        %1582 = vmatpush1.msra.mxu0 %v1151
        %1583 = vmatprep.subr.mxu0 %v1158
        %1584 = vmatpush1.msra.mxu0 %v1157
        %1585 = vmatprep.subr.mxu0 %v1164
        %1586 = vmatpush1.msra.mxu0 %v1163
        %1587 = vmatprep.subr.mxu0 %v1170
        %1588 = vmatpush1.msra.mxu0 %v1169
        %1589 = vmatprep.subr.mxu0 %v1176
        %1590 = vmatpush1.msra.mxu0 %v1175
        %1591 = vmatprep.subr.mxu0 %v1182
        %1592 = vmatpush1.msra.mxu0 %v1181
        %1593 = vmatprep.subr.mxu0 %v1188
        %1594 = vmatpush1.msra.mxu0 %v1187
        %1595 = vmatprep.subr.mxu0 %v1194
        %1596 = vmatpush1.msra.mxu0 %v1193
        %1597 = vmatprep.subr.mxu0 %v1200
        %1598 = vmatpush1.msra.mxu0 %v1199
        %1599 = vmatprep.subr.mxu0 %v1206
        %1600 = vmatpush1.msra.mxu0 %v1205
        %1601 = vmatprep.subr.mxu0 %v1212
        %1602 = vmatpush1.msra.mxu0 %v1211
        %1603 = vmatprep.subr.mxu0 %v1218
        %1604 = vmatpush1.msra.mxu0 %v1217
        %1605 = vmatprep.subr.mxu0 %v1224
        %1606 = vmatpush1.msra.mxu0 %v1223
        %1607 = vmatprep.subr.mxu0 %v1230
        %1608 = vmatpush1.msra.mxu0 %v1229
        %1609 = vmatprep.subr.mxu0 %v1236
        %1610 = vmatpush1.msra.mxu0 %v1235
        %1611 = vmatprep.subr.mxu0 %v1242
        %1612 = vmatpush1.msra.mxu0 %v1241
        %1613 = vmatprep.subr.mxu0 %v1248
        %1614 = vmatpush1.msra.mxu0 %v1247
        %1615 = vmatprep.subr.mxu0 %v1254
        %1616 = vmatpush1.msra.mxu0 %v1253
        %1617 = vmatprep.subr.mxu0 %v1260
        %1618 = vmatpush1.msra.mxu0 %v1259
        %1619 = vmatprep.subr.mxu0 %v1266
        %1620 = vmatpush1.msra.mxu0 %v1265
        %1621 = vmatprep.mubr.f32.mxu0 %v1014
        %1622 = vmatmul.mubr.f32.gmra.mrb[0].mxu0 %v1013
        %v1623 = vpop.f32.mrb[0].mxu0
        %v1624 = vadd.f32 %v1281, %v1623
        %v1625 = vpop.f32.mrb[0].mxu0
        %v1626 = vadd.f32 %v1285, %v1625
        %1627 = vmatprep.mubr.f32.mxu0 %v1016
        %1628 = vmatmul.mubr.f32.gmra.mrb[0].mxu0 %v1015
        %v1629 = vpop.f32.mrb[0].mxu0
        %v1630 = vadd.f32 %v1281, %v1629
        %v1631 = vpop.f32.mrb[0].mxu0
        %v1632 = vadd.f32 %v1285, %v1631
        %1633 = vmatprep.mubr.f32.mxu0 %v1018
        %1634 = vmatmul.mubr.f32.gmra.mrb[0].mxu0 %v1017
        %v1635 = vpop.f32.mrb[0].mxu0
        %v1636 = vadd.f32 %v1281, %v1635
        %v1637 = vpop.f32.mrb[0].mxu0
        %v1638 = vadd.f32 %v1285, %v1637
        %1639 = vmatprep.mubr.f32.mxu0 %v1020
        %1640 = vmatmul.mubr.f32.gmra.mrb[0].mxu0 %v1019
        %v1641 = vpop.f32.mrb[0].mxu0
        %v1642 = vadd.f32 %v1281, %v1641
        %v1643 = vpop.f32.mrb[0].mxu0
        %v1644 = vadd.f32 %v1285, %v1643
        %1645 = vmatprep.mubr.f32.mxu0 %v1022
        %1646 = vmatmul.mubr.f32.gmra.mrb[0].mxu0 %v1021
        %v1647 = vpop.f32.mrb[0].mxu0
        %v1648 = vadd.f32 %v1281, %v1647
        %v1649 = vpop.f32.mrb[0].mxu0
        %v1650 = vadd.f32 %v1285, %v1649
        %1651 = vmatprep.mubr.f32.mxu0 %v1024
        %1652 = vmatmul.mubr.f32.gmra.mrb[0].mxu0 %v1023
        %v1653 = vpop.f32.mrb[0].mxu0
        %v1654 = vadd.f32 %v1281, %v1653
        %v1655 = vpop.f32.mrb[0].mxu0
        %v1656 = vadd.f32 %v1285, %v1655
        %1657 = vmatprep.mubr.f32.mxu0 %v1026
        %1658 = vmatmul.mubr.f32.gmra.mrb[0].mxu0 %v1025
        %v1659 = vpop.f32.mrb[0].mxu0
        %v1660 = vadd.f32 %v1281, %v1659
        %v1661 = vpop.f32.mrb[0].mxu0
        %v1662 = vadd.f32 %v1285, %v1661
        %1663 = vmatprep.mubr.f32.mxu0 %v1028
        %1664 = vmatmul.mubr.f32.gmra.mrb[0].mxu0 %v1027
        %v1665 = vpop.f32.mrb[0].mxu0
        %v1666 = vadd.f32 %v1281, %v1665
        %v1667 = vpop.f32.mrb[0].mxu0
        %v1668 = vadd.f32 %v1285, %v1667
        %1669 = vmatprep.mubr.f32.mxu0 %v1030
        %1670 = vmatmul.mubr.f32.gmra.mrb[0].mxu0 %v1029
        %v1671 = vpop.f32.mrb[0].mxu0
        %v1672 = vadd.f32 %v1281, %v1671
        %v1673 = vpop.f32.mrb[0].mxu0
        %v1674 = vadd.f32 %v1285, %v1673
        %1675 = vmatprep.mubr.f32.mxu0 %v1032
        %1676 = vmatmul.mubr.f32.gmra.mrb[0].mxu0 %v1031
        %v1677 = vpop.f32.mrb[0].mxu0
        %v1678 = vadd.f32 %v1281, %v1677
        %v1679 = vpop.f32.mrb[0].mxu0
        %v1680 = vadd.f32 %v1285, %v1679
        %1681 = vmatprep.mubr.f32.mxu0 %v1034
        %1682 = vmatmul.mubr.f32.gmra.mrb[0].mxu0 %v1033
        %v1683 = vpop.f32.mrb[0].mxu0
        %v1684 = vadd.f32 %v1281, %v1683
        %v1685 = vpop.f32.mrb[0].mxu0
        %v1686 = vadd.f32 %v1285, %v1685
        %1687 = vmatprep.mubr.f32.mxu0 %v1036
        %1688 = vmatmul.mubr.f32.gmra.mrb[0].mxu0 %v1035
        %v1689 = vpop.f32.mrb[0].mxu0
        %v1690 = vadd.f32 %v1281, %v1689
        %v1691 = vpop.f32.mrb[0].mxu0
        %v1692 = vadd.f32 %v1285, %v1691
        %1693 = vmatprep.mubr.f32.mxu0 %v1038
        %1694 = vmatmul.mubr.f32.gmra.mrb[0].mxu0 %v1037
        %v1695 = vpop.f32.mrb[0].mxu0
        %v1696 = vadd.f32 %v1281, %v1695
        %v1697 = vpop.f32.mrb[0].mxu0
        %v1698 = vadd.f32 %v1285, %v1697
        %1699 = vmatprep.mubr.f32.mxu0 %v1040
        %1700 = vmatmul.mubr.f32.gmra.mrb[0].mxu0 %v1039
        %v1701 = vpop.f32.mrb[0].mxu0
        %v1702 = vadd.f32 %v1281, %v1701
        %v1703 = vpop.f32.mrb[0].mxu0
        %v1704 = vadd.f32 %v1285, %v1703
        %1705 = vmatprep.mubr.f32.mxu0 %v1042
        %1706 = vmatmul.mubr.f32.gmra.mrb[0].mxu0 %v1041
        %v1707 = vpop.f32.mrb[0].mxu0
        %v1708 = vadd.f32 %v1281, %v1707
        %v1709 = vpop.f32.mrb[0].mxu0
        %v1710 = vadd.f32 %v1285, %v1709
        %1711 = vmatprep.mubr.f32.mxu0 %v1044
        %1712 = vmatmul.mubr.f32.gmra.mrb[0].mxu0 %v1043
        %v1713 = vpop.f32.mrb[0].mxu0
        %v1714 = vadd.f32 %v1281, %v1713
        %v1715 = vpop.f32.mrb[0].mxu0
        %v1716 = vadd.f32 %v1285, %v1715
        %1717 = vmatprep.mubr.f32.mxu0 %v1046
        %1718 = vmatmul.mubr.f32.gmra.mrb[0].mxu0 %v1045
        %v1719 = vpop.f32.mrb[0].mxu0
        %v1720 = vadd.f32 %v1281, %v1719
        %v1721 = vpop.f32.mrb[0].mxu0
        %v1722 = vadd.f32 %v1285, %v1721
        %1723 = vmatprep.mubr.f32.mxu0 %v1048
        %1724 = vmatmul.mubr.f32.gmra.mrb[0].mxu0 %v1047
        %v1725 = vpop.f32.mrb[0].mxu0
        %v1726 = vadd.f32 %v1281, %v1725
        %v1727 = vpop.f32.mrb[0].mxu0
        %v1728 = vadd.f32 %v1285, %v1727
        %1729 = vmatprep.mubr.f32.mxu0 %v1050
        %1730 = vmatmul.mubr.f32.gmra.mrb[0].mxu0 %v1049
        %v1731 = vpop.f32.mrb[0].mxu0
        %v1732 = vadd.f32 %v1281, %v1731
        %v1733 = vpop.f32.mrb[0].mxu0
        %v1734 = vadd.f32 %v1285, %v1733
        %1735 = vmatprep.mubr.f32.mxu0 %v1052
        %1736 = vmatmul.mubr.f32.gmra.mrb[0].mxu0 %v1051
        %v1737 = vpop.f32.mrb[0].mxu0
        %v1738 = vadd.f32 %v1281, %v1737
        %v1739 = vpop.f32.mrb[0].mxu0
        %v1740 = vadd.f32 %v1285, %v1739
        %1741 = vmatprep.mubr.f32.mxu0 %v1054
        %1742 = vmatmul.mubr.f32.gmra.mrb[0].mxu0 %v1053
        %v1743 = vpop.f32.mrb[0].mxu0
        %v1744 = vadd.f32 %v1281, %v1743
        %v1745 = vpop.f32.mrb[0].mxu0
        %v1746 = vadd.f32 %v1285, %v1745
        %1747 = vmatprep.mubr.f32.mxu0 %v1056
        %1748 = vmatmul.mubr.f32.gmra.mrb[0].mxu0 %v1055
        %v1749 = vpop.f32.mrb[0].mxu0
        %v1750 = vadd.f32 %v1281, %v1749
        %v1751 = vpop.f32.mrb[0].mxu0
        %v1752 = vadd.f32 %v1285, %v1751
        %1753 = vmatprep.mubr.f32.mxu0 %v1058
        %1754 = vmatmul.mubr.f32.gmra.mrb[0].mxu0 %v1057
        %v1755 = vpop.f32.mrb[0].mxu0
        %v1756 = vadd.f32 %v1281, %v1755
        %v1757 = vpop.f32.mrb[0].mxu0
        %v1758 = vadd.f32 %v1285, %v1757
        %1759 = vmatprep.mubr.f32.mxu0 %v1060
        %1760 = vmatmul.mubr.f32.gmra.mrb[0].mxu0 %v1059
        %v1761 = vpop.f32.mrb[0].mxu0
        %v1762 = vadd.f32 %v1281, %v1761
        %v1763 = vpop.f32.mrb[0].mxu0
        %v1764 = vadd.f32 %v1285, %v1763
        %1765 = vmatprep.mubr.f32.mxu0 %v1062
        %1766 = vmatmul.mubr.f32.gmra.mrb[0].mxu0 %v1061
        %v1767 = vpop.f32.mrb[0].mxu0
        %v1768 = vadd.f32 %v1281, %v1767
        %v1769 = vpop.f32.mrb[0].mxu0
        %v1770 = vadd.f32 %v1285, %v1769
        %1771 = vmatprep.mubr.f32.mxu0 %v1064
        %1772 = vmatmul.mubr.f32.gmra.mrb[0].mxu0 %v1063
        %v1773 = vpop.f32.mrb[0].mxu0
        %v1774 = vadd.f32 %v1281, %v1773
        %v1775 = vpop.f32.mrb[0].mxu0
        %v1776 = vadd.f32 %v1285, %v1775
        %1777 = vmatprep.mubr.f32.mxu0 %v1066
        %1778 = vmatmul.mubr.f32.gmra.mrb[0].mxu0 %v1065
        %v1779 = vpop.f32.mrb[0].mxu0
        %v1780 = vadd.f32 %v1281, %v1779
        %v1781 = vpop.f32.mrb[0].mxu0
        %v1782 = vadd.f32 %v1285, %v1781
        %1783 = vmatprep.mubr.f32.mxu0 %v1068
        %1784 = vmatmul.mubr.f32.gmra.mrb[0].mxu0 %v1067
        %v1785 = vpop.f32.mrb[0].mxu0
        %v1786 = vadd.f32 %v1281, %v1785
        %v1787 = vpop.f32.mrb[0].mxu0
        %v1788 = vadd.f32 %v1285, %v1787
        %1789 = vmatprep.mubr.f32.mxu0 %v1070
        %1790 = vmatmul.mubr.f32.gmra.mrb[0].mxu0 %v1069
        %v1791 = vpop.f32.mrb[0].mxu0
        %v1792 = vadd.f32 %v1281, %v1791
        %v1793 = vpop.f32.mrb[0].mxu0
        %v1794 = vadd.f32 %v1285, %v1793
        %1795 = vmatprep.mubr.f32.mxu0 %v1072
        %1796 = vmatmul.mubr.f32.gmra.mrb[0].mxu0 %v1071
        %v1797 = vpop.f32.mrb[0].mxu0
        %v1798 = vadd.f32 %v1281, %v1797
        %v1799 = vpop.f32.mrb[0].mxu0
        %v1800 = vadd.f32 %v1285, %v1799
        %1801 = vmatprep.mubr.f32.mxu0 %v1074
        %1802 = vmatmul.mubr.f32.gmra.mrb[0].mxu0 %v1073
        %v1803 = vpop.f32.mrb[0].mxu0
        %v1804 = vadd.f32 %v1281, %v1803
        %v1805 = vpop.f32.mrb[0].mxu0
        %v1806 = vadd.f32 %v1285, %v1805
        %1807 = vmatprep.mubr.f32.mxu0 %v1076
        %1808 = vmatmul.mubr.f32.gmra.mrb[0].mxu0 %v1075
        %v1809 = vpop.f32.mrb[0].mxu0
        %v1810 = vadd.f32 %v1281, %v1809
        %v1811 = vpop.f32.mrb[0].mxu0
        %v1812 = vadd.f32 %v1285, %v1811
        %1813 = vdwg.mxu0
        %1814 = vmatprep.subr.mxu0 %v1082
        %1815 = vmatpush1.msra.mxu0 %v1081
        %1816 = vmatprep.subr.mxu0 %v1088
        %1817 = vmatpush1.msra.mxu0 %v1087
        %1818 = vmatprep.subr.mxu0 %v1094
        %1819 = vmatpush1.msra.mxu0 %v1093
        %1820 = vmatprep.subr.mxu0 %v1100
        %1821 = vmatpush1.msra.mxu0 %v1099
        %1822 = vmatprep.subr.mxu0 %v1106
        %1823 = vmatpush1.msra.mxu0 %v1105
        %1824 = vmatprep.subr.mxu0 %v1112
        %1825 = vmatpush1.msra.mxu0 %v1111
        %1826 = vmatprep.subr.mxu0 %v1118
        %1827 = vmatpush1.msra.mxu0 %v1117
        %1828 = vmatprep.subr.mxu0 %v1124
        %1829 = vmatpush1.msra.mxu0 %v1123
        %1830 = vmatprep.subr.mxu0 %v1130
        %1831 = vmatpush1.msra.mxu0 %v1129
        %1832 = vmatprep.subr.mxu0 %v1136
        %1833 = vmatpush1.msra.mxu0 %v1135
        %1834 = vmatprep.subr.mxu0 %v1142
        %1835 = vmatpush1.msra.mxu0 %v1141
        %1836 = vmatprep.subr.mxu0 %v1148
        %1837 = vmatpush1.msra.mxu0 %v1147
        %1838 = vmatprep.subr.mxu0 %v1154
        %1839 = vmatpush1.msra.mxu0 %v1153
        %1840 = vmatprep.subr.mxu0 %v1160
        %1841 = vmatpush1.msra.mxu0 %v1159
        %1842 = vmatprep.subr.mxu0 %v1166
        %1843 = vmatpush1.msra.mxu0 %v1165
        %1844 = vmatprep.subr.mxu0 %v1172
        %1845 = vmatpush1.msra.mxu0 %v1171
        %1846 = vmatprep.subr.mxu0 %v1178
        %1847 = vmatpush1.msra.mxu0 %v1177
        %1848 = vmatprep.subr.mxu0 %v1184
        %1849 = vmatpush1.msra.mxu0 %v1183
        %1850 = vmatprep.subr.mxu0 %v1190
        %1851 = vmatpush1.msra.mxu0 %v1189
        %1852 = vmatprep.subr.mxu0 %v1196
        %1853 = vmatpush1.msra.mxu0 %v1195
        %1854 = vmatprep.subr.mxu0 %v1202
        %1855 = vmatpush1.msra.mxu0 %v1201
        %1856 = vmatprep.subr.mxu0 %v1208
        %1857 = vmatpush1.msra.mxu0 %v1207
        %1858 = vmatprep.subr.mxu0 %v1214
        %1859 = vmatpush1.msra.mxu0 %v1213
        %1860 = vmatprep.subr.mxu0 %v1220
        %1861 = vmatpush1.msra.mxu0 %v1219
        %1862 = vmatprep.subr.mxu0 %v1226
        %1863 = vmatpush1.msra.mxu0 %v1225
        %1864 = vmatprep.subr.mxu0 %v1232
        %1865 = vmatpush1.msra.mxu0 %v1231
        %1866 = vmatprep.subr.mxu0 %v1238
        %1867 = vmatpush1.msra.mxu0 %v1237
        %1868 = vmatprep.subr.mxu0 %v1244
        %1869 = vmatpush1.msra.mxu0 %v1243
        %1870 = vmatprep.subr.mxu0 %v1250
        %1871 = vmatpush1.msra.mxu0 %v1249
        %1872 = vmatprep.subr.mxu0 %v1256
        %1873 = vmatpush1.msra.mxu0 %v1255
        %1874 = vmatprep.subr.mxu0 %v1262
        %1875 = vmatpush1.msra.mxu0 %v1261
        %1876 = vmatprep.subr.mxu0 %v1268
        %1877 = vmatpush1.msra.mxu0 %v1267
        %1878 = vmatprep.mubr.f32.mxu0 %v1014
        %1879 = vmatmul.mubr.f32.gmra.mrb[0].mxu0 %v1013
        %v1880 = vpop.f32.mrb[0].mxu0
        %v1881 = vadd.f32 %v1289, %v1880
        %v1882 = vpop.f32.mrb[0].mxu0
        %v1883 = vadd.f32 %v1293, %v1882
        %1884 = vmatprep.mubr.f32.mxu0 %v1016
        %1885 = vmatmul.mubr.f32.gmra.mrb[0].mxu0 %v1015
        %v1886 = vpop.f32.mrb[0].mxu0
        %v1887 = vadd.f32 %v1289, %v1886
        %v1888 = vpop.f32.mrb[0].mxu0
        %v1889 = vadd.f32 %v1293, %v1888
        %1890 = vmatprep.mubr.f32.mxu0 %v1018
        %1891 = vmatmul.mubr.f32.gmra.mrb[0].mxu0 %v1017
        %v1892 = vpop.f32.mrb[0].mxu0
        %v1893 = vadd.f32 %v1289, %v1892
        %v1894 = vpop.f32.mrb[0].mxu0
        %v1895 = vadd.f32 %v1293, %v1894
        %1896 = vmatprep.mubr.f32.mxu0 %v1020
        %1897 = vmatmul.mubr.f32.gmra.mrb[0].mxu0 %v1019
        %v1898 = vpop.f32.mrb[0].mxu0
        %v1899 = vadd.f32 %v1289, %v1898
        %v1900 = vpop.f32.mrb[0].mxu0
        %v1901 = vadd.f32 %v1293, %v1900
        %1902 = vmatprep.mubr.f32.mxu0 %v1022
        %1903 = vmatmul.mubr.f32.gmra.mrb[0].mxu0 %v1021
        %v1904 = vpop.f32.mrb[0].mxu0
        %v1905 = vadd.f32 %v1289, %v1904
        %v1906 = vpop.f32.mrb[0].mxu0
        %v1907 = vadd.f32 %v1293, %v1906
        %1908 = vmatprep.mubr.f32.mxu0 %v1024
        %1909 = vmatmul.mubr.f32.gmra.mrb[0].mxu0 %v1023
        %v1910 = vpop.f32.mrb[0].mxu0
        %v1911 = vadd.f32 %v1289, %v1910
        %v1912 = vpop.f32.mrb[0].mxu0
        %v1913 = vadd.f32 %v1293, %v1912
        %1914 = vmatprep.mubr.f32.mxu0 %v1026
        %1915 = vmatmul.mubr.f32.gmra.mrb[0].mxu0 %v1025
        %v1916 = vpop.f32.mrb[0].mxu0
        %v1917 = vadd.f32 %v1289, %v1916
        %v1918 = vpop.f32.mrb[0].mxu0
        %v1919 = vadd.f32 %v1293, %v1918
        %1920 = vmatprep.mubr.f32.mxu0 %v1028
        %1921 = vmatmul.mubr.f32.gmra.mrb[0].mxu0 %v1027
        %v1922 = vpop.f32.mrb[0].mxu0
        %v1923 = vadd.f32 %v1289, %v1922
        %v1924 = vpop.f32.mrb[0].mxu0
        %v1925 = vadd.f32 %v1293, %v1924
        %1926 = vmatprep.mubr.f32.mxu0 %v1030
        %1927 = vmatmul.mubr.f32.gmra.mrb[0].mxu0 %v1029
        %v1928 = vpop.f32.mrb[0].mxu0
        %v1929 = vadd.f32 %v1289, %v1928
        %v1930 = vpop.f32.mrb[0].mxu0
        %v1931 = vadd.f32 %v1293, %v1930
        %1932 = vmatprep.mubr.f32.mxu0 %v1032
        %1933 = vmatmul.mubr.f32.gmra.mrb[0].mxu0 %v1031
        %v1934 = vpop.f32.mrb[0].mxu0
        %v1935 = vadd.f32 %v1289, %v1934
        %v1936 = vpop.f32.mrb[0].mxu0
        %v1937 = vadd.f32 %v1293, %v1936
        %1938 = vmatprep.mubr.f32.mxu0 %v1034
        %1939 = vmatmul.mubr.f32.gmra.mrb[0].mxu0 %v1033
        %v1940 = vpop.f32.mrb[0].mxu0
        %v1941 = vadd.f32 %v1289, %v1940
        %v1942 = vpop.f32.mrb[0].mxu0
        %v1943 = vadd.f32 %v1293, %v1942
        %1944 = vmatprep.mubr.f32.mxu0 %v1036
        %1945 = vmatmul.mubr.f32.gmra.mrb[0].mxu0 %v1035
        %v1946 = vpop.f32.mrb[0].mxu0
        %v1947 = vadd.f32 %v1289, %v1946
        %v1948 = vpop.f32.mrb[0].mxu0
        %v1949 = vadd.f32 %v1293, %v1948
        %1950 = vmatprep.mubr.f32.mxu0 %v1038
        %1951 = vmatmul.mubr.f32.gmra.mrb[0].mxu0 %v1037
        %v1952 = vpop.f32.mrb[0].mxu0
        %v1953 = vadd.f32 %v1289, %v1952
        %v1954 = vpop.f32.mrb[0].mxu0
        %v1955 = vadd.f32 %v1293, %v1954
        %1956 = vmatprep.mubr.f32.mxu0 %v1040
        %1957 = vmatmul.mubr.f32.gmra.mrb[0].mxu0 %v1039
        %v1958 = vpop.f32.mrb[0].mxu0
        %v1959 = vadd.f32 %v1289, %v1958
        %v1960 = vpop.f32.mrb[0].mxu0
        %v1961 = vadd.f32 %v1293, %v1960
        %1962 = vmatprep.mubr.f32.mxu0 %v1042
        %1963 = vmatmul.mubr.f32.gmra.mrb[0].mxu0 %v1041
        %v1964 = vpop.f32.mrb[0].mxu0
        %v1965 = vadd.f32 %v1289, %v1964
        %v1966 = vpop.f32.mrb[0].mxu0
        %v1967 = vadd.f32 %v1293, %v1966
        %1968 = vmatprep.mubr.f32.mxu0 %v1044
        %1969 = vmatmul.mubr.f32.gmra.mrb[0].mxu0 %v1043
        %v1970 = vpop.f32.mrb[0].mxu0
        %v1971 = vadd.f32 %v1289, %v1970
        %v1972 = vpop.f32.mrb[0].mxu0
        %v1973 = vadd.f32 %v1293, %v1972
        %1974 = vmatprep.mubr.f32.mxu0 %v1046
        %1975 = vmatmul.mubr.f32.gmra.mrb[0].mxu0 %v1045
        %v1976 = vpop.f32.mrb[0].mxu0
        %v1977 = vadd.f32 %v1289, %v1976
        %v1978 = vpop.f32.mrb[0].mxu0
        %v1979 = vadd.f32 %v1293, %v1978
        %1980 = vmatprep.mubr.f32.mxu0 %v1048
        %1981 = vmatmul.mubr.f32.gmra.mrb[0].mxu0 %v1047
        %v1982 = vpop.f32.mrb[0].mxu0
        %v1983 = vadd.f32 %v1289, %v1982
        %v1984 = vpop.f32.mrb[0].mxu0
        %v1985 = vadd.f32 %v1293, %v1984
        %1986 = vmatprep.mubr.f32.mxu0 %v1050
        %1987 = vmatmul.mubr.f32.gmra.mrb[0].mxu0 %v1049
        %v1988 = vpop.f32.mrb[0].mxu0
        %v1989 = vadd.f32 %v1289, %v1988
        %v1990 = vpop.f32.mrb[0].mxu0
        %v1991 = vadd.f32 %v1293, %v1990
        %1992 = vmatprep.mubr.f32.mxu0 %v1052
        %1993 = vmatmul.mubr.f32.gmra.mrb[0].mxu0 %v1051
        %v1994 = vpop.f32.mrb[0].mxu0
        %v1995 = vadd.f32 %v1289, %v1994
        %v1996 = vpop.f32.mrb[0].mxu0
        %v1997 = vadd.f32 %v1293, %v1996
        %1998 = vmatprep.mubr.f32.mxu0 %v1054
        %1999 = vmatmul.mubr.f32.gmra.mrb[0].mxu0 %v1053
        %v2000 = vpop.f32.mrb[0].mxu0
        %v2001 = vadd.f32 %v1289, %v2000
        %v2002 = vpop.f32.mrb[0].mxu0
        %v2003 = vadd.f32 %v1293, %v2002
        %2004 = vmatprep.mubr.f32.mxu0 %v1056
        %2005 = vmatmul.mubr.f32.gmra.mrb[0].mxu0 %v1055
        %v2006 = vpop.f32.mrb[0].mxu0
        %v2007 = vadd.f32 %v1289, %v2006
        %v2008 = vpop.f32.mrb[0].mxu0
        %v2009 = vadd.f32 %v1293, %v2008
        %2010 = vmatprep.mubr.f32.mxu0 %v1058
        %2011 = vmatmul.mubr.f32.gmra.mrb[0].mxu0 %v1057
        %v2012 = vpop.f32.mrb[0].mxu0
        %v2013 = vadd.f32 %v1289, %v2012
        %v2014 = vpop.f32.mrb[0].mxu0
        %v2015 = vadd.f32 %v1293, %v2014
        %2016 = vmatprep.mubr.f32.mxu0 %v1060
        %2017 = vmatmul.mubr.f32.gmra.mrb[0].mxu0 %v1059
        %v2018 = vpop.f32.mrb[0].mxu0
        %v2019 = vadd.f32 %v1289, %v2018
        %v2020 = vpop.f32.mrb[0].mxu0
        %v2021 = vadd.f32 %v1293, %v2020
        %2022 = vmatprep.mubr.f32.mxu0 %v1062
        %2023 = vmatmul.mubr.f32.gmra.mrb[0].mxu0 %v1061
        %v2024 = vpop.f32.mrb[0].mxu0
        %v2025 = vadd.f32 %v1289, %v2024
        %v2026 = vpop.f32.mrb[0].mxu0
        %v2027 = vadd.f32 %v1293, %v2026
        %2028 = vmatprep.mubr.f32.mxu0 %v1064
        %2029 = vmatmul.mubr.f32.gmra.mrb[0].mxu0 %v1063
        %v2030 = vpop.f32.mrb[0].mxu0
        %v2031 = vadd.f32 %v1289, %v2030
        %v2032 = vpop.f32.mrb[0].mxu0
        %v2033 = vadd.f32 %v1293, %v2032
        %2034 = vmatprep.mubr.f32.mxu0 %v1066
        %2035 = vmatmul.mubr.f32.gmra.mrb[0].mxu0 %v1065
        %v2036 = vpop.f32.mrb[0].mxu0
        %v2037 = vadd.f32 %v1289, %v2036
        %v2038 = vpop.f32.mrb[0].mxu0
        %v2039 = vadd.f32 %v1293, %v2038
        %2040 = vmatprep.mubr.f32.mxu0 %v1068
        %2041 = vmatmul.mubr.f32.gmra.mrb[0].mxu0 %v1067
        %v2042 = vpop.f32.mrb[0].mxu0
        %v2043 = vadd.f32 %v1289, %v2042
        %v2044 = vpop.f32.mrb[0].mxu0
        %v2045 = vadd.f32 %v1293, %v2044
        %2046 = vmatprep.mubr.f32.mxu0 %v1070
        %2047 = vmatmul.mubr.f32.gmra.mrb[0].mxu0 %v1069
        %v2048 = vpop.f32.mrb[0].mxu0
        %v2049 = vadd.f32 %v1289, %v2048
        %v2050 = vpop.f32.mrb[0].mxu0
        %v2051 = vadd.f32 %v1293, %v2050
        %2052 = vmatprep.mubr.f32.mxu0 %v1072
        %2053 = vmatmul.mubr.f32.gmra.mrb[0].mxu0 %v1071
        %v2054 = vpop.f32.mrb[0].mxu0
        %v2055 = vadd.f32 %v1289, %v2054
        %v2056 = vpop.f32.mrb[0].mxu0
        %v2057 = vadd.f32 %v1293, %v2056
        %2058 = vmatprep.mubr.f32.mxu0 %v1074
        %2059 = vmatmul.mubr.f32.gmra.mrb[0].mxu0 %v1073
        %v2060 = vpop.f32.mrb[0].mxu0
        %v2061 = vadd.f32 %v1289, %v2060
        %v2062 = vpop.f32.mrb[0].mxu0
        %v2063 = vadd.f32 %v1293, %v2062
        %2064 = vmatprep.mubr.f32.mxu0 %v1076
        %2065 = vmatmul.mubr.f32.gmra.mrb[0].mxu0 %v1075
        %v2066 = vpop.f32.mrb[0].mxu0
        %v2067 = vadd.f32 %v1289, %v2066
        %v2068 = vpop.f32.mrb[0].mxu0
        %v2069 = vadd.f32 %v1293, %v2068
        %2070 = vdwg.mxu0
        %v2071 = vmul.f32 %v1367, 0.088388346
        %v2072 = vmul.f32 %v1369, 0.088388346
        %v2073 = vmul.f32 %v1373, 0.088388346
        %v2074 = vmul.f32 %v1375, 0.088388346
        %v2075 = vmul.f32 %v1379, 0.088388346
        %v2076 = vmul.f32 %v1381, 0.088388346
        %v2077 = vmul.f32 %v1385, 0.088388346
        %v2078 = vmul.f32 %v1387, 0.088388346
        %v2079 = vmul.f32 %v1391, 0.088388346
        %v2080 = vmul.f32 %v1393, 0.088388346
        %v2081 = vmul.f32 %v1397, 0.088388346
        %v2082 = vmul.f32 %v1399, 0.088388346
        %v2083 = vmul.f32 %v1403, 0.088388346
        %v2084 = vmul.f32 %v1405, 0.088388346
        %v2085 = vmul.f32 %v1409, 0.088388346
        %v2086 = vmul.f32 %v1411, 0.088388346
        %v2087 = vmul.f32 %v1415, 0.088388346
        %v2088 = vmul.f32 %v1417, 0.088388346
        %v2089 = vmul.f32 %v1421, 0.088388346
        %v2090 = vmul.f32 %v1423, 0.088388346
        %v2091 = vmul.f32 %v1427, 0.088388346
        %v2092 = vmul.f32 %v1429, 0.088388346
        %v2093 = vmul.f32 %v1433, 0.088388346
        %v2094 = vmul.f32 %v1435, 0.088388346
        %v2095 = vmul.f32 %v1439, 0.088388346
        %v2096 = vmul.f32 %v1441, 0.088388346
        %v2097 = vmul.f32 %v1445, 0.088388346
        %v2098 = vmul.f32 %v1447, 0.088388346
        %v2099 = vmul.f32 %v1451, 0.088388346
        %v2100 = vmul.f32 %v1453, 0.088388346
        %v2101 = vmul.f32 %v1457, 0.088388346
        %v2102 = vmul.f32 %v1459, 0.088388346
        %v2103 = vmul.f32 %v1463, 0.088388346
        %v2104 = vmul.f32 %v1465, 0.088388346
        %v2105 = vmul.f32 %v1469, 0.088388346
        %v2106 = vmul.f32 %v1471, 0.088388346
        %v2107 = vmul.f32 %v1475, 0.088388346
        %v2108 = vmul.f32 %v1477, 0.088388346
        %v2109 = vmul.f32 %v1481, 0.088388346
        %v2110 = vmul.f32 %v1483, 0.088388346
        %v2111 = vmul.f32 %v1487, 0.088388346
        %v2112 = vmul.f32 %v1489, 0.088388346
        %v2113 = vmul.f32 %v1493, 0.088388346
        %v2114 = vmul.f32 %v1495, 0.088388346
        %v2115 = vmul.f32 %v1499, 0.088388346
        %v2116 = vmul.f32 %v1501, 0.088388346
        %v2117 = vmul.f32 %v1505, 0.088388346
        %v2118 = vmul.f32 %v1507, 0.088388346
        %v2119 = vmul.f32 %v1511, 0.088388346
        %v2120 = vmul.f32 %v1513, 0.088388346
        %v2121 = vmul.f32 %v1517, 0.088388346
        %v2122 = vmul.f32 %v1519, 0.088388346
        %v2123 = vmul.f32 %v1523, 0.088388346
        %v2124 = vmul.f32 %v1525, 0.088388346
        %v2125 = vmul.f32 %v1529, 0.088388346
        %v2126 = vmul.f32 %v1531, 0.088388346
        %v2127 = vmul.f32 %v1535, 0.088388346
        %v2128 = vmul.f32 %v1537, 0.088388346
        %v2129 = vmul.f32 %v1541, 0.088388346
        %v2130 = vmul.f32 %v1543, 0.088388346
        %v2131 = vmul.f32 %v1547, 0.088388346
        %v2132 = vmul.f32 %v1549, 0.088388346
        %v2133 = vmul.f32 %v1553, 0.088388346
        %v2134 = vmul.f32 %v1555, 0.088388346
        %2135 = vmatprep.subr.mxu0 0.0
        %2136 = vmatpush1.xpose.msra.mxu0 %v1624
        %2137 = vmatprep.subr.mxu0 0.0
        %2138 = vmatpush1.xpose.msra.mxu0 %v1630
        %2139 = vmatprep.subr.mxu0 0.0
        %2140 = vmatpush1.xpose.msra.mxu0 %v1636
        %2141 = vmatprep.subr.mxu0 0.0
        %2142 = vmatpush1.xpose.msra.mxu0 %v1642
        %2143 = vmatprep.subr.mxu0 0.0
        %2144 = vmatpush1.xpose.msra.mxu0 %v1648
        %2145 = vmatprep.subr.mxu0 0.0
        %2146 = vmatpush1.xpose.msra.mxu0 %v1654
        %2147 = vmatprep.subr.mxu0 0.0
        %2148 = vmatpush1.xpose.msra.mxu0 %v1660
        %2149 = vmatprep.subr.mxu0 0.0
        %2150 = vmatpush1.xpose.msra.mxu0 %v1666
        %2151 = vmatprep.subr.mxu0 0.0
        %2152 = vmatpush1.xpose.msra.mxu0 %v1672
        %2153 = vmatprep.subr.mxu0 0.0
        %2154 = vmatpush1.xpose.msra.mxu0 %v1678
        %2155 = vmatprep.subr.mxu0 0.0
        %2156 = vmatpush1.xpose.msra.mxu0 %v1684
        %2157 = vmatprep.subr.mxu0 0.0
        %2158 = vmatpush1.xpose.msra.mxu0 %v1690
        %2159 = vmatprep.subr.mxu0 0.0
        %2160 = vmatpush1.xpose.msra.mxu0 %v1696
        %2161 = vmatprep.subr.mxu0 0.0
        %2162 = vmatpush1.xpose.msra.mxu0 %v1702
        %2163 = vmatprep.subr.mxu0 0.0
        %2164 = vmatpush1.xpose.msra.mxu0 %v1708
        %2165 = vmatprep.subr.mxu0 0.0
        %2166 = vmatpush1.xpose.msra.mxu0 %v1714
        %2167 = vmatprep.subr.mxu0 0.0
        %2168 = vmatpush1.xpose.msra.mxu0 0.0
        %2169 = vmatprep.subr.mxu0 0.0
        %2170 = vmatpush1.xpose.msra.mxu0 0.0
        %2171 = vmatprep.subr.mxu0 0.0
        %2172 = vmatpush1.xpose.msra.mxu0 0.0
        %2173 = vmatprep.subr.mxu0 0.0
        %2174 = vmatpush1.xpose.msra.mxu0 0.0
        %2175 = vmatprep.subr.mxu0 0.0
        %2176 = vmatpush1.xpose.msra.mxu0 0.0
        %2177 = vmatprep.subr.mxu0 0.0
        %2178 = vmatpush1.xpose.msra.mxu0 0.0
        %2179 = vmatprep.subr.mxu0 0.0
        %2180 = vmatpush1.xpose.msra.mxu0 0.0
        %2181 = vmatprep.subr.mxu0 0.0
        %2182 = vmatpush1.xpose.msra.mxu0 0.0
        %2183 = vmatprep.subr.mxu0 0.0
        %2184 = vmatpush1.xpose.msra.mxu0 0.0
        %2185 = vmatprep.subr.mxu0 0.0
        %2186 = vmatpush1.xpose.msra.mxu0 0.0
        %2187 = vmatprep.subr.mxu0 0.0
        %2188 = vmatpush1.xpose.msra.mxu0 0.0
        %2189 = vmatprep.subr.mxu0 0.0
        %2190 = vmatpush1.xpose.msra.mxu0 0.0
        %2191 = vmatprep.subr.mxu0 0.0
        %2192 = vmatpush1.xpose.msra.mxu0 0.0
        %2193 = vmatprep.subr.mxu0 0.0
        %2194 = vmatpush1.xpose.msra.mxu0 0.0
        %2195 = vmatprep.subr.mxu0 0.0
        %2196 = vmatpush1.xpose.msra.mxu0 0.0
        %2197 = vmatprep.subr.mxu0 0.0
        %2198 = vmatpush1.xpose.msra.mxu0 0.0
        %2199 = vmatprep.mubr.f32.mxu0 0.0
        %2200 = vmatmul.mubr.f32.gmra.mrb[0].mxu0 %v2071
        %v2201 = vpop.f32.mrb[0].mxu0
        %v2202 = vadd.f32 0.0, %v2201
        %v2203 = vpop.f32.mrb[0].mxu0
        %2204 = vmatprep.mubr.f32.mxu0 0.0
        %2205 = vmatmul.mubr.f32.gmra.mrb[0].mxu0 %v2073
        %v2206 = vpop.f32.mrb[0].mxu0
        %v2207 = vadd.f32 0.0, %v2206
        %v2208 = vpop.f32.mrb[0].mxu0
        %2209 = vmatprep.mubr.f32.mxu0 0.0
        %2210 = vmatmul.mubr.f32.gmra.mrb[0].mxu0 %v2075
        %v2211 = vpop.f32.mrb[0].mxu0
        %v2212 = vadd.f32 0.0, %v2211
        %v2213 = vpop.f32.mrb[0].mxu0
        %2214 = vmatprep.mubr.f32.mxu0 0.0
        %2215 = vmatmul.mubr.f32.gmra.mrb[0].mxu0 %v2077
        %v2216 = vpop.f32.mrb[0].mxu0
        %v2217 = vadd.f32 0.0, %v2216
        %v2218 = vpop.f32.mrb[0].mxu0
        %2219 = vmatprep.mubr.f32.mxu0 0.0
        %2220 = vmatmul.mubr.f32.gmra.mrb[0].mxu0 %v2079
        %v2221 = vpop.f32.mrb[0].mxu0
        %v2222 = vadd.f32 0.0, %v2221
        %v2223 = vpop.f32.mrb[0].mxu0
        %2224 = vmatprep.mubr.f32.mxu0 0.0
        %2225 = vmatmul.mubr.f32.gmra.mrb[0].mxu0 %v2081
        %v2226 = vpop.f32.mrb[0].mxu0
        %v2227 = vadd.f32 0.0, %v2226
        %v2228 = vpop.f32.mrb[0].mxu0
        %2229 = vmatprep.mubr.f32.mxu0 0.0
        %2230 = vmatmul.mubr.f32.gmra.mrb[0].mxu0 %v2083
        %v2231 = vpop.f32.mrb[0].mxu0
        %v2232 = vadd.f32 0.0, %v2231
        %v2233 = vpop.f32.mrb[0].mxu0
        %2234 = vmatprep.mubr.f32.mxu0 0.0
        %2235 = vmatmul.mubr.f32.gmra.mrb[0].mxu0 %v2085
        %v2236 = vpop.f32.mrb[0].mxu0
        %v2237 = vadd.f32 0.0, %v2236
        %v2238 = vpop.f32.mrb[0].mxu0
        %2239 = vmatprep.mubr.f32.mxu0 0.0
        %2240 = vmatmul.mubr.f32.gmra.mrb[0].mxu0 %v2087
        %v2241 = vpop.f32.mrb[0].mxu0
        %v2242 = vadd.f32 0.0, %v2241
        %v2243 = vpop.f32.mrb[0].mxu0
        %2244 = vmatprep.mubr.f32.mxu0 0.0
        %2245 = vmatmul.mubr.f32.gmra.mrb[0].mxu0 %v2089
        %v2246 = vpop.f32.mrb[0].mxu0
        %v2247 = vadd.f32 0.0, %v2246
        %v2248 = vpop.f32.mrb[0].mxu0
        %2249 = vmatprep.mubr.f32.mxu0 0.0
        %2250 = vmatmul.mubr.f32.gmra.mrb[0].mxu0 %v2091
        %v2251 = vpop.f32.mrb[0].mxu0
        %v2252 = vadd.f32 0.0, %v2251
        %v2253 = vpop.f32.mrb[0].mxu0
        %2254 = vmatprep.mubr.f32.mxu0 0.0
        %2255 = vmatmul.mubr.f32.gmra.mrb[0].mxu0 %v2093
        %v2256 = vpop.f32.mrb[0].mxu0
        %v2257 = vadd.f32 0.0, %v2256
        %v2258 = vpop.f32.mrb[0].mxu0
        %2259 = vmatprep.mubr.f32.mxu0 0.0
        %2260 = vmatmul.mubr.f32.gmra.mrb[0].mxu0 %v2095
        %v2261 = vpop.f32.mrb[0].mxu0
        %v2262 = vadd.f32 0.0, %v2261
        %v2263 = vpop.f32.mrb[0].mxu0
        %2264 = vmatprep.mubr.f32.mxu0 0.0
        %2265 = vmatmul.mubr.f32.gmra.mrb[0].mxu0 %v2097
        %v2266 = vpop.f32.mrb[0].mxu0
        %v2267 = vadd.f32 0.0, %v2266
        %v2268 = vpop.f32.mrb[0].mxu0
        %2269 = vmatprep.mubr.f32.mxu0 0.0
        %2270 = vmatmul.mubr.f32.gmra.mrb[0].mxu0 %v2099
        %v2271 = vpop.f32.mrb[0].mxu0
        %v2272 = vadd.f32 0.0, %v2271
        %v2273 = vpop.f32.mrb[0].mxu0
        %2274 = vmatprep.mubr.f32.mxu0 0.0
        %2275 = vmatmul.mubr.f32.gmra.mrb[0].mxu0 %v2101
        %v2276 = vpop.f32.mrb[0].mxu0
        %v2277 = vadd.f32 0.0, %v2276
        %v2278 = vpop.f32.mrb[0].mxu0
        %2279 = vdwg.mxu0
        %2280 = vmatprep.subr.mxu0 0.0
        %2281 = vmatpush1.xpose.msra.mxu0 %v1720
        %2282 = vmatprep.subr.mxu0 0.0
        %2283 = vmatpush1.xpose.msra.mxu0 %v1726
        %2284 = vmatprep.subr.mxu0 0.0
        %2285 = vmatpush1.xpose.msra.mxu0 %v1732
        %2286 = vmatprep.subr.mxu0 0.0
        %2287 = vmatpush1.xpose.msra.mxu0 %v1738
        %2288 = vmatprep.subr.mxu0 0.0
        %2289 = vmatpush1.xpose.msra.mxu0 %v1744
        %2290 = vmatprep.subr.mxu0 0.0
        %2291 = vmatpush1.xpose.msra.mxu0 %v1750
        %2292 = vmatprep.subr.mxu0 0.0
        %2293 = vmatpush1.xpose.msra.mxu0 %v1756
        %2294 = vmatprep.subr.mxu0 0.0
        %2295 = vmatpush1.xpose.msra.mxu0 %v1762
        %2296 = vmatprep.subr.mxu0 0.0
        %2297 = vmatpush1.xpose.msra.mxu0 %v1768
        %2298 = vmatprep.subr.mxu0 0.0
        %2299 = vmatpush1.xpose.msra.mxu0 %v1774
        %2300 = vmatprep.subr.mxu0 0.0
        %2301 = vmatpush1.xpose.msra.mxu0 %v1780
        %2302 = vmatprep.subr.mxu0 0.0
        %2303 = vmatpush1.xpose.msra.mxu0 %v1786
        %2304 = vmatprep.subr.mxu0 0.0
        %2305 = vmatpush1.xpose.msra.mxu0 %v1792
        %2306 = vmatprep.subr.mxu0 0.0
        %2307 = vmatpush1.xpose.msra.mxu0 %v1798
        %2308 = vmatprep.subr.mxu0 0.0
        %2309 = vmatpush1.xpose.msra.mxu0 %v1804
        %2310 = vmatprep.subr.mxu0 0.0
        %2311 = vmatpush1.xpose.msra.mxu0 %v1810
        %2312 = vmatprep.subr.mxu0 0.0
        %2313 = vmatpush1.xpose.msra.mxu0 0.0
        %2314 = vmatprep.subr.mxu0 0.0
        %2315 = vmatpush1.xpose.msra.mxu0 0.0
        %2316 = vmatprep.subr.mxu0 0.0
        %2317 = vmatpush1.xpose.msra.mxu0 0.0
        %2318 = vmatprep.subr.mxu0 0.0
        %2319 = vmatpush1.xpose.msra.mxu0 0.0
        %2320 = vmatprep.subr.mxu0 0.0
        %2321 = vmatpush1.xpose.msra.mxu0 0.0
        %2322 = vmatprep.subr.mxu0 0.0
        %2323 = vmatpush1.xpose.msra.mxu0 0.0
        %2324 = vmatprep.subr.mxu0 0.0
        %2325 = vmatpush1.xpose.msra.mxu0 0.0
        %2326 = vmatprep.subr.mxu0 0.0
        %2327 = vmatpush1.xpose.msra.mxu0 0.0
        %2328 = vmatprep.subr.mxu0 0.0
        %2329 = vmatpush1.xpose.msra.mxu0 0.0
        %2330 = vmatprep.subr.mxu0 0.0
        %2331 = vmatpush1.xpose.msra.mxu0 0.0
        %2332 = vmatprep.subr.mxu0 0.0
        %2333 = vmatpush1.xpose.msra.mxu0 0.0
        %2334 = vmatprep.subr.mxu0 0.0
        %2335 = vmatpush1.xpose.msra.mxu0 0.0
        %2336 = vmatprep.subr.mxu0 0.0
        %2337 = vmatpush1.xpose.msra.mxu0 0.0
        %2338 = vmatprep.subr.mxu0 0.0
        %2339 = vmatpush1.xpose.msra.mxu0 0.0
        %2340 = vmatprep.subr.mxu0 0.0
        %2341 = vmatpush1.xpose.msra.mxu0 0.0
        %2342 = vmatprep.subr.mxu0 0.0
        %2343 = vmatpush1.xpose.msra.mxu0 0.0
        %2344 = vmatprep.mubr.f32.mxu0 0.0
        %2345 = vmatmul.mubr.f32.gmra.mrb[0].mxu0 %v2103
        %v2346 = vpop.f32.mrb[0].mxu0
        %v2347 = vadd.f32 0.0, %v2346
        %v2348 = vpop.f32.mrb[0].mxu0
        %2349 = vmatprep.mubr.f32.mxu0 0.0
        %2350 = vmatmul.mubr.f32.gmra.mrb[0].mxu0 %v2105
        %v2351 = vpop.f32.mrb[0].mxu0
        %v2352 = vadd.f32 0.0, %v2351
        %v2353 = vpop.f32.mrb[0].mxu0
        %2354 = vmatprep.mubr.f32.mxu0 0.0
        %2355 = vmatmul.mubr.f32.gmra.mrb[0].mxu0 %v2107
        %v2356 = vpop.f32.mrb[0].mxu0
        %v2357 = vadd.f32 0.0, %v2356
        %v2358 = vpop.f32.mrb[0].mxu0
        %2359 = vmatprep.mubr.f32.mxu0 0.0
        %2360 = vmatmul.mubr.f32.gmra.mrb[0].mxu0 %v2109
        %v2361 = vpop.f32.mrb[0].mxu0
        %v2362 = vadd.f32 0.0, %v2361
        %v2363 = vpop.f32.mrb[0].mxu0
        %2364 = vmatprep.mubr.f32.mxu0 0.0
        %2365 = vmatmul.mubr.f32.gmra.mrb[0].mxu0 %v2111
        %v2366 = vpop.f32.mrb[0].mxu0
        %v2367 = vadd.f32 0.0, %v2366
        %v2368 = vpop.f32.mrb[0].mxu0
        %2369 = vmatprep.mubr.f32.mxu0 0.0
        %2370 = vmatmul.mubr.f32.gmra.mrb[0].mxu0 %v2113
        %v2371 = vpop.f32.mrb[0].mxu0
        %v2372 = vadd.f32 0.0, %v2371
        %v2373 = vpop.f32.mrb[0].mxu0
        %2374 = vmatprep.mubr.f32.mxu0 0.0
        %2375 = vmatmul.mubr.f32.gmra.mrb[0].mxu0 %v2115
        %v2376 = vpop.f32.mrb[0].mxu0
        %v2377 = vadd.f32 0.0, %v2376
        %v2378 = vpop.f32.mrb[0].mxu0
        %2379 = vmatprep.mubr.f32.mxu0 0.0
        %2380 = vmatmul.mubr.f32.gmra.mrb[0].mxu0 %v2117
        %v2381 = vpop.f32.mrb[0].mxu0
        %v2382 = vadd.f32 0.0, %v2381
        %v2383 = vpop.f32.mrb[0].mxu0
        %2384 = vmatprep.mubr.f32.mxu0 0.0
        %2385 = vmatmul.mubr.f32.gmra.mrb[0].mxu0 %v2119
        %v2386 = vpop.f32.mrb[0].mxu0
        %v2387 = vadd.f32 0.0, %v2386
        %v2388 = vpop.f32.mrb[0].mxu0
        %2389 = vmatprep.mubr.f32.mxu0 0.0
        %2390 = vmatmul.mubr.f32.gmra.mrb[0].mxu0 %v2121
        %v2391 = vpop.f32.mrb[0].mxu0
        %v2392 = vadd.f32 0.0, %v2391
        %v2393 = vpop.f32.mrb[0].mxu0
        %2394 = vmatprep.mubr.f32.mxu0 0.0
        %2395 = vmatmul.mubr.f32.gmra.mrb[0].mxu0 %v2123
        %v2396 = vpop.f32.mrb[0].mxu0
        %v2397 = vadd.f32 0.0, %v2396
        %v2398 = vpop.f32.mrb[0].mxu0
        %2399 = vmatprep.mubr.f32.mxu0 0.0
        %2400 = vmatmul.mubr.f32.gmra.mrb[0].mxu0 %v2125
        %v2401 = vpop.f32.mrb[0].mxu0
        %v2402 = vadd.f32 0.0, %v2401
        %v2403 = vpop.f32.mrb[0].mxu0
        %2404 = vmatprep.mubr.f32.mxu0 0.0
        %2405 = vmatmul.mubr.f32.gmra.mrb[0].mxu0 %v2127
        %v2406 = vpop.f32.mrb[0].mxu0
        %v2407 = vadd.f32 0.0, %v2406
        %v2408 = vpop.f32.mrb[0].mxu0
        %2409 = vmatprep.mubr.f32.mxu0 0.0
        %2410 = vmatmul.mubr.f32.gmra.mrb[0].mxu0 %v2129
        %v2411 = vpop.f32.mrb[0].mxu0
        %v2412 = vadd.f32 0.0, %v2411
        %v2413 = vpop.f32.mrb[0].mxu0
        %2414 = vmatprep.mubr.f32.mxu0 0.0
        %2415 = vmatmul.mubr.f32.gmra.mrb[0].mxu0 %v2131
        %v2416 = vpop.f32.mrb[0].mxu0
        %v2417 = vadd.f32 0.0, %v2416
        %v2418 = vpop.f32.mrb[0].mxu0
        %2419 = vmatprep.mubr.f32.mxu0 0.0
        %2420 = vmatmul.mubr.f32.gmra.mrb[0].mxu0 %v2133
        %v2421 = vpop.f32.mrb[0].mxu0
        %v2422 = vadd.f32 0.0, %v2421
        %v2423 = vpop.f32.mrb[0].mxu0
        %2424 = vdwg.mxu0
        %2425 = vmatprep.subr.mxu0 0.0
        %2426 = vmatpush1.xpose.msra.mxu0 %v1626
        %2427 = vmatprep.subr.mxu0 0.0
        %2428 = vmatpush1.xpose.msra.mxu0 %v1632
        %2429 = vmatprep.subr.mxu0 0.0
        %2430 = vmatpush1.xpose.msra.mxu0 %v1638
        %2431 = vmatprep.subr.mxu0 0.0
        %2432 = vmatpush1.xpose.msra.mxu0 %v1644
        %2433 = vmatprep.subr.mxu0 0.0
        %2434 = vmatpush1.xpose.msra.mxu0 %v1650
        %2435 = vmatprep.subr.mxu0 0.0
        %2436 = vmatpush1.xpose.msra.mxu0 %v1656
        %2437 = vmatprep.subr.mxu0 0.0
        %2438 = vmatpush1.xpose.msra.mxu0 %v1662
        %2439 = vmatprep.subr.mxu0 0.0
        %2440 = vmatpush1.xpose.msra.mxu0 %v1668
        %2441 = vmatprep.subr.mxu0 0.0
        %2442 = vmatpush1.xpose.msra.mxu0 %v1674
        %2443 = vmatprep.subr.mxu0 0.0
        %2444 = vmatpush1.xpose.msra.mxu0 %v1680
        %2445 = vmatprep.subr.mxu0 0.0
        %2446 = vmatpush1.xpose.msra.mxu0 %v1686
        %2447 = vmatprep.subr.mxu0 0.0
        %2448 = vmatpush1.xpose.msra.mxu0 %v1692
        %2449 = vmatprep.subr.mxu0 0.0
        %2450 = vmatpush1.xpose.msra.mxu0 %v1698
        %2451 = vmatprep.subr.mxu0 0.0
        %2452 = vmatpush1.xpose.msra.mxu0 %v1704
        %2453 = vmatprep.subr.mxu0 0.0
        %2454 = vmatpush1.xpose.msra.mxu0 %v1710
        %2455 = vmatprep.subr.mxu0 0.0
        %2456 = vmatpush1.xpose.msra.mxu0 %v1716
        %2457 = vmatprep.subr.mxu0 0.0
        %2458 = vmatpush1.xpose.msra.mxu0 0.0
        %2459 = vmatprep.subr.mxu0 0.0
        %2460 = vmatpush1.xpose.msra.mxu0 0.0
        %2461 = vmatprep.subr.mxu0 0.0
        %2462 = vmatpush1.xpose.msra.mxu0 0.0
        %2463 = vmatprep.subr.mxu0 0.0
        %2464 = vmatpush1.xpose.msra.mxu0 0.0
        %2465 = vmatprep.subr.mxu0 0.0
        %2466 = vmatpush1.xpose.msra.mxu0 0.0
        %2467 = vmatprep.subr.mxu0 0.0
        %2468 = vmatpush1.xpose.msra.mxu0 0.0
        %2469 = vmatprep.subr.mxu0 0.0
        %2470 = vmatpush1.xpose.msra.mxu0 0.0
        %2471 = vmatprep.subr.mxu0 0.0
        %2472 = vmatpush1.xpose.msra.mxu0 0.0
        %2473 = vmatprep.subr.mxu0 0.0
        %2474 = vmatpush1.xpose.msra.mxu0 0.0
        %2475 = vmatprep.subr.mxu0 0.0
        %2476 = vmatpush1.xpose.msra.mxu0 0.0
        %2477 = vmatprep.subr.mxu0 0.0
        %2478 = vmatpush1.xpose.msra.mxu0 0.0
        %2479 = vmatprep.subr.mxu0 0.0
        %2480 = vmatpush1.xpose.msra.mxu0 0.0
        %2481 = vmatprep.subr.mxu0 0.0
        %2482 = vmatpush1.xpose.msra.mxu0 0.0
        %2483 = vmatprep.subr.mxu0 0.0
        %2484 = vmatpush1.xpose.msra.mxu0 0.0
        %2485 = vmatprep.subr.mxu0 0.0
        %2486 = vmatpush1.xpose.msra.mxu0 0.0
        %2487 = vmatprep.subr.mxu0 0.0
        %2488 = vmatpush1.xpose.msra.mxu0 0.0
        %2489 = vmatprep.mubr.f32.mxu0 0.0
        %2490 = vmatmul.mubr.f32.gmra.mrb[0].mxu0 %v2072
        %v2491 = vpop.f32.mrb[0].mxu0
        %v2492 = vadd.f32 0.0, %v2491
        %v2493 = vpop.f32.mrb[0].mxu0
        %2494 = vmatprep.mubr.f32.mxu0 0.0
        %2495 = vmatmul.mubr.f32.gmra.mrb[0].mxu0 %v2074
        %v2496 = vpop.f32.mrb[0].mxu0
        %v2497 = vadd.f32 0.0, %v2496
        %v2498 = vpop.f32.mrb[0].mxu0
        %2499 = vmatprep.mubr.f32.mxu0 0.0
        %2500 = vmatmul.mubr.f32.gmra.mrb[0].mxu0 %v2076
        %v2501 = vpop.f32.mrb[0].mxu0
        %v2502 = vadd.f32 0.0, %v2501
        %v2503 = vpop.f32.mrb[0].mxu0
        %2504 = vmatprep.mubr.f32.mxu0 0.0
        %2505 = vmatmul.mubr.f32.gmra.mrb[0].mxu0 %v2078
        %v2506 = vpop.f32.mrb[0].mxu0
        %v2507 = vadd.f32 0.0, %v2506
        %v2508 = vpop.f32.mrb[0].mxu0
        %2509 = vmatprep.mubr.f32.mxu0 0.0
        %2510 = vmatmul.mubr.f32.gmra.mrb[0].mxu0 %v2080
        %v2511 = vpop.f32.mrb[0].mxu0
        %v2512 = vadd.f32 0.0, %v2511
        %v2513 = vpop.f32.mrb[0].mxu0
        %2514 = vmatprep.mubr.f32.mxu0 0.0
        %2515 = vmatmul.mubr.f32.gmra.mrb[0].mxu0 %v2082
        %v2516 = vpop.f32.mrb[0].mxu0
        %v2517 = vadd.f32 0.0, %v2516
        %v2518 = vpop.f32.mrb[0].mxu0
        %2519 = vmatprep.mubr.f32.mxu0 0.0
        %2520 = vmatmul.mubr.f32.gmra.mrb[0].mxu0 %v2084
        %v2521 = vpop.f32.mrb[0].mxu0
        %v2522 = vadd.f32 0.0, %v2521
        %v2523 = vpop.f32.mrb[0].mxu0
        %2524 = vmatprep.mubr.f32.mxu0 0.0
        %2525 = vmatmul.mubr.f32.gmra.mrb[0].mxu0 %v2086
        %v2526 = vpop.f32.mrb[0].mxu0
        %v2527 = vadd.f32 0.0, %v2526
        %v2528 = vpop.f32.mrb[0].mxu0
        %2529 = vmatprep.mubr.f32.mxu0 0.0
        %2530 = vmatmul.mubr.f32.gmra.mrb[0].mxu0 %v2088
        %v2531 = vpop.f32.mrb[0].mxu0
        %v2532 = vadd.f32 0.0, %v2531
        %v2533 = vpop.f32.mrb[0].mxu0
        %2534 = vmatprep.mubr.f32.mxu0 0.0
        %2535 = vmatmul.mubr.f32.gmra.mrb[0].mxu0 %v2090
        %v2536 = vpop.f32.mrb[0].mxu0
        %v2537 = vadd.f32 0.0, %v2536
        %v2538 = vpop.f32.mrb[0].mxu0
        %2539 = vmatprep.mubr.f32.mxu0 0.0
        %2540 = vmatmul.mubr.f32.gmra.mrb[0].mxu0 %v2092
        %v2541 = vpop.f32.mrb[0].mxu0
        %v2542 = vadd.f32 0.0, %v2541
        %v2543 = vpop.f32.mrb[0].mxu0
        %2544 = vmatprep.mubr.f32.mxu0 0.0
        %2545 = vmatmul.mubr.f32.gmra.mrb[0].mxu0 %v2094
        %v2546 = vpop.f32.mrb[0].mxu0
        %v2547 = vadd.f32 0.0, %v2546
        %v2548 = vpop.f32.mrb[0].mxu0
        %2549 = vmatprep.mubr.f32.mxu0 0.0
        %2550 = vmatmul.mubr.f32.gmra.mrb[0].mxu0 %v2096
        %v2551 = vpop.f32.mrb[0].mxu0
        %v2552 = vadd.f32 0.0, %v2551
        %v2553 = vpop.f32.mrb[0].mxu0
        %2554 = vmatprep.mubr.f32.mxu0 0.0
        %2555 = vmatmul.mubr.f32.gmra.mrb[0].mxu0 %v2098
        %v2556 = vpop.f32.mrb[0].mxu0
        %v2557 = vadd.f32 0.0, %v2556
        %v2558 = vpop.f32.mrb[0].mxu0
        %2559 = vmatprep.mubr.f32.mxu0 0.0
        %2560 = vmatmul.mubr.f32.gmra.mrb[0].mxu0 %v2100
        %v2561 = vpop.f32.mrb[0].mxu0
        %v2562 = vadd.f32 0.0, %v2561
        %v2563 = vpop.f32.mrb[0].mxu0
        %2564 = vmatprep.mubr.f32.mxu0 0.0
        %2565 = vmatmul.mubr.f32.gmra.mrb[0].mxu0 %v2102
        %v2566 = vpop.f32.mrb[0].mxu0
        %v2567 = vadd.f32 0.0, %v2566
        %v2568 = vpop.f32.mrb[0].mxu0
        %2569 = vdwg.mxu0
        %2570 = vmatprep.subr.mxu0 0.0
        %2571 = vmatpush1.xpose.msra.mxu0 %v1722
        %2572 = vmatprep.subr.mxu0 0.0
        %2573 = vmatpush1.xpose.msra.mxu0 %v1728
        %2574 = vmatprep.subr.mxu0 0.0
        %2575 = vmatpush1.xpose.msra.mxu0 %v1734
        %2576 = vmatprep.subr.mxu0 0.0
        %2577 = vmatpush1.xpose.msra.mxu0 %v1740
        %2578 = vmatprep.subr.mxu0 0.0
        %2579 = vmatpush1.xpose.msra.mxu0 %v1746
        %2580 = vmatprep.subr.mxu0 0.0
        %2581 = vmatpush1.xpose.msra.mxu0 %v1752
        %2582 = vmatprep.subr.mxu0 0.0
        %2583 = vmatpush1.xpose.msra.mxu0 %v1758
        %2584 = vmatprep.subr.mxu0 0.0
        %2585 = vmatpush1.xpose.msra.mxu0 %v1764
        %2586 = vmatprep.subr.mxu0 0.0
        %2587 = vmatpush1.xpose.msra.mxu0 %v1770
        %2588 = vmatprep.subr.mxu0 0.0
        %2589 = vmatpush1.xpose.msra.mxu0 %v1776
        %2590 = vmatprep.subr.mxu0 0.0
        %2591 = vmatpush1.xpose.msra.mxu0 %v1782
        %2592 = vmatprep.subr.mxu0 0.0
        %2593 = vmatpush1.xpose.msra.mxu0 %v1788
        %2594 = vmatprep.subr.mxu0 0.0
        %2595 = vmatpush1.xpose.msra.mxu0 %v1794
        %2596 = vmatprep.subr.mxu0 0.0
        %2597 = vmatpush1.xpose.msra.mxu0 %v1800
        %2598 = vmatprep.subr.mxu0 0.0
        %2599 = vmatpush1.xpose.msra.mxu0 %v1806
        %2600 = vmatprep.subr.mxu0 0.0
        %2601 = vmatpush1.xpose.msra.mxu0 %v1812
        %2602 = vmatprep.subr.mxu0 0.0
        %2603 = vmatpush1.xpose.msra.mxu0 0.0
        %2604 = vmatprep.subr.mxu0 0.0
        %2605 = vmatpush1.xpose.msra.mxu0 0.0
        %2606 = vmatprep.subr.mxu0 0.0
        %2607 = vmatpush1.xpose.msra.mxu0 0.0
        %2608 = vmatprep.subr.mxu0 0.0
        %2609 = vmatpush1.xpose.msra.mxu0 0.0
        %2610 = vmatprep.subr.mxu0 0.0
        %2611 = vmatpush1.xpose.msra.mxu0 0.0
        %2612 = vmatprep.subr.mxu0 0.0
        %2613 = vmatpush1.xpose.msra.mxu0 0.0
        %2614 = vmatprep.subr.mxu0 0.0
        %2615 = vmatpush1.xpose.msra.mxu0 0.0
        %2616 = vmatprep.subr.mxu0 0.0
        %2617 = vmatpush1.xpose.msra.mxu0 0.0
        %2618 = vmatprep.subr.mxu0 0.0
        %2619 = vmatpush1.xpose.msra.mxu0 0.0
        %2620 = vmatprep.subr.mxu0 0.0
        %2621 = vmatpush1.xpose.msra.mxu0 0.0
        %2622 = vmatprep.subr.mxu0 0.0
        %2623 = vmatpush1.xpose.msra.mxu0 0.0
        %2624 = vmatprep.subr.mxu0 0.0
        %2625 = vmatpush1.xpose.msra.mxu0 0.0
        %2626 = vmatprep.subr.mxu0 0.0
        %2627 = vmatpush1.xpose.msra.mxu0 0.0
        %2628 = vmatprep.subr.mxu0 0.0
        %2629 = vmatpush1.xpose.msra.mxu0 0.0
        %2630 = vmatprep.subr.mxu0 0.0
        %2631 = vmatpush1.xpose.msra.mxu0 0.0
        %2632 = vmatprep.subr.mxu0 0.0
        %2633 = vmatpush1.xpose.msra.mxu0 0.0
        %2634 = vmatprep.mubr.f32.mxu0 0.0
        %2635 = vmatmul.mubr.f32.gmra.mrb[0].mxu0 %v2104
        %v2636 = vpop.f32.mrb[0].mxu0
        %v2637 = vadd.f32 0.0, %v2636
        %v2638 = vpop.f32.mrb[0].mxu0
        %2639 = vmatprep.mubr.f32.mxu0 0.0
        %2640 = vmatmul.mubr.f32.gmra.mrb[0].mxu0 %v2106
        %v2641 = vpop.f32.mrb[0].mxu0
        %v2642 = vadd.f32 0.0, %v2641
        %v2643 = vpop.f32.mrb[0].mxu0
        %2644 = vmatprep.mubr.f32.mxu0 0.0
        %2645 = vmatmul.mubr.f32.gmra.mrb[0].mxu0 %v2108
        %v2646 = vpop.f32.mrb[0].mxu0
        %v2647 = vadd.f32 0.0, %v2646
        %v2648 = vpop.f32.mrb[0].mxu0
        %2649 = vmatprep.mubr.f32.mxu0 0.0
        %2650 = vmatmul.mubr.f32.gmra.mrb[0].mxu0 %v2110
        %v2651 = vpop.f32.mrb[0].mxu0
        %v2652 = vadd.f32 0.0, %v2651
        %v2653 = vpop.f32.mrb[0].mxu0
        %2654 = vmatprep.mubr.f32.mxu0 0.0
        %2655 = vmatmul.mubr.f32.gmra.mrb[0].mxu0 %v2112
        %v2656 = vpop.f32.mrb[0].mxu0
        %v2657 = vadd.f32 0.0, %v2656
        %v2658 = vpop.f32.mrb[0].mxu0
        %2659 = vmatprep.mubr.f32.mxu0 0.0
        %2660 = vmatmul.mubr.f32.gmra.mrb[0].mxu0 %v2114
        %v2661 = vpop.f32.mrb[0].mxu0
        %v2662 = vadd.f32 0.0, %v2661
        %v2663 = vpop.f32.mrb[0].mxu0
        %2664 = vmatprep.mubr.f32.mxu0 0.0
        %2665 = vmatmul.mubr.f32.gmra.mrb[0].mxu0 %v2116
        %v2666 = vpop.f32.mrb[0].mxu0
        %v2667 = vadd.f32 0.0, %v2666
        %v2668 = vpop.f32.mrb[0].mxu0
        %2669 = vmatprep.mubr.f32.mxu0 0.0
        %2670 = vmatmul.mubr.f32.gmra.mrb[0].mxu0 %v2118
        %v2671 = vpop.f32.mrb[0].mxu0
        %v2672 = vadd.f32 0.0, %v2671
        %v2673 = vpop.f32.mrb[0].mxu0
        %2674 = vmatprep.mubr.f32.mxu0 0.0
        %2675 = vmatmul.mubr.f32.gmra.mrb[0].mxu0 %v2120
        %v2676 = vpop.f32.mrb[0].mxu0
        %v2677 = vadd.f32 0.0, %v2676
        %v2678 = vpop.f32.mrb[0].mxu0
        %2679 = vmatprep.mubr.f32.mxu0 0.0
        %2680 = vmatmul.mubr.f32.gmra.mrb[0].mxu0 %v2122
        %v2681 = vpop.f32.mrb[0].mxu0
        %v2682 = vadd.f32 0.0, %v2681
        %v2683 = vpop.f32.mrb[0].mxu0
        %2684 = vmatprep.mubr.f32.mxu0 0.0
        %2685 = vmatmul.mubr.f32.gmra.mrb[0].mxu0 %v2124
        %v2686 = vpop.f32.mrb[0].mxu0
        %v2687 = vadd.f32 0.0, %v2686
        %v2688 = vpop.f32.mrb[0].mxu0
        %2689 = vmatprep.mubr.f32.mxu0 0.0
        %2690 = vmatmul.mubr.f32.gmra.mrb[0].mxu0 %v2126
        %v2691 = vpop.f32.mrb[0].mxu0
        %v2692 = vadd.f32 0.0, %v2691
        %v2693 = vpop.f32.mrb[0].mxu0
        %2694 = vmatprep.mubr.f32.mxu0 0.0
        %2695 = vmatmul.mubr.f32.gmra.mrb[0].mxu0 %v2128
        %v2696 = vpop.f32.mrb[0].mxu0
        %v2697 = vadd.f32 0.0, %v2696
        %v2698 = vpop.f32.mrb[0].mxu0
        %2699 = vmatprep.mubr.f32.mxu0 0.0
        %2700 = vmatmul.mubr.f32.gmra.mrb[0].mxu0 %v2130
        %v2701 = vpop.f32.mrb[0].mxu0
        %v2702 = vadd.f32 0.0, %v2701
        %v2703 = vpop.f32.mrb[0].mxu0
        %2704 = vmatprep.mubr.f32.mxu0 0.0
        %2705 = vmatmul.mubr.f32.gmra.mrb[0].mxu0 %v2132
        %v2706 = vpop.f32.mrb[0].mxu0
        %v2707 = vadd.f32 0.0, %v2706
        %v2708 = vpop.f32.mrb[0].mxu0
        %2709 = vmatprep.mubr.f32.mxu0 0.0
        %2710 = vmatmul.mubr.f32.gmra.mrb[0].mxu0 %v2134
        %v2711 = vpop.f32.mrb[0].mxu0
        %v2712 = vadd.f32 0.0, %v2711
        %v2713 = vpop.f32.mrb[0].mxu0
        %2714 = vdwg.mxu0
        %v2715 = vlaneseq
        %v2716 = vshrl.u32 %v2715, 7
        %v2717 = vadd.s32 %v2716, 8
        %v2718 = vadd.s32 %v2716, 16
        %v2719 = vadd.s32 %v2716, 24
        %v2720 = vadd.s32 %v2716, 32
        %v2721 = vadd.s32 %v2716, 40
        %v2722 = vadd.s32 %v2716, 48
        %v2723 = vadd.s32 %v2716, 56
        %v2724 = vadd.s32 %v2716, 64
        %v2725 = vadd.s32 %v2716, 72
        %v2726 = vadd.s32 %v2716, 80
        %v2727 = vadd.s32 %v2716, 88
        %v2728 = vadd.s32 %v2716, 96
        %v2729 = vadd.s32 %v2716, 104
        %v2730 = vadd.s32 %v2716, 112
        %v2731 = vadd.s32 %v2716, 120
        %v2732 = vlaneseq
        %v2733 = vand.u32 %v2732, 127
        %vm2734 = vcmp.ge.s32.totalorder %v2716, %v2733
        %vm2735 = vcmp.ge.s32.totalorder %v2717, %v2733
        %vm2736 = vcmp.ge.s32.totalorder %v2718, %v2733
        %vm2737 = vcmp.ge.s32.totalorder %v2719, %v2733
        %vm2738 = vcmp.ge.s32.totalorder %v2720, %v2733
        %vm2739 = vcmp.ge.s32.totalorder %v2721, %v2733
        %vm2740 = vcmp.ge.s32.totalorder %v2722, %v2733
        %vm2741 = vcmp.ge.s32.totalorder %v2723, %v2733
        %vm2742 = vcmp.ge.s32.totalorder %v2724, %v2733
        %vm2743 = vcmp.ge.s32.totalorder %v2725, %v2733
        %vm2744 = vcmp.ge.s32.totalorder %v2726, %v2733
        %vm2745 = vcmp.ge.s32.totalorder %v2727, %v2733
        %vm2746 = vcmp.ge.s32.totalorder %v2728, %v2733
        %vm2747 = vcmp.ge.s32.totalorder %v2729, %v2733
        %vm2748 = vcmp.ge.s32.totalorder %v2730, %v2733
        %vm2749 = vcmp.ge.s32.totalorder %v2731, %v2733
        %v2750 = vsel %vm2734, %v2202, -1e+30
        %v2751 = vsel %vm2735, %v2207, -1e+30
        %v2752 = vsel %vm2736, %v2212, -1e+30
        %v2753 = vsel %vm2737, %v2217, -1e+30
        %v2754 = vsel %vm2738, %v2222, -1e+30
        %v2755 = vsel %vm2739, %v2227, -1e+30
        %v2756 = vsel %vm2740, %v2232, -1e+30
        %v2757 = vsel %vm2741, %v2237, -1e+30
        %v2758 = vsel %vm2742, %v2242, -1e+30
        %v2759 = vsel %vm2743, %v2247, -1e+30
        %v2760 = vsel %vm2744, %v2252, -1e+30
        %v2761 = vsel %vm2745, %v2257, -1e+30
        %v2762 = vsel %vm2746, %v2262, -1e+30
        %v2763 = vsel %vm2747, %v2267, -1e+30
        %v2764 = vsel %vm2748, %v2272, -1e+30
        %v2765 = vsel %vm2749, %v2277, -1e+30
        %v2766 = vsel %vm2734, %v2347, -1e+30
        %v2767 = vsel %vm2735, %v2352, -1e+30
        %v2768 = vsel %vm2736, %v2357, -1e+30
        %v2769 = vsel %vm2737, %v2362, -1e+30
        %v2770 = vsel %vm2738, %v2367, -1e+30
        %v2771 = vsel %vm2739, %v2372, -1e+30
        %v2772 = vsel %vm2740, %v2377, -1e+30
        %v2773 = vsel %vm2741, %v2382, -1e+30
        %v2774 = vsel %vm2742, %v2387, -1e+30
        %v2775 = vsel %vm2743, %v2392, -1e+30
        %v2776 = vsel %vm2744, %v2397, -1e+30
        %v2777 = vsel %vm2745, %v2402, -1e+30
        %v2778 = vsel %vm2746, %v2407, -1e+30
        %v2779 = vsel %vm2747, %v2412, -1e+30
        %v2780 = vsel %vm2748, %v2417, -1e+30
        %v2781 = vsel %vm2749, %v2422, -1e+30
        %v2782 = vsel %vm2734, %v2492, -1e+30
        %v2783 = vsel %vm2735, %v2497, -1e+30
        %v2784 = vsel %vm2736, %v2502, -1e+30
        %v2785 = vsel %vm2737, %v2507, -1e+30
        %v2786 = vsel %vm2738, %v2512, -1e+30
        %v2787 = vsel %vm2739, %v2517, -1e+30
        %v2788 = vsel %vm2740, %v2522, -1e+30
        %v2789 = vsel %vm2741, %v2527, -1e+30
        %v2790 = vsel %vm2742, %v2532, -1e+30
        %v2791 = vsel %vm2743, %v2537, -1e+30
        %v2792 = vsel %vm2744, %v2542, -1e+30
        %v2793 = vsel %vm2745, %v2547, -1e+30
        %v2794 = vsel %vm2746, %v2552, -1e+30
        %v2795 = vsel %vm2747, %v2557, -1e+30
        %v2796 = vsel %vm2748, %v2562, -1e+30
        %v2797 = vsel %vm2749, %v2567, -1e+30
        %v2798 = vsel %vm2734, %v2637, -1e+30
        %v2799 = vsel %vm2735, %v2642, -1e+30
        %v2800 = vsel %vm2736, %v2647, -1e+30
        %v2801 = vsel %vm2737, %v2652, -1e+30
        %v2802 = vsel %vm2738, %v2657, -1e+30
        %v2803 = vsel %vm2739, %v2662, -1e+30
        %v2804 = vsel %vm2740, %v2667, -1e+30
        %v2805 = vsel %vm2741, %v2672, -1e+30
        %v2806 = vsel %vm2742, %v2677, -1e+30
        %v2807 = vsel %vm2743, %v2682, -1e+30
        %v2808 = vsel %vm2744, %v2687, -1e+30
        %v2809 = vsel %vm2745, %v2692, -1e+30
        %v2810 = vsel %vm2746, %v2697, -1e+30
        %v2811 = vsel %vm2747, %v2702, -1e+30
        %v2812 = vsel %vm2748, %v2707, -1e+30
        %v2813 = vsel %vm2749, %v2712, -1e+30
        %2814 = vmax.xlane.f32.xlu0 %v2750
        %v2815 = vpop.xlane.xlu0 %2814
        %2816 = vmax.xlane.f32.xlu0 %v2751
        %v2817 = vpop.xlane.xlu0 %2816
        %2818 = vmax.xlane.f32.xlu0 %v2752
        %v2819 = vpop.xlane.xlu0 %2818
        %2820 = vmax.xlane.f32.xlu0 %v2753
        %v2821 = vpop.xlane.xlu0 %2820
        %2822 = vmax.xlane.f32.xlu0 %v2754
        %v2823 = vpop.xlane.xlu0 %2822
        %2824 = vmax.xlane.f32.xlu0 %v2755
        %v2825 = vpop.xlane.xlu0 %2824
        %2826 = vmax.xlane.f32.xlu0 %v2756
        %v2827 = vpop.xlane.xlu0 %2826
        %2828 = vmax.xlane.f32.xlu0 %v2757
        %v2829 = vpop.xlane.xlu0 %2828
        %2830 = vmax.xlane.f32.xlu0 %v2758
        %v2831 = vpop.xlane.xlu0 %2830
        %2832 = vmax.xlane.f32.xlu0 %v2759
        %v2833 = vpop.xlane.xlu0 %2832
        %2834 = vmax.xlane.f32.xlu0 %v2760
        %v2835 = vpop.xlane.xlu0 %2834
        %2836 = vmax.xlane.f32.xlu0 %v2761
        %v2837 = vpop.xlane.xlu0 %2836
        %2838 = vmax.xlane.f32.xlu0 %v2762
        %v2839 = vpop.xlane.xlu0 %2838
        %2840 = vmax.xlane.f32.xlu0 %v2763
        %v2841 = vpop.xlane.xlu0 %2840
        %2842 = vmax.xlane.f32.xlu0 %v2764
        %v2843 = vpop.xlane.xlu0 %2842
        %2844 = vmax.xlane.f32.xlu0 %v2765
        %v2845 = vpop.xlane.xlu0 %2844
        %2846 = vmax.xlane.f32.xlu0 %v2766
        %v2847 = vpop.xlane.xlu0 %2846
        %2848 = vmax.xlane.f32.xlu0 %v2767
        %v2849 = vpop.xlane.xlu0 %2848
        %2850 = vmax.xlane.f32.xlu0 %v2768
        %v2851 = vpop.xlane.xlu0 %2850
        %2852 = vmax.xlane.f32.xlu0 %v2769
        %v2853 = vpop.xlane.xlu0 %2852
        %2854 = vmax.xlane.f32.xlu0 %v2770
        %v2855 = vpop.xlane.xlu0 %2854
        %2856 = vmax.xlane.f32.xlu0 %v2771
        %v2857 = vpop.xlane.xlu0 %2856
        %2858 = vmax.xlane.f32.xlu0 %v2772
        %v2859 = vpop.xlane.xlu0 %2858
        %2860 = vmax.xlane.f32.xlu0 %v2773
        %v2861 = vpop.xlane.xlu0 %2860
        %2862 = vmax.xlane.f32.xlu0 %v2774
        %v2863 = vpop.xlane.xlu0 %2862
        %2864 = vmax.xlane.f32.xlu0 %v2775
        %v2865 = vpop.xlane.xlu0 %2864
        %2866 = vmax.xlane.f32.xlu0 %v2776
        %v2867 = vpop.xlane.xlu0 %2866
        %2868 = vmax.xlane.f32.xlu0 %v2777
        %v2869 = vpop.xlane.xlu0 %2868
        %2870 = vmax.xlane.f32.xlu0 %v2778
        %v2871 = vpop.xlane.xlu0 %2870
        %2872 = vmax.xlane.f32.xlu0 %v2779
        %v2873 = vpop.xlane.xlu0 %2872
        %2874 = vmax.xlane.f32.xlu0 %v2780
        %v2875 = vpop.xlane.xlu0 %2874
        %2876 = vmax.xlane.f32.xlu0 %v2781
        %v2877 = vpop.xlane.xlu0 %2876
        %2878 = vmax.xlane.f32.xlu0 %v2782
        %v2879 = vpop.xlane.xlu0 %2878
        %2880 = vmax.xlane.f32.xlu0 %v2783
        %v2881 = vpop.xlane.xlu0 %2880
        %2882 = vmax.xlane.f32.xlu0 %v2784
        %v2883 = vpop.xlane.xlu0 %2882
        %2884 = vmax.xlane.f32.xlu0 %v2785
        %v2885 = vpop.xlane.xlu0 %2884
        %2886 = vmax.xlane.f32.xlu0 %v2786
        %v2887 = vpop.xlane.xlu0 %2886
        %2888 = vmax.xlane.f32.xlu0 %v2787
        %v2889 = vpop.xlane.xlu0 %2888
        %2890 = vmax.xlane.f32.xlu0 %v2788
        %v2891 = vpop.xlane.xlu0 %2890
        %2892 = vmax.xlane.f32.xlu0 %v2789
        %v2893 = vpop.xlane.xlu0 %2892
        %2894 = vmax.xlane.f32.xlu0 %v2790
        %v2895 = vpop.xlane.xlu0 %2894
        %2896 = vmax.xlane.f32.xlu0 %v2791
        %v2897 = vpop.xlane.xlu0 %2896
        %2898 = vmax.xlane.f32.xlu0 %v2792
        %v2899 = vpop.xlane.xlu0 %2898
        %2900 = vmax.xlane.f32.xlu0 %v2793
        %v2901 = vpop.xlane.xlu0 %2900
        %2902 = vmax.xlane.f32.xlu0 %v2794
        %v2903 = vpop.xlane.xlu0 %2902
        %2904 = vmax.xlane.f32.xlu0 %v2795
        %v2905 = vpop.xlane.xlu0 %2904
        %2906 = vmax.xlane.f32.xlu0 %v2796
        %v2907 = vpop.xlane.xlu0 %2906
        %2908 = vmax.xlane.f32.xlu0 %v2797
        %v2909 = vpop.xlane.xlu0 %2908
        %2910 = vmax.xlane.f32.xlu0 %v2798
        %v2911 = vpop.xlane.xlu0 %2910
        %2912 = vmax.xlane.f32.xlu0 %v2799
        %v2913 = vpop.xlane.xlu0 %2912
        %2914 = vmax.xlane.f32.xlu0 %v2800
        %v2915 = vpop.xlane.xlu0 %2914
        %2916 = vmax.xlane.f32.xlu0 %v2801
        %v2917 = vpop.xlane.xlu0 %2916
        %2918 = vmax.xlane.f32.xlu0 %v2802
        %v2919 = vpop.xlane.xlu0 %2918
        %2920 = vmax.xlane.f32.xlu0 %v2803
        %v2921 = vpop.xlane.xlu0 %2920
        %2922 = vmax.xlane.f32.xlu0 %v2804
        %v2923 = vpop.xlane.xlu0 %2922
        %2924 = vmax.xlane.f32.xlu0 %v2805
        %v2925 = vpop.xlane.xlu0 %2924
        %2926 = vmax.xlane.f32.xlu0 %v2806
        %v2927 = vpop.xlane.xlu0 %2926
        %2928 = vmax.xlane.f32.xlu0 %v2807
        %v2929 = vpop.xlane.xlu0 %2928
        %2930 = vmax.xlane.f32.xlu0 %v2808
        %v2931 = vpop.xlane.xlu0 %2930
        %2932 = vmax.xlane.f32.xlu0 %v2809
        %v2933 = vpop.xlane.xlu0 %2932
        %2934 = vmax.xlane.f32.xlu0 %v2810
        %v2935 = vpop.xlane.xlu0 %2934
        %2936 = vmax.xlane.f32.xlu0 %v2811
        %v2937 = vpop.xlane.xlu0 %2936
        %2938 = vmax.xlane.f32.xlu0 %v2812
        %v2939 = vpop.xlane.xlu0 %2938
        %2940 = vmax.xlane.f32.xlu0 %v2813
        %v2941 = vpop.xlane.xlu0 %2940
        %v2942 = vsub.f32 %v2750, %v2815
        %v2943 = vsub.f32 %v2751, %v2817
        %v2944 = vsub.f32 %v2752, %v2819
        %v2945 = vsub.f32 %v2753, %v2821
        %v2946 = vsub.f32 %v2754, %v2823
        %v2947 = vsub.f32 %v2755, %v2825
        %v2948 = vsub.f32 %v2756, %v2827
        %v2949 = vsub.f32 %v2757, %v2829
        %v2950 = vsub.f32 %v2758, %v2831
        %v2951 = vsub.f32 %v2759, %v2833
        %v2952 = vsub.f32 %v2760, %v2835
        %v2953 = vsub.f32 %v2761, %v2837
        %v2954 = vsub.f32 %v2762, %v2839
        %v2955 = vsub.f32 %v2763, %v2841
        %v2956 = vsub.f32 %v2764, %v2843
        %v2957 = vsub.f32 %v2765, %v2845
        %v2958 = vsub.f32 %v2766, %v2847
        %v2959 = vsub.f32 %v2767, %v2849
        %v2960 = vsub.f32 %v2768, %v2851
        %v2961 = vsub.f32 %v2769, %v2853
        %v2962 = vsub.f32 %v2770, %v2855
        %v2963 = vsub.f32 %v2771, %v2857
        %v2964 = vsub.f32 %v2772, %v2859
        %v2965 = vsub.f32 %v2773, %v2861
        %v2966 = vsub.f32 %v2774, %v2863
        %v2967 = vsub.f32 %v2775, %v2865
        %v2968 = vsub.f32 %v2776, %v2867
        %v2969 = vsub.f32 %v2777, %v2869
        %v2970 = vsub.f32 %v2778, %v2871
        %v2971 = vsub.f32 %v2779, %v2873
        %v2972 = vsub.f32 %v2780, %v2875
        %v2973 = vsub.f32 %v2781, %v2877
        %v2974 = vsub.f32 %v2782, %v2879
        %v2975 = vsub.f32 %v2783, %v2881
        %v2976 = vsub.f32 %v2784, %v2883
        %v2977 = vsub.f32 %v2785, %v2885
        %v2978 = vsub.f32 %v2786, %v2887
        %v2979 = vsub.f32 %v2787, %v2889
        %v2980 = vsub.f32 %v2788, %v2891
        %v2981 = vsub.f32 %v2789, %v2893
        %v2982 = vsub.f32 %v2790, %v2895
        %v2983 = vsub.f32 %v2791, %v2897
        %v2984 = vsub.f32 %v2792, %v2899
        %v2985 = vsub.f32 %v2793, %v2901
        %v2986 = vsub.f32 %v2794, %v2903
        %v2987 = vsub.f32 %v2795, %v2905
        %v2988 = vsub.f32 %v2796, %v2907
        %v2989 = vsub.f32 %v2797, %v2909
        %v2990 = vsub.f32 %v2798, %v2911
        %v2991 = vsub.f32 %v2799, %v2913
        %v2992 = vsub.f32 %v2800, %v2915
        %v2993 = vsub.f32 %v2801, %v2917
        %v2994 = vsub.f32 %v2802, %v2919
        %v2995 = vsub.f32 %v2803, %v2921
        %v2996 = vsub.f32 %v2804, %v2923
        %v2997 = vsub.f32 %v2805, %v2925
        %v2998 = vsub.f32 %v2806, %v2927
        %v2999 = vsub.f32 %v2807, %v2929
        %v3000 = vsub.f32 %v2808, %v2931
        %v3001 = vsub.f32 %v2809, %v2933
        %v3002 = vsub.f32 %v2810, %v2935
        %v3003 = vsub.f32 %v2811, %v2937
        %v3004 = vsub.f32 %v2812, %v2939
        %v3005 = vsub.f32 %v2813, %v2941
        %v3006 = vmul.f32 %v2942, 1.442695
        %v3007 = vpow.pop %v3006
        %v3008 = vmul.f32 %v2943, 1.442695
        %v3009 = vpow.pop %v3008
        %v3010 = vmul.f32 %v2944, 1.442695
        %v3011 = vpow.pop %v3010
        %v3012 = vmul.f32 %v2945, 1.442695
        %v3013 = vpow.pop %v3012
        %v3014 = vmul.f32 %v2946, 1.442695
        %v3015 = vpow.pop %v3014
        %v3016 = vmul.f32 %v2947, 1.442695
        %v3017 = vpow.pop %v3016
        %v3018 = vmul.f32 %v2948, 1.442695
        %v3019 = vpow.pop %v3018
        %v3020 = vmul.f32 %v2949, 1.442695
        %v3021 = vpow.pop %v3020
        %v3022 = vmul.f32 %v2950, 1.442695
        %v3023 = vpow.pop %v3022
        %v3024 = vmul.f32 %v2951, 1.442695
        %v3025 = vpow.pop %v3024
        %v3026 = vmul.f32 %v2952, 1.442695
        %v3027 = vpow.pop %v3026
        %v3028 = vmul.f32 %v2953, 1.442695
        %v3029 = vpow.pop %v3028
        %v3030 = vmul.f32 %v2954, 1.442695
        %v3031 = vpow.pop %v3030
        %v3032 = vmul.f32 %v2955, 1.442695
        %v3033 = vpow.pop %v3032
        %v3034 = vmul.f32 %v2956, 1.442695
        %v3035 = vpow.pop %v3034
        %v3036 = vmul.f32 %v2957, 1.442695
        %v3037 = vpow.pop %v3036
        %v3038 = vmul.f32 %v2958, 1.442695
        %v3039 = vpow.pop %v3038
        %v3040 = vmul.f32 %v2959, 1.442695
        %v3041 = vpow.pop %v3040
        %v3042 = vmul.f32 %v2960, 1.442695
        %v3043 = vpow.pop %v3042
        %v3044 = vmul.f32 %v2961, 1.442695
        %v3045 = vpow.pop %v3044
        %v3046 = vmul.f32 %v2962, 1.442695
        %v3047 = vpow.pop %v3046
        %v3048 = vmul.f32 %v2963, 1.442695
        %v3049 = vpow.pop %v3048
        %v3050 = vmul.f32 %v2964, 1.442695
        %v3051 = vpow.pop %v3050
        %v3052 = vmul.f32 %v2965, 1.442695
        %v3053 = vpow.pop %v3052
        %v3054 = vmul.f32 %v2966, 1.442695
        %v3055 = vpow.pop %v3054
        %v3056 = vmul.f32 %v2967, 1.442695
        %v3057 = vpow.pop %v3056
        %v3058 = vmul.f32 %v2968, 1.442695
        %v3059 = vpow.pop %v3058
        %v3060 = vmul.f32 %v2969, 1.442695
        %v3061 = vpow.pop %v3060
        %v3062 = vmul.f32 %v2970, 1.442695
        %v3063 = vpow.pop %v3062
        %v3064 = vmul.f32 %v2971, 1.442695
        %v3065 = vpow.pop %v3064
        %v3066 = vmul.f32 %v2972, 1.442695
        %v3067 = vpow.pop %v3066
        %v3068 = vmul.f32 %v2973, 1.442695
        %v3069 = vpow.pop %v3068
        %v3070 = vmul.f32 %v2974, 1.442695
        %v3071 = vpow.pop %v3070
        %v3072 = vmul.f32 %v2975, 1.442695
        %v3073 = vpow.pop %v3072
        %v3074 = vmul.f32 %v2976, 1.442695
        %v3075 = vpow.pop %v3074
        %v3076 = vmul.f32 %v2977, 1.442695
        %v3077 = vpow.pop %v3076
        %v3078 = vmul.f32 %v2978, 1.442695
        %v3079 = vpow.pop %v3078
        %v3080 = vmul.f32 %v2979, 1.442695
        %v3081 = vpow.pop %v3080
        %v3082 = vmul.f32 %v2980, 1.442695
        %v3083 = vpow.pop %v3082
        %v3084 = vmul.f32 %v2981, 1.442695
        %v3085 = vpow.pop %v3084
        %v3086 = vmul.f32 %v2982, 1.442695
        %v3087 = vpow.pop %v3086
        %v3088 = vmul.f32 %v2983, 1.442695
        %v3089 = vpow.pop %v3088
        %v3090 = vmul.f32 %v2984, 1.442695
        %v3091 = vpow.pop %v3090
        %v3092 = vmul.f32 %v2985, 1.442695
        %v3093 = vpow.pop %v3092
        %v3094 = vmul.f32 %v2986, 1.442695
        %v3095 = vpow.pop %v3094
        %v3096 = vmul.f32 %v2987, 1.442695
        %v3097 = vpow.pop %v3096
        %v3098 = vmul.f32 %v2988, 1.442695
        %v3099 = vpow.pop %v3098
        %v3100 = vmul.f32 %v2989, 1.442695
        %v3101 = vpow.pop %v3100
        %v3102 = vmul.f32 %v2990, 1.442695
        %v3103 = vpow.pop %v3102
        %v3104 = vmul.f32 %v2991, 1.442695
        %v3105 = vpow.pop %v3104
        %v3106 = vmul.f32 %v2992, 1.442695
        %v3107 = vpow.pop %v3106
        %v3108 = vmul.f32 %v2993, 1.442695
        %v3109 = vpow.pop %v3108
        %v3110 = vmul.f32 %v2994, 1.442695
        %v3111 = vpow.pop %v3110
        %v3112 = vmul.f32 %v2995, 1.442695
        %v3113 = vpow.pop %v3112
        %v3114 = vmul.f32 %v2996, 1.442695
        %v3115 = vpow.pop %v3114
        %v3116 = vmul.f32 %v2997, 1.442695
        %v3117 = vpow.pop %v3116
        %v3118 = vmul.f32 %v2998, 1.442695
        %v3119 = vpow.pop %v3118
        %v3120 = vmul.f32 %v2999, 1.442695
        %v3121 = vpow.pop %v3120
        %v3122 = vmul.f32 %v3000, 1.442695
        %v3123 = vpow.pop %v3122
        %v3124 = vmul.f32 %v3001, 1.442695
        %v3125 = vpow.pop %v3124
        %v3126 = vmul.f32 %v3002, 1.442695
        %v3127 = vpow.pop %v3126
        %v3128 = vmul.f32 %v3003, 1.442695
        %v3129 = vpow.pop %v3128
        %v3130 = vmul.f32 %v3004, 1.442695
        %v3131 = vpow.pop %v3130
        %v3132 = vmul.f32 %v3005, 1.442695
        %v3133 = vpow.pop %v3132
        %3134 = vadd.xlane.f32.xlu0 %v3007
        %v3135 = vpop.xlane.xlu0 %3134
        %3136 = vadd.xlane.f32.xlu0 %v3009
        %v3137 = vpop.xlane.xlu0 %3136
        %3138 = vadd.xlane.f32.xlu0 %v3011
        %v3139 = vpop.xlane.xlu0 %3138
        %3140 = vadd.xlane.f32.xlu0 %v3013
        %v3141 = vpop.xlane.xlu0 %3140
        %3142 = vadd.xlane.f32.xlu0 %v3015
        %v3143 = vpop.xlane.xlu0 %3142
        %3144 = vadd.xlane.f32.xlu0 %v3017
        %v3145 = vpop.xlane.xlu0 %3144
        %3146 = vadd.xlane.f32.xlu0 %v3019
        %v3147 = vpop.xlane.xlu0 %3146
        %3148 = vadd.xlane.f32.xlu0 %v3021
        %v3149 = vpop.xlane.xlu0 %3148
        %3150 = vadd.xlane.f32.xlu0 %v3023
        %v3151 = vpop.xlane.xlu0 %3150
        %3152 = vadd.xlane.f32.xlu0 %v3025
        %v3153 = vpop.xlane.xlu0 %3152
        %3154 = vadd.xlane.f32.xlu0 %v3027
        %v3155 = vpop.xlane.xlu0 %3154
        %3156 = vadd.xlane.f32.xlu0 %v3029
        %v3157 = vpop.xlane.xlu0 %3156
        %3158 = vadd.xlane.f32.xlu0 %v3031
        %v3159 = vpop.xlane.xlu0 %3158
        %3160 = vadd.xlane.f32.xlu0 %v3033
        %v3161 = vpop.xlane.xlu0 %3160
        %3162 = vadd.xlane.f32.xlu0 %v3035
        %v3163 = vpop.xlane.xlu0 %3162
        %3164 = vadd.xlane.f32.xlu0 %v3037
        %v3165 = vpop.xlane.xlu0 %3164
        %3166 = vadd.xlane.f32.xlu0 %v3039
        %v3167 = vpop.xlane.xlu0 %3166
        %3168 = vadd.xlane.f32.xlu0 %v3041
        %v3169 = vpop.xlane.xlu0 %3168
        %3170 = vadd.xlane.f32.xlu0 %v3043
        %v3171 = vpop.xlane.xlu0 %3170
        %3172 = vadd.xlane.f32.xlu0 %v3045
        %v3173 = vpop.xlane.xlu0 %3172
        %3174 = vadd.xlane.f32.xlu0 %v3047
        %v3175 = vpop.xlane.xlu0 %3174
        %3176 = vadd.xlane.f32.xlu0 %v3049
        %v3177 = vpop.xlane.xlu0 %3176
        %3178 = vadd.xlane.f32.xlu0 %v3051
        %v3179 = vpop.xlane.xlu0 %3178
        %3180 = vadd.xlane.f32.xlu0 %v3053
        %v3181 = vpop.xlane.xlu0 %3180
        %3182 = vadd.xlane.f32.xlu0 %v3055
        %v3183 = vpop.xlane.xlu0 %3182
        %3184 = vadd.xlane.f32.xlu0 %v3057
        %v3185 = vpop.xlane.xlu0 %3184
        %3186 = vadd.xlane.f32.xlu0 %v3059
        %v3187 = vpop.xlane.xlu0 %3186
        %3188 = vadd.xlane.f32.xlu0 %v3061
        %v3189 = vpop.xlane.xlu0 %3188
        %3190 = vadd.xlane.f32.xlu0 %v3063
        %v3191 = vpop.xlane.xlu0 %3190
        %3192 = vadd.xlane.f32.xlu0 %v3065
        %v3193 = vpop.xlane.xlu0 %3192
        %3194 = vadd.xlane.f32.xlu0 %v3067
        %v3195 = vpop.xlane.xlu0 %3194
        %3196 = vadd.xlane.f32.xlu0 %v3069
        %v3197 = vpop.xlane.xlu0 %3196
        %3198 = vadd.xlane.f32.xlu0 %v3071
        %v3199 = vpop.xlane.xlu0 %3198
        %3200 = vadd.xlane.f32.xlu0 %v3073
        %v3201 = vpop.xlane.xlu0 %3200
        %3202 = vadd.xlane.f32.xlu0 %v3075
        %v3203 = vpop.xlane.xlu0 %3202
        %3204 = vadd.xlane.f32.xlu0 %v3077
        %v3205 = vpop.xlane.xlu0 %3204
        %3206 = vadd.xlane.f32.xlu0 %v3079
        %v3207 = vpop.xlane.xlu0 %3206
        %3208 = vadd.xlane.f32.xlu0 %v3081
        %v3209 = vpop.xlane.xlu0 %3208
        %3210 = vadd.xlane.f32.xlu0 %v3083
        %v3211 = vpop.xlane.xlu0 %3210
        %3212 = vadd.xlane.f32.xlu0 %v3085
        %v3213 = vpop.xlane.xlu0 %3212
        %3214 = vadd.xlane.f32.xlu0 %v3087
        %v3215 = vpop.xlane.xlu0 %3214
        %3216 = vadd.xlane.f32.xlu0 %v3089
        %v3217 = vpop.xlane.xlu0 %3216
        %3218 = vadd.xlane.f32.xlu0 %v3091
        %v3219 = vpop.xlane.xlu0 %3218
        %3220 = vadd.xlane.f32.xlu0 %v3093
        %v3221 = vpop.xlane.xlu0 %3220
        %3222 = vadd.xlane.f32.xlu0 %v3095
        %v3223 = vpop.xlane.xlu0 %3222
        %3224 = vadd.xlane.f32.xlu0 %v3097
        %v3225 = vpop.xlane.xlu0 %3224
        %3226 = vadd.xlane.f32.xlu0 %v3099
        %v3227 = vpop.xlane.xlu0 %3226
        %3228 = vadd.xlane.f32.xlu0 %v3101
        %v3229 = vpop.xlane.xlu0 %3228
        %3230 = vadd.xlane.f32.xlu0 %v3103
        %v3231 = vpop.xlane.xlu0 %3230
        %3232 = vadd.xlane.f32.xlu0 %v3105
        %v3233 = vpop.xlane.xlu0 %3232
        %3234 = vadd.xlane.f32.xlu0 %v3107
        %v3235 = vpop.xlane.xlu0 %3234
        %3236 = vadd.xlane.f32.xlu0 %v3109
        %v3237 = vpop.xlane.xlu0 %3236
        %3238 = vadd.xlane.f32.xlu0 %v3111
        %v3239 = vpop.xlane.xlu0 %3238
        %3240 = vadd.xlane.f32.xlu0 %v3113
        %v3241 = vpop.xlane.xlu0 %3240
        %3242 = vadd.xlane.f32.xlu0 %v3115
        %v3243 = vpop.xlane.xlu0 %3242
        %3244 = vadd.xlane.f32.xlu0 %v3117
        %v3245 = vpop.xlane.xlu0 %3244
        %3246 = vadd.xlane.f32.xlu0 %v3119
        %v3247 = vpop.xlane.xlu0 %3246
        %3248 = vadd.xlane.f32.xlu0 %v3121
        %v3249 = vpop.xlane.xlu0 %3248
        %3250 = vadd.xlane.f32.xlu0 %v3123
        %v3251 = vpop.xlane.xlu0 %3250
        %3252 = vadd.xlane.f32.xlu0 %v3125
        %v3253 = vpop.xlane.xlu0 %3252
        %3254 = vadd.xlane.f32.xlu0 %v3127
        %v3255 = vpop.xlane.xlu0 %3254
        %3256 = vadd.xlane.f32.xlu0 %v3129
        %v3257 = vpop.xlane.xlu0 %3256
        %3258 = vadd.xlane.f32.xlu0 %v3131
        %v3259 = vpop.xlane.xlu0 %3258
        %3260 = vadd.xlane.f32.xlu0 %v3133
        %v3261 = vpop.xlane.xlu0 %3260
        %v3262 = vrcp.pop %v3135
        %v3263 = vrcp.pop %v3137
        %v3264 = vrcp.pop %v3139
        %v3265 = vrcp.pop %v3141
        %v3266 = vrcp.pop %v3143
        %v3267 = vrcp.pop %v3145
        %v3268 = vrcp.pop %v3147
        %v3269 = vrcp.pop %v3149
        %v3270 = vrcp.pop %v3151
        %v3271 = vrcp.pop %v3153
        %v3272 = vrcp.pop %v3155
        %v3273 = vrcp.pop %v3157
        %v3274 = vrcp.pop %v3159
        %v3275 = vrcp.pop %v3161
        %v3276 = vrcp.pop %v3163
        %v3277 = vrcp.pop %v3165
        %v3278 = vrcp.pop %v3167
        %v3279 = vrcp.pop %v3169
        %v3280 = vrcp.pop %v3171
        %v3281 = vrcp.pop %v3173
        %v3282 = vrcp.pop %v3175
        %v3283 = vrcp.pop %v3177
        %v3284 = vrcp.pop %v3179
        %v3285 = vrcp.pop %v3181
        %v3286 = vrcp.pop %v3183
        %v3287 = vrcp.pop %v3185
        %v3288 = vrcp.pop %v3187
        %v3289 = vrcp.pop %v3189
        %v3290 = vrcp.pop %v3191
        %v3291 = vrcp.pop %v3193
        %v3292 = vrcp.pop %v3195
        %v3293 = vrcp.pop %v3197
        %v3294 = vrcp.pop %v3199
        %v3295 = vrcp.pop %v3201
        %v3296 = vrcp.pop %v3203
        %v3297 = vrcp.pop %v3205
        %v3298 = vrcp.pop %v3207
        %v3299 = vrcp.pop %v3209
        %v3300 = vrcp.pop %v3211
        %v3301 = vrcp.pop %v3213
        %v3302 = vrcp.pop %v3215
        %v3303 = vrcp.pop %v3217
        %v3304 = vrcp.pop %v3219
        %v3305 = vrcp.pop %v3221
        %v3306 = vrcp.pop %v3223
        %v3307 = vrcp.pop %v3225
        %v3308 = vrcp.pop %v3227
        %v3309 = vrcp.pop %v3229
        %v3310 = vrcp.pop %v3231
        %v3311 = vrcp.pop %v3233
        %v3312 = vrcp.pop %v3235
        %v3313 = vrcp.pop %v3237
        %v3314 = vrcp.pop %v3239
        %v3315 = vrcp.pop %v3241
        %v3316 = vrcp.pop %v3243
        %v3317 = vrcp.pop %v3245
        %v3318 = vrcp.pop %v3247
        %v3319 = vrcp.pop %v3249
        %v3320 = vrcp.pop %v3251
        %v3321 = vrcp.pop %v3253
        %v3322 = vrcp.pop %v3255
        %v3323 = vrcp.pop %v3257
        %v3324 = vrcp.pop %v3259
        %v3325 = vrcp.pop %v3261
        %v3326 = vmul.f32 %v3007, %v3262
        %v3327 = vmul.f32 %v3009, %v3263
        %v3328 = vmul.f32 %v3011, %v3264
        %v3329 = vmul.f32 %v3013, %v3265
        %v3330 = vmul.f32 %v3015, %v3266
        %v3331 = vmul.f32 %v3017, %v3267
        %v3332 = vmul.f32 %v3019, %v3268
        %v3333 = vmul.f32 %v3021, %v3269
        %v3334 = vmul.f32 %v3023, %v3270
        %v3335 = vmul.f32 %v3025, %v3271
        %v3336 = vmul.f32 %v3027, %v3272
        %v3337 = vmul.f32 %v3029, %v3273
        %v3338 = vmul.f32 %v3031, %v3274
        %v3339 = vmul.f32 %v3033, %v3275
        %v3340 = vmul.f32 %v3035, %v3276
        %v3341 = vmul.f32 %v3037, %v3277
        %v3342 = vmul.f32 %v3039, %v3278
        %v3343 = vmul.f32 %v3041, %v3279
        %v3344 = vmul.f32 %v3043, %v3280
        %v3345 = vmul.f32 %v3045, %v3281
        %v3346 = vmul.f32 %v3047, %v3282
        %v3347 = vmul.f32 %v3049, %v3283
        %v3348 = vmul.f32 %v3051, %v3284
        %v3349 = vmul.f32 %v3053, %v3285
        %v3350 = vmul.f32 %v3055, %v3286
        %v3351 = vmul.f32 %v3057, %v3287
        %v3352 = vmul.f32 %v3059, %v3288
        %v3353 = vmul.f32 %v3061, %v3289
        %v3354 = vmul.f32 %v3063, %v3290
        %v3355 = vmul.f32 %v3065, %v3291
        %v3356 = vmul.f32 %v3067, %v3292
        %v3357 = vmul.f32 %v3069, %v3293
        %v3358 = vmul.f32 %v3071, %v3294
        %v3359 = vmul.f32 %v3073, %v3295
        %v3360 = vmul.f32 %v3075, %v3296
        %v3361 = vmul.f32 %v3077, %v3297
        %v3362 = vmul.f32 %v3079, %v3298
        %v3363 = vmul.f32 %v3081, %v3299
        %v3364 = vmul.f32 %v3083, %v3300
        %v3365 = vmul.f32 %v3085, %v3301
        %v3366 = vmul.f32 %v3087, %v3302
        %v3367 = vmul.f32 %v3089, %v3303
        %v3368 = vmul.f32 %v3091, %v3304
        %v3369 = vmul.f32 %v3093, %v3305
        %v3370 = vmul.f32 %v3095, %v3306
        %v3371 = vmul.f32 %v3097, %v3307
        %v3372 = vmul.f32 %v3099, %v3308
        %v3373 = vmul.f32 %v3101, %v3309
        %v3374 = vmul.f32 %v3103, %v3310
        %v3375 = vmul.f32 %v3105, %v3311
        %v3376 = vmul.f32 %v3107, %v3312
        %v3377 = vmul.f32 %v3109, %v3313
        %v3378 = vmul.f32 %v3111, %v3314
        %v3379 = vmul.f32 %v3113, %v3315
        %v3380 = vmul.f32 %v3115, %v3316
        %v3381 = vmul.f32 %v3117, %v3317
        %v3382 = vmul.f32 %v3119, %v3318
        %v3383 = vmul.f32 %v3121, %v3319
        %v3384 = vmul.f32 %v3123, %v3320
        %v3385 = vmul.f32 %v3125, %v3321
        %v3386 = vmul.f32 %v3127, %v3322
        %v3387 = vmul.f32 %v3129, %v3323
        %v3388 = vmul.f32 %v3131, %v3324
        %v3389 = vmul.f32 %v3133, %v3325
        %3390 = vmatprep.subr.mxu0 0.0
        %3391 = vmatpush1.msra.mxu0 %v1881
        %3392 = vmatprep.subr.mxu0 0.0
        %3393 = vmatpush1.msra.mxu0 %v1887
        %3394 = vmatprep.subr.mxu0 0.0
        %3395 = vmatpush1.msra.mxu0 %v1893
        %3396 = vmatprep.subr.mxu0 0.0
        %3397 = vmatpush1.msra.mxu0 %v1899
        %3398 = vmatprep.subr.mxu0 0.0
        %3399 = vmatpush1.msra.mxu0 %v1905
        %3400 = vmatprep.subr.mxu0 0.0
        %3401 = vmatpush1.msra.mxu0 %v1911
        %3402 = vmatprep.subr.mxu0 0.0
        %3403 = vmatpush1.msra.mxu0 %v1917
        %3404 = vmatprep.subr.mxu0 0.0
        %3405 = vmatpush1.msra.mxu0 %v1923
        %3406 = vmatprep.subr.mxu0 0.0
        %3407 = vmatpush1.msra.mxu0 %v1929
        %3408 = vmatprep.subr.mxu0 0.0
        %3409 = vmatpush1.msra.mxu0 %v1935
        %3410 = vmatprep.subr.mxu0 0.0
        %3411 = vmatpush1.msra.mxu0 %v1941
        %3412 = vmatprep.subr.mxu0 0.0
        %3413 = vmatpush1.msra.mxu0 %v1947
        %3414 = vmatprep.subr.mxu0 0.0
        %3415 = vmatpush1.msra.mxu0 %v1953
        %3416 = vmatprep.subr.mxu0 0.0
        %3417 = vmatpush1.msra.mxu0 %v1959
        %3418 = vmatprep.subr.mxu0 0.0
        %3419 = vmatpush1.msra.mxu0 %v1965
        %3420 = vmatprep.subr.mxu0 0.0
        %3421 = vmatpush1.msra.mxu0 %v1971
        %3422 = vmatprep.subr.mxu0 0.0
        %3423 = vmatpush1.msra.mxu0 0.0
        %3424 = vmatprep.subr.mxu0 0.0
        %3425 = vmatpush1.msra.mxu0 0.0
        %3426 = vmatprep.subr.mxu0 0.0
        %3427 = vmatpush1.msra.mxu0 0.0
        %3428 = vmatprep.subr.mxu0 0.0
        %3429 = vmatpush1.msra.mxu0 0.0
        %3430 = vmatprep.subr.mxu0 0.0
        %3431 = vmatpush1.msra.mxu0 0.0
        %3432 = vmatprep.subr.mxu0 0.0
        %3433 = vmatpush1.msra.mxu0 0.0
        %3434 = vmatprep.subr.mxu0 0.0
        %3435 = vmatpush1.msra.mxu0 0.0
        %3436 = vmatprep.subr.mxu0 0.0
        %3437 = vmatpush1.msra.mxu0 0.0
        %3438 = vmatprep.subr.mxu0 0.0
        %3439 = vmatpush1.msra.mxu0 0.0
        %3440 = vmatprep.subr.mxu0 0.0
        %3441 = vmatpush1.msra.mxu0 0.0
        %3442 = vmatprep.subr.mxu0 0.0
        %3443 = vmatpush1.msra.mxu0 0.0
        %3444 = vmatprep.subr.mxu0 0.0
        %3445 = vmatpush1.msra.mxu0 0.0
        %3446 = vmatprep.subr.mxu0 0.0
        %3447 = vmatpush1.msra.mxu0 0.0
        %3448 = vmatprep.subr.mxu0 0.0
        %3449 = vmatpush1.msra.mxu0 0.0
        %3450 = vmatprep.subr.mxu0 0.0
        %3451 = vmatpush1.msra.mxu0 0.0
        %3452 = vmatprep.subr.mxu0 0.0
        %3453 = vmatpush1.msra.mxu0 0.0
        %3454 = vmatprep.mubr.f32.mxu0 0.0
        %3455 = vmatmul.mubr.f32.gmra.mrb[0].mxu0 %v3326
        %v3456 = vpop.f32.mrb[0].mxu0
        %v3457 = vadd.f32 0.0, %v3456
        %v3458 = vpop.f32.mrb[0].mxu0
        %3459 = vmatprep.mubr.f32.mxu0 0.0
        %3460 = vmatmul.mubr.f32.gmra.mrb[0].mxu0 %v3327
        %v3461 = vpop.f32.mrb[0].mxu0
        %v3462 = vadd.f32 0.0, %v3461
        %v3463 = vpop.f32.mrb[0].mxu0
        %3464 = vmatprep.mubr.f32.mxu0 0.0
        %3465 = vmatmul.mubr.f32.gmra.mrb[0].mxu0 %v3328
        %v3466 = vpop.f32.mrb[0].mxu0
        %v3467 = vadd.f32 0.0, %v3466
        %v3468 = vpop.f32.mrb[0].mxu0
        %3469 = vmatprep.mubr.f32.mxu0 0.0
        %3470 = vmatmul.mubr.f32.gmra.mrb[0].mxu0 %v3329
        %v3471 = vpop.f32.mrb[0].mxu0
        %v3472 = vadd.f32 0.0, %v3471
        %v3473 = vpop.f32.mrb[0].mxu0
        %3474 = vmatprep.mubr.f32.mxu0 0.0
        %3475 = vmatmul.mubr.f32.gmra.mrb[0].mxu0 %v3330
        %v3476 = vpop.f32.mrb[0].mxu0
        %v3477 = vadd.f32 0.0, %v3476
        %v3478 = vpop.f32.mrb[0].mxu0
        %3479 = vmatprep.mubr.f32.mxu0 0.0
        %3480 = vmatmul.mubr.f32.gmra.mrb[0].mxu0 %v3331
        %v3481 = vpop.f32.mrb[0].mxu0
        %v3482 = vadd.f32 0.0, %v3481
        %v3483 = vpop.f32.mrb[0].mxu0
        %3484 = vmatprep.mubr.f32.mxu0 0.0
        %3485 = vmatmul.mubr.f32.gmra.mrb[0].mxu0 %v3332
        %v3486 = vpop.f32.mrb[0].mxu0
        %v3487 = vadd.f32 0.0, %v3486
        %v3488 = vpop.f32.mrb[0].mxu0
        %3489 = vmatprep.mubr.f32.mxu0 0.0
        %3490 = vmatmul.mubr.f32.gmra.mrb[0].mxu0 %v3333
        %v3491 = vpop.f32.mrb[0].mxu0
        %v3492 = vadd.f32 0.0, %v3491
        %v3493 = vpop.f32.mrb[0].mxu0
        %3494 = vmatprep.mubr.f32.mxu0 0.0
        %3495 = vmatmul.mubr.f32.gmra.mrb[0].mxu0 %v3334
        %v3496 = vpop.f32.mrb[0].mxu0
        %v3497 = vadd.f32 0.0, %v3496
        %v3498 = vpop.f32.mrb[0].mxu0
        %3499 = vmatprep.mubr.f32.mxu0 0.0
        %3500 = vmatmul.mubr.f32.gmra.mrb[0].mxu0 %v3335
        %v3501 = vpop.f32.mrb[0].mxu0
        %v3502 = vadd.f32 0.0, %v3501
        %v3503 = vpop.f32.mrb[0].mxu0
        %3504 = vmatprep.mubr.f32.mxu0 0.0
        %3505 = vmatmul.mubr.f32.gmra.mrb[0].mxu0 %v3336
        %v3506 = vpop.f32.mrb[0].mxu0
        %v3507 = vadd.f32 0.0, %v3506
        %v3508 = vpop.f32.mrb[0].mxu0
        %3509 = vmatprep.mubr.f32.mxu0 0.0
        %3510 = vmatmul.mubr.f32.gmra.mrb[0].mxu0 %v3337
        %v3511 = vpop.f32.mrb[0].mxu0
        %v3512 = vadd.f32 0.0, %v3511
        %v3513 = vpop.f32.mrb[0].mxu0
        %3514 = vmatprep.mubr.f32.mxu0 0.0
        %3515 = vmatmul.mubr.f32.gmra.mrb[0].mxu0 %v3338
        %v3516 = vpop.f32.mrb[0].mxu0
        %v3517 = vadd.f32 0.0, %v3516
        %v3518 = vpop.f32.mrb[0].mxu0
        %3519 = vmatprep.mubr.f32.mxu0 0.0
        %3520 = vmatmul.mubr.f32.gmra.mrb[0].mxu0 %v3339
        %v3521 = vpop.f32.mrb[0].mxu0
        %v3522 = vadd.f32 0.0, %v3521
        %v3523 = vpop.f32.mrb[0].mxu0
        %3524 = vmatprep.mubr.f32.mxu0 0.0
        %3525 = vmatmul.mubr.f32.gmra.mrb[0].mxu0 %v3340
        %v3526 = vpop.f32.mrb[0].mxu0
        %v3527 = vadd.f32 0.0, %v3526
        %v3528 = vpop.f32.mrb[0].mxu0
        %3529 = vmatprep.mubr.f32.mxu0 0.0
        %3530 = vmatmul.mubr.f32.gmra.mrb[0].mxu0 %v3341
        %v3531 = vpop.f32.mrb[0].mxu0
        %v3532 = vadd.f32 0.0, %v3531
        %v3533 = vpop.f32.mrb[0].mxu0
        %3534 = vdwg.mxu0
        %3535 = vmatprep.subr.mxu0 0.0
        %3536 = vmatpush1.msra.mxu0 %v1977
        %3537 = vmatprep.subr.mxu0 0.0
        %3538 = vmatpush1.msra.mxu0 %v1983
        %3539 = vmatprep.subr.mxu0 0.0
        %3540 = vmatpush1.msra.mxu0 %v1989
        %3541 = vmatprep.subr.mxu0 0.0
        %3542 = vmatpush1.msra.mxu0 %v1995
        %3543 = vmatprep.subr.mxu0 0.0
        %3544 = vmatpush1.msra.mxu0 %v2001
        %3545 = vmatprep.subr.mxu0 0.0
        %3546 = vmatpush1.msra.mxu0 %v2007
        %3547 = vmatprep.subr.mxu0 0.0
        %3548 = vmatpush1.msra.mxu0 %v2013
        %3549 = vmatprep.subr.mxu0 0.0
        %3550 = vmatpush1.msra.mxu0 %v2019
        %3551 = vmatprep.subr.mxu0 0.0
        %3552 = vmatpush1.msra.mxu0 %v2025
        %3553 = vmatprep.subr.mxu0 0.0
        %3554 = vmatpush1.msra.mxu0 %v2031
        %3555 = vmatprep.subr.mxu0 0.0
        %3556 = vmatpush1.msra.mxu0 %v2037
        %3557 = vmatprep.subr.mxu0 0.0
        %3558 = vmatpush1.msra.mxu0 %v2043
        %3559 = vmatprep.subr.mxu0 0.0
        %3560 = vmatpush1.msra.mxu0 %v2049
        %3561 = vmatprep.subr.mxu0 0.0
        %3562 = vmatpush1.msra.mxu0 %v2055
        %3563 = vmatprep.subr.mxu0 0.0
        %3564 = vmatpush1.msra.mxu0 %v2061
        %3565 = vmatprep.subr.mxu0 0.0
        %3566 = vmatpush1.msra.mxu0 %v2067
        %3567 = vmatprep.subr.mxu0 0.0
        %3568 = vmatpush1.msra.mxu0 0.0
        %3569 = vmatprep.subr.mxu0 0.0
        %3570 = vmatpush1.msra.mxu0 0.0
        %3571 = vmatprep.subr.mxu0 0.0
        %3572 = vmatpush1.msra.mxu0 0.0
        %3573 = vmatprep.subr.mxu0 0.0
        %3574 = vmatpush1.msra.mxu0 0.0
        %3575 = vmatprep.subr.mxu0 0.0
        %3576 = vmatpush1.msra.mxu0 0.0
        %3577 = vmatprep.subr.mxu0 0.0
        %3578 = vmatpush1.msra.mxu0 0.0
        %3579 = vmatprep.subr.mxu0 0.0
        %3580 = vmatpush1.msra.mxu0 0.0
        %3581 = vmatprep.subr.mxu0 0.0
        %3582 = vmatpush1.msra.mxu0 0.0
        %3583 = vmatprep.subr.mxu0 0.0
        %3584 = vmatpush1.msra.mxu0 0.0
        %3585 = vmatprep.subr.mxu0 0.0
        %3586 = vmatpush1.msra.mxu0 0.0
        %3587 = vmatprep.subr.mxu0 0.0
        %3588 = vmatpush1.msra.mxu0 0.0
        %3589 = vmatprep.subr.mxu0 0.0
        %3590 = vmatpush1.msra.mxu0 0.0
        %3591 = vmatprep.subr.mxu0 0.0
        %3592 = vmatpush1.msra.mxu0 0.0
        %3593 = vmatprep.subr.mxu0 0.0
        %3594 = vmatpush1.msra.mxu0 0.0
        %3595 = vmatprep.subr.mxu0 0.0
        %3596 = vmatpush1.msra.mxu0 0.0
        %3597 = vmatprep.subr.mxu0 0.0
        %3598 = vmatpush1.msra.mxu0 0.0
        %3599 = vmatprep.mubr.f32.mxu0 0.0
        %3600 = vmatmul.mubr.f32.gmra.mrb[0].mxu0 %v3342
        %v3601 = vpop.f32.mrb[0].mxu0
        %v3602 = vadd.f32 0.0, %v3601
        %v3603 = vpop.f32.mrb[0].mxu0
        %3604 = vmatprep.mubr.f32.mxu0 0.0
        %3605 = vmatmul.mubr.f32.gmra.mrb[0].mxu0 %v3343
        %v3606 = vpop.f32.mrb[0].mxu0
        %v3607 = vadd.f32 0.0, %v3606
        %v3608 = vpop.f32.mrb[0].mxu0
        %3609 = vmatprep.mubr.f32.mxu0 0.0
        %3610 = vmatmul.mubr.f32.gmra.mrb[0].mxu0 %v3344
        %v3611 = vpop.f32.mrb[0].mxu0
        %v3612 = vadd.f32 0.0, %v3611
        %v3613 = vpop.f32.mrb[0].mxu0
        %3614 = vmatprep.mubr.f32.mxu0 0.0
        %3615 = vmatmul.mubr.f32.gmra.mrb[0].mxu0 %v3345
        %v3616 = vpop.f32.mrb[0].mxu0
        %v3617 = vadd.f32 0.0, %v3616
        %v3618 = vpop.f32.mrb[0].mxu0
        %3619 = vmatprep.mubr.f32.mxu0 0.0
        %3620 = vmatmul.mubr.f32.gmra.mrb[0].mxu0 %v3346
        %v3621 = vpop.f32.mrb[0].mxu0
        %v3622 = vadd.f32 0.0, %v3621
        %v3623 = vpop.f32.mrb[0].mxu0
        %3624 = vmatprep.mubr.f32.mxu0 0.0
        %3625 = vmatmul.mubr.f32.gmra.mrb[0].mxu0 %v3347
        %v3626 = vpop.f32.mrb[0].mxu0
        %v3627 = vadd.f32 0.0, %v3626
        %v3628 = vpop.f32.mrb[0].mxu0
        %3629 = vmatprep.mubr.f32.mxu0 0.0
        %3630 = vmatmul.mubr.f32.gmra.mrb[0].mxu0 %v3348
        %v3631 = vpop.f32.mrb[0].mxu0
        %v3632 = vadd.f32 0.0, %v3631
        %v3633 = vpop.f32.mrb[0].mxu0
        %3634 = vmatprep.mubr.f32.mxu0 0.0
        %3635 = vmatmul.mubr.f32.gmra.mrb[0].mxu0 %v3349
        %v3636 = vpop.f32.mrb[0].mxu0
        %v3637 = vadd.f32 0.0, %v3636
        %v3638 = vpop.f32.mrb[0].mxu0
        %3639 = vmatprep.mubr.f32.mxu0 0.0
        %3640 = vmatmul.mubr.f32.gmra.mrb[0].mxu0 %v3350
        %v3641 = vpop.f32.mrb[0].mxu0
        %v3642 = vadd.f32 0.0, %v3641
        %v3643 = vpop.f32.mrb[0].mxu0
        %3644 = vmatprep.mubr.f32.mxu0 0.0
        %3645 = vmatmul.mubr.f32.gmra.mrb[0].mxu0 %v3351
        %v3646 = vpop.f32.mrb[0].mxu0
        %v3647 = vadd.f32 0.0, %v3646
        %v3648 = vpop.f32.mrb[0].mxu0
        %3649 = vmatprep.mubr.f32.mxu0 0.0
        %3650 = vmatmul.mubr.f32.gmra.mrb[0].mxu0 %v3352
        %v3651 = vpop.f32.mrb[0].mxu0
        %v3652 = vadd.f32 0.0, %v3651
        %v3653 = vpop.f32.mrb[0].mxu0
        %3654 = vmatprep.mubr.f32.mxu0 0.0
        %3655 = vmatmul.mubr.f32.gmra.mrb[0].mxu0 %v3353
        %v3656 = vpop.f32.mrb[0].mxu0
        %v3657 = vadd.f32 0.0, %v3656
        %v3658 = vpop.f32.mrb[0].mxu0
        %3659 = vmatprep.mubr.f32.mxu0 0.0
        %3660 = vmatmul.mubr.f32.gmra.mrb[0].mxu0 %v3354
        %v3661 = vpop.f32.mrb[0].mxu0
        %v3662 = vadd.f32 0.0, %v3661
        %v3663 = vpop.f32.mrb[0].mxu0
        %3664 = vmatprep.mubr.f32.mxu0 0.0
        %3665 = vmatmul.mubr.f32.gmra.mrb[0].mxu0 %v3355
        %v3666 = vpop.f32.mrb[0].mxu0
        %v3667 = vadd.f32 0.0, %v3666
        %v3668 = vpop.f32.mrb[0].mxu0
        %3669 = vmatprep.mubr.f32.mxu0 0.0
        %3670 = vmatmul.mubr.f32.gmra.mrb[0].mxu0 %v3356
        %v3671 = vpop.f32.mrb[0].mxu0
        %v3672 = vadd.f32 0.0, %v3671
        %v3673 = vpop.f32.mrb[0].mxu0
        %3674 = vmatprep.mubr.f32.mxu0 0.0
        %3675 = vmatmul.mubr.f32.gmra.mrb[0].mxu0 %v3357
        %v3676 = vpop.f32.mrb[0].mxu0
        %v3677 = vadd.f32 0.0, %v3676
        %v3678 = vpop.f32.mrb[0].mxu0
        %3679 = vdwg.mxu0
        %3680 = vmatprep.subr.mxu0 0.0
        %3681 = vmatpush1.msra.mxu0 %v1883
        %3682 = vmatprep.subr.mxu0 0.0
        %3683 = vmatpush1.msra.mxu0 %v1889
        %3684 = vmatprep.subr.mxu0 0.0
        %3685 = vmatpush1.msra.mxu0 %v1895
        %3686 = vmatprep.subr.mxu0 0.0
        %3687 = vmatpush1.msra.mxu0 %v1901
        %3688 = vmatprep.subr.mxu0 0.0
        %3689 = vmatpush1.msra.mxu0 %v1907
        %3690 = vmatprep.subr.mxu0 0.0
        %3691 = vmatpush1.msra.mxu0 %v1913
        %3692 = vmatprep.subr.mxu0 0.0
        %3693 = vmatpush1.msra.mxu0 %v1919
        %3694 = vmatprep.subr.mxu0 0.0
        %3695 = vmatpush1.msra.mxu0 %v1925
        %3696 = vmatprep.subr.mxu0 0.0
        %3697 = vmatpush1.msra.mxu0 %v1931
        %3698 = vmatprep.subr.mxu0 0.0
        %3699 = vmatpush1.msra.mxu0 %v1937
        %3700 = vmatprep.subr.mxu0 0.0
        %3701 = vmatpush1.msra.mxu0 %v1943
        %3702 = vmatprep.subr.mxu0 0.0
        %3703 = vmatpush1.msra.mxu0 %v1949
        %3704 = vmatprep.subr.mxu0 0.0
        %3705 = vmatpush1.msra.mxu0 %v1955
        %3706 = vmatprep.subr.mxu0 0.0
        %3707 = vmatpush1.msra.mxu0 %v1961
        %3708 = vmatprep.subr.mxu0 0.0
        %3709 = vmatpush1.msra.mxu0 %v1967
        %3710 = vmatprep.subr.mxu0 0.0
        %3711 = vmatpush1.msra.mxu0 %v1973
        %3712 = vmatprep.subr.mxu0 0.0
        %3713 = vmatpush1.msra.mxu0 0.0
        %3714 = vmatprep.subr.mxu0 0.0
        %3715 = vmatpush1.msra.mxu0 0.0
        %3716 = vmatprep.subr.mxu0 0.0
        %3717 = vmatpush1.msra.mxu0 0.0
        %3718 = vmatprep.subr.mxu0 0.0
        %3719 = vmatpush1.msra.mxu0 0.0
        %3720 = vmatprep.subr.mxu0 0.0
        %3721 = vmatpush1.msra.mxu0 0.0
        %3722 = vmatprep.subr.mxu0 0.0
        %3723 = vmatpush1.msra.mxu0 0.0
        %3724 = vmatprep.subr.mxu0 0.0
        %3725 = vmatpush1.msra.mxu0 0.0
        %3726 = vmatprep.subr.mxu0 0.0
        %3727 = vmatpush1.msra.mxu0 0.0
        %3728 = vmatprep.subr.mxu0 0.0
        %3729 = vmatpush1.msra.mxu0 0.0
        %3730 = vmatprep.subr.mxu0 0.0
        %3731 = vmatpush1.msra.mxu0 0.0
        %3732 = vmatprep.subr.mxu0 0.0
        %3733 = vmatpush1.msra.mxu0 0.0
        %3734 = vmatprep.subr.mxu0 0.0
        %3735 = vmatpush1.msra.mxu0 0.0
        %3736 = vmatprep.subr.mxu0 0.0
        %3737 = vmatpush1.msra.mxu0 0.0
        %3738 = vmatprep.subr.mxu0 0.0
        %3739 = vmatpush1.msra.mxu0 0.0
        %3740 = vmatprep.subr.mxu0 0.0
        %3741 = vmatpush1.msra.mxu0 0.0
        %3742 = vmatprep.subr.mxu0 0.0
        %3743 = vmatpush1.msra.mxu0 0.0
        %3744 = vmatprep.mubr.f32.mxu0 0.0
        %3745 = vmatmul.mubr.f32.gmra.mrb[0].mxu0 %v3358
        %v3746 = vpop.f32.mrb[0].mxu0
        %v3747 = vadd.f32 0.0, %v3746
        %v3748 = vpop.f32.mrb[0].mxu0
        %3749 = vmatprep.mubr.f32.mxu0 0.0
        %3750 = vmatmul.mubr.f32.gmra.mrb[0].mxu0 %v3359
        %v3751 = vpop.f32.mrb[0].mxu0
        %v3752 = vadd.f32 0.0, %v3751
        %v3753 = vpop.f32.mrb[0].mxu0
        %3754 = vmatprep.mubr.f32.mxu0 0.0
        %3755 = vmatmul.mubr.f32.gmra.mrb[0].mxu0 %v3360
        %v3756 = vpop.f32.mrb[0].mxu0
        %v3757 = vadd.f32 0.0, %v3756
        %v3758 = vpop.f32.mrb[0].mxu0
        %3759 = vmatprep.mubr.f32.mxu0 0.0
        %3760 = vmatmul.mubr.f32.gmra.mrb[0].mxu0 %v3361
        %v3761 = vpop.f32.mrb[0].mxu0
        %v3762 = vadd.f32 0.0, %v3761
        %v3763 = vpop.f32.mrb[0].mxu0
        %3764 = vmatprep.mubr.f32.mxu0 0.0
        %3765 = vmatmul.mubr.f32.gmra.mrb[0].mxu0 %v3362
        %v3766 = vpop.f32.mrb[0].mxu0
        %v3767 = vadd.f32 0.0, %v3766
        %v3768 = vpop.f32.mrb[0].mxu0
        %3769 = vmatprep.mubr.f32.mxu0 0.0
        %3770 = vmatmul.mubr.f32.gmra.mrb[0].mxu0 %v3363
        %v3771 = vpop.f32.mrb[0].mxu0
        %v3772 = vadd.f32 0.0, %v3771
        %v3773 = vpop.f32.mrb[0].mxu0
        %3774 = vmatprep.mubr.f32.mxu0 0.0
        %3775 = vmatmul.mubr.f32.gmra.mrb[0].mxu0 %v3364
        %v3776 = vpop.f32.mrb[0].mxu0
        %v3777 = vadd.f32 0.0, %v3776
        %v3778 = vpop.f32.mrb[0].mxu0
        %3779 = vmatprep.mubr.f32.mxu0 0.0
        %3780 = vmatmul.mubr.f32.gmra.mrb[0].mxu0 %v3365
        %v3781 = vpop.f32.mrb[0].mxu0
        %v3782 = vadd.f32 0.0, %v3781
        %v3783 = vpop.f32.mrb[0].mxu0
        %3784 = vmatprep.mubr.f32.mxu0 0.0
        %3785 = vmatmul.mubr.f32.gmra.mrb[0].mxu0 %v3366
        %v3786 = vpop.f32.mrb[0].mxu0
        %v3787 = vadd.f32 0.0, %v3786
        %v3788 = vpop.f32.mrb[0].mxu0
        %3789 = vmatprep.mubr.f32.mxu0 0.0
        %3790 = vmatmul.mubr.f32.gmra.mrb[0].mxu0 %v3367
        %v3791 = vpop.f32.mrb[0].mxu0
        %v3792 = vadd.f32 0.0, %v3791
        %v3793 = vpop.f32.mrb[0].mxu0
        %3794 = vmatprep.mubr.f32.mxu0 0.0
        %3795 = vmatmul.mubr.f32.gmra.mrb[0].mxu0 %v3368
        %v3796 = vpop.f32.mrb[0].mxu0
        %v3797 = vadd.f32 0.0, %v3796
        %v3798 = vpop.f32.mrb[0].mxu0
        %3799 = vmatprep.mubr.f32.mxu0 0.0
        %3800 = vmatmul.mubr.f32.gmra.mrb[0].mxu0 %v3369
        %v3801 = vpop.f32.mrb[0].mxu0
        %v3802 = vadd.f32 0.0, %v3801
        %v3803 = vpop.f32.mrb[0].mxu0
        %3804 = vmatprep.mubr.f32.mxu0 0.0
        %3805 = vmatmul.mubr.f32.gmra.mrb[0].mxu0 %v3370
        %v3806 = vpop.f32.mrb[0].mxu0
        %v3807 = vadd.f32 0.0, %v3806
        %v3808 = vpop.f32.mrb[0].mxu0
        %3809 = vmatprep.mubr.f32.mxu0 0.0
        %3810 = vmatmul.mubr.f32.gmra.mrb[0].mxu0 %v3371
        %v3811 = vpop.f32.mrb[0].mxu0
        %v3812 = vadd.f32 0.0, %v3811
        %v3813 = vpop.f32.mrb[0].mxu0
        %3814 = vmatprep.mubr.f32.mxu0 0.0
        %3815 = vmatmul.mubr.f32.gmra.mrb[0].mxu0 %v3372
        %v3816 = vpop.f32.mrb[0].mxu0
        %v3817 = vadd.f32 0.0, %v3816
        %v3818 = vpop.f32.mrb[0].mxu0
        %3819 = vmatprep.mubr.f32.mxu0 0.0
        %3820 = vmatmul.mubr.f32.gmra.mrb[0].mxu0 %v3373
        %v3821 = vpop.f32.mrb[0].mxu0
        %v3822 = vadd.f32 0.0, %v3821
        %v3823 = vpop.f32.mrb[0].mxu0
        %3824 = vdwg.mxu0
        %3825 = vmatprep.subr.mxu0 0.0
        %3826 = vmatpush1.msra.mxu0 %v1979
        %3827 = vmatprep.subr.mxu0 0.0
        %3828 = vmatpush1.msra.mxu0 %v1985
        %3829 = vmatprep.subr.mxu0 0.0
        %3830 = vmatpush1.msra.mxu0 %v1991
        %3831 = vmatprep.subr.mxu0 0.0
        %3832 = vmatpush1.msra.mxu0 %v1997
        %3833 = vmatprep.subr.mxu0 0.0
        %3834 = vmatpush1.msra.mxu0 %v2003
        %3835 = vmatprep.subr.mxu0 0.0
        %3836 = vmatpush1.msra.mxu0 %v2009
        %3837 = vmatprep.subr.mxu0 0.0
        %3838 = vmatpush1.msra.mxu0 %v2015
        %3839 = vmatprep.subr.mxu0 0.0
        %3840 = vmatpush1.msra.mxu0 %v2021
        %3841 = vmatprep.subr.mxu0 0.0
        %3842 = vmatpush1.msra.mxu0 %v2027
        %3843 = vmatprep.subr.mxu0 0.0
        %3844 = vmatpush1.msra.mxu0 %v2033
        %3845 = vmatprep.subr.mxu0 0.0
        %3846 = vmatpush1.msra.mxu0 %v2039
        %3847 = vmatprep.subr.mxu0 0.0
        %3848 = vmatpush1.msra.mxu0 %v2045
        %3849 = vmatprep.subr.mxu0 0.0
        %3850 = vmatpush1.msra.mxu0 %v2051
        %3851 = vmatprep.subr.mxu0 0.0
        %3852 = vmatpush1.msra.mxu0 %v2057
        %3853 = vmatprep.subr.mxu0 0.0
        %3854 = vmatpush1.msra.mxu0 %v2063
        %3855 = vmatprep.subr.mxu0 0.0
        %3856 = vmatpush1.msra.mxu0 %v2069
        %3857 = vmatprep.subr.mxu0 0.0
        %3858 = vmatpush1.msra.mxu0 0.0
        %3859 = vmatprep.subr.mxu0 0.0
        %3860 = vmatpush1.msra.mxu0 0.0
        %3861 = vmatprep.subr.mxu0 0.0
        %3862 = vmatpush1.msra.mxu0 0.0
        %3863 = vmatprep.subr.mxu0 0.0
        %3864 = vmatpush1.msra.mxu0 0.0
        %3865 = vmatprep.subr.mxu0 0.0
        %3866 = vmatpush1.msra.mxu0 0.0
        %3867 = vmatprep.subr.mxu0 0.0
        %3868 = vmatpush1.msra.mxu0 0.0
        %3869 = vmatprep.subr.mxu0 0.0
        %3870 = vmatpush1.msra.mxu0 0.0
        %3871 = vmatprep.subr.mxu0 0.0
        %3872 = vmatpush1.msra.mxu0 0.0
        %3873 = vmatprep.subr.mxu0 0.0
        %3874 = vmatpush1.msra.mxu0 0.0
        %3875 = vmatprep.subr.mxu0 0.0
        %3876 = vmatpush1.msra.mxu0 0.0
        %3877 = vmatprep.subr.mxu0 0.0
        %3878 = vmatpush1.msra.mxu0 0.0
        %3879 = vmatprep.subr.mxu0 0.0
        %3880 = vmatpush1.msra.mxu0 0.0
        %3881 = vmatprep.subr.mxu0 0.0
        %3882 = vmatpush1.msra.mxu0 0.0
        %3883 = vmatprep.subr.mxu0 0.0
        %3884 = vmatpush1.msra.mxu0 0.0
        %3885 = vmatprep.subr.mxu0 0.0
        %3886 = vmatpush1.msra.mxu0 0.0
        %3887 = vmatprep.subr.mxu0 0.0
        %3888 = vmatpush1.msra.mxu0 0.0
        %3889 = vmatprep.mubr.f32.mxu0 0.0
        %3890 = vmatmul.mubr.f32.gmra.mrb[0].mxu0 %v3374
        %v3891 = vpop.f32.mrb[0].mxu0
        %v3892 = vadd.f32 0.0, %v3891
        %v3893 = vpop.f32.mrb[0].mxu0
        %3894 = vmatprep.mubr.f32.mxu0 0.0
        %3895 = vmatmul.mubr.f32.gmra.mrb[0].mxu0 %v3375
        %v3896 = vpop.f32.mrb[0].mxu0
        %v3897 = vadd.f32 0.0, %v3896
        %v3898 = vpop.f32.mrb[0].mxu0
        %3899 = vmatprep.mubr.f32.mxu0 0.0
        %3900 = vmatmul.mubr.f32.gmra.mrb[0].mxu0 %v3376
        %v3901 = vpop.f32.mrb[0].mxu0
        %v3902 = vadd.f32 0.0, %v3901
        %v3903 = vpop.f32.mrb[0].mxu0
        %3904 = vmatprep.mubr.f32.mxu0 0.0
        %3905 = vmatmul.mubr.f32.gmra.mrb[0].mxu0 %v3377
        %v3906 = vpop.f32.mrb[0].mxu0
        %v3907 = vadd.f32 0.0, %v3906
        %v3908 = vpop.f32.mrb[0].mxu0
        %3909 = vmatprep.mubr.f32.mxu0 0.0
        %3910 = vmatmul.mubr.f32.gmra.mrb[0].mxu0 %v3378
        %v3911 = vpop.f32.mrb[0].mxu0
        %v3912 = vadd.f32 0.0, %v3911
        %v3913 = vpop.f32.mrb[0].mxu0
        %3914 = vmatprep.mubr.f32.mxu0 0.0
        %3915 = vmatmul.mubr.f32.gmra.mrb[0].mxu0 %v3379
        %v3916 = vpop.f32.mrb[0].mxu0
        %v3917 = vadd.f32 0.0, %v3916
        %v3918 = vpop.f32.mrb[0].mxu0
        %3919 = vmatprep.mubr.f32.mxu0 0.0
        %3920 = vmatmul.mubr.f32.gmra.mrb[0].mxu0 %v3380
        %v3921 = vpop.f32.mrb[0].mxu0
        %v3922 = vadd.f32 0.0, %v3921
        %v3923 = vpop.f32.mrb[0].mxu0
        %3924 = vmatprep.mubr.f32.mxu0 0.0
        %3925 = vmatmul.mubr.f32.gmra.mrb[0].mxu0 %v3381
        %v3926 = vpop.f32.mrb[0].mxu0
        %v3927 = vadd.f32 0.0, %v3926
        %v3928 = vpop.f32.mrb[0].mxu0
        %3929 = vmatprep.mubr.f32.mxu0 0.0
        %3930 = vmatmul.mubr.f32.gmra.mrb[0].mxu0 %v3382
        %v3931 = vpop.f32.mrb[0].mxu0
        %v3932 = vadd.f32 0.0, %v3931
        %v3933 = vpop.f32.mrb[0].mxu0
        %3934 = vmatprep.mubr.f32.mxu0 0.0
        %3935 = vmatmul.mubr.f32.gmra.mrb[0].mxu0 %v3383
        %v3936 = vpop.f32.mrb[0].mxu0
        %v3937 = vadd.f32 0.0, %v3936
        %v3938 = vpop.f32.mrb[0].mxu0
        %3939 = vmatprep.mubr.f32.mxu0 0.0
        %3940 = vmatmul.mubr.f32.gmra.mrb[0].mxu0 %v3384
        %v3941 = vpop.f32.mrb[0].mxu0
        %v3942 = vadd.f32 0.0, %v3941
        %v3943 = vpop.f32.mrb[0].mxu0
        %3944 = vmatprep.mubr.f32.mxu0 0.0
        %3945 = vmatmul.mubr.f32.gmra.mrb[0].mxu0 %v3385
        %v3946 = vpop.f32.mrb[0].mxu0
        %v3947 = vadd.f32 0.0, %v3946
        %v3948 = vpop.f32.mrb[0].mxu0
        %3949 = vmatprep.mubr.f32.mxu0 0.0
        %3950 = vmatmul.mubr.f32.gmra.mrb[0].mxu0 %v3386
        %v3951 = vpop.f32.mrb[0].mxu0
        %v3952 = vadd.f32 0.0, %v3951
        %v3953 = vpop.f32.mrb[0].mxu0
        %3954 = vmatprep.mubr.f32.mxu0 0.0
        %3955 = vmatmul.mubr.f32.gmra.mrb[0].mxu0 %v3387
        %v3956 = vpop.f32.mrb[0].mxu0
        %v3957 = vadd.f32 0.0, %v3956
        %v3958 = vpop.f32.mrb[0].mxu0
        %3959 = vmatprep.mubr.f32.mxu0 0.0
        %3960 = vmatmul.mubr.f32.gmra.mrb[0].mxu0 %v3388
        %v3961 = vpop.f32.mrb[0].mxu0
        %v3962 = vadd.f32 0.0, %v3961
        %v3963 = vpop.f32.mrb[0].mxu0
        %3964 = vmatprep.mubr.f32.mxu0 0.0
        %3965 = vmatmul.mubr.f32.gmra.mrb[0].mxu0 %v3389
        %v3966 = vpop.f32.mrb[0].mxu0
        %v3967 = vadd.f32 0.0, %v3966
        %v3968 = vpop.f32.mrb[0].mxu0
        %3969 = vdwg.mxu0
        %v3970 = vld [vmem:[#allocation7] sm:$0xff]
        %v3971 = vld [vmem:[#allocation7 + $0x8] sm:$0xff]
        %v3972 = vld [vmem:[#allocation7 + $0x10] sm:$0xff]
        %v3973 = vld [vmem:[#allocation7 + $0x18] sm:$0xff]
        %v3974 = vld [vmem:[#allocation7 + $0x20] sm:$0xff]
        %v3975 = vld [vmem:[#allocation7 + $0x28] sm:$0xff]
        %v3976 = vld [vmem:[#allocation7 + $0x30] sm:$0xff]
        %v3977 = vld [vmem:[#allocation7 + $0x38] sm:$0xff]
        %v3978 = vld [vmem:[#allocation7 + $0x40] sm:$0xff]
        %v3979 = vld [vmem:[#allocation7 + $0x48] sm:$0xff]
        %v3980 = vld [vmem:[#allocation7 + $0x50] sm:$0xff]
        %v3981 = vld [vmem:[#allocation7 + $0x58] sm:$0xff]
        %v3982 = vld [vmem:[#allocation7 + $0x60] sm:$0xff]
        %v3983 = vld [vmem:[#allocation7 + $0x68] sm:$0xff]
        %v3984 = vld [vmem:[#allocation7 + $0x70] sm:$0xff]
        %v3985 = vld [vmem:[#allocation7 + $0x78] sm:$0xff]
        %v3986 = vld [vmem:[#allocation7 + $0x80] sm:$0xff]
        %v3987 = vld [vmem:[#allocation7 + $0x88] sm:$0xff]
        %v3988 = vld [vmem:[#allocation7 + $0x90] sm:$0xff]
        %v3989 = vld [vmem:[#allocation7 + $0x98] sm:$0xff]
        %v3990 = vld [vmem:[#allocation7 + $0xa0] sm:$0xff]
        %v3991 = vld [vmem:[#allocation7 + $0xa8] sm:$0xff]
        %v3992 = vld [vmem:[#allocation7 + $0xb0] sm:$0xff]
        %v3993 = vld [vmem:[#allocation7 + $0xb8] sm:$0xff]
        %v3994 = vld [vmem:[#allocation7 + $0xc0] sm:$0xff]
        %v3995 = vld [vmem:[#allocation7 + $0xc8] sm:$0xff]
        %v3996 = vld [vmem:[#allocation7 + $0xd0] sm:$0xff]
        %v3997 = vld [vmem:[#allocation7 + $0xd8] sm:$0xff]
        %v3998 = vld [vmem:[#allocation7 + $0xe0] sm:$0xff]
        %v3999 = vld [vmem:[#allocation7 + $0xe8] sm:$0xff]
        %v4000 = vld [vmem:[#allocation7 + $0xf0] sm:$0xff]
        %v4001 = vld [vmem:[#allocation7 + $0xf8] sm:$0xff]
        %v4002 = vld [vmem:[#allocation7 + $0x100] sm:$0xff]
        %v4003 = vld [vmem:[#allocation7 + $0x108] sm:$0xff]
        %v4004 = vld [vmem:[#allocation7 + $0x110] sm:$0xff]
        %v4005 = vld [vmem:[#allocation7 + $0x118] sm:$0xff]
        %v4006 = vld [vmem:[#allocation7 + $0x120] sm:$0xff]
        %v4007 = vld [vmem:[#allocation7 + $0x128] sm:$0xff]
        %v4008 = vld [vmem:[#allocation7 + $0x130] sm:$0xff]
        %v4009 = vld [vmem:[#allocation7 + $0x138] sm:$0xff]
        %v4010 = vld [vmem:[#allocation7 + $0x140] sm:$0xff]
        %v4011 = vld [vmem:[#allocation7 + $0x148] sm:$0xff]
        %v4012 = vld [vmem:[#allocation7 + $0x150] sm:$0xff]
        %v4013 = vld [vmem:[#allocation7 + $0x158] sm:$0xff]
        %v4014 = vld [vmem:[#allocation7 + $0x160] sm:$0xff]
        %v4015 = vld [vmem:[#allocation7 + $0x168] sm:$0xff]
        %v4016 = vld [vmem:[#allocation7 + $0x170] sm:$0xff]
        %v4017 = vld [vmem:[#allocation7 + $0x178] sm:$0xff]
        %v4018 = vld [vmem:[#allocation7 + $0x180] sm:$0xff]
        %v4019 = vld [vmem:[#allocation7 + $0x188] sm:$0xff]
        %v4020 = vld [vmem:[#allocation7 + $0x190] sm:$0xff]
        %v4021 = vld [vmem:[#allocation7 + $0x198] sm:$0xff]
        %v4022 = vld [vmem:[#allocation7 + $0x1a0] sm:$0xff]
        %v4023 = vld [vmem:[#allocation7 + $0x1a8] sm:$0xff]
        %v4024 = vld [vmem:[#allocation7 + $0x1b0] sm:$0xff]
        %v4025 = vld [vmem:[#allocation7 + $0x1b8] sm:$0xff]
        %v4026 = vld [vmem:[#allocation7 + $0x1c0] sm:$0xff]
        %v4027 = vld [vmem:[#allocation7 + $0x1c8] sm:$0xff]
        %v4028 = vld [vmem:[#allocation7 + $0x1d0] sm:$0xff]
        %v4029 = vld [vmem:[#allocation7 + $0x1d8] sm:$0xff]
        %v4030 = vld [vmem:[#allocation7 + $0x1e0] sm:$0xff]
        %v4031 = vld [vmem:[#allocation7 + $0x1e8] sm:$0xff]
        %v4032 = vld [vmem:[#allocation7 + $0x1f0] sm:$0xff]
        %v4033 = vld [vmem:[#allocation7 + $0x1f8] sm:$0xff]
        %v4035 = vlaneseq
        %v4036 = vshrl.u32 %v4035, 7
        %v4037 = vsub.s32 0, %v4036
        %v4038 = vrot.slane %v403, %v4037
        %v4039 = vlaneseq
        %v4040 = vshrl.u32 %v4039, 7
        %v4041 = vsub.s32 1, %v4040
        %v4042 = vrot.slane %v403, %v4041
        %4045 = vmatprep.subr.mxu0 %v3971
        %4046 = vmatpush1.msra.mxu0 %v3970
        %4047 = vmatprep.subr.mxu0 %v3973
        %4048 = vmatpush1.msra.mxu0 %v3972
        %4049 = vmatprep.subr.mxu0 %v3975
        %4050 = vmatpush1.msra.mxu0 %v3974
        %4051 = vmatprep.subr.mxu0 %v3977
        %4052 = vmatpush1.msra.mxu0 %v3976
        %4053 = vmatprep.subr.mxu0 %v3979
        %4054 = vmatpush1.msra.mxu0 %v3978
        %4055 = vmatprep.subr.mxu0 %v3981
        %4056 = vmatpush1.msra.mxu0 %v3980
        %4057 = vmatprep.subr.mxu0 %v3983
        %4058 = vmatpush1.msra.mxu0 %v3982
        %4059 = vmatprep.subr.mxu0 %v3985
        %4060 = vmatpush1.msra.mxu0 %v3984
        %4061 = vmatprep.subr.mxu0 %v3987
        %4062 = vmatpush1.msra.mxu0 %v3986
        %4063 = vmatprep.subr.mxu0 %v3989
        %4064 = vmatpush1.msra.mxu0 %v3988
        %4065 = vmatprep.subr.mxu0 %v3991
        %4066 = vmatpush1.msra.mxu0 %v3990
        %4067 = vmatprep.subr.mxu0 %v3993
        %4068 = vmatpush1.msra.mxu0 %v3992
        %4069 = vmatprep.subr.mxu0 %v3995
        %4070 = vmatpush1.msra.mxu0 %v3994
        %4071 = vmatprep.subr.mxu0 %v3997
        %4072 = vmatpush1.msra.mxu0 %v3996
        %4073 = vmatprep.subr.mxu0 %v3999
        %4074 = vmatpush1.msra.mxu0 %v3998
        %4075 = vmatprep.subr.mxu0 %v4001
        %4076 = vmatpush1.msra.mxu0 %v4000
        %4077 = vmatprep.subr.mxu0 %v4003
        %4078 = vmatpush1.msra.mxu0 %v4002
        %4079 = vmatprep.subr.mxu0 %v4005
        %4080 = vmatpush1.msra.mxu0 %v4004
        %4081 = vmatprep.subr.mxu0 %v4007
        %4082 = vmatpush1.msra.mxu0 %v4006
        %4083 = vmatprep.subr.mxu0 %v4009
        %4084 = vmatpush1.msra.mxu0 %v4008
        %4085 = vmatprep.subr.mxu0 %v4011
        %4086 = vmatpush1.msra.mxu0 %v4010
        %4087 = vmatprep.subr.mxu0 %v4013
        %4088 = vmatpush1.msra.mxu0 %v4012
        %4089 = vmatprep.subr.mxu0 %v4015
        %4090 = vmatpush1.msra.mxu0 %v4014
        %4091 = vmatprep.subr.mxu0 %v4017
        %4092 = vmatpush1.msra.mxu0 %v4016
        %4093 = vmatprep.subr.mxu0 %v4019
        %4094 = vmatpush1.msra.mxu0 %v4018
        %4095 = vmatprep.subr.mxu0 %v4021
        %4096 = vmatpush1.msra.mxu0 %v4020
        %4097 = vmatprep.subr.mxu0 %v4023
        %4098 = vmatpush1.msra.mxu0 %v4022
        %4099 = vmatprep.subr.mxu0 %v4025
        %4100 = vmatpush1.msra.mxu0 %v4024
        %4101 = vmatprep.subr.mxu0 %v4027
        %4102 = vmatpush1.msra.mxu0 %v4026
        %4103 = vmatprep.subr.mxu0 %v4029
        %4104 = vmatpush1.msra.mxu0 %v4028
        %4105 = vmatprep.subr.mxu0 %v4031
        %4106 = vmatpush1.msra.mxu0 %v4030
        %4107 = vmatprep.subr.mxu0 %v4033
        %4108 = vmatpush1.msra.mxu0 %v4032
        %4109 = vmatprep.mubr.f32.mxu0 %v3747
        %4110 = vmatmul.mubr.f32.gmra.mrb[0].mxu0 %v3457
        %v4111 = vpop.f32.mrb[0].mxu0
        %v4112 = vadd.f32 %v4038, %v4111
        %v4113 = vpop.f32.mrb[0].mxu0
        %v4114 = vadd.f32 %v4042, %v4113
        %4115 = vmatprep.mubr.f32.mxu0 %v3752
        %4116 = vmatmul.mubr.f32.gmra.mrb[0].mxu0 %v3462
        %v4117 = vpop.f32.mrb[0].mxu0
        %v4118 = vadd.f32 %v4038, %v4117
        %v4119 = vpop.f32.mrb[0].mxu0
        %v4120 = vadd.f32 %v4042, %v4119
        %4121 = vmatprep.mubr.f32.mxu0 %v3757
        %4122 = vmatmul.mubr.f32.gmra.mrb[0].mxu0 %v3467
        %v4123 = vpop.f32.mrb[0].mxu0
        %v4124 = vadd.f32 %v4038, %v4123
        %v4125 = vpop.f32.mrb[0].mxu0
        %v4126 = vadd.f32 %v4042, %v4125
        %4127 = vmatprep.mubr.f32.mxu0 %v3762
        %4128 = vmatmul.mubr.f32.gmra.mrb[0].mxu0 %v3472
        %v4129 = vpop.f32.mrb[0].mxu0
        %v4130 = vadd.f32 %v4038, %v4129
        %v4131 = vpop.f32.mrb[0].mxu0
        %v4132 = vadd.f32 %v4042, %v4131
        %4133 = vmatprep.mubr.f32.mxu0 %v3767
        %4134 = vmatmul.mubr.f32.gmra.mrb[0].mxu0 %v3477
        %v4135 = vpop.f32.mrb[0].mxu0
        %v4136 = vadd.f32 %v4038, %v4135
        %v4137 = vpop.f32.mrb[0].mxu0
        %v4138 = vadd.f32 %v4042, %v4137
        %4139 = vmatprep.mubr.f32.mxu0 %v3772
        %4140 = vmatmul.mubr.f32.gmra.mrb[0].mxu0 %v3482
        %v4141 = vpop.f32.mrb[0].mxu0
        %v4142 = vadd.f32 %v4038, %v4141
        %v4143 = vpop.f32.mrb[0].mxu0
        %v4144 = vadd.f32 %v4042, %v4143
        %4145 = vmatprep.mubr.f32.mxu0 %v3777
        %4146 = vmatmul.mubr.f32.gmra.mrb[0].mxu0 %v3487
        %v4147 = vpop.f32.mrb[0].mxu0
        %v4148 = vadd.f32 %v4038, %v4147
        %v4149 = vpop.f32.mrb[0].mxu0
        %v4150 = vadd.f32 %v4042, %v4149
        %4151 = vmatprep.mubr.f32.mxu0 %v3782
        %4152 = vmatmul.mubr.f32.gmra.mrb[0].mxu0 %v3492
        %v4153 = vpop.f32.mrb[0].mxu0
        %v4154 = vadd.f32 %v4038, %v4153
        %v4155 = vpop.f32.mrb[0].mxu0
        %v4156 = vadd.f32 %v4042, %v4155
        %4157 = vmatprep.mubr.f32.mxu0 %v3787
        %4158 = vmatmul.mubr.f32.gmra.mrb[0].mxu0 %v3497
        %v4159 = vpop.f32.mrb[0].mxu0
        %v4160 = vadd.f32 %v4038, %v4159
        %v4161 = vpop.f32.mrb[0].mxu0
        %v4162 = vadd.f32 %v4042, %v4161
        %4163 = vmatprep.mubr.f32.mxu0 %v3792
        %4164 = vmatmul.mubr.f32.gmra.mrb[0].mxu0 %v3502
        %v4165 = vpop.f32.mrb[0].mxu0
        %v4166 = vadd.f32 %v4038, %v4165
        %v4167 = vpop.f32.mrb[0].mxu0
        %v4168 = vadd.f32 %v4042, %v4167
        %4169 = vmatprep.mubr.f32.mxu0 %v3797
        %4170 = vmatmul.mubr.f32.gmra.mrb[0].mxu0 %v3507
        %v4171 = vpop.f32.mrb[0].mxu0
        %v4172 = vadd.f32 %v4038, %v4171
        %v4173 = vpop.f32.mrb[0].mxu0
        %v4174 = vadd.f32 %v4042, %v4173
        %4175 = vmatprep.mubr.f32.mxu0 %v3802
        %4176 = vmatmul.mubr.f32.gmra.mrb[0].mxu0 %v3512
        %v4177 = vpop.f32.mrb[0].mxu0
        %v4178 = vadd.f32 %v4038, %v4177
        %v4179 = vpop.f32.mrb[0].mxu0
        %v4180 = vadd.f32 %v4042, %v4179
        %4181 = vmatprep.mubr.f32.mxu0 %v3807
        %4182 = vmatmul.mubr.f32.gmra.mrb[0].mxu0 %v3517
        %v4183 = vpop.f32.mrb[0].mxu0
        %v4184 = vadd.f32 %v4038, %v4183
        %v4185 = vpop.f32.mrb[0].mxu0
        %v4186 = vadd.f32 %v4042, %v4185
        %4187 = vmatprep.mubr.f32.mxu0 %v3812
        %4188 = vmatmul.mubr.f32.gmra.mrb[0].mxu0 %v3522
        %v4189 = vpop.f32.mrb[0].mxu0
        %v4190 = vadd.f32 %v4038, %v4189
        %v4191 = vpop.f32.mrb[0].mxu0
        %v4192 = vadd.f32 %v4042, %v4191
        %4193 = vmatprep.mubr.f32.mxu0 %v3817
        %4194 = vmatmul.mubr.f32.gmra.mrb[0].mxu0 %v3527
        %v4195 = vpop.f32.mrb[0].mxu0
        %v4196 = vadd.f32 %v4038, %v4195
        %v4197 = vpop.f32.mrb[0].mxu0
        %v4198 = vadd.f32 %v4042, %v4197
        %4199 = vmatprep.mubr.f32.mxu0 %v3822
        %4200 = vmatmul.mubr.f32.gmra.mrb[0].mxu0 %v3532
        %v4201 = vpop.f32.mrb[0].mxu0
        %v4202 = vadd.f32 %v4038, %v4201
        %v4203 = vpop.f32.mrb[0].mxu0
        %v4204 = vadd.f32 %v4042, %v4203
        %4205 = vmatprep.mubr.f32.mxu0 %v3892
        %4206 = vmatmul.mubr.f32.gmra.mrb[0].mxu0 %v3602
        %v4207 = vpop.f32.mrb[0].mxu0
        %v4208 = vadd.f32 %v4038, %v4207
        %v4209 = vpop.f32.mrb[0].mxu0
        %v4210 = vadd.f32 %v4042, %v4209
        %4211 = vmatprep.mubr.f32.mxu0 %v3897
        %4212 = vmatmul.mubr.f32.gmra.mrb[0].mxu0 %v3607
        %v4213 = vpop.f32.mrb[0].mxu0
        %v4214 = vadd.f32 %v4038, %v4213
        %v4215 = vpop.f32.mrb[0].mxu0
        %v4216 = vadd.f32 %v4042, %v4215
        %4217 = vmatprep.mubr.f32.mxu0 %v3902
        %4218 = vmatmul.mubr.f32.gmra.mrb[0].mxu0 %v3612
        %v4219 = vpop.f32.mrb[0].mxu0
        %v4220 = vadd.f32 %v4038, %v4219
        %v4221 = vpop.f32.mrb[0].mxu0
        %v4222 = vadd.f32 %v4042, %v4221
        %4223 = vmatprep.mubr.f32.mxu0 %v3907
        %4224 = vmatmul.mubr.f32.gmra.mrb[0].mxu0 %v3617
        %v4225 = vpop.f32.mrb[0].mxu0
        %v4226 = vadd.f32 %v4038, %v4225
        %v4227 = vpop.f32.mrb[0].mxu0
        %v4228 = vadd.f32 %v4042, %v4227
        %4229 = vmatprep.mubr.f32.mxu0 %v3912
        %4230 = vmatmul.mubr.f32.gmra.mrb[0].mxu0 %v3622
        %v4231 = vpop.f32.mrb[0].mxu0
        %v4232 = vadd.f32 %v4038, %v4231
        %v4233 = vpop.f32.mrb[0].mxu0
        %v4234 = vadd.f32 %v4042, %v4233
        %4235 = vmatprep.mubr.f32.mxu0 %v3917
        %4236 = vmatmul.mubr.f32.gmra.mrb[0].mxu0 %v3627
        %v4237 = vpop.f32.mrb[0].mxu0
        %v4238 = vadd.f32 %v4038, %v4237
        %v4239 = vpop.f32.mrb[0].mxu0
        %v4240 = vadd.f32 %v4042, %v4239
        %4241 = vmatprep.mubr.f32.mxu0 %v3922
        %4242 = vmatmul.mubr.f32.gmra.mrb[0].mxu0 %v3632
        %v4243 = vpop.f32.mrb[0].mxu0
        %v4244 = vadd.f32 %v4038, %v4243
        %v4245 = vpop.f32.mrb[0].mxu0
        %v4246 = vadd.f32 %v4042, %v4245
        %4247 = vmatprep.mubr.f32.mxu0 %v3927
        %4248 = vmatmul.mubr.f32.gmra.mrb[0].mxu0 %v3637
        %v4249 = vpop.f32.mrb[0].mxu0
        %v4250 = vadd.f32 %v4038, %v4249
        %v4251 = vpop.f32.mrb[0].mxu0
        %v4252 = vadd.f32 %v4042, %v4251
        %4253 = vmatprep.mubr.f32.mxu0 %v3932
        %4254 = vmatmul.mubr.f32.gmra.mrb[0].mxu0 %v3642
        %v4255 = vpop.f32.mrb[0].mxu0
        %v4256 = vadd.f32 %v4038, %v4255
        %v4257 = vpop.f32.mrb[0].mxu0
        %v4258 = vadd.f32 %v4042, %v4257
        %4259 = vmatprep.mubr.f32.mxu0 %v3937
        %4260 = vmatmul.mubr.f32.gmra.mrb[0].mxu0 %v3647
        %v4261 = vpop.f32.mrb[0].mxu0
        %v4262 = vadd.f32 %v4038, %v4261
        %v4263 = vpop.f32.mrb[0].mxu0
        %v4264 = vadd.f32 %v4042, %v4263
        %4265 = vmatprep.mubr.f32.mxu0 %v3942
        %4266 = vmatmul.mubr.f32.gmra.mrb[0].mxu0 %v3652
        %v4267 = vpop.f32.mrb[0].mxu0
        %v4268 = vadd.f32 %v4038, %v4267
        %v4269 = vpop.f32.mrb[0].mxu0
        %v4270 = vadd.f32 %v4042, %v4269
        %4271 = vmatprep.mubr.f32.mxu0 %v3947
        %4272 = vmatmul.mubr.f32.gmra.mrb[0].mxu0 %v3657
        %v4273 = vpop.f32.mrb[0].mxu0
        %v4274 = vadd.f32 %v4038, %v4273
        %v4275 = vpop.f32.mrb[0].mxu0
        %v4276 = vadd.f32 %v4042, %v4275
        %4277 = vmatprep.mubr.f32.mxu0 %v3952
        %4278 = vmatmul.mubr.f32.gmra.mrb[0].mxu0 %v3662
        %v4279 = vpop.f32.mrb[0].mxu0
        %v4280 = vadd.f32 %v4038, %v4279
        %v4281 = vpop.f32.mrb[0].mxu0
        %v4282 = vadd.f32 %v4042, %v4281
        %4283 = vmatprep.mubr.f32.mxu0 %v3957
        %4284 = vmatmul.mubr.f32.gmra.mrb[0].mxu0 %v3667
        %v4285 = vpop.f32.mrb[0].mxu0
        %v4286 = vadd.f32 %v4038, %v4285
        %v4287 = vpop.f32.mrb[0].mxu0
        %v4288 = vadd.f32 %v4042, %v4287
        %4289 = vmatprep.mubr.f32.mxu0 %v3962
        %4290 = vmatmul.mubr.f32.gmra.mrb[0].mxu0 %v3672
        %v4291 = vpop.f32.mrb[0].mxu0
        %v4292 = vadd.f32 %v4038, %v4291
        %v4293 = vpop.f32.mrb[0].mxu0
        %v4294 = vadd.f32 %v4042, %v4293
        %4295 = vmatprep.mubr.f32.mxu0 %v3967
        %4296 = vmatmul.mubr.f32.gmra.mrb[0].mxu0 %v3677
        %v4297 = vpop.f32.mrb[0].mxu0
        %v4298 = vadd.f32 %v4038, %v4297
        %v4299 = vpop.f32.mrb[0].mxu0
        %v4300 = vadd.f32 %v4042, %v4299
        %4301 = vdwg.mxu0
        %v4302 = vadd.f32 %v331, %v4112
        %v4303 = vadd.f32 %v332, %v4114
        %v4304 = vadd.f32 %v333, %v4118
        %v4305 = vadd.f32 %v334, %v4120
        %v4306 = vadd.f32 %v335, %v4124
        %v4307 = vadd.f32 %v336, %v4126
        %v4308 = vadd.f32 %v337, %v4130
        %v4309 = vadd.f32 %v338, %v4132
        %v4310 = vadd.f32 %v339, %v4136
        %v4311 = vadd.f32 %v340, %v4138
        %v4312 = vadd.f32 %v341, %v4142
        %v4313 = vadd.f32 %v342, %v4144
        %v4314 = vadd.f32 %v343, %v4148
        %v4315 = vadd.f32 %v344, %v4150
        %v4316 = vadd.f32 %v345, %v4154
        %v4317 = vadd.f32 %v346, %v4156
        %v4318 = vadd.f32 %v347, %v4160
        %v4319 = vadd.f32 %v348, %v4162
        %v4320 = vadd.f32 %v349, %v4166
        %v4321 = vadd.f32 %v350, %v4168
        %v4322 = vadd.f32 %v351, %v4172
        %v4323 = vadd.f32 %v352, %v4174
        %v4324 = vadd.f32 %v353, %v4178
        %v4325 = vadd.f32 %v354, %v4180
        %v4326 = vadd.f32 %v355, %v4184
        %v4327 = vadd.f32 %v356, %v4186
        %v4328 = vadd.f32 %v357, %v4190
        %v4329 = vadd.f32 %v358, %v4192
        %v4330 = vadd.f32 %v359, %v4196
        %v4331 = vadd.f32 %v360, %v4198
        %v4332 = vadd.f32 %v361, %v4202
        %v4333 = vadd.f32 %v362, %v4204
        %v4334 = vadd.f32 %v363, %v4208
        %v4335 = vadd.f32 %v364, %v4210
        %v4336 = vadd.f32 %v365, %v4214
        %v4337 = vadd.f32 %v366, %v4216
        %v4338 = vadd.f32 %v367, %v4220
        %v4339 = vadd.f32 %v368, %v4222
        %v4340 = vadd.f32 %v369, %v4226
        %v4341 = vadd.f32 %v370, %v4228
        %v4342 = vadd.f32 %v371, %v4232
        %v4343 = vadd.f32 %v372, %v4234
        %v4344 = vadd.f32 %v373, %v4238
        %v4345 = vadd.f32 %v374, %v4240
        %v4346 = vadd.f32 %v375, %v4244
        %v4347 = vadd.f32 %v376, %v4246
        %v4348 = vadd.f32 %v377, %v4250
        %v4349 = vadd.f32 %v378, %v4252
        %v4350 = vadd.f32 %v379, %v4256
        %v4351 = vadd.f32 %v380, %v4258
        %v4352 = vadd.f32 %v381, %v4262
        %v4353 = vadd.f32 %v382, %v4264
        %v4354 = vadd.f32 %v383, %v4268
        %v4355 = vadd.f32 %v384, %v4270
        %v4356 = vadd.f32 %v385, %v4274
        %v4357 = vadd.f32 %v386, %v4276
        %v4358 = vadd.f32 %v387, %v4280
        %v4359 = vadd.f32 %v388, %v4282
        %v4360 = vadd.f32 %v389, %v4286
        %v4361 = vadd.f32 %v390, %v4288
        %v4362 = vadd.f32 %v391, %v4292
        %v4363 = vadd.f32 %v392, %v4294
        %v4364 = vadd.f32 %v393, %v4298
        %v4365 = vadd.f32 %v394, %v4300
        %v4366 = vadd.f32 %v4302, %v4303
        %4367 = vadd.xlane.f32.xlu0 %v4366
        %v4368 = vpop.xlane.xlu0 %4367
        %v4369 = vadd.f32 %v4304, %v4305
        %4370 = vadd.xlane.f32.xlu0 %v4369
        %v4371 = vpop.xlane.xlu0 %4370
        %v4372 = vadd.f32 %v4306, %v4307
        %4373 = vadd.xlane.f32.xlu0 %v4372
        %v4374 = vpop.xlane.xlu0 %4373
        %v4375 = vadd.f32 %v4308, %v4309
        %4376 = vadd.xlane.f32.xlu0 %v4375
        %v4377 = vpop.xlane.xlu0 %4376
        %v4378 = vadd.f32 %v4310, %v4311
        %4379 = vadd.xlane.f32.xlu0 %v4378
        %v4380 = vpop.xlane.xlu0 %4379
        %v4381 = vadd.f32 %v4312, %v4313
        %4382 = vadd.xlane.f32.xlu0 %v4381
        %v4383 = vpop.xlane.xlu0 %4382
        %v4384 = vadd.f32 %v4314, %v4315
        %4385 = vadd.xlane.f32.xlu0 %v4384
        %v4386 = vpop.xlane.xlu0 %4385
        %v4387 = vadd.f32 %v4316, %v4317
        %4388 = vadd.xlane.f32.xlu0 %v4387
        %v4389 = vpop.xlane.xlu0 %4388
        %v4390 = vadd.f32 %v4318, %v4319
        %4391 = vadd.xlane.f32.xlu0 %v4390
        %v4392 = vpop.xlane.xlu0 %4391
        %v4393 = vadd.f32 %v4320, %v4321
        %4394 = vadd.xlane.f32.xlu0 %v4393
        %v4395 = vpop.xlane.xlu0 %4394
        %v4396 = vadd.f32 %v4322, %v4323
        %4397 = vadd.xlane.f32.xlu0 %v4396
        %v4398 = vpop.xlane.xlu0 %4397
        %v4399 = vadd.f32 %v4324, %v4325
        %4400 = vadd.xlane.f32.xlu0 %v4399
        %v4401 = vpop.xlane.xlu0 %4400
        %v4402 = vadd.f32 %v4326, %v4327
        %4403 = vadd.xlane.f32.xlu0 %v4402
        %v4404 = vpop.xlane.xlu0 %4403
        %v4405 = vadd.f32 %v4328, %v4329
        %4406 = vadd.xlane.f32.xlu0 %v4405
        %v4407 = vpop.xlane.xlu0 %4406
        %v4408 = vadd.f32 %v4330, %v4331
        %4409 = vadd.xlane.f32.xlu0 %v4408
        %v4410 = vpop.xlane.xlu0 %4409
        %v4411 = vadd.f32 %v4332, %v4333
        %4412 = vadd.xlane.f32.xlu0 %v4411
        %v4413 = vpop.xlane.xlu0 %4412
        %v4414 = vadd.f32 %v4334, %v4335
        %4415 = vadd.xlane.f32.xlu0 %v4414
        %v4416 = vpop.xlane.xlu0 %4415
        %v4417 = vadd.f32 %v4336, %v4337
        %4418 = vadd.xlane.f32.xlu0 %v4417
        %v4419 = vpop.xlane.xlu0 %4418
        %v4420 = vadd.f32 %v4338, %v4339
        %4421 = vadd.xlane.f32.xlu0 %v4420
        %v4422 = vpop.xlane.xlu0 %4421
        %v4423 = vadd.f32 %v4340, %v4341
        %4424 = vadd.xlane.f32.xlu0 %v4423
        %v4425 = vpop.xlane.xlu0 %4424
        %v4426 = vadd.f32 %v4342, %v4343
        %4427 = vadd.xlane.f32.xlu0 %v4426
        %v4428 = vpop.xlane.xlu0 %4427
        %v4429 = vadd.f32 %v4344, %v4345
        %4430 = vadd.xlane.f32.xlu0 %v4429
        %v4431 = vpop.xlane.xlu0 %4430
        %v4432 = vadd.f32 %v4346, %v4347
        %4433 = vadd.xlane.f32.xlu0 %v4432
        %v4434 = vpop.xlane.xlu0 %4433
        %v4435 = vadd.f32 %v4348, %v4349
        %4436 = vadd.xlane.f32.xlu0 %v4435
        %v4437 = vpop.xlane.xlu0 %4436
        %v4438 = vadd.f32 %v4350, %v4351
        %4439 = vadd.xlane.f32.xlu0 %v4438
        %v4440 = vpop.xlane.xlu0 %4439
        %v4441 = vadd.f32 %v4352, %v4353
        %4442 = vadd.xlane.f32.xlu0 %v4441
        %v4443 = vpop.xlane.xlu0 %4442
        %v4444 = vadd.f32 %v4354, %v4355
        %4445 = vadd.xlane.f32.xlu0 %v4444
        %v4446 = vpop.xlane.xlu0 %4445
        %v4447 = vadd.f32 %v4356, %v4357
        %4448 = vadd.xlane.f32.xlu0 %v4447
        %v4449 = vpop.xlane.xlu0 %4448
        %v4450 = vadd.f32 %v4358, %v4359
        %4451 = vadd.xlane.f32.xlu0 %v4450
        %v4452 = vpop.xlane.xlu0 %4451
        %v4453 = vadd.f32 %v4360, %v4361
        %4454 = vadd.xlane.f32.xlu0 %v4453
        %v4455 = vpop.xlane.xlu0 %4454
        %v4456 = vadd.f32 %v4362, %v4363
        %4457 = vadd.xlane.f32.xlu0 %v4456
        %v4458 = vpop.xlane.xlu0 %4457
        %v4459 = vadd.f32 %v4364, %v4365
        %4460 = vadd.xlane.f32.xlu0 %v4459
        %v4461 = vpop.xlane.xlu0 %4460
        %v4462 = vmul.f32 %v4368, %v510
        %v4463 = vmul.f32 %v4371, %v510
        %v4464 = vmul.f32 %v4374, %v510
        %v4465 = vmul.f32 %v4377, %v510
        %v4466 = vmul.f32 %v4380, %v510
        %v4467 = vmul.f32 %v4383, %v510
        %v4468 = vmul.f32 %v4386, %v510
        %v4469 = vmul.f32 %v4389, %v510
        %v4470 = vmul.f32 %v4392, %v510
        %v4471 = vmul.f32 %v4395, %v510
        %v4472 = vmul.f32 %v4398, %v510
        %v4473 = vmul.f32 %v4401, %v510
        %v4474 = vmul.f32 %v4404, %v510
        %v4475 = vmul.f32 %v4407, %v510
        %v4476 = vmul.f32 %v4410, %v510
        %v4477 = vmul.f32 %v4413, %v510
        %v4478 = vmul.f32 %v4416, %v510
        %v4479 = vmul.f32 %v4419, %v510
        %v4480 = vmul.f32 %v4422, %v510
        %v4481 = vmul.f32 %v4425, %v510
        %v4482 = vmul.f32 %v4428, %v510
        %v4483 = vmul.f32 %v4431, %v510
        %v4484 = vmul.f32 %v4434, %v510
        %v4485 = vmul.f32 %v4437, %v510
        %v4486 = vmul.f32 %v4440, %v510
        %v4487 = vmul.f32 %v4443, %v510
        %v4488 = vmul.f32 %v4446, %v510
        %v4489 = vmul.f32 %v4449, %v510
        %v4490 = vmul.f32 %v4452, %v510
        %v4491 = vmul.f32 %v4455, %v510
        %v4492 = vmul.f32 %v4458, %v510
        %v4493 = vmul.f32 %v4461, %v510
        %v4494 = vsub.f32 %v4302, %v4462
        %v4495 = vsub.f32 %v4303, %v4462
        %v4496 = vsub.f32 %v4304, %v4463
        %v4497 = vsub.f32 %v4305, %v4463
        %v4498 = vsub.f32 %v4306, %v4464
        %v4499 = vsub.f32 %v4307, %v4464
        %v4500 = vsub.f32 %v4308, %v4465
        %v4501 = vsub.f32 %v4309, %v4465
        %v4502 = vsub.f32 %v4310, %v4466
        %v4503 = vsub.f32 %v4311, %v4466
        %v4504 = vsub.f32 %v4312, %v4467
        %v4505 = vsub.f32 %v4313, %v4467
        %v4506 = vsub.f32 %v4314, %v4468
        %v4507 = vsub.f32 %v4315, %v4468
        %v4508 = vsub.f32 %v4316, %v4469
        %v4509 = vsub.f32 %v4317, %v4469
        %v4510 = vsub.f32 %v4318, %v4470
        %v4511 = vsub.f32 %v4319, %v4470
        %v4512 = vsub.f32 %v4320, %v4471
        %v4513 = vsub.f32 %v4321, %v4471
        %v4514 = vsub.f32 %v4322, %v4472
        %v4515 = vsub.f32 %v4323, %v4472
        %v4516 = vsub.f32 %v4324, %v4473
        %v4517 = vsub.f32 %v4325, %v4473
        %v4518 = vsub.f32 %v4326, %v4474
        %v4519 = vsub.f32 %v4327, %v4474
        %v4520 = vsub.f32 %v4328, %v4475
        %v4521 = vsub.f32 %v4329, %v4475
        %v4522 = vsub.f32 %v4330, %v4476
        %v4523 = vsub.f32 %v4331, %v4476
        %v4524 = vsub.f32 %v4332, %v4477
        %v4525 = vsub.f32 %v4333, %v4477
        %v4526 = vsub.f32 %v4334, %v4478
        %v4527 = vsub.f32 %v4335, %v4478
        %v4528 = vsub.f32 %v4336, %v4479
        %v4529 = vsub.f32 %v4337, %v4479
        %v4530 = vsub.f32 %v4338, %v4480
        %v4531 = vsub.f32 %v4339, %v4480
        %v4532 = vsub.f32 %v4340, %v4481
        %v4533 = vsub.f32 %v4341, %v4481
        %v4534 = vsub.f32 %v4342, %v4482
        %v4535 = vsub.f32 %v4343, %v4482
        %v4536 = vsub.f32 %v4344, %v4483
        %v4537 = vsub.f32 %v4345, %v4483
        %v4538 = vsub.f32 %v4346, %v4484
        %v4539 = vsub.f32 %v4347, %v4484
        %v4540 = vsub.f32 %v4348, %v4485
        %v4541 = vsub.f32 %v4349, %v4485
        %v4542 = vsub.f32 %v4350, %v4486
        %v4543 = vsub.f32 %v4351, %v4486
        %v4544 = vsub.f32 %v4352, %v4487
        %v4545 = vsub.f32 %v4353, %v4487
        %v4546 = vsub.f32 %v4354, %v4488
        %v4547 = vsub.f32 %v4355, %v4488
        %v4548 = vsub.f32 %v4356, %v4489
        %v4549 = vsub.f32 %v4357, %v4489
        %v4550 = vsub.f32 %v4358, %v4490
        %v4551 = vsub.f32 %v4359, %v4490
        %v4552 = vsub.f32 %v4360, %v4491
        %v4553 = vsub.f32 %v4361, %v4491
        %v4554 = vsub.f32 %v4362, %v4492
        %v4555 = vsub.f32 %v4363, %v4492
        %v4556 = vsub.f32 %v4364, %v4493
        %v4557 = vsub.f32 %v4365, %v4493
        %v4558 = vmul.f32 %v4494, %v4494
        %v4559 = vmul.f32 %v4495, %v4495
        %v4560 = vmul.f32 %v4496, %v4496
        %v4561 = vmul.f32 %v4497, %v4497
        %v4562 = vmul.f32 %v4498, %v4498
        %v4563 = vmul.f32 %v4499, %v4499
        %v4564 = vmul.f32 %v4500, %v4500
        %v4565 = vmul.f32 %v4501, %v4501
        %v4566 = vmul.f32 %v4502, %v4502
        %v4567 = vmul.f32 %v4503, %v4503
        %v4568 = vmul.f32 %v4504, %v4504
        %v4569 = vmul.f32 %v4505, %v4505
        %v4570 = vmul.f32 %v4506, %v4506
        %v4571 = vmul.f32 %v4507, %v4507
        %v4572 = vmul.f32 %v4508, %v4508
        %v4573 = vmul.f32 %v4509, %v4509
        %v4574 = vmul.f32 %v4510, %v4510
        %v4575 = vmul.f32 %v4511, %v4511
        %v4576 = vmul.f32 %v4512, %v4512
        %v4577 = vmul.f32 %v4513, %v4513
        %v4578 = vmul.f32 %v4514, %v4514
        %v4579 = vmul.f32 %v4515, %v4515
        %v4580 = vmul.f32 %v4516, %v4516
        %v4581 = vmul.f32 %v4517, %v4517
        %v4582 = vmul.f32 %v4518, %v4518
        %v4583 = vmul.f32 %v4519, %v4519
        %v4584 = vmul.f32 %v4520, %v4520
        %v4585 = vmul.f32 %v4521, %v4521
        %v4586 = vmul.f32 %v4522, %v4522
        %v4587 = vmul.f32 %v4523, %v4523
        %v4588 = vmul.f32 %v4524, %v4524
        %v4589 = vmul.f32 %v4525, %v4525
        %v4590 = vmul.f32 %v4526, %v4526
        %v4591 = vmul.f32 %v4527, %v4527
        %v4592 = vmul.f32 %v4528, %v4528
        %v4593 = vmul.f32 %v4529, %v4529
        %v4594 = vmul.f32 %v4530, %v4530
        %v4595 = vmul.f32 %v4531, %v4531
        %v4596 = vmul.f32 %v4532, %v4532
        %v4597 = vmul.f32 %v4533, %v4533
        %v4598 = vmul.f32 %v4534, %v4534
        %v4599 = vmul.f32 %v4535, %v4535
        %v4600 = vmul.f32 %v4536, %v4536
        %v4601 = vmul.f32 %v4537, %v4537
        %v4602 = vmul.f32 %v4538, %v4538
        %v4603 = vmul.f32 %v4539, %v4539
        %v4604 = vmul.f32 %v4540, %v4540
        %v4605 = vmul.f32 %v4541, %v4541
        %v4606 = vmul.f32 %v4542, %v4542
        %v4607 = vmul.f32 %v4543, %v4543
        %v4608 = vmul.f32 %v4544, %v4544
        %v4609 = vmul.f32 %v4545, %v4545
        %v4610 = vmul.f32 %v4546, %v4546
        %v4611 = vmul.f32 %v4547, %v4547
        %v4612 = vmul.f32 %v4548, %v4548
        %v4613 = vmul.f32 %v4549, %v4549
        %v4614 = vmul.f32 %v4550, %v4550
        %v4615 = vmul.f32 %v4551, %v4551
        %v4616 = vmul.f32 %v4552, %v4552
        %v4617 = vmul.f32 %v4553, %v4553
        %v4618 = vmul.f32 %v4554, %v4554
        %v4619 = vmul.f32 %v4555, %v4555
        %v4620 = vmul.f32 %v4556, %v4556
        %v4621 = vmul.f32 %v4557, %v4557
        %v4622 = vadd.f32 %v4558, %v4559
        %4623 = vadd.xlane.f32.xlu0 %v4622
        %v4624 = vpop.xlane.xlu0 %4623
        %v4625 = vadd.f32 %v4560, %v4561
        %4626 = vadd.xlane.f32.xlu0 %v4625
        %v4627 = vpop.xlane.xlu0 %4626
        %v4628 = vadd.f32 %v4562, %v4563
        %4629 = vadd.xlane.f32.xlu0 %v4628
        %v4630 = vpop.xlane.xlu0 %4629
        %v4631 = vadd.f32 %v4564, %v4565
        %4632 = vadd.xlane.f32.xlu0 %v4631
        %v4633 = vpop.xlane.xlu0 %4632
        %v4634 = vadd.f32 %v4566, %v4567
        %4635 = vadd.xlane.f32.xlu0 %v4634
        %v4636 = vpop.xlane.xlu0 %4635
        %v4637 = vadd.f32 %v4568, %v4569
        %4638 = vadd.xlane.f32.xlu0 %v4637
        %v4639 = vpop.xlane.xlu0 %4638
        %v4640 = vadd.f32 %v4570, %v4571
        %4641 = vadd.xlane.f32.xlu0 %v4640
        %v4642 = vpop.xlane.xlu0 %4641
        %v4643 = vadd.f32 %v4572, %v4573
        %4644 = vadd.xlane.f32.xlu0 %v4643
        %v4645 = vpop.xlane.xlu0 %4644
        %v4646 = vadd.f32 %v4574, %v4575
        %4647 = vadd.xlane.f32.xlu0 %v4646
        %v4648 = vpop.xlane.xlu0 %4647
        %v4649 = vadd.f32 %v4576, %v4577
        %4650 = vadd.xlane.f32.xlu0 %v4649
        %v4651 = vpop.xlane.xlu0 %4650
        %v4652 = vadd.f32 %v4578, %v4579
        %4653 = vadd.xlane.f32.xlu0 %v4652
        %v4654 = vpop.xlane.xlu0 %4653
        %v4655 = vadd.f32 %v4580, %v4581
        %4656 = vadd.xlane.f32.xlu0 %v4655
        %v4657 = vpop.xlane.xlu0 %4656
        %v4658 = vadd.f32 %v4582, %v4583
        %4659 = vadd.xlane.f32.xlu0 %v4658
        %v4660 = vpop.xlane.xlu0 %4659
        %v4661 = vadd.f32 %v4584, %v4585
        %4662 = vadd.xlane.f32.xlu0 %v4661
        %v4663 = vpop.xlane.xlu0 %4662
        %v4664 = vadd.f32 %v4586, %v4587
        %4665 = vadd.xlane.f32.xlu0 %v4664
        %v4666 = vpop.xlane.xlu0 %4665
        %v4667 = vadd.f32 %v4588, %v4589
        %4668 = vadd.xlane.f32.xlu0 %v4667
        %v4669 = vpop.xlane.xlu0 %4668
        %v4670 = vadd.f32 %v4590, %v4591
        %4671 = vadd.xlane.f32.xlu0 %v4670
        %v4672 = vpop.xlane.xlu0 %4671
        %v4673 = vadd.f32 %v4592, %v4593
        %4674 = vadd.xlane.f32.xlu0 %v4673
        %v4675 = vpop.xlane.xlu0 %4674
        %v4676 = vadd.f32 %v4594, %v4595
        %4677 = vadd.xlane.f32.xlu0 %v4676
        %v4678 = vpop.xlane.xlu0 %4677
        %v4679 = vadd.f32 %v4596, %v4597
        %4680 = vadd.xlane.f32.xlu0 %v4679
        %v4681 = vpop.xlane.xlu0 %4680
        %v4682 = vadd.f32 %v4598, %v4599
        %4683 = vadd.xlane.f32.xlu0 %v4682
        %v4684 = vpop.xlane.xlu0 %4683
        %v4685 = vadd.f32 %v4600, %v4601
        %4686 = vadd.xlane.f32.xlu0 %v4685
        %v4687 = vpop.xlane.xlu0 %4686
        %v4688 = vadd.f32 %v4602, %v4603
        %4689 = vadd.xlane.f32.xlu0 %v4688
        %v4690 = vpop.xlane.xlu0 %4689
        %v4691 = vadd.f32 %v4604, %v4605
        %4692 = vadd.xlane.f32.xlu0 %v4691
        %v4693 = vpop.xlane.xlu0 %4692
        %v4694 = vadd.f32 %v4606, %v4607
        %4695 = vadd.xlane.f32.xlu0 %v4694
        %v4696 = vpop.xlane.xlu0 %4695
        %v4697 = vadd.f32 %v4608, %v4609
        %4698 = vadd.xlane.f32.xlu0 %v4697
        %v4699 = vpop.xlane.xlu0 %4698
        %v4700 = vadd.f32 %v4610, %v4611
        %4701 = vadd.xlane.f32.xlu0 %v4700
        %v4702 = vpop.xlane.xlu0 %4701
        %v4703 = vadd.f32 %v4612, %v4613
        %4704 = vadd.xlane.f32.xlu0 %v4703
        %v4705 = vpop.xlane.xlu0 %4704
        %v4706 = vadd.f32 %v4614, %v4615
        %4707 = vadd.xlane.f32.xlu0 %v4706
        %v4708 = vpop.xlane.xlu0 %4707
        %v4709 = vadd.f32 %v4616, %v4617
        %4710 = vadd.xlane.f32.xlu0 %v4709
        %v4711 = vpop.xlane.xlu0 %4710
        %v4712 = vadd.f32 %v4618, %v4619
        %4713 = vadd.xlane.f32.xlu0 %v4712
        %v4714 = vpop.xlane.xlu0 %4713
        %v4715 = vadd.f32 %v4620, %v4621
        %4716 = vadd.xlane.f32.xlu0 %v4715
        %v4717 = vpop.xlane.xlu0 %4716
        %v4718 = vmul.f32 %v4624, %v510
        %v4719 = vmul.f32 %v4627, %v510
        %v4720 = vmul.f32 %v4630, %v510
        %v4721 = vmul.f32 %v4633, %v510
        %v4722 = vmul.f32 %v4636, %v510
        %v4723 = vmul.f32 %v4639, %v510
        %v4724 = vmul.f32 %v4642, %v510
        %v4725 = vmul.f32 %v4645, %v510
        %v4726 = vmul.f32 %v4648, %v510
        %v4727 = vmul.f32 %v4651, %v510
        %v4728 = vmul.f32 %v4654, %v510
        %v4729 = vmul.f32 %v4657, %v510
        %v4730 = vmul.f32 %v4660, %v510
        %v4731 = vmul.f32 %v4663, %v510
        %v4732 = vmul.f32 %v4666, %v510
        %v4733 = vmul.f32 %v4669, %v510
        %v4734 = vmul.f32 %v4672, %v510
        %v4735 = vmul.f32 %v4675, %v510
        %v4736 = vmul.f32 %v4678, %v510
        %v4737 = vmul.f32 %v4681, %v510
        %v4738 = vmul.f32 %v4684, %v510
        %v4739 = vmul.f32 %v4687, %v510
        %v4740 = vmul.f32 %v4690, %v510
        %v4741 = vmul.f32 %v4693, %v510
        %v4742 = vmul.f32 %v4696, %v510
        %v4743 = vmul.f32 %v4699, %v510
        %v4744 = vmul.f32 %v4702, %v510
        %v4745 = vmul.f32 %v4705, %v510
        %v4746 = vmul.f32 %v4708, %v510
        %v4747 = vmul.f32 %v4711, %v510
        %v4748 = vmul.f32 %v4714, %v510
        %v4749 = vmul.f32 %v4717, %v510
        %v4750 = vadd.f32 %v4718, 1e-05
        %v4751 = vadd.f32 %v4719, 1e-05
        %v4752 = vadd.f32 %v4720, 1e-05
        %v4753 = vadd.f32 %v4721, 1e-05
        %v4754 = vadd.f32 %v4722, 1e-05
        %v4755 = vadd.f32 %v4723, 1e-05
        %v4756 = vadd.f32 %v4724, 1e-05
        %v4757 = vadd.f32 %v4725, 1e-05
        %v4758 = vadd.f32 %v4726, 1e-05
        %v4759 = vadd.f32 %v4727, 1e-05
        %v4760 = vadd.f32 %v4728, 1e-05
        %v4761 = vadd.f32 %v4729, 1e-05
        %v4762 = vadd.f32 %v4730, 1e-05
        %v4763 = vadd.f32 %v4731, 1e-05
        %v4764 = vadd.f32 %v4732, 1e-05
        %v4765 = vadd.f32 %v4733, 1e-05
        %v4766 = vadd.f32 %v4734, 1e-05
        %v4767 = vadd.f32 %v4735, 1e-05
        %v4768 = vadd.f32 %v4736, 1e-05
        %v4769 = vadd.f32 %v4737, 1e-05
        %v4770 = vadd.f32 %v4738, 1e-05
        %v4771 = vadd.f32 %v4739, 1e-05
        %v4772 = vadd.f32 %v4740, 1e-05
        %v4773 = vadd.f32 %v4741, 1e-05
        %v4774 = vadd.f32 %v4742, 1e-05
        %v4775 = vadd.f32 %v4743, 1e-05
        %v4776 = vadd.f32 %v4744, 1e-05
        %v4777 = vadd.f32 %v4745, 1e-05
        %v4778 = vadd.f32 %v4746, 1e-05
        %v4779 = vadd.f32 %v4747, 1e-05
        %v4780 = vadd.f32 %v4748, 1e-05
        %v4781 = vadd.f32 %v4749, 1e-05
        %v4782 = vrsqrt.pop %v4750
        %v4783 = vrsqrt.pop %v4751
        %v4784 = vrsqrt.pop %v4752
        %v4785 = vrsqrt.pop %v4753
        %v4786 = vrsqrt.pop %v4754
        %v4787 = vrsqrt.pop %v4755
        %v4788 = vrsqrt.pop %v4756
        %v4789 = vrsqrt.pop %v4757
        %v4790 = vrsqrt.pop %v4758
        %v4791 = vrsqrt.pop %v4759
        %v4792 = vrsqrt.pop %v4760
        %v4793 = vrsqrt.pop %v4761
        %v4794 = vrsqrt.pop %v4762
        %v4795 = vrsqrt.pop %v4763
        %v4796 = vrsqrt.pop %v4764
        %v4797 = vrsqrt.pop %v4765
        %v4798 = vrsqrt.pop %v4766
        %v4799 = vrsqrt.pop %v4767
        %v4800 = vrsqrt.pop %v4768
        %v4801 = vrsqrt.pop %v4769
        %v4802 = vrsqrt.pop %v4770
        %v4803 = vrsqrt.pop %v4771
        %v4804 = vrsqrt.pop %v4772
        %v4805 = vrsqrt.pop %v4773
        %v4806 = vrsqrt.pop %v4774
        %v4807 = vrsqrt.pop %v4775
        %v4808 = vrsqrt.pop %v4776
        %v4809 = vrsqrt.pop %v4777
        %v4810 = vrsqrt.pop %v4778
        %v4811 = vrsqrt.pop %v4779
        %v4812 = vrsqrt.pop %v4780
        %v4813 = vrsqrt.pop %v4781
        %v4814 = vmul.f32 %v4494, %v4782
        %v4815 = vmul.f32 %v4495, %v4782
        %v4816 = vmul.f32 %v4496, %v4783
        %v4817 = vmul.f32 %v4497, %v4783
        %v4818 = vmul.f32 %v4498, %v4784
        %v4819 = vmul.f32 %v4499, %v4784
        %v4820 = vmul.f32 %v4500, %v4785
        %v4821 = vmul.f32 %v4501, %v4785
        %v4822 = vmul.f32 %v4502, %v4786
        %v4823 = vmul.f32 %v4503, %v4786
        %v4824 = vmul.f32 %v4504, %v4787
        %v4825 = vmul.f32 %v4505, %v4787
        %v4826 = vmul.f32 %v4506, %v4788
        %v4827 = vmul.f32 %v4507, %v4788
        %v4828 = vmul.f32 %v4508, %v4789
        %v4829 = vmul.f32 %v4509, %v4789
        %v4830 = vmul.f32 %v4510, %v4790
        %v4831 = vmul.f32 %v4511, %v4790
        %v4832 = vmul.f32 %v4512, %v4791
        %v4833 = vmul.f32 %v4513, %v4791
        %v4834 = vmul.f32 %v4514, %v4792
        %v4835 = vmul.f32 %v4515, %v4792
        %v4836 = vmul.f32 %v4516, %v4793
        %v4837 = vmul.f32 %v4517, %v4793
        %v4838 = vmul.f32 %v4518, %v4794
        %v4839 = vmul.f32 %v4519, %v4794
        %v4840 = vmul.f32 %v4520, %v4795
        %v4841 = vmul.f32 %v4521, %v4795
        %v4842 = vmul.f32 %v4522, %v4796
        %v4843 = vmul.f32 %v4523, %v4796
        %v4844 = vmul.f32 %v4524, %v4797
        %v4845 = vmul.f32 %v4525, %v4797
        %v4846 = vmul.f32 %v4526, %v4798
        %v4847 = vmul.f32 %v4527, %v4798
        %v4848 = vmul.f32 %v4528, %v4799
        %v4849 = vmul.f32 %v4529, %v4799
        %v4850 = vmul.f32 %v4530, %v4800
        %v4851 = vmul.f32 %v4531, %v4800
        %v4852 = vmul.f32 %v4532, %v4801
        %v4853 = vmul.f32 %v4533, %v4801
        %v4854 = vmul.f32 %v4534, %v4802
        %v4855 = vmul.f32 %v4535, %v4802
        %v4856 = vmul.f32 %v4536, %v4803
        %v4857 = vmul.f32 %v4537, %v4803
        %v4858 = vmul.f32 %v4538, %v4804
        %v4859 = vmul.f32 %v4539, %v4804
        %v4860 = vmul.f32 %v4540, %v4805
        %v4861 = vmul.f32 %v4541, %v4805
        %v4862 = vmul.f32 %v4542, %v4806
        %v4863 = vmul.f32 %v4543, %v4806
        %v4864 = vmul.f32 %v4544, %v4807
        %v4865 = vmul.f32 %v4545, %v4807
        %v4866 = vmul.f32 %v4546, %v4808
        %v4867 = vmul.f32 %v4547, %v4808
        %v4868 = vmul.f32 %v4548, %v4809
        %v4869 = vmul.f32 %v4549, %v4809
        %v4870 = vmul.f32 %v4550, %v4810
        %v4871 = vmul.f32 %v4551, %v4810
        %v4872 = vmul.f32 %v4552, %v4811
        %v4873 = vmul.f32 %v4553, %v4811
        %v4874 = vmul.f32 %v4554, %v4812
        %v4875 = vmul.f32 %v4555, %v4812
        %v4876 = vmul.f32 %v4556, %v4813
        %v4877 = vmul.f32 %v4557, %v4813
        %v4879 = vlaneseq
        %v4880 = vshrl.u32 %v4879, 7
        %v4881 = vsub.s32 0, %v4880
        %v4882 = vrot.slane %v399, %v4881
        %v4883 = vlaneseq
        %v4884 = vshrl.u32 %v4883, 7
        %v4885 = vsub.s32 1, %v4884
        %v4886 = vrot.slane %v399, %v4885
        %v4889 = vmul.f32 %v4814, %v4882
        %v4890 = vmul.f32 %v4815, %v4886
        %v4891 = vmul.f32 %v4816, %v4882
        %v4892 = vmul.f32 %v4817, %v4886
        %v4893 = vmul.f32 %v4818, %v4882
        %v4894 = vmul.f32 %v4819, %v4886
        %v4895 = vmul.f32 %v4820, %v4882
        %v4896 = vmul.f32 %v4821, %v4886
        %v4897 = vmul.f32 %v4822, %v4882
        %v4898 = vmul.f32 %v4823, %v4886
        %v4899 = vmul.f32 %v4824, %v4882
        %v4900 = vmul.f32 %v4825, %v4886
        %v4901 = vmul.f32 %v4826, %v4882
        %v4902 = vmul.f32 %v4827, %v4886
        %v4903 = vmul.f32 %v4828, %v4882
        %v4904 = vmul.f32 %v4829, %v4886
        %v4905 = vmul.f32 %v4830, %v4882
        %v4906 = vmul.f32 %v4831, %v4886
        %v4907 = vmul.f32 %v4832, %v4882
        %v4908 = vmul.f32 %v4833, %v4886
        %v4909 = vmul.f32 %v4834, %v4882
        %v4910 = vmul.f32 %v4835, %v4886
        %v4911 = vmul.f32 %v4836, %v4882
        %v4912 = vmul.f32 %v4837, %v4886
        %v4913 = vmul.f32 %v4838, %v4882
        %v4914 = vmul.f32 %v4839, %v4886
        %v4915 = vmul.f32 %v4840, %v4882
        %v4916 = vmul.f32 %v4841, %v4886
        %v4917 = vmul.f32 %v4842, %v4882
        %v4918 = vmul.f32 %v4843, %v4886
        %v4919 = vmul.f32 %v4844, %v4882
        %v4920 = vmul.f32 %v4845, %v4886
        %v4921 = vmul.f32 %v4846, %v4882
        %v4922 = vmul.f32 %v4847, %v4886
        %v4923 = vmul.f32 %v4848, %v4882
        %v4924 = vmul.f32 %v4849, %v4886
        %v4925 = vmul.f32 %v4850, %v4882
        %v4926 = vmul.f32 %v4851, %v4886
        %v4927 = vmul.f32 %v4852, %v4882
        %v4928 = vmul.f32 %v4853, %v4886
        %v4929 = vmul.f32 %v4854, %v4882
        %v4930 = vmul.f32 %v4855, %v4886
        %v4931 = vmul.f32 %v4856, %v4882
        %v4932 = vmul.f32 %v4857, %v4886
        %v4933 = vmul.f32 %v4858, %v4882
        %v4934 = vmul.f32 %v4859, %v4886
        %v4935 = vmul.f32 %v4860, %v4882
        %v4936 = vmul.f32 %v4861, %v4886
        %v4937 = vmul.f32 %v4862, %v4882
        %v4938 = vmul.f32 %v4863, %v4886
        %v4939 = vmul.f32 %v4864, %v4882
        %v4940 = vmul.f32 %v4865, %v4886
        %v4941 = vmul.f32 %v4866, %v4882
        %v4942 = vmul.f32 %v4867, %v4886
        %v4943 = vmul.f32 %v4868, %v4882
        %v4944 = vmul.f32 %v4869, %v4886
        %v4945 = vmul.f32 %v4870, %v4882
        %v4946 = vmul.f32 %v4871, %v4886
        %v4947 = vmul.f32 %v4872, %v4882
        %v4948 = vmul.f32 %v4873, %v4886
        %v4949 = vmul.f32 %v4874, %v4882
        %v4950 = vmul.f32 %v4875, %v4886
        %v4951 = vmul.f32 %v4876, %v4882
        %v4952 = vmul.f32 %v4877, %v4886
        %v4954 = vlaneseq
        %v4955 = vshrl.u32 %v4954, 7
        %v4956 = vsub.s32 0, %v4955
        %v4957 = vrot.slane %v401, %v4956
        %v4958 = vlaneseq
        %v4959 = vshrl.u32 %v4958, 7
        %v4960 = vsub.s32 1, %v4959
        %v4961 = vrot.slane %v401, %v4960
        %v4964 = vadd.f32 %v4889, %v4957
        %v4965 = vadd.f32 %v4890, %v4961
        %v4966 = vadd.f32 %v4891, %v4957
        %v4967 = vadd.f32 %v4892, %v4961
        %v4968 = vadd.f32 %v4893, %v4957
        %v4969 = vadd.f32 %v4894, %v4961
        %v4970 = vadd.f32 %v4895, %v4957
        %v4971 = vadd.f32 %v4896, %v4961
        %v4972 = vadd.f32 %v4897, %v4957
        %v4973 = vadd.f32 %v4898, %v4961
        %v4974 = vadd.f32 %v4899, %v4957
        %v4975 = vadd.f32 %v4900, %v4961
        %v4976 = vadd.f32 %v4901, %v4957
        %v4977 = vadd.f32 %v4902, %v4961
        %v4978 = vadd.f32 %v4903, %v4957
        %v4979 = vadd.f32 %v4904, %v4961
        %v4980 = vadd.f32 %v4905, %v4957
        %v4981 = vadd.f32 %v4906, %v4961
        %v4982 = vadd.f32 %v4907, %v4957
        %v4983 = vadd.f32 %v4908, %v4961
        %v4984 = vadd.f32 %v4909, %v4957
        %v4985 = vadd.f32 %v4910, %v4961
        %v4986 = vadd.f32 %v4911, %v4957
        %v4987 = vadd.f32 %v4912, %v4961
        %v4988 = vadd.f32 %v4913, %v4957
        %v4989 = vadd.f32 %v4914, %v4961
        %v4990 = vadd.f32 %v4915, %v4957
        %v4991 = vadd.f32 %v4916, %v4961
        %v4992 = vadd.f32 %v4917, %v4957
        %v4993 = vadd.f32 %v4918, %v4961
        %v4994 = vadd.f32 %v4919, %v4957
        %v4995 = vadd.f32 %v4920, %v4961
        %v4996 = vadd.f32 %v4921, %v4957
        %v4997 = vadd.f32 %v4922, %v4961
        %v4998 = vadd.f32 %v4923, %v4957
        %v4999 = vadd.f32 %v4924, %v4961
        %v5000 = vadd.f32 %v4925, %v4957
        %v5001 = vadd.f32 %v4926, %v4961
        %v5002 = vadd.f32 %v4927, %v4957
        %v5003 = vadd.f32 %v4928, %v4961
        %v5004 = vadd.f32 %v4929, %v4957
        %v5005 = vadd.f32 %v4930, %v4961
        %v5006 = vadd.f32 %v4931, %v4957
        %v5007 = vadd.f32 %v4932, %v4961
        %v5008 = vadd.f32 %v4933, %v4957
        %v5009 = vadd.f32 %v4934, %v4961
        %v5010 = vadd.f32 %v4935, %v4957
        %v5011 = vadd.f32 %v4936, %v4961
        %v5012 = vadd.f32 %v4937, %v4957
        %v5013 = vadd.f32 %v4938, %v4961
        %v5014 = vadd.f32 %v4939, %v4957
        %v5015 = vadd.f32 %v4940, %v4961
        %v5016 = vadd.f32 %v4941, %v4957
        %v5017 = vadd.f32 %v4942, %v4961
        %v5018 = vadd.f32 %v4943, %v4957
        %v5019 = vadd.f32 %v4944, %v4961
        %v5020 = vadd.f32 %v4945, %v4957
        %v5021 = vadd.f32 %v4946, %v4961
        %v5022 = vadd.f32 %v4947, %v4957
        %v5023 = vadd.f32 %v4948, %v4961
        %v5024 = vadd.f32 %v4949, %v4957
        %v5025 = vadd.f32 %v4950, %v4961
        %v5026 = vadd.f32 %v4951, %v4957
        %v5027 = vadd.f32 %v4952, %v4961
        %v5028 = vld [vmem:[#allocation8] sm:$0xff]
        %v5029 = vld [vmem:[#allocation8 + $0x8] sm:$0xff]
        %v5030 = vld [vmem:[#allocation8 + $0x10] sm:$0xff]
        %v5031 = vld [vmem:[#allocation8 + $0x18] sm:$0xff]
        %v5032 = vld [vmem:[#allocation8 + $0x20] sm:$0xff]
        %v5033 = vld [vmem:[#allocation8 + $0x28] sm:$0xff]
        %v5034 = vld [vmem:[#allocation8 + $0x30] sm:$0xff]
        %v5035 = vld [vmem:[#allocation8 + $0x38] sm:$0xff]
        %v5036 = vld [vmem:[#allocation8 + $0x40] sm:$0xff]
        %v5037 = vld [vmem:[#allocation8 + $0x48] sm:$0xff]
        %v5038 = vld [vmem:[#allocation8 + $0x50] sm:$0xff]
        %v5039 = vld [vmem:[#allocation8 + $0x58] sm:$0xff]
        %v5040 = vld [vmem:[#allocation8 + $0x60] sm:$0xff]
        %v5041 = vld [vmem:[#allocation8 + $0x68] sm:$0xff]
        %v5042 = vld [vmem:[#allocation8 + $0x70] sm:$0xff]
        %v5043 = vld [vmem:[#allocation8 + $0x78] sm:$0xff]
        %v5044 = vld [vmem:[#allocation8 + $0x80] sm:$0xff]
        %v5045 = vld [vmem:[#allocation8 + $0x88] sm:$0xff]
        %v5046 = vld [vmem:[#allocation8 + $0x90] sm:$0xff]
        %v5047 = vld [vmem:[#allocation8 + $0x98] sm:$0xff]
        %v5048 = vld [vmem:[#allocation8 + $0xa0] sm:$0xff]
        %v5049 = vld [vmem:[#allocation8 + $0xa8] sm:$0xff]
        %v5050 = vld [vmem:[#allocation8 + $0xb0] sm:$0xff]
        %v5051 = vld [vmem:[#allocation8 + $0xb8] sm:$0xff]
        %v5052 = vld [vmem:[#allocation8 + $0xc0] sm:$0xff]
        %v5053 = vld [vmem:[#allocation8 + $0xc8] sm:$0xff]
        %v5054 = vld [vmem:[#allocation8 + $0xd0] sm:$0xff]
        %v5055 = vld [vmem:[#allocation8 + $0xd8] sm:$0xff]
        %v5056 = vld [vmem:[#allocation8 + $0xe0] sm:$0xff]
        %v5057 = vld [vmem:[#allocation8 + $0xe8] sm:$0xff]
        %v5058 = vld [vmem:[#allocation8 + $0xf0] sm:$0xff]
        %v5059 = vld [vmem:[#allocation8 + $0xf8] sm:$0xff]
        %v5060 = vld [vmem:[#allocation8 + $0x100] sm:$0xff]
        %v5061 = vld [vmem:[#allocation8 + $0x108] sm:$0xff]
        %v5062 = vld [vmem:[#allocation8 + $0x110] sm:$0xff]
        %v5063 = vld [vmem:[#allocation8 + $0x118] sm:$0xff]
        %v5064 = vld [vmem:[#allocation8 + $0x120] sm:$0xff]
        %v5065 = vld [vmem:[#allocation8 + $0x128] sm:$0xff]
        %v5066 = vld [vmem:[#allocation8 + $0x130] sm:$0xff]
        %v5067 = vld [vmem:[#allocation8 + $0x138] sm:$0xff]
        %v5068 = vld [vmem:[#allocation8 + $0x140] sm:$0xff]
        %v5069 = vld [vmem:[#allocation8 + $0x148] sm:$0xff]
        %v5070 = vld [vmem:[#allocation8 + $0x150] sm:$0xff]
        %v5071 = vld [vmem:[#allocation8 + $0x158] sm:$0xff]
        %v5072 = vld [vmem:[#allocation8 + $0x160] sm:$0xff]
        %v5073 = vld [vmem:[#allocation8 + $0x168] sm:$0xff]
        %v5074 = vld [vmem:[#allocation8 + $0x170] sm:$0xff]
        %v5075 = vld [vmem:[#allocation8 + $0x178] sm:$0xff]
        %v5076 = vld [vmem:[#allocation8 + $0x180] sm:$0xff]
        %v5077 = vld [vmem:[#allocation8 + $0x188] sm:$0xff]
        %v5078 = vld [vmem:[#allocation8 + $0x190] sm:$0xff]
        %v5079 = vld [vmem:[#allocation8 + $0x198] sm:$0xff]
        %v5080 = vld [vmem:[#allocation8 + $0x1a0] sm:$0xff]
        %v5081 = vld [vmem:[#allocation8 + $0x1a8] sm:$0xff]
        %v5082 = vld [vmem:[#allocation8 + $0x1b0] sm:$0xff]
        %v5083 = vld [vmem:[#allocation8 + $0x1b8] sm:$0xff]
        %v5084 = vld [vmem:[#allocation8 + $0x1c0] sm:$0xff]
        %v5085 = vld [vmem:[#allocation8 + $0x1c8] sm:$0xff]
        %v5086 = vld [vmem:[#allocation8 + $0x1d0] sm:$0xff]
        %v5087 = vld [vmem:[#allocation8 + $0x1d8] sm:$0xff]
        %v5088 = vld [vmem:[#allocation8 + $0x1e0] sm:$0xff]
        %v5089 = vld [vmem:[#allocation8 + $0x1e8] sm:$0xff]
        %v5090 = vld [vmem:[#allocation8 + $0x1f0] sm:$0xff]
        %v5091 = vld [vmem:[#allocation8 + $0x1f8] sm:$0xff]
        %v5092 = vld [vmem:[#allocation8 + $0x200] sm:$0xff]
        %v5093 = vld [vmem:[#allocation8 + $0x208] sm:$0xff]
        %v5094 = vld [vmem:[#allocation8 + $0x210] sm:$0xff]
        %v5095 = vld [vmem:[#allocation8 + $0x218] sm:$0xff]
        %v5096 = vld [vmem:[#allocation8 + $0x220] sm:$0xff]
        %v5097 = vld [vmem:[#allocation8 + $0x228] sm:$0xff]
        %v5098 = vld [vmem:[#allocation8 + $0x230] sm:$0xff]
        %v5099 = vld [vmem:[#allocation8 + $0x238] sm:$0xff]
        %v5100 = vld [vmem:[#allocation8 + $0x240] sm:$0xff]
        %v5101 = vld [vmem:[#allocation8 + $0x248] sm:$0xff]
        %v5102 = vld [vmem:[#allocation8 + $0x250] sm:$0xff]
        %v5103 = vld [vmem:[#allocation8 + $0x258] sm:$0xff]
        %v5104 = vld [vmem:[#allocation8 + $0x260] sm:$0xff]
        %v5105 = vld [vmem:[#allocation8 + $0x268] sm:$0xff]
        %v5106 = vld [vmem:[#allocation8 + $0x270] sm:$0xff]
        %v5107 = vld [vmem:[#allocation8 + $0x278] sm:$0xff]
        %v5108 = vld [vmem:[#allocation8 + $0x280] sm:$0xff]
        %v5109 = vld [vmem:[#allocation8 + $0x288] sm:$0xff]
        %v5110 = vld [vmem:[#allocation8 + $0x290] sm:$0xff]
        %v5111 = vld [vmem:[#allocation8 + $0x298] sm:$0xff]
        %v5112 = vld [vmem:[#allocation8 + $0x2a0] sm:$0xff]
        %v5113 = vld [vmem:[#allocation8 + $0x2a8] sm:$0xff]
        %v5114 = vld [vmem:[#allocation8 + $0x2b0] sm:$0xff]
        %v5115 = vld [vmem:[#allocation8 + $0x2b8] sm:$0xff]
        %v5116 = vld [vmem:[#allocation8 + $0x2c0] sm:$0xff]
        %v5117 = vld [vmem:[#allocation8 + $0x2c8] sm:$0xff]
        %v5118 = vld [vmem:[#allocation8 + $0x2d0] sm:$0xff]
        %v5119 = vld [vmem:[#allocation8 + $0x2d8] sm:$0xff]
        %v5120 = vld [vmem:[#allocation8 + $0x2e0] sm:$0xff]
        %v5121 = vld [vmem:[#allocation8 + $0x2e8] sm:$0xff]
        %v5122 = vld [vmem:[#allocation8 + $0x2f0] sm:$0xff]
        %v5123 = vld [vmem:[#allocation8 + $0x2f8] sm:$0xff]
        %v5124 = vld [vmem:[#allocation8 + $0x300] sm:$0xff]
        %v5125 = vld [vmem:[#allocation8 + $0x308] sm:$0xff]
        %v5126 = vld [vmem:[#allocation8 + $0x310] sm:$0xff]
        %v5127 = vld [vmem:[#allocation8 + $0x318] sm:$0xff]
        %v5128 = vld [vmem:[#allocation8 + $0x320] sm:$0xff]
        %v5129 = vld [vmem:[#allocation8 + $0x328] sm:$0xff]
        %v5130 = vld [vmem:[#allocation8 + $0x330] sm:$0xff]
        %v5131 = vld [vmem:[#allocation8 + $0x338] sm:$0xff]
        %v5132 = vld [vmem:[#allocation8 + $0x340] sm:$0xff]
        %v5133 = vld [vmem:[#allocation8 + $0x348] sm:$0xff]
        %v5134 = vld [vmem:[#allocation8 + $0x350] sm:$0xff]
        %v5135 = vld [vmem:[#allocation8 + $0x358] sm:$0xff]
        %v5136 = vld [vmem:[#allocation8 + $0x360] sm:$0xff]
        %v5137 = vld [vmem:[#allocation8 + $0x368] sm:$0xff]
        %v5138 = vld [vmem:[#allocation8 + $0x370] sm:$0xff]
        %v5139 = vld [vmem:[#allocation8 + $0x378] sm:$0xff]
        %v5140 = vld [vmem:[#allocation8 + $0x380] sm:$0xff]
        %v5141 = vld [vmem:[#allocation8 + $0x388] sm:$0xff]
        %v5142 = vld [vmem:[#allocation8 + $0x390] sm:$0xff]
        %v5143 = vld [vmem:[#allocation8 + $0x398] sm:$0xff]
        %v5144 = vld [vmem:[#allocation8 + $0x3a0] sm:$0xff]
        %v5145 = vld [vmem:[#allocation8 + $0x3a8] sm:$0xff]
        %v5146 = vld [vmem:[#allocation8 + $0x3b0] sm:$0xff]
        %v5147 = vld [vmem:[#allocation8 + $0x3b8] sm:$0xff]
        %v5148 = vld [vmem:[#allocation8 + $0x3c0] sm:$0xff]
        %v5149 = vld [vmem:[#allocation8 + $0x3c8] sm:$0xff]
        %v5150 = vld [vmem:[#allocation8 + $0x3d0] sm:$0xff]
        %v5151 = vld [vmem:[#allocation8 + $0x3d8] sm:$0xff]
        %v5152 = vld [vmem:[#allocation8 + $0x3e0] sm:$0xff]
        %v5153 = vld [vmem:[#allocation8 + $0x3e8] sm:$0xff]
        %v5154 = vld [vmem:[#allocation8 + $0x3f0] sm:$0xff]
        %v5155 = vld [vmem:[#allocation8 + $0x3f8] sm:$0xff]
        %v5156 = vld [vmem:[#allocation8 + $0x400] sm:$0xff]
        %v5157 = vld [vmem:[#allocation8 + $0x408] sm:$0xff]
        %v5158 = vld [vmem:[#allocation8 + $0x410] sm:$0xff]
        %v5159 = vld [vmem:[#allocation8 + $0x418] sm:$0xff]
        %v5160 = vld [vmem:[#allocation8 + $0x420] sm:$0xff]
        %v5161 = vld [vmem:[#allocation8 + $0x428] sm:$0xff]
        %v5162 = vld [vmem:[#allocation8 + $0x430] sm:$0xff]
        %v5163 = vld [vmem:[#allocation8 + $0x438] sm:$0xff]
        %v5164 = vld [vmem:[#allocation8 + $0x440] sm:$0xff]
        %v5165 = vld [vmem:[#allocation8 + $0x448] sm:$0xff]
        %v5166 = vld [vmem:[#allocation8 + $0x450] sm:$0xff]
        %v5167 = vld [vmem:[#allocation8 + $0x458] sm:$0xff]
        %v5168 = vld [vmem:[#allocation8 + $0x460] sm:$0xff]
        %v5169 = vld [vmem:[#allocation8 + $0x468] sm:$0xff]
        %v5170 = vld [vmem:[#allocation8 + $0x470] sm:$0xff]
        %v5171 = vld [vmem:[#allocation8 + $0x478] sm:$0xff]
        %v5172 = vld [vmem:[#allocation8 + $0x480] sm:$0xff]
        %v5173 = vld [vmem:[#allocation8 + $0x488] sm:$0xff]
        %v5174 = vld [vmem:[#allocation8 + $0x490] sm:$0xff]
        %v5175 = vld [vmem:[#allocation8 + $0x498] sm:$0xff]
        %v5176 = vld [vmem:[#allocation8 + $0x4a0] sm:$0xff]
        %v5177 = vld [vmem:[#allocation8 + $0x4a8] sm:$0xff]
        %v5178 = vld [vmem:[#allocation8 + $0x4b0] sm:$0xff]
        %v5179 = vld [vmem:[#allocation8 + $0x4b8] sm:$0xff]
        %v5180 = vld [vmem:[#allocation8 + $0x4c0] sm:$0xff]
        %v5181 = vld [vmem:[#allocation8 + $0x4c8] sm:$0xff]
        %v5182 = vld [vmem:[#allocation8 + $0x4d0] sm:$0xff]
        %v5183 = vld [vmem:[#allocation8 + $0x4d8] sm:$0xff]
        %v5184 = vld [vmem:[#allocation8 + $0x4e0] sm:$0xff]
        %v5185 = vld [vmem:[#allocation8 + $0x4e8] sm:$0xff]
        %v5186 = vld [vmem:[#allocation8 + $0x4f0] sm:$0xff]
        %v5187 = vld [vmem:[#allocation8 + $0x4f8] sm:$0xff]
        %v5188 = vld [vmem:[#allocation8 + $0x500] sm:$0xff]
        %v5189 = vld [vmem:[#allocation8 + $0x508] sm:$0xff]
        %v5190 = vld [vmem:[#allocation8 + $0x510] sm:$0xff]
        %v5191 = vld [vmem:[#allocation8 + $0x518] sm:$0xff]
        %v5192 = vld [vmem:[#allocation8 + $0x520] sm:$0xff]
        %v5193 = vld [vmem:[#allocation8 + $0x528] sm:$0xff]
        %v5194 = vld [vmem:[#allocation8 + $0x530] sm:$0xff]
        %v5195 = vld [vmem:[#allocation8 + $0x538] sm:$0xff]
        %v5196 = vld [vmem:[#allocation8 + $0x540] sm:$0xff]
        %v5197 = vld [vmem:[#allocation8 + $0x548] sm:$0xff]
        %v5198 = vld [vmem:[#allocation8 + $0x550] sm:$0xff]
        %v5199 = vld [vmem:[#allocation8 + $0x558] sm:$0xff]
        %v5200 = vld [vmem:[#allocation8 + $0x560] sm:$0xff]
        %v5201 = vld [vmem:[#allocation8 + $0x568] sm:$0xff]
        %v5202 = vld [vmem:[#allocation8 + $0x570] sm:$0xff]
        %v5203 = vld [vmem:[#allocation8 + $0x578] sm:$0xff]
        %v5204 = vld [vmem:[#allocation8 + $0x580] sm:$0xff]
        %v5205 = vld [vmem:[#allocation8 + $0x588] sm:$0xff]
        %v5206 = vld [vmem:[#allocation8 + $0x590] sm:$0xff]
        %v5207 = vld [vmem:[#allocation8 + $0x598] sm:$0xff]
        %v5208 = vld [vmem:[#allocation8 + $0x5a0] sm:$0xff]
        %v5209 = vld [vmem:[#allocation8 + $0x5a8] sm:$0xff]
        %v5210 = vld [vmem:[#allocation8 + $0x5b0] sm:$0xff]
        %v5211 = vld [vmem:[#allocation8 + $0x5b8] sm:$0xff]
        %v5212 = vld [vmem:[#allocation8 + $0x5c0] sm:$0xff]
        %v5213 = vld [vmem:[#allocation8 + $0x5c8] sm:$0xff]
        %v5214 = vld [vmem:[#allocation8 + $0x5d0] sm:$0xff]
        %v5215 = vld [vmem:[#allocation8 + $0x5d8] sm:$0xff]
        %v5216 = vld [vmem:[#allocation8 + $0x5e0] sm:$0xff]
        %v5217 = vld [vmem:[#allocation8 + $0x5e8] sm:$0xff]
        %v5218 = vld [vmem:[#allocation8 + $0x5f0] sm:$0xff]
        %v5219 = vld [vmem:[#allocation8 + $0x5f8] sm:$0xff]
        %v5220 = vld [vmem:[#allocation8 + $0x600] sm:$0xff]
        %v5221 = vld [vmem:[#allocation8 + $0x608] sm:$0xff]
        %v5222 = vld [vmem:[#allocation8 + $0x610] sm:$0xff]
        %v5223 = vld [vmem:[#allocation8 + $0x618] sm:$0xff]
        %v5224 = vld [vmem:[#allocation8 + $0x620] sm:$0xff]
        %v5225 = vld [vmem:[#allocation8 + $0x628] sm:$0xff]
        %v5226 = vld [vmem:[#allocation8 + $0x630] sm:$0xff]
        %v5227 = vld [vmem:[#allocation8 + $0x638] sm:$0xff]
        %v5228 = vld [vmem:[#allocation8 + $0x640] sm:$0xff]
        %v5229 = vld [vmem:[#allocation8 + $0x648] sm:$0xff]
        %v5230 = vld [vmem:[#allocation8 + $0x650] sm:$0xff]
        %v5231 = vld [vmem:[#allocation8 + $0x658] sm:$0xff]
        %v5232 = vld [vmem:[#allocation8 + $0x660] sm:$0xff]
        %v5233 = vld [vmem:[#allocation8 + $0x668] sm:$0xff]
        %v5234 = vld [vmem:[#allocation8 + $0x670] sm:$0xff]
        %v5235 = vld [vmem:[#allocation8 + $0x678] sm:$0xff]
        %v5236 = vld [vmem:[#allocation8 + $0x680] sm:$0xff]
        %v5237 = vld [vmem:[#allocation8 + $0x688] sm:$0xff]
        %v5238 = vld [vmem:[#allocation8 + $0x690] sm:$0xff]
        %v5239 = vld [vmem:[#allocation8 + $0x698] sm:$0xff]
        %v5240 = vld [vmem:[#allocation8 + $0x6a0] sm:$0xff]
        %v5241 = vld [vmem:[#allocation8 + $0x6a8] sm:$0xff]
        %v5242 = vld [vmem:[#allocation8 + $0x6b0] sm:$0xff]
        %v5243 = vld [vmem:[#allocation8 + $0x6b8] sm:$0xff]
        %v5244 = vld [vmem:[#allocation8 + $0x6c0] sm:$0xff]
        %v5245 = vld [vmem:[#allocation8 + $0x6c8] sm:$0xff]
        %v5246 = vld [vmem:[#allocation8 + $0x6d0] sm:$0xff]
        %v5247 = vld [vmem:[#allocation8 + $0x6d8] sm:$0xff]
        %v5248 = vld [vmem:[#allocation8 + $0x6e0] sm:$0xff]
        %v5249 = vld [vmem:[#allocation8 + $0x6e8] sm:$0xff]
        %v5250 = vld [vmem:[#allocation8 + $0x6f0] sm:$0xff]
        %v5251 = vld [vmem:[#allocation8 + $0x6f8] sm:$0xff]
        %v5252 = vld [vmem:[#allocation8 + $0x700] sm:$0xff]
        %v5253 = vld [vmem:[#allocation8 + $0x708] sm:$0xff]
        %v5254 = vld [vmem:[#allocation8 + $0x710] sm:$0xff]
        %v5255 = vld [vmem:[#allocation8 + $0x718] sm:$0xff]
        %v5256 = vld [vmem:[#allocation8 + $0x720] sm:$0xff]
        %v5257 = vld [vmem:[#allocation8 + $0x728] sm:$0xff]
        %v5258 = vld [vmem:[#allocation8 + $0x730] sm:$0xff]
        %v5259 = vld [vmem:[#allocation8 + $0x738] sm:$0xff]
        %v5260 = vld [vmem:[#allocation8 + $0x740] sm:$0xff]
        %v5261 = vld [vmem:[#allocation8 + $0x748] sm:$0xff]
        %v5262 = vld [vmem:[#allocation8 + $0x750] sm:$0xff]
        %v5263 = vld [vmem:[#allocation8 + $0x758] sm:$0xff]
        %v5264 = vld [vmem:[#allocation8 + $0x760] sm:$0xff]
        %v5265 = vld [vmem:[#allocation8 + $0x768] sm:$0xff]
        %v5266 = vld [vmem:[#allocation8 + $0x770] sm:$0xff]
        %v5267 = vld [vmem:[#allocation8 + $0x778] sm:$0xff]
        %v5268 = vld [vmem:[#allocation8 + $0x780] sm:$0xff]
        %v5269 = vld [vmem:[#allocation8 + $0x788] sm:$0xff]
        %v5270 = vld [vmem:[#allocation8 + $0x790] sm:$0xff]
        %v5271 = vld [vmem:[#allocation8 + $0x798] sm:$0xff]
        %v5272 = vld [vmem:[#allocation8 + $0x7a0] sm:$0xff]
        %v5273 = vld [vmem:[#allocation8 + $0x7a8] sm:$0xff]
        %v5274 = vld [vmem:[#allocation8 + $0x7b0] sm:$0xff]
        %v5275 = vld [vmem:[#allocation8 + $0x7b8] sm:$0xff]
        %v5276 = vld [vmem:[#allocation8 + $0x7c0] sm:$0xff]
        %v5277 = vld [vmem:[#allocation8 + $0x7c8] sm:$0xff]
        %v5278 = vld [vmem:[#allocation8 + $0x7d0] sm:$0xff]
        %v5279 = vld [vmem:[#allocation8 + $0x7d8] sm:$0xff]
        %v5280 = vld [vmem:[#allocation8 + $0x7e0] sm:$0xff]
        %v5281 = vld [vmem:[#allocation8 + $0x7e8] sm:$0xff]
        %v5282 = vld [vmem:[#allocation8 + $0x7f0] sm:$0xff]
        %v5283 = vld [vmem:[#allocation8 + $0x7f8] sm:$0xff]
        %v5285 = vlaneseq
        %v5286 = vshrl.u32 %v5285, 7
        %v5287 = vsub.s32 0, %v5286
        %v5288 = vrot.slane %v413, %v5287
        %v5289 = vlaneseq
        %v5290 = vshrl.u32 %v5289, 7
        %v5291 = vsub.s32 1, %v5290
        %v5292 = vrot.slane %v413, %v5291
        %v5293 = vlaneseq
        %v5294 = vshrl.u32 %v5293, 7
        %v5295 = vsub.s32 2, %v5294
        %v5296 = vrot.slane %v413, %v5295
        %v5297 = vlaneseq
        %v5298 = vshrl.u32 %v5297, 7
        %v5299 = vsub.s32 3, %v5298
        %v5300 = vrot.slane %v413, %v5299
        %v5301 = vlaneseq
        %v5302 = vshrl.u32 %v5301, 7
        %v5303 = vsub.s32 4, %v5302
        %v5304 = vrot.slane %v413, %v5303
        %v5305 = vlaneseq
        %v5306 = vshrl.u32 %v5305, 7
        %v5307 = vsub.s32 5, %v5306
        %v5308 = vrot.slane %v413, %v5307
        %v5309 = vlaneseq
        %v5310 = vshrl.u32 %v5309, 7
        %v5311 = vsub.s32 6, %v5310
        %v5312 = vrot.slane %v413, %v5311
        %v5313 = vlaneseq
        %v5314 = vshrl.u32 %v5313, 7
        %v5315 = vsub.s32 7, %v5314
        %v5316 = vrot.slane %v413, %v5315
        %5325 = vmatprep.subr.mxu0 %v5029
        %5326 = vmatpush1.msra.mxu0 %v5028
        %5327 = vmatprep.subr.mxu0 %v5037
        %5328 = vmatpush1.msra.mxu0 %v5036
        %5329 = vmatprep.subr.mxu0 %v5045
        %5330 = vmatpush1.msra.mxu0 %v5044
        %5331 = vmatprep.subr.mxu0 %v5053
        %5332 = vmatpush1.msra.mxu0 %v5052
        %5333 = vmatprep.subr.mxu0 %v5061
        %5334 = vmatpush1.msra.mxu0 %v5060
        %5335 = vmatprep.subr.mxu0 %v5069
        %5336 = vmatpush1.msra.mxu0 %v5068
        %5337 = vmatprep.subr.mxu0 %v5077
        %5338 = vmatpush1.msra.mxu0 %v5076
        %5339 = vmatprep.subr.mxu0 %v5085
        %5340 = vmatpush1.msra.mxu0 %v5084
        %5341 = vmatprep.subr.mxu0 %v5093
        %5342 = vmatpush1.msra.mxu0 %v5092
        %5343 = vmatprep.subr.mxu0 %v5101
        %5344 = vmatpush1.msra.mxu0 %v5100
        %5345 = vmatprep.subr.mxu0 %v5109
        %5346 = vmatpush1.msra.mxu0 %v5108
        %5347 = vmatprep.subr.mxu0 %v5117
        %5348 = vmatpush1.msra.mxu0 %v5116
        %5349 = vmatprep.subr.mxu0 %v5125
        %5350 = vmatpush1.msra.mxu0 %v5124
        %5351 = vmatprep.subr.mxu0 %v5133
        %5352 = vmatpush1.msra.mxu0 %v5132
        %5353 = vmatprep.subr.mxu0 %v5141
        %5354 = vmatpush1.msra.mxu0 %v5140
        %5355 = vmatprep.subr.mxu0 %v5149
        %5356 = vmatpush1.msra.mxu0 %v5148
        %5357 = vmatprep.subr.mxu0 %v5157
        %5358 = vmatpush1.msra.mxu0 %v5156
        %5359 = vmatprep.subr.mxu0 %v5165
        %5360 = vmatpush1.msra.mxu0 %v5164
        %5361 = vmatprep.subr.mxu0 %v5173
        %5362 = vmatpush1.msra.mxu0 %v5172
        %5363 = vmatprep.subr.mxu0 %v5181
        %5364 = vmatpush1.msra.mxu0 %v5180
        %5365 = vmatprep.subr.mxu0 %v5189
        %5366 = vmatpush1.msra.mxu0 %v5188
        %5367 = vmatprep.subr.mxu0 %v5197
        %5368 = vmatpush1.msra.mxu0 %v5196
        %5369 = vmatprep.subr.mxu0 %v5205
        %5370 = vmatpush1.msra.mxu0 %v5204
        %5371 = vmatprep.subr.mxu0 %v5213
        %5372 = vmatpush1.msra.mxu0 %v5212
        %5373 = vmatprep.subr.mxu0 %v5221
        %5374 = vmatpush1.msra.mxu0 %v5220
        %5375 = vmatprep.subr.mxu0 %v5229
        %5376 = vmatpush1.msra.mxu0 %v5228
        %5377 = vmatprep.subr.mxu0 %v5237
        %5378 = vmatpush1.msra.mxu0 %v5236
        %5379 = vmatprep.subr.mxu0 %v5245
        %5380 = vmatpush1.msra.mxu0 %v5244
        %5381 = vmatprep.subr.mxu0 %v5253
        %5382 = vmatpush1.msra.mxu0 %v5252
        %5383 = vmatprep.subr.mxu0 %v5261
        %5384 = vmatpush1.msra.mxu0 %v5260
        %5385 = vmatprep.subr.mxu0 %v5269
        %5386 = vmatpush1.msra.mxu0 %v5268
        %5387 = vmatprep.subr.mxu0 %v5277
        %5388 = vmatpush1.msra.mxu0 %v5276
        %5389 = vmatprep.mubr.f32.mxu0 %v4965
        %5390 = vmatmul.mubr.f32.gmra.mrb[0].mxu0 %v4964
        %v5391 = vpop.f32.mrb[0].mxu0
        %v5392 = vadd.f32 %v5288, %v5391
        %v5393 = vpop.f32.mrb[0].mxu0
        %v5394 = vadd.f32 %v5292, %v5393
        %5395 = vmatprep.mubr.f32.mxu0 %v4967
        %5396 = vmatmul.mubr.f32.gmra.mrb[0].mxu0 %v4966
        %v5397 = vpop.f32.mrb[0].mxu0
        %v5398 = vadd.f32 %v5288, %v5397
        %v5399 = vpop.f32.mrb[0].mxu0
        %v5400 = vadd.f32 %v5292, %v5399
        %5401 = vmatprep.mubr.f32.mxu0 %v4969
        %5402 = vmatmul.mubr.f32.gmra.mrb[0].mxu0 %v4968
        %v5403 = vpop.f32.mrb[0].mxu0
        %v5404 = vadd.f32 %v5288, %v5403
        %v5405 = vpop.f32.mrb[0].mxu0
        %v5406 = vadd.f32 %v5292, %v5405
        %5407 = vmatprep.mubr.f32.mxu0 %v4971
        %5408 = vmatmul.mubr.f32.gmra.mrb[0].mxu0 %v4970
        %v5409 = vpop.f32.mrb[0].mxu0
        %v5410 = vadd.f32 %v5288, %v5409
        %v5411 = vpop.f32.mrb[0].mxu0
        %v5412 = vadd.f32 %v5292, %v5411
        %5413 = vmatprep.mubr.f32.mxu0 %v4973
        %5414 = vmatmul.mubr.f32.gmra.mrb[0].mxu0 %v4972
        %v5415 = vpop.f32.mrb[0].mxu0
        %v5416 = vadd.f32 %v5288, %v5415
        %v5417 = vpop.f32.mrb[0].mxu0
        %v5418 = vadd.f32 %v5292, %v5417
        %5419 = vmatprep.mubr.f32.mxu0 %v4975
        %5420 = vmatmul.mubr.f32.gmra.mrb[0].mxu0 %v4974
        %v5421 = vpop.f32.mrb[0].mxu0
        %v5422 = vadd.f32 %v5288, %v5421
        %v5423 = vpop.f32.mrb[0].mxu0
        %v5424 = vadd.f32 %v5292, %v5423
        %5425 = vmatprep.mubr.f32.mxu0 %v4977
        %5426 = vmatmul.mubr.f32.gmra.mrb[0].mxu0 %v4976
        %v5427 = vpop.f32.mrb[0].mxu0
        %v5428 = vadd.f32 %v5288, %v5427
        %v5429 = vpop.f32.mrb[0].mxu0
        %v5430 = vadd.f32 %v5292, %v5429
        %5431 = vmatprep.mubr.f32.mxu0 %v4979
        %5432 = vmatmul.mubr.f32.gmra.mrb[0].mxu0 %v4978
        %v5433 = vpop.f32.mrb[0].mxu0
        %v5434 = vadd.f32 %v5288, %v5433
        %v5435 = vpop.f32.mrb[0].mxu0
        %v5436 = vadd.f32 %v5292, %v5435
        %5437 = vmatprep.mubr.f32.mxu0 %v4981
        %5438 = vmatmul.mubr.f32.gmra.mrb[0].mxu0 %v4980
        %v5439 = vpop.f32.mrb[0].mxu0
        %v5440 = vadd.f32 %v5288, %v5439
        %v5441 = vpop.f32.mrb[0].mxu0
        %v5442 = vadd.f32 %v5292, %v5441
        %5443 = vmatprep.mubr.f32.mxu0 %v4983
        %5444 = vmatmul.mubr.f32.gmra.mrb[0].mxu0 %v4982
        %v5445 = vpop.f32.mrb[0].mxu0
        %v5446 = vadd.f32 %v5288, %v5445
        %v5447 = vpop.f32.mrb[0].mxu0
        %v5448 = vadd.f32 %v5292, %v5447
        %5449 = vmatprep.mubr.f32.mxu0 %v4985
        %5450 = vmatmul.mubr.f32.gmra.mrb[0].mxu0 %v4984
        %v5451 = vpop.f32.mrb[0].mxu0
        %v5452 = vadd.f32 %v5288, %v5451
        %v5453 = vpop.f32.mrb[0].mxu0
        %v5454 = vadd.f32 %v5292, %v5453
        %5455 = vmatprep.mubr.f32.mxu0 %v4987
        %5456 = vmatmul.mubr.f32.gmra.mrb[0].mxu0 %v4986
        %v5457 = vpop.f32.mrb[0].mxu0
        %v5458 = vadd.f32 %v5288, %v5457
        %v5459 = vpop.f32.mrb[0].mxu0
        %v5460 = vadd.f32 %v5292, %v5459
        %5461 = vmatprep.mubr.f32.mxu0 %v4989
        %5462 = vmatmul.mubr.f32.gmra.mrb[0].mxu0 %v4988
        %v5463 = vpop.f32.mrb[0].mxu0
        %v5464 = vadd.f32 %v5288, %v5463
        %v5465 = vpop.f32.mrb[0].mxu0
        %v5466 = vadd.f32 %v5292, %v5465
        %5467 = vmatprep.mubr.f32.mxu0 %v4991
        %5468 = vmatmul.mubr.f32.gmra.mrb[0].mxu0 %v4990
        %v5469 = vpop.f32.mrb[0].mxu0
        %v5470 = vadd.f32 %v5288, %v5469
        %v5471 = vpop.f32.mrb[0].mxu0
        %v5472 = vadd.f32 %v5292, %v5471
        %5473 = vmatprep.mubr.f32.mxu0 %v4993
        %5474 = vmatmul.mubr.f32.gmra.mrb[0].mxu0 %v4992
        %v5475 = vpop.f32.mrb[0].mxu0
        %v5476 = vadd.f32 %v5288, %v5475
        %v5477 = vpop.f32.mrb[0].mxu0
        %v5478 = vadd.f32 %v5292, %v5477
        %5479 = vmatprep.mubr.f32.mxu0 %v4995
        %5480 = vmatmul.mubr.f32.gmra.mrb[0].mxu0 %v4994
        %v5481 = vpop.f32.mrb[0].mxu0
        %v5482 = vadd.f32 %v5288, %v5481
        %v5483 = vpop.f32.mrb[0].mxu0
        %v5484 = vadd.f32 %v5292, %v5483
        %5485 = vmatprep.mubr.f32.mxu0 %v4997
        %5486 = vmatmul.mubr.f32.gmra.mrb[0].mxu0 %v4996
        %v5487 = vpop.f32.mrb[0].mxu0
        %v5488 = vadd.f32 %v5288, %v5487
        %v5489 = vpop.f32.mrb[0].mxu0
        %v5490 = vadd.f32 %v5292, %v5489
        %5491 = vmatprep.mubr.f32.mxu0 %v4999
        %5492 = vmatmul.mubr.f32.gmra.mrb[0].mxu0 %v4998
        %v5493 = vpop.f32.mrb[0].mxu0
        %v5494 = vadd.f32 %v5288, %v5493
        %v5495 = vpop.f32.mrb[0].mxu0
        %v5496 = vadd.f32 %v5292, %v5495
        %5497 = vmatprep.mubr.f32.mxu0 %v5001
        %5498 = vmatmul.mubr.f32.gmra.mrb[0].mxu0 %v5000
        %v5499 = vpop.f32.mrb[0].mxu0
        %v5500 = vadd.f32 %v5288, %v5499
        %v5501 = vpop.f32.mrb[0].mxu0
        %v5502 = vadd.f32 %v5292, %v5501
        %5503 = vmatprep.mubr.f32.mxu0 %v5003
        %5504 = vmatmul.mubr.f32.gmra.mrb[0].mxu0 %v5002
        %v5505 = vpop.f32.mrb[0].mxu0
        %v5506 = vadd.f32 %v5288, %v5505
        %v5507 = vpop.f32.mrb[0].mxu0
        %v5508 = vadd.f32 %v5292, %v5507
        %5509 = vmatprep.mubr.f32.mxu0 %v5005
        %5510 = vmatmul.mubr.f32.gmra.mrb[0].mxu0 %v5004
        %v5511 = vpop.f32.mrb[0].mxu0
        %v5512 = vadd.f32 %v5288, %v5511
        %v5513 = vpop.f32.mrb[0].mxu0
        %v5514 = vadd.f32 %v5292, %v5513
        %5515 = vmatprep.mubr.f32.mxu0 %v5007
        %5516 = vmatmul.mubr.f32.gmra.mrb[0].mxu0 %v5006
        %v5517 = vpop.f32.mrb[0].mxu0
        %v5518 = vadd.f32 %v5288, %v5517
        %v5519 = vpop.f32.mrb[0].mxu0
        %v5520 = vadd.f32 %v5292, %v5519
        %5521 = vmatprep.mubr.f32.mxu0 %v5009
        %5522 = vmatmul.mubr.f32.gmra.mrb[0].mxu0 %v5008
        %v5523 = vpop.f32.mrb[0].mxu0
        %v5524 = vadd.f32 %v5288, %v5523
        %v5525 = vpop.f32.mrb[0].mxu0
        %v5526 = vadd.f32 %v5292, %v5525
        %5527 = vmatprep.mubr.f32.mxu0 %v5011
        %5528 = vmatmul.mubr.f32.gmra.mrb[0].mxu0 %v5010
        %v5529 = vpop.f32.mrb[0].mxu0
        %v5530 = vadd.f32 %v5288, %v5529
        %v5531 = vpop.f32.mrb[0].mxu0
        %v5532 = vadd.f32 %v5292, %v5531
        %5533 = vmatprep.mubr.f32.mxu0 %v5013
        %5534 = vmatmul.mubr.f32.gmra.mrb[0].mxu0 %v5012
        %v5535 = vpop.f32.mrb[0].mxu0
        %v5536 = vadd.f32 %v5288, %v5535
        %v5537 = vpop.f32.mrb[0].mxu0
        %v5538 = vadd.f32 %v5292, %v5537
        %5539 = vmatprep.mubr.f32.mxu0 %v5015
        %5540 = vmatmul.mubr.f32.gmra.mrb[0].mxu0 %v5014
        %v5541 = vpop.f32.mrb[0].mxu0
        %v5542 = vadd.f32 %v5288, %v5541
        %v5543 = vpop.f32.mrb[0].mxu0
        %v5544 = vadd.f32 %v5292, %v5543
        %5545 = vmatprep.mubr.f32.mxu0 %v5017
        %5546 = vmatmul.mubr.f32.gmra.mrb[0].mxu0 %v5016
        %v5547 = vpop.f32.mrb[0].mxu0
        %v5548 = vadd.f32 %v5288, %v5547
        %v5549 = vpop.f32.mrb[0].mxu0
        %v5550 = vadd.f32 %v5292, %v5549
        %5551 = vmatprep.mubr.f32.mxu0 %v5019
        %5552 = vmatmul.mubr.f32.gmra.mrb[0].mxu0 %v5018
        %v5553 = vpop.f32.mrb[0].mxu0
        %v5554 = vadd.f32 %v5288, %v5553
        %v5555 = vpop.f32.mrb[0].mxu0
        %v5556 = vadd.f32 %v5292, %v5555
        %5557 = vmatprep.mubr.f32.mxu0 %v5021
        %5558 = vmatmul.mubr.f32.gmra.mrb[0].mxu0 %v5020
        %v5559 = vpop.f32.mrb[0].mxu0
        %v5560 = vadd.f32 %v5288, %v5559
        %v5561 = vpop.f32.mrb[0].mxu0
        %v5562 = vadd.f32 %v5292, %v5561
        %5563 = vmatprep.mubr.f32.mxu0 %v5023
        %5564 = vmatmul.mubr.f32.gmra.mrb[0].mxu0 %v5022
        %v5565 = vpop.f32.mrb[0].mxu0
        %v5566 = vadd.f32 %v5288, %v5565
        %v5567 = vpop.f32.mrb[0].mxu0
        %v5568 = vadd.f32 %v5292, %v5567
        %5569 = vmatprep.mubr.f32.mxu0 %v5025
        %5570 = vmatmul.mubr.f32.gmra.mrb[0].mxu0 %v5024
        %v5571 = vpop.f32.mrb[0].mxu0
        %v5572 = vadd.f32 %v5288, %v5571
        %v5573 = vpop.f32.mrb[0].mxu0
        %v5574 = vadd.f32 %v5292, %v5573
        %5575 = vmatprep.mubr.f32.mxu0 %v5027
        %5576 = vmatmul.mubr.f32.gmra.mrb[0].mxu0 %v5026
        %v5577 = vpop.f32.mrb[0].mxu0
        %v5578 = vadd.f32 %v5288, %v5577
        %v5579 = vpop.f32.mrb[0].mxu0
        %v5580 = vadd.f32 %v5292, %v5579
        %5581 = vdwg.mxu0
        %5582 = vmatprep.subr.mxu0 %v5031
        %5583 = vmatpush1.msra.mxu0 %v5030
        %5584 = vmatprep.subr.mxu0 %v5039
        %5585 = vmatpush1.msra.mxu0 %v5038
        %5586 = vmatprep.subr.mxu0 %v5047
        %5587 = vmatpush1.msra.mxu0 %v5046
        %5588 = vmatprep.subr.mxu0 %v5055
        %5589 = vmatpush1.msra.mxu0 %v5054
        %5590 = vmatprep.subr.mxu0 %v5063
        %5591 = vmatpush1.msra.mxu0 %v5062
        %5592 = vmatprep.subr.mxu0 %v5071
        %5593 = vmatpush1.msra.mxu0 %v5070
        %5594 = vmatprep.subr.mxu0 %v5079
        %5595 = vmatpush1.msra.mxu0 %v5078
        %5596 = vmatprep.subr.mxu0 %v5087
        %5597 = vmatpush1.msra.mxu0 %v5086
        %5598 = vmatprep.subr.mxu0 %v5095
        %5599 = vmatpush1.msra.mxu0 %v5094
        %5600 = vmatprep.subr.mxu0 %v5103
        %5601 = vmatpush1.msra.mxu0 %v5102
        %5602 = vmatprep.subr.mxu0 %v5111
        %5603 = vmatpush1.msra.mxu0 %v5110
        %5604 = vmatprep.subr.mxu0 %v5119
        %5605 = vmatpush1.msra.mxu0 %v5118
        %5606 = vmatprep.subr.mxu0 %v5127
        %5607 = vmatpush1.msra.mxu0 %v5126
        %5608 = vmatprep.subr.mxu0 %v5135
        %5609 = vmatpush1.msra.mxu0 %v5134
        %5610 = vmatprep.subr.mxu0 %v5143
        %5611 = vmatpush1.msra.mxu0 %v5142
        %5612 = vmatprep.subr.mxu0 %v5151
        %5613 = vmatpush1.msra.mxu0 %v5150
        %5614 = vmatprep.subr.mxu0 %v5159
        %5615 = vmatpush1.msra.mxu0 %v5158
        %5616 = vmatprep.subr.mxu0 %v5167
        %5617 = vmatpush1.msra.mxu0 %v5166
        %5618 = vmatprep.subr.mxu0 %v5175
        %5619 = vmatpush1.msra.mxu0 %v5174
        %5620 = vmatprep.subr.mxu0 %v5183
        %5621 = vmatpush1.msra.mxu0 %v5182
        %5622 = vmatprep.subr.mxu0 %v5191
        %5623 = vmatpush1.msra.mxu0 %v5190
        %5624 = vmatprep.subr.mxu0 %v5199
        %5625 = vmatpush1.msra.mxu0 %v5198
        %5626 = vmatprep.subr.mxu0 %v5207
        %5627 = vmatpush1.msra.mxu0 %v5206
        %5628 = vmatprep.subr.mxu0 %v5215
        %5629 = vmatpush1.msra.mxu0 %v5214
        %5630 = vmatprep.subr.mxu0 %v5223
        %5631 = vmatpush1.msra.mxu0 %v5222
        %5632 = vmatprep.subr.mxu0 %v5231
        %5633 = vmatpush1.msra.mxu0 %v5230
        %5634 = vmatprep.subr.mxu0 %v5239
        %5635 = vmatpush1.msra.mxu0 %v5238
        %5636 = vmatprep.subr.mxu0 %v5247
        %5637 = vmatpush1.msra.mxu0 %v5246
        %5638 = vmatprep.subr.mxu0 %v5255
        %5639 = vmatpush1.msra.mxu0 %v5254
        %5640 = vmatprep.subr.mxu0 %v5263
        %5641 = vmatpush1.msra.mxu0 %v5262
        %5642 = vmatprep.subr.mxu0 %v5271
        %5643 = vmatpush1.msra.mxu0 %v5270
        %5644 = vmatprep.subr.mxu0 %v5279
        %5645 = vmatpush1.msra.mxu0 %v5278
        %5646 = vmatprep.mubr.f32.mxu0 %v4965
        %5647 = vmatmul.mubr.f32.gmra.mrb[0].mxu0 %v4964
        %v5648 = vpop.f32.mrb[0].mxu0
        %v5649 = vadd.f32 %v5296, %v5648
        %v5650 = vpop.f32.mrb[0].mxu0
        %v5651 = vadd.f32 %v5300, %v5650
        %5652 = vmatprep.mubr.f32.mxu0 %v4967
        %5653 = vmatmul.mubr.f32.gmra.mrb[0].mxu0 %v4966
        %v5654 = vpop.f32.mrb[0].mxu0
        %v5655 = vadd.f32 %v5296, %v5654
        %v5656 = vpop.f32.mrb[0].mxu0
        %v5657 = vadd.f32 %v5300, %v5656
        %5658 = vmatprep.mubr.f32.mxu0 %v4969
        %5659 = vmatmul.mubr.f32.gmra.mrb[0].mxu0 %v4968
        %v5660 = vpop.f32.mrb[0].mxu0
        %v5661 = vadd.f32 %v5296, %v5660
        %v5662 = vpop.f32.mrb[0].mxu0
        %v5663 = vadd.f32 %v5300, %v5662
        %5664 = vmatprep.mubr.f32.mxu0 %v4971
        %5665 = vmatmul.mubr.f32.gmra.mrb[0].mxu0 %v4970
        %v5666 = vpop.f32.mrb[0].mxu0
        %v5667 = vadd.f32 %v5296, %v5666
        %v5668 = vpop.f32.mrb[0].mxu0
        %v5669 = vadd.f32 %v5300, %v5668
        %5670 = vmatprep.mubr.f32.mxu0 %v4973
        %5671 = vmatmul.mubr.f32.gmra.mrb[0].mxu0 %v4972
        %v5672 = vpop.f32.mrb[0].mxu0
        %v5673 = vadd.f32 %v5296, %v5672
        %v5674 = vpop.f32.mrb[0].mxu0
        %v5675 = vadd.f32 %v5300, %v5674
        %5676 = vmatprep.mubr.f32.mxu0 %v4975
        %5677 = vmatmul.mubr.f32.gmra.mrb[0].mxu0 %v4974
        %v5678 = vpop.f32.mrb[0].mxu0
        %v5679 = vadd.f32 %v5296, %v5678
        %v5680 = vpop.f32.mrb[0].mxu0
        %v5681 = vadd.f32 %v5300, %v5680
        %5682 = vmatprep.mubr.f32.mxu0 %v4977
        %5683 = vmatmul.mubr.f32.gmra.mrb[0].mxu0 %v4976
        %v5684 = vpop.f32.mrb[0].mxu0
        %v5685 = vadd.f32 %v5296, %v5684
        %v5686 = vpop.f32.mrb[0].mxu0
        %v5687 = vadd.f32 %v5300, %v5686
        %5688 = vmatprep.mubr.f32.mxu0 %v4979
        %5689 = vmatmul.mubr.f32.gmra.mrb[0].mxu0 %v4978
        %v5690 = vpop.f32.mrb[0].mxu0
        %v5691 = vadd.f32 %v5296, %v5690
        %v5692 = vpop.f32.mrb[0].mxu0
        %v5693 = vadd.f32 %v5300, %v5692
        %5694 = vmatprep.mubr.f32.mxu0 %v4981
        %5695 = vmatmul.mubr.f32.gmra.mrb[0].mxu0 %v4980
        %v5696 = vpop.f32.mrb[0].mxu0
        %v5697 = vadd.f32 %v5296, %v5696
        %v5698 = vpop.f32.mrb[0].mxu0
        %v5699 = vadd.f32 %v5300, %v5698
        %5700 = vmatprep.mubr.f32.mxu0 %v4983
        %5701 = vmatmul.mubr.f32.gmra.mrb[0].mxu0 %v4982
        %v5702 = vpop.f32.mrb[0].mxu0
        %v5703 = vadd.f32 %v5296, %v5702
        %v5704 = vpop.f32.mrb[0].mxu0
        %v5705 = vadd.f32 %v5300, %v5704
        %5706 = vmatprep.mubr.f32.mxu0 %v4985
        %5707 = vmatmul.mubr.f32.gmra.mrb[0].mxu0 %v4984
        %v5708 = vpop.f32.mrb[0].mxu0
        %v5709 = vadd.f32 %v5296, %v5708
        %v5710 = vpop.f32.mrb[0].mxu0
        %v5711 = vadd.f32 %v5300, %v5710
        %5712 = vmatprep.mubr.f32.mxu0 %v4987
        %5713 = vmatmul.mubr.f32.gmra.mrb[0].mxu0 %v4986
        %v5714 = vpop.f32.mrb[0].mxu0
        %v5715 = vadd.f32 %v5296, %v5714
        %v5716 = vpop.f32.mrb[0].mxu0
        %v5717 = vadd.f32 %v5300, %v5716
        %5718 = vmatprep.mubr.f32.mxu0 %v4989
        %5719 = vmatmul.mubr.f32.gmra.mrb[0].mxu0 %v4988
        %v5720 = vpop.f32.mrb[0].mxu0
        %v5721 = vadd.f32 %v5296, %v5720
        %v5722 = vpop.f32.mrb[0].mxu0
        %v5723 = vadd.f32 %v5300, %v5722
        %5724 = vmatprep.mubr.f32.mxu0 %v4991
        %5725 = vmatmul.mubr.f32.gmra.mrb[0].mxu0 %v4990
        %v5726 = vpop.f32.mrb[0].mxu0
        %v5727 = vadd.f32 %v5296, %v5726
        %v5728 = vpop.f32.mrb[0].mxu0
        %v5729 = vadd.f32 %v5300, %v5728
        %5730 = vmatprep.mubr.f32.mxu0 %v4993
        %5731 = vmatmul.mubr.f32.gmra.mrb[0].mxu0 %v4992
        %v5732 = vpop.f32.mrb[0].mxu0
        %v5733 = vadd.f32 %v5296, %v5732
        %v5734 = vpop.f32.mrb[0].mxu0
        %v5735 = vadd.f32 %v5300, %v5734
        %5736 = vmatprep.mubr.f32.mxu0 %v4995
        %5737 = vmatmul.mubr.f32.gmra.mrb[0].mxu0 %v4994
        %v5738 = vpop.f32.mrb[0].mxu0
        %v5739 = vadd.f32 %v5296, %v5738
        %v5740 = vpop.f32.mrb[0].mxu0
        %v5741 = vadd.f32 %v5300, %v5740
        %5742 = vmatprep.mubr.f32.mxu0 %v4997
        %5743 = vmatmul.mubr.f32.gmra.mrb[0].mxu0 %v4996
        %v5744 = vpop.f32.mrb[0].mxu0
        %v5745 = vadd.f32 %v5296, %v5744
        %v5746 = vpop.f32.mrb[0].mxu0
        %v5747 = vadd.f32 %v5300, %v5746
        %5748 = vmatprep.mubr.f32.mxu0 %v4999
        %5749 = vmatmul.mubr.f32.gmra.mrb[0].mxu0 %v4998
        %v5750 = vpop.f32.mrb[0].mxu0
        %v5751 = vadd.f32 %v5296, %v5750
        %v5752 = vpop.f32.mrb[0].mxu0
        %v5753 = vadd.f32 %v5300, %v5752
        %5754 = vmatprep.mubr.f32.mxu0 %v5001
        %5755 = vmatmul.mubr.f32.gmra.mrb[0].mxu0 %v5000
        %v5756 = vpop.f32.mrb[0].mxu0
        %v5757 = vadd.f32 %v5296, %v5756
        %v5758 = vpop.f32.mrb[0].mxu0
        %v5759 = vadd.f32 %v5300, %v5758
        %5760 = vmatprep.mubr.f32.mxu0 %v5003
        %5761 = vmatmul.mubr.f32.gmra.mrb[0].mxu0 %v5002
        %v5762 = vpop.f32.mrb[0].mxu0
        %v5763 = vadd.f32 %v5296, %v5762
        %v5764 = vpop.f32.mrb[0].mxu0
        %v5765 = vadd.f32 %v5300, %v5764
        %5766 = vmatprep.mubr.f32.mxu0 %v5005
        %5767 = vmatmul.mubr.f32.gmra.mrb[0].mxu0 %v5004
        %v5768 = vpop.f32.mrb[0].mxu0
        %v5769 = vadd.f32 %v5296, %v5768
        %v5770 = vpop.f32.mrb[0].mxu0
        %v5771 = vadd.f32 %v5300, %v5770
        %5772 = vmatprep.mubr.f32.mxu0 %v5007
        %5773 = vmatmul.mubr.f32.gmra.mrb[0].mxu0 %v5006
        %v5774 = vpop.f32.mrb[0].mxu0
        %v5775 = vadd.f32 %v5296, %v5774
        %v5776 = vpop.f32.mrb[0].mxu0
        %v5777 = vadd.f32 %v5300, %v5776
        %5778 = vmatprep.mubr.f32.mxu0 %v5009
        %5779 = vmatmul.mubr.f32.gmra.mrb[0].mxu0 %v5008
        %v5780 = vpop.f32.mrb[0].mxu0
        %v5781 = vadd.f32 %v5296, %v5780
        %v5782 = vpop.f32.mrb[0].mxu0
        %v5783 = vadd.f32 %v5300, %v5782
        %5784 = vmatprep.mubr.f32.mxu0 %v5011
        %5785 = vmatmul.mubr.f32.gmra.mrb[0].mxu0 %v5010
        %v5786 = vpop.f32.mrb[0].mxu0
        %v5787 = vadd.f32 %v5296, %v5786
        %v5788 = vpop.f32.mrb[0].mxu0
        %v5789 = vadd.f32 %v5300, %v5788
        %5790 = vmatprep.mubr.f32.mxu0 %v5013
        %5791 = vmatmul.mubr.f32.gmra.mrb[0].mxu0 %v5012
        %v5792 = vpop.f32.mrb[0].mxu0
        %v5793 = vadd.f32 %v5296, %v5792
        %v5794 = vpop.f32.mrb[0].mxu0
        %v5795 = vadd.f32 %v5300, %v5794
        %5796 = vmatprep.mubr.f32.mxu0 %v5015
        %5797 = vmatmul.mubr.f32.gmra.mrb[0].mxu0 %v5014
        %v5798 = vpop.f32.mrb[0].mxu0
        %v5799 = vadd.f32 %v5296, %v5798
        %v5800 = vpop.f32.mrb[0].mxu0
        %v5801 = vadd.f32 %v5300, %v5800
        %5802 = vmatprep.mubr.f32.mxu0 %v5017
        %5803 = vmatmul.mubr.f32.gmra.mrb[0].mxu0 %v5016
        %v5804 = vpop.f32.mrb[0].mxu0
        %v5805 = vadd.f32 %v5296, %v5804
        %v5806 = vpop.f32.mrb[0].mxu0
        %v5807 = vadd.f32 %v5300, %v5806
        %5808 = vmatprep.mubr.f32.mxu0 %v5019
        %5809 = vmatmul.mubr.f32.gmra.mrb[0].mxu0 %v5018
        %v5810 = vpop.f32.mrb[0].mxu0
        %v5811 = vadd.f32 %v5296, %v5810
        %v5812 = vpop.f32.mrb[0].mxu0
        %v5813 = vadd.f32 %v5300, %v5812
        %5814 = vmatprep.mubr.f32.mxu0 %v5021
        %5815 = vmatmul.mubr.f32.gmra.mrb[0].mxu0 %v5020
        %v5816 = vpop.f32.mrb[0].mxu0
        %v5817 = vadd.f32 %v5296, %v5816
        %v5818 = vpop.f32.mrb[0].mxu0
        %v5819 = vadd.f32 %v5300, %v5818
        %5820 = vmatprep.mubr.f32.mxu0 %v5023
        %5821 = vmatmul.mubr.f32.gmra.mrb[0].mxu0 %v5022
        %v5822 = vpop.f32.mrb[0].mxu0
        %v5823 = vadd.f32 %v5296, %v5822
        %v5824 = vpop.f32.mrb[0].mxu0
        %v5825 = vadd.f32 %v5300, %v5824
        %5826 = vmatprep.mubr.f32.mxu0 %v5025
        %5827 = vmatmul.mubr.f32.gmra.mrb[0].mxu0 %v5024
        %v5828 = vpop.f32.mrb[0].mxu0
        %v5829 = vadd.f32 %v5296, %v5828
        %v5830 = vpop.f32.mrb[0].mxu0
        %v5831 = vadd.f32 %v5300, %v5830
        %5832 = vmatprep.mubr.f32.mxu0 %v5027
        %5833 = vmatmul.mubr.f32.gmra.mrb[0].mxu0 %v5026
        %v5834 = vpop.f32.mrb[0].mxu0
        %v5835 = vadd.f32 %v5296, %v5834
        %v5836 = vpop.f32.mrb[0].mxu0
        %v5837 = vadd.f32 %v5300, %v5836
        %5838 = vdwg.mxu0
        %5839 = vmatprep.subr.mxu0 %v5033
        %5840 = vmatpush1.msra.mxu0 %v5032
        %5841 = vmatprep.subr.mxu0 %v5041
        %5842 = vmatpush1.msra.mxu0 %v5040
        %5843 = vmatprep.subr.mxu0 %v5049
        %5844 = vmatpush1.msra.mxu0 %v5048
        %5845 = vmatprep.subr.mxu0 %v5057
        %5846 = vmatpush1.msra.mxu0 %v5056
        %5847 = vmatprep.subr.mxu0 %v5065
        %5848 = vmatpush1.msra.mxu0 %v5064
        %5849 = vmatprep.subr.mxu0 %v5073
        %5850 = vmatpush1.msra.mxu0 %v5072
        %5851 = vmatprep.subr.mxu0 %v5081
        %5852 = vmatpush1.msra.mxu0 %v5080
        %5853 = vmatprep.subr.mxu0 %v5089
        %5854 = vmatpush1.msra.mxu0 %v5088
        %5855 = vmatprep.subr.mxu0 %v5097
        %5856 = vmatpush1.msra.mxu0 %v5096
        %5857 = vmatprep.subr.mxu0 %v5105
        %5858 = vmatpush1.msra.mxu0 %v5104
        %5859 = vmatprep.subr.mxu0 %v5113
        %5860 = vmatpush1.msra.mxu0 %v5112
        %5861 = vmatprep.subr.mxu0 %v5121
        %5862 = vmatpush1.msra.mxu0 %v5120
        %5863 = vmatprep.subr.mxu0 %v5129
        %5864 = vmatpush1.msra.mxu0 %v5128
        %5865 = vmatprep.subr.mxu0 %v5137
        %5866 = vmatpush1.msra.mxu0 %v5136
        %5867 = vmatprep.subr.mxu0 %v5145
        %5868 = vmatpush1.msra.mxu0 %v5144
        %5869 = vmatprep.subr.mxu0 %v5153
        %5870 = vmatpush1.msra.mxu0 %v5152
        %5871 = vmatprep.subr.mxu0 %v5161
        %5872 = vmatpush1.msra.mxu0 %v5160
        %5873 = vmatprep.subr.mxu0 %v5169
        %5874 = vmatpush1.msra.mxu0 %v5168
        %5875 = vmatprep.subr.mxu0 %v5177
        %5876 = vmatpush1.msra.mxu0 %v5176
        %5877 = vmatprep.subr.mxu0 %v5185
        %5878 = vmatpush1.msra.mxu0 %v5184
        %5879 = vmatprep.subr.mxu0 %v5193
        %5880 = vmatpush1.msra.mxu0 %v5192
        %5881 = vmatprep.subr.mxu0 %v5201
        %5882 = vmatpush1.msra.mxu0 %v5200
        %5883 = vmatprep.subr.mxu0 %v5209
        %5884 = vmatpush1.msra.mxu0 %v5208
        %5885 = vmatprep.subr.mxu0 %v5217
        %5886 = vmatpush1.msra.mxu0 %v5216
        %5887 = vmatprep.subr.mxu0 %v5225
        %5888 = vmatpush1.msra.mxu0 %v5224
        %5889 = vmatprep.subr.mxu0 %v5233
        %5890 = vmatpush1.msra.mxu0 %v5232
        %5891 = vmatprep.subr.mxu0 %v5241
        %5892 = vmatpush1.msra.mxu0 %v5240
        %5893 = vmatprep.subr.mxu0 %v5249
        %5894 = vmatpush1.msra.mxu0 %v5248
        %5895 = vmatprep.subr.mxu0 %v5257
        %5896 = vmatpush1.msra.mxu0 %v5256
        %5897 = vmatprep.subr.mxu0 %v5265
        %5898 = vmatpush1.msra.mxu0 %v5264
        %5899 = vmatprep.subr.mxu0 %v5273
        %5900 = vmatpush1.msra.mxu0 %v5272
        %5901 = vmatprep.subr.mxu0 %v5281
        %5902 = vmatpush1.msra.mxu0 %v5280
        %5903 = vmatprep.mubr.f32.mxu0 %v4965
        %5904 = vmatmul.mubr.f32.gmra.mrb[0].mxu0 %v4964
        %v5905 = vpop.f32.mrb[0].mxu0
        %v5906 = vadd.f32 %v5304, %v5905
        %v5907 = vpop.f32.mrb[0].mxu0
        %v5908 = vadd.f32 %v5308, %v5907
        %5909 = vmatprep.mubr.f32.mxu0 %v4967
        %5910 = vmatmul.mubr.f32.gmra.mrb[0].mxu0 %v4966
        %v5911 = vpop.f32.mrb[0].mxu0
        %v5912 = vadd.f32 %v5304, %v5911
        %v5913 = vpop.f32.mrb[0].mxu0
        %v5914 = vadd.f32 %v5308, %v5913
        %5915 = vmatprep.mubr.f32.mxu0 %v4969
        %5916 = vmatmul.mubr.f32.gmra.mrb[0].mxu0 %v4968
        %v5917 = vpop.f32.mrb[0].mxu0
        %v5918 = vadd.f32 %v5304, %v5917
        %v5919 = vpop.f32.mrb[0].mxu0
        %v5920 = vadd.f32 %v5308, %v5919
        %5921 = vmatprep.mubr.f32.mxu0 %v4971
        %5922 = vmatmul.mubr.f32.gmra.mrb[0].mxu0 %v4970
        %v5923 = vpop.f32.mrb[0].mxu0
        %v5924 = vadd.f32 %v5304, %v5923
        %v5925 = vpop.f32.mrb[0].mxu0
        %v5926 = vadd.f32 %v5308, %v5925
        %5927 = vmatprep.mubr.f32.mxu0 %v4973
        %5928 = vmatmul.mubr.f32.gmra.mrb[0].mxu0 %v4972
        %v5929 = vpop.f32.mrb[0].mxu0
        %v5930 = vadd.f32 %v5304, %v5929
        %v5931 = vpop.f32.mrb[0].mxu0
        %v5932 = vadd.f32 %v5308, %v5931
        %5933 = vmatprep.mubr.f32.mxu0 %v4975
        %5934 = vmatmul.mubr.f32.gmra.mrb[0].mxu0 %v4974
        %v5935 = vpop.f32.mrb[0].mxu0
        %v5936 = vadd.f32 %v5304, %v5935
        %v5937 = vpop.f32.mrb[0].mxu0
        %v5938 = vadd.f32 %v5308, %v5937
        %5939 = vmatprep.mubr.f32.mxu0 %v4977
        %5940 = vmatmul.mubr.f32.gmra.mrb[0].mxu0 %v4976
        %v5941 = vpop.f32.mrb[0].mxu0
        %v5942 = vadd.f32 %v5304, %v5941
        %v5943 = vpop.f32.mrb[0].mxu0
        %v5944 = vadd.f32 %v5308, %v5943
        %5945 = vmatprep.mubr.f32.mxu0 %v4979
        %5946 = vmatmul.mubr.f32.gmra.mrb[0].mxu0 %v4978
        %v5947 = vpop.f32.mrb[0].mxu0
        %v5948 = vadd.f32 %v5304, %v5947
        %v5949 = vpop.f32.mrb[0].mxu0
        %v5950 = vadd.f32 %v5308, %v5949
        %5951 = vmatprep.mubr.f32.mxu0 %v4981
        %5952 = vmatmul.mubr.f32.gmra.mrb[0].mxu0 %v4980
        %v5953 = vpop.f32.mrb[0].mxu0
        %v5954 = vadd.f32 %v5304, %v5953
        %v5955 = vpop.f32.mrb[0].mxu0
        %v5956 = vadd.f32 %v5308, %v5955
        %5957 = vmatprep.mubr.f32.mxu0 %v4983
        %5958 = vmatmul.mubr.f32.gmra.mrb[0].mxu0 %v4982
        %v5959 = vpop.f32.mrb[0].mxu0
        %v5960 = vadd.f32 %v5304, %v5959
        %v5961 = vpop.f32.mrb[0].mxu0
        %v5962 = vadd.f32 %v5308, %v5961
        %5963 = vmatprep.mubr.f32.mxu0 %v4985
        %5964 = vmatmul.mubr.f32.gmra.mrb[0].mxu0 %v4984
        %v5965 = vpop.f32.mrb[0].mxu0
        %v5966 = vadd.f32 %v5304, %v5965
        %v5967 = vpop.f32.mrb[0].mxu0
        %v5968 = vadd.f32 %v5308, %v5967
        %5969 = vmatprep.mubr.f32.mxu0 %v4987
        %5970 = vmatmul.mubr.f32.gmra.mrb[0].mxu0 %v4986
        %v5971 = vpop.f32.mrb[0].mxu0
        %v5972 = vadd.f32 %v5304, %v5971
        %v5973 = vpop.f32.mrb[0].mxu0
        %v5974 = vadd.f32 %v5308, %v5973
        %5975 = vmatprep.mubr.f32.mxu0 %v4989
        %5976 = vmatmul.mubr.f32.gmra.mrb[0].mxu0 %v4988
        %v5977 = vpop.f32.mrb[0].mxu0
        %v5978 = vadd.f32 %v5304, %v5977
        %v5979 = vpop.f32.mrb[0].mxu0
        %v5980 = vadd.f32 %v5308, %v5979
        %5981 = vmatprep.mubr.f32.mxu0 %v4991
        %5982 = vmatmul.mubr.f32.gmra.mrb[0].mxu0 %v4990
        %v5983 = vpop.f32.mrb[0].mxu0
        %v5984 = vadd.f32 %v5304, %v5983
        %v5985 = vpop.f32.mrb[0].mxu0
        %v5986 = vadd.f32 %v5308, %v5985
        %5987 = vmatprep.mubr.f32.mxu0 %v4993
        %5988 = vmatmul.mubr.f32.gmra.mrb[0].mxu0 %v4992
        %v5989 = vpop.f32.mrb[0].mxu0
        %v5990 = vadd.f32 %v5304, %v5989
        %v5991 = vpop.f32.mrb[0].mxu0
        %v5992 = vadd.f32 %v5308, %v5991
        %5993 = vmatprep.mubr.f32.mxu0 %v4995
        %5994 = vmatmul.mubr.f32.gmra.mrb[0].mxu0 %v4994
        %v5995 = vpop.f32.mrb[0].mxu0
        %v5996 = vadd.f32 %v5304, %v5995
        %v5997 = vpop.f32.mrb[0].mxu0
        %v5998 = vadd.f32 %v5308, %v5997
        %5999 = vmatprep.mubr.f32.mxu0 %v4997
        %6000 = vmatmul.mubr.f32.gmra.mrb[0].mxu0 %v4996
        %v6001 = vpop.f32.mrb[0].mxu0
        %v6002 = vadd.f32 %v5304, %v6001
        %v6003 = vpop.f32.mrb[0].mxu0
        %v6004 = vadd.f32 %v5308, %v6003
        %6005 = vmatprep.mubr.f32.mxu0 %v4999
        %6006 = vmatmul.mubr.f32.gmra.mrb[0].mxu0 %v4998
        %v6007 = vpop.f32.mrb[0].mxu0
        %v6008 = vadd.f32 %v5304, %v6007
        %v6009 = vpop.f32.mrb[0].mxu0
        %v6010 = vadd.f32 %v5308, %v6009
        %6011 = vmatprep.mubr.f32.mxu0 %v5001
        %6012 = vmatmul.mubr.f32.gmra.mrb[0].mxu0 %v5000
        %v6013 = vpop.f32.mrb[0].mxu0
        %v6014 = vadd.f32 %v5304, %v6013
        %v6015 = vpop.f32.mrb[0].mxu0
        %v6016 = vadd.f32 %v5308, %v6015
        %6017 = vmatprep.mubr.f32.mxu0 %v5003
        %6018 = vmatmul.mubr.f32.gmra.mrb[0].mxu0 %v5002
        %v6019 = vpop.f32.mrb[0].mxu0
        %v6020 = vadd.f32 %v5304, %v6019
        %v6021 = vpop.f32.mrb[0].mxu0
        %v6022 = vadd.f32 %v5308, %v6021
        %6023 = vmatprep.mubr.f32.mxu0 %v5005
        %6024 = vmatmul.mubr.f32.gmra.mrb[0].mxu0 %v5004
        %v6025 = vpop.f32.mrb[0].mxu0
        %v6026 = vadd.f32 %v5304, %v6025
        %v6027 = vpop.f32.mrb[0].mxu0
        %v6028 = vadd.f32 %v5308, %v6027
        %6029 = vmatprep.mubr.f32.mxu0 %v5007
        %6030 = vmatmul.mubr.f32.gmra.mrb[0].mxu0 %v5006
        %v6031 = vpop.f32.mrb[0].mxu0
        %v6032 = vadd.f32 %v5304, %v6031
        %v6033 = vpop.f32.mrb[0].mxu0
        %v6034 = vadd.f32 %v5308, %v6033
        %6035 = vmatprep.mubr.f32.mxu0 %v5009
        %6036 = vmatmul.mubr.f32.gmra.mrb[0].mxu0 %v5008
        %v6037 = vpop.f32.mrb[0].mxu0
        %v6038 = vadd.f32 %v5304, %v6037
        %v6039 = vpop.f32.mrb[0].mxu0
        %v6040 = vadd.f32 %v5308, %v6039
        %6041 = vmatprep.mubr.f32.mxu0 %v5011
        %6042 = vmatmul.mubr.f32.gmra.mrb[0].mxu0 %v5010
        %v6043 = vpop.f32.mrb[0].mxu0
        %v6044 = vadd.f32 %v5304, %v6043
        %v6045 = vpop.f32.mrb[0].mxu0
        %v6046 = vadd.f32 %v5308, %v6045
        %6047 = vmatprep.mubr.f32.mxu0 %v5013
        %6048 = vmatmul.mubr.f32.gmra.mrb[0].mxu0 %v5012
        %v6049 = vpop.f32.mrb[0].mxu0
        %v6050 = vadd.f32 %v5304, %v6049
        %v6051 = vpop.f32.mrb[0].mxu0
        %v6052 = vadd.f32 %v5308, %v6051
        %6053 = vmatprep.mubr.f32.mxu0 %v5015
        %6054 = vmatmul.mubr.f32.gmra.mrb[0].mxu0 %v5014
        %v6055 = vpop.f32.mrb[0].mxu0
        %v6056 = vadd.f32 %v5304, %v6055
        %v6057 = vpop.f32.mrb[0].mxu0
        %v6058 = vadd.f32 %v5308, %v6057
        %6059 = vmatprep.mubr.f32.mxu0 %v5017
        %6060 = vmatmul.mubr.f32.gmra.mrb[0].mxu0 %v5016
        %v6061 = vpop.f32.mrb[0].mxu0
        %v6062 = vadd.f32 %v5304, %v6061
        %v6063 = vpop.f32.mrb[0].mxu0
        %v6064 = vadd.f32 %v5308, %v6063
        %6065 = vmatprep.mubr.f32.mxu0 %v5019
        %6066 = vmatmul.mubr.f32.gmra.mrb[0].mxu0 %v5018
        %v6067 = vpop.f32.mrb[0].mxu0
        %v6068 = vadd.f32 %v5304, %v6067
        %v6069 = vpop.f32.mrb[0].mxu0
        %v6070 = vadd.f32 %v5308, %v6069
        %6071 = vmatprep.mubr.f32.mxu0 %v5021
        %6072 = vmatmul.mubr.f32.gmra.mrb[0].mxu0 %v5020
        %v6073 = vpop.f32.mrb[0].mxu0
        %v6074 = vadd.f32 %v5304, %v6073
        %v6075 = vpop.f32.mrb[0].mxu0
        %v6076 = vadd.f32 %v5308, %v6075
        %6077 = vmatprep.mubr.f32.mxu0 %v5023
        %6078 = vmatmul.mubr.f32.gmra.mrb[0].mxu0 %v5022
        %v6079 = vpop.f32.mrb[0].mxu0
        %v6080 = vadd.f32 %v5304, %v6079
        %v6081 = vpop.f32.mrb[0].mxu0
        %v6082 = vadd.f32 %v5308, %v6081
        %6083 = vmatprep.mubr.f32.mxu0 %v5025
        %6084 = vmatmul.mubr.f32.gmra.mrb[0].mxu0 %v5024
        %v6085 = vpop.f32.mrb[0].mxu0
        %v6086 = vadd.f32 %v5304, %v6085
        %v6087 = vpop.f32.mrb[0].mxu0
        %v6088 = vadd.f32 %v5308, %v6087
        %6089 = vmatprep.mubr.f32.mxu0 %v5027
        %6090 = vmatmul.mubr.f32.gmra.mrb[0].mxu0 %v5026
        %v6091 = vpop.f32.mrb[0].mxu0
        %v6092 = vadd.f32 %v5304, %v6091
        %v6093 = vpop.f32.mrb[0].mxu0
        %v6094 = vadd.f32 %v5308, %v6093
        %6095 = vdwg.mxu0
        %6096 = vmatprep.subr.mxu0 %v5035
        %6097 = vmatpush1.msra.mxu0 %v5034
        %6098 = vmatprep.subr.mxu0 %v5043
        %6099 = vmatpush1.msra.mxu0 %v5042
        %6100 = vmatprep.subr.mxu0 %v5051
        %6101 = vmatpush1.msra.mxu0 %v5050
        %6102 = vmatprep.subr.mxu0 %v5059
        %6103 = vmatpush1.msra.mxu0 %v5058
        %6104 = vmatprep.subr.mxu0 %v5067
        %6105 = vmatpush1.msra.mxu0 %v5066
        %6106 = vmatprep.subr.mxu0 %v5075
        %6107 = vmatpush1.msra.mxu0 %v5074
        %6108 = vmatprep.subr.mxu0 %v5083
        %6109 = vmatpush1.msra.mxu0 %v5082
        %6110 = vmatprep.subr.mxu0 %v5091
        %6111 = vmatpush1.msra.mxu0 %v5090
        %6112 = vmatprep.subr.mxu0 %v5099
        %6113 = vmatpush1.msra.mxu0 %v5098
        %6114 = vmatprep.subr.mxu0 %v5107
        %6115 = vmatpush1.msra.mxu0 %v5106
        %6116 = vmatprep.subr.mxu0 %v5115
        %6117 = vmatpush1.msra.mxu0 %v5114
        %6118 = vmatprep.subr.mxu0 %v5123
        %6119 = vmatpush1.msra.mxu0 %v5122
        %6120 = vmatprep.subr.mxu0 %v5131
        %6121 = vmatpush1.msra.mxu0 %v5130
        %6122 = vmatprep.subr.mxu0 %v5139
        %6123 = vmatpush1.msra.mxu0 %v5138
        %6124 = vmatprep.subr.mxu0 %v5147
        %6125 = vmatpush1.msra.mxu0 %v5146
        %6126 = vmatprep.subr.mxu0 %v5155
        %6127 = vmatpush1.msra.mxu0 %v5154
        %6128 = vmatprep.subr.mxu0 %v5163
        %6129 = vmatpush1.msra.mxu0 %v5162
        %6130 = vmatprep.subr.mxu0 %v5171
        %6131 = vmatpush1.msra.mxu0 %v5170
        %6132 = vmatprep.subr.mxu0 %v5179
        %6133 = vmatpush1.msra.mxu0 %v5178
        %6134 = vmatprep.subr.mxu0 %v5187
        %6135 = vmatpush1.msra.mxu0 %v5186
        %6136 = vmatprep.subr.mxu0 %v5195
        %6137 = vmatpush1.msra.mxu0 %v5194
        %6138 = vmatprep.subr.mxu0 %v5203
        %6139 = vmatpush1.msra.mxu0 %v5202
        %6140 = vmatprep.subr.mxu0 %v5211
        %6141 = vmatpush1.msra.mxu0 %v5210
        %6142 = vmatprep.subr.mxu0 %v5219
        %6143 = vmatpush1.msra.mxu0 %v5218
        %6144 = vmatprep.subr.mxu0 %v5227
        %6145 = vmatpush1.msra.mxu0 %v5226
        %6146 = vmatprep.subr.mxu0 %v5235
        %6147 = vmatpush1.msra.mxu0 %v5234
        %6148 = vmatprep.subr.mxu0 %v5243
        %6149 = vmatpush1.msra.mxu0 %v5242
        %6150 = vmatprep.subr.mxu0 %v5251
        %6151 = vmatpush1.msra.mxu0 %v5250
        %6152 = vmatprep.subr.mxu0 %v5259
        %6153 = vmatpush1.msra.mxu0 %v5258
        %6154 = vmatprep.subr.mxu0 %v5267
        %6155 = vmatpush1.msra.mxu0 %v5266
        %6156 = vmatprep.subr.mxu0 %v5275
        %6157 = vmatpush1.msra.mxu0 %v5274
        %6158 = vmatprep.subr.mxu0 %v5283
        %6159 = vmatpush1.msra.mxu0 %v5282
        %6160 = vmatprep.mubr.f32.mxu0 %v4965
        %6161 = vmatmul.mubr.f32.gmra.mrb[0].mxu0 %v4964
        %v6162 = vpop.f32.mrb[0].mxu0
        %v6163 = vadd.f32 %v5312, %v6162
        %v6164 = vpop.f32.mrb[0].mxu0
        %v6165 = vadd.f32 %v5316, %v6164
        %6166 = vmatprep.mubr.f32.mxu0 %v4967
        %6167 = vmatmul.mubr.f32.gmra.mrb[0].mxu0 %v4966
        %v6168 = vpop.f32.mrb[0].mxu0
        %v6169 = vadd.f32 %v5312, %v6168
        %v6170 = vpop.f32.mrb[0].mxu0
        %v6171 = vadd.f32 %v5316, %v6170
        %6172 = vmatprep.mubr.f32.mxu0 %v4969
        %6173 = vmatmul.mubr.f32.gmra.mrb[0].mxu0 %v4968
        %v6174 = vpop.f32.mrb[0].mxu0
        %v6175 = vadd.f32 %v5312, %v6174
        %v6176 = vpop.f32.mrb[0].mxu0
        %v6177 = vadd.f32 %v5316, %v6176
        %6178 = vmatprep.mubr.f32.mxu0 %v4971
        %6179 = vmatmul.mubr.f32.gmra.mrb[0].mxu0 %v4970
        %v6180 = vpop.f32.mrb[0].mxu0
        %v6181 = vadd.f32 %v5312, %v6180
        %v6182 = vpop.f32.mrb[0].mxu0
        %v6183 = vadd.f32 %v5316, %v6182
        %6184 = vmatprep.mubr.f32.mxu0 %v4973
        %6185 = vmatmul.mubr.f32.gmra.mrb[0].mxu0 %v4972
        %v6186 = vpop.f32.mrb[0].mxu0
        %v6187 = vadd.f32 %v5312, %v6186
        %v6188 = vpop.f32.mrb[0].mxu0
        %v6189 = vadd.f32 %v5316, %v6188
        %6190 = vmatprep.mubr.f32.mxu0 %v4975
        %6191 = vmatmul.mubr.f32.gmra.mrb[0].mxu0 %v4974
        %v6192 = vpop.f32.mrb[0].mxu0
        %v6193 = vadd.f32 %v5312, %v6192
        %v6194 = vpop.f32.mrb[0].mxu0
        %v6195 = vadd.f32 %v5316, %v6194
        %6196 = vmatprep.mubr.f32.mxu0 %v4977
        %6197 = vmatmul.mubr.f32.gmra.mrb[0].mxu0 %v4976
        %v6198 = vpop.f32.mrb[0].mxu0
        %v6199 = vadd.f32 %v5312, %v6198
        %v6200 = vpop.f32.mrb[0].mxu0
        %v6201 = vadd.f32 %v5316, %v6200
        %6202 = vmatprep.mubr.f32.mxu0 %v4979
        %6203 = vmatmul.mubr.f32.gmra.mrb[0].mxu0 %v4978
        %v6204 = vpop.f32.mrb[0].mxu0
        %v6205 = vadd.f32 %v5312, %v6204
        %v6206 = vpop.f32.mrb[0].mxu0
        %v6207 = vadd.f32 %v5316, %v6206
        %6208 = vmatprep.mubr.f32.mxu0 %v4981
        %6209 = vmatmul.mubr.f32.gmra.mrb[0].mxu0 %v4980
        %v6210 = vpop.f32.mrb[0].mxu0
        %v6211 = vadd.f32 %v5312, %v6210
        %v6212 = vpop.f32.mrb[0].mxu0
        %v6213 = vadd.f32 %v5316, %v6212
        %6214 = vmatprep.mubr.f32.mxu0 %v4983
        %6215 = vmatmul.mubr.f32.gmra.mrb[0].mxu0 %v4982
        %v6216 = vpop.f32.mrb[0].mxu0
        %v6217 = vadd.f32 %v5312, %v6216
        %v6218 = vpop.f32.mrb[0].mxu0
        %v6219 = vadd.f32 %v5316, %v6218
        %6220 = vmatprep.mubr.f32.mxu0 %v4985
        %6221 = vmatmul.mubr.f32.gmra.mrb[0].mxu0 %v4984
        %v6222 = vpop.f32.mrb[0].mxu0
        %v6223 = vadd.f32 %v5312, %v6222
        %v6224 = vpop.f32.mrb[0].mxu0
        %v6225 = vadd.f32 %v5316, %v6224
        %6226 = vmatprep.mubr.f32.mxu0 %v4987
        %6227 = vmatmul.mubr.f32.gmra.mrb[0].mxu0 %v4986
        %v6228 = vpop.f32.mrb[0].mxu0
        %v6229 = vadd.f32 %v5312, %v6228
        %v6230 = vpop.f32.mrb[0].mxu0
        %v6231 = vadd.f32 %v5316, %v6230
        %6232 = vmatprep.mubr.f32.mxu0 %v4989
        %6233 = vmatmul.mubr.f32.gmra.mrb[0].mxu0 %v4988
        %v6234 = vpop.f32.mrb[0].mxu0
        %v6235 = vadd.f32 %v5312, %v6234
        %v6236 = vpop.f32.mrb[0].mxu0
        %v6237 = vadd.f32 %v5316, %v6236
        %6238 = vmatprep.mubr.f32.mxu0 %v4991
        %6239 = vmatmul.mubr.f32.gmra.mrb[0].mxu0 %v4990
        %v6240 = vpop.f32.mrb[0].mxu0
        %v6241 = vadd.f32 %v5312, %v6240
        %v6242 = vpop.f32.mrb[0].mxu0
        %v6243 = vadd.f32 %v5316, %v6242
        %6244 = vmatprep.mubr.f32.mxu0 %v4993
        %6245 = vmatmul.mubr.f32.gmra.mrb[0].mxu0 %v4992
        %v6246 = vpop.f32.mrb[0].mxu0
        %v6247 = vadd.f32 %v5312, %v6246
        %v6248 = vpop.f32.mrb[0].mxu0
        %v6249 = vadd.f32 %v5316, %v6248
        %6250 = vmatprep.mubr.f32.mxu0 %v4995
        %6251 = vmatmul.mubr.f32.gmra.mrb[0].mxu0 %v4994
        %v6252 = vpop.f32.mrb[0].mxu0
        %v6253 = vadd.f32 %v5312, %v6252
        %v6254 = vpop.f32.mrb[0].mxu0
        %v6255 = vadd.f32 %v5316, %v6254
        %6256 = vmatprep.mubr.f32.mxu0 %v4997
        %6257 = vmatmul.mubr.f32.gmra.mrb[0].mxu0 %v4996
        %v6258 = vpop.f32.mrb[0].mxu0
        %v6259 = vadd.f32 %v5312, %v6258
        %v6260 = vpop.f32.mrb[0].mxu0
        %v6261 = vadd.f32 %v5316, %v6260
        %6262 = vmatprep.mubr.f32.mxu0 %v4999
        %6263 = vmatmul.mubr.f32.gmra.mrb[0].mxu0 %v4998
        %v6264 = vpop.f32.mrb[0].mxu0
        %v6265 = vadd.f32 %v5312, %v6264
        %v6266 = vpop.f32.mrb[0].mxu0
        %v6267 = vadd.f32 %v5316, %v6266
        %6268 = vmatprep.mubr.f32.mxu0 %v5001
        %6269 = vmatmul.mubr.f32.gmra.mrb[0].mxu0 %v5000
        %v6270 = vpop.f32.mrb[0].mxu0
        %v6271 = vadd.f32 %v5312, %v6270
        %v6272 = vpop.f32.mrb[0].mxu0
        %v6273 = vadd.f32 %v5316, %v6272
        %6274 = vmatprep.mubr.f32.mxu0 %v5003
        %6275 = vmatmul.mubr.f32.gmra.mrb[0].mxu0 %v5002
        %v6276 = vpop.f32.mrb[0].mxu0
        %v6277 = vadd.f32 %v5312, %v6276
        %v6278 = vpop.f32.mrb[0].mxu0
        %v6279 = vadd.f32 %v5316, %v6278
        %6280 = vmatprep.mubr.f32.mxu0 %v5005
        %6281 = vmatmul.mubr.f32.gmra.mrb[0].mxu0 %v5004
        %v6282 = vpop.f32.mrb[0].mxu0
        %v6283 = vadd.f32 %v5312, %v6282
        %v6284 = vpop.f32.mrb[0].mxu0
        %v6285 = vadd.f32 %v5316, %v6284
        %6286 = vmatprep.mubr.f32.mxu0 %v5007
        %6287 = vmatmul.mubr.f32.gmra.mrb[0].mxu0 %v5006
        %v6288 = vpop.f32.mrb[0].mxu0
        %v6289 = vadd.f32 %v5312, %v6288
        %v6290 = vpop.f32.mrb[0].mxu0
        %v6291 = vadd.f32 %v5316, %v6290
        %6292 = vmatprep.mubr.f32.mxu0 %v5009
        %6293 = vmatmul.mubr.f32.gmra.mrb[0].mxu0 %v5008
        %v6294 = vpop.f32.mrb[0].mxu0
        %v6295 = vadd.f32 %v5312, %v6294
        %v6296 = vpop.f32.mrb[0].mxu0
        %v6297 = vadd.f32 %v5316, %v6296
        %6298 = vmatprep.mubr.f32.mxu0 %v5011
        %6299 = vmatmul.mubr.f32.gmra.mrb[0].mxu0 %v5010
        %v6300 = vpop.f32.mrb[0].mxu0
        %v6301 = vadd.f32 %v5312, %v6300
        %v6302 = vpop.f32.mrb[0].mxu0
        %v6303 = vadd.f32 %v5316, %v6302
        %6304 = vmatprep.mubr.f32.mxu0 %v5013
        %6305 = vmatmul.mubr.f32.gmra.mrb[0].mxu0 %v5012
        %v6306 = vpop.f32.mrb[0].mxu0
        %v6307 = vadd.f32 %v5312, %v6306
        %v6308 = vpop.f32.mrb[0].mxu0
        %v6309 = vadd.f32 %v5316, %v6308
        %6310 = vmatprep.mubr.f32.mxu0 %v5015
        %6311 = vmatmul.mubr.f32.gmra.mrb[0].mxu0 %v5014
        %v6312 = vpop.f32.mrb[0].mxu0
        %v6313 = vadd.f32 %v5312, %v6312
        %v6314 = vpop.f32.mrb[0].mxu0
        %v6315 = vadd.f32 %v5316, %v6314
        %6316 = vmatprep.mubr.f32.mxu0 %v5017
        %6317 = vmatmul.mubr.f32.gmra.mrb[0].mxu0 %v5016
        %v6318 = vpop.f32.mrb[0].mxu0
        %v6319 = vadd.f32 %v5312, %v6318
        %v6320 = vpop.f32.mrb[0].mxu0
        %v6321 = vadd.f32 %v5316, %v6320
        %6322 = vmatprep.mubr.f32.mxu0 %v5019
        %6323 = vmatmul.mubr.f32.gmra.mrb[0].mxu0 %v5018
        %v6324 = vpop.f32.mrb[0].mxu0
        %v6325 = vadd.f32 %v5312, %v6324
        %v6326 = vpop.f32.mrb[0].mxu0
        %v6327 = vadd.f32 %v5316, %v6326
        %6328 = vmatprep.mubr.f32.mxu0 %v5021
        %6329 = vmatmul.mubr.f32.gmra.mrb[0].mxu0 %v5020
        %v6330 = vpop.f32.mrb[0].mxu0
        %v6331 = vadd.f32 %v5312, %v6330
        %v6332 = vpop.f32.mrb[0].mxu0
        %v6333 = vadd.f32 %v5316, %v6332
        %6334 = vmatprep.mubr.f32.mxu0 %v5023
        %6335 = vmatmul.mubr.f32.gmra.mrb[0].mxu0 %v5022
        %v6336 = vpop.f32.mrb[0].mxu0
        %v6337 = vadd.f32 %v5312, %v6336
        %v6338 = vpop.f32.mrb[0].mxu0
        %v6339 = vadd.f32 %v5316, %v6338
        %6340 = vmatprep.mubr.f32.mxu0 %v5025
        %6341 = vmatmul.mubr.f32.gmra.mrb[0].mxu0 %v5024
        %v6342 = vpop.f32.mrb[0].mxu0
        %v6343 = vadd.f32 %v5312, %v6342
        %v6344 = vpop.f32.mrb[0].mxu0
        %v6345 = vadd.f32 %v5316, %v6344
        %6346 = vmatprep.mubr.f32.mxu0 %v5027
        %6347 = vmatmul.mubr.f32.gmra.mrb[0].mxu0 %v5026
        %v6348 = vpop.f32.mrb[0].mxu0
        %v6349 = vadd.f32 %v5312, %v6348
        %v6350 = vpop.f32.mrb[0].mxu0
        %v6351 = vadd.f32 %v5316, %v6350
        %6352 = vdwg.mxu0
        %v6353 = vmul.f32 %v5392, 0.5
        %v6354 = vmul.f32 %v5394, 0.5
        %v6355 = vmul.f32 %v5649, 0.5
        %v6356 = vmul.f32 %v5651, 0.5
        %v6357 = vmul.f32 %v5906, 0.5
        %v6358 = vmul.f32 %v5908, 0.5
        %v6359 = vmul.f32 %v6163, 0.5
        %v6360 = vmul.f32 %v6165, 0.5
        %v6361 = vmul.f32 %v5398, 0.5
        %v6362 = vmul.f32 %v5400, 0.5
        %v6363 = vmul.f32 %v5655, 0.5
        %v6364 = vmul.f32 %v5657, 0.5
        %v6365 = vmul.f32 %v5912, 0.5
        %v6366 = vmul.f32 %v5914, 0.5
        %v6367 = vmul.f32 %v6169, 0.5
        %v6368 = vmul.f32 %v6171, 0.5
        %v6369 = vmul.f32 %v5404, 0.5
        %v6370 = vmul.f32 %v5406, 0.5
        %v6371 = vmul.f32 %v5661, 0.5
        %v6372 = vmul.f32 %v5663, 0.5
        %v6373 = vmul.f32 %v5918, 0.5
        %v6374 = vmul.f32 %v5920, 0.5
        %v6375 = vmul.f32 %v6175, 0.5
        %v6376 = vmul.f32 %v6177, 0.5
        %v6377 = vmul.f32 %v5410, 0.5
        %v6378 = vmul.f32 %v5412, 0.5
        %v6379 = vmul.f32 %v5667, 0.5
        %v6380 = vmul.f32 %v5669, 0.5
        %v6381 = vmul.f32 %v5924, 0.5
        %v6382 = vmul.f32 %v5926, 0.5
        %v6383 = vmul.f32 %v6181, 0.5
        %v6384 = vmul.f32 %v6183, 0.5
        %v6385 = vmul.f32 %v5416, 0.5
        %v6386 = vmul.f32 %v5418, 0.5
        %v6387 = vmul.f32 %v5673, 0.5
        %v6388 = vmul.f32 %v5675, 0.5
        %v6389 = vmul.f32 %v5930, 0.5
        %v6390 = vmul.f32 %v5932, 0.5
        %v6391 = vmul.f32 %v6187, 0.5
        %v6392 = vmul.f32 %v6189, 0.5
        %v6393 = vmul.f32 %v5422, 0.5
        %v6394 = vmul.f32 %v5424, 0.5
        %v6395 = vmul.f32 %v5679, 0.5
        %v6396 = vmul.f32 %v5681, 0.5
        %v6397 = vmul.f32 %v5936, 0.5
        %v6398 = vmul.f32 %v5938, 0.5
        %v6399 = vmul.f32 %v6193, 0.5
        %v6400 = vmul.f32 %v6195, 0.5
        %v6401 = vmul.f32 %v5428, 0.5
        %v6402 = vmul.f32 %v5430, 0.5
        %v6403 = vmul.f32 %v5685, 0.5
        %v6404 = vmul.f32 %v5687, 0.5
        %v6405 = vmul.f32 %v5942, 0.5
        %v6406 = vmul.f32 %v5944, 0.5
        %v6407 = vmul.f32 %v6199, 0.5
        %v6408 = vmul.f32 %v6201, 0.5
        %v6409 = vmul.f32 %v5434, 0.5
        %v6410 = vmul.f32 %v5436, 0.5
        %v6411 = vmul.f32 %v5691, 0.5
        %v6412 = vmul.f32 %v5693, 0.5
        %v6413 = vmul.f32 %v5948, 0.5
        %v6414 = vmul.f32 %v5950, 0.5
        %v6415 = vmul.f32 %v6205, 0.5
        %v6416 = vmul.f32 %v6207, 0.5
        %v6417 = vmul.f32 %v5440, 0.5
        %v6418 = vmul.f32 %v5442, 0.5
        %v6419 = vmul.f32 %v5697, 0.5
        %v6420 = vmul.f32 %v5699, 0.5
        %v6421 = vmul.f32 %v5954, 0.5
        %v6422 = vmul.f32 %v5956, 0.5
        %v6423 = vmul.f32 %v6211, 0.5
        %v6424 = vmul.f32 %v6213, 0.5
        %v6425 = vmul.f32 %v5446, 0.5
        %v6426 = vmul.f32 %v5448, 0.5
        %v6427 = vmul.f32 %v5703, 0.5
        %v6428 = vmul.f32 %v5705, 0.5
        %v6429 = vmul.f32 %v5960, 0.5
        %v6430 = vmul.f32 %v5962, 0.5
        %v6431 = vmul.f32 %v6217, 0.5
        %v6432 = vmul.f32 %v6219, 0.5
        %v6433 = vmul.f32 %v5452, 0.5
        %v6434 = vmul.f32 %v5454, 0.5
        %v6435 = vmul.f32 %v5709, 0.5
        %v6436 = vmul.f32 %v5711, 0.5
        %v6437 = vmul.f32 %v5966, 0.5
        %v6438 = vmul.f32 %v5968, 0.5
        %v6439 = vmul.f32 %v6223, 0.5
        %v6440 = vmul.f32 %v6225, 0.5
        %v6441 = vmul.f32 %v5458, 0.5
        %v6442 = vmul.f32 %v5460, 0.5
        %v6443 = vmul.f32 %v5715, 0.5
        %v6444 = vmul.f32 %v5717, 0.5
        %v6445 = vmul.f32 %v5972, 0.5
        %v6446 = vmul.f32 %v5974, 0.5
        %v6447 = vmul.f32 %v6229, 0.5
        %v6448 = vmul.f32 %v6231, 0.5
        %v6449 = vmul.f32 %v5464, 0.5
        %v6450 = vmul.f32 %v5466, 0.5
        %v6451 = vmul.f32 %v5721, 0.5
        %v6452 = vmul.f32 %v5723, 0.5
        %v6453 = vmul.f32 %v5978, 0.5
        %v6454 = vmul.f32 %v5980, 0.5
        %v6455 = vmul.f32 %v6235, 0.5
        %v6456 = vmul.f32 %v6237, 0.5
        %v6457 = vmul.f32 %v5470, 0.5
        %v6458 = vmul.f32 %v5472, 0.5
        %v6459 = vmul.f32 %v5727, 0.5
        %v6460 = vmul.f32 %v5729, 0.5
        %v6461 = vmul.f32 %v5984, 0.5
        %v6462 = vmul.f32 %v5986, 0.5
        %v6463 = vmul.f32 %v6241, 0.5
        %v6464 = vmul.f32 %v6243, 0.5
        %v6465 = vmul.f32 %v5476, 0.5
        %v6466 = vmul.f32 %v5478, 0.5
        %v6467 = vmul.f32 %v5733, 0.5
        %v6468 = vmul.f32 %v5735, 0.5
        %v6469 = vmul.f32 %v5990, 0.5
        %v6470 = vmul.f32 %v5992, 0.5
        %v6471 = vmul.f32 %v6247, 0.5
        %v6472 = vmul.f32 %v6249, 0.5
        %v6473 = vmul.f32 %v5482, 0.5
        %v6474 = vmul.f32 %v5484, 0.5
        %v6475 = vmul.f32 %v5739, 0.5
        %v6476 = vmul.f32 %v5741, 0.5
        %v6477 = vmul.f32 %v5996, 0.5
        %v6478 = vmul.f32 %v5998, 0.5
        %v6479 = vmul.f32 %v6253, 0.5
        %v6480 = vmul.f32 %v6255, 0.5
        %v6481 = vmul.f32 %v5488, 0.5
        %v6482 = vmul.f32 %v5490, 0.5
        %v6483 = vmul.f32 %v5745, 0.5
        %v6484 = vmul.f32 %v5747, 0.5
        %v6485 = vmul.f32 %v6002, 0.5
        %v6486 = vmul.f32 %v6004, 0.5
        %v6487 = vmul.f32 %v6259, 0.5
        %v6488 = vmul.f32 %v6261, 0.5
        %v6489 = vmul.f32 %v5494, 0.5
        %v6490 = vmul.f32 %v5496, 0.5
        %v6491 = vmul.f32 %v5751, 0.5
        %v6492 = vmul.f32 %v5753, 0.5
        %v6493 = vmul.f32 %v6008, 0.5
        %v6494 = vmul.f32 %v6010, 0.5
        %v6495 = vmul.f32 %v6265, 0.5
        %v6496 = vmul.f32 %v6267, 0.5
        %v6497 = vmul.f32 %v5500, 0.5
        %v6498 = vmul.f32 %v5502, 0.5
        %v6499 = vmul.f32 %v5757, 0.5
        %v6500 = vmul.f32 %v5759, 0.5
        %v6501 = vmul.f32 %v6014, 0.5
        %v6502 = vmul.f32 %v6016, 0.5
        %v6503 = vmul.f32 %v6271, 0.5
        %v6504 = vmul.f32 %v6273, 0.5
        %v6505 = vmul.f32 %v5506, 0.5
        %v6506 = vmul.f32 %v5508, 0.5
        %v6507 = vmul.f32 %v5763, 0.5
        %v6508 = vmul.f32 %v5765, 0.5
        %v6509 = vmul.f32 %v6020, 0.5
        %v6510 = vmul.f32 %v6022, 0.5
        %v6511 = vmul.f32 %v6277, 0.5
        %v6512 = vmul.f32 %v6279, 0.5
        %v6513 = vmul.f32 %v5512, 0.5
        %v6514 = vmul.f32 %v5514, 0.5
        %v6515 = vmul.f32 %v5769, 0.5
        %v6516 = vmul.f32 %v5771, 0.5
        %v6517 = vmul.f32 %v6026, 0.5
        %v6518 = vmul.f32 %v6028, 0.5
        %v6519 = vmul.f32 %v6283, 0.5
        %v6520 = vmul.f32 %v6285, 0.5
        %v6521 = vmul.f32 %v5518, 0.5
        %v6522 = vmul.f32 %v5520, 0.5
        %v6523 = vmul.f32 %v5775, 0.5
        %v6524 = vmul.f32 %v5777, 0.5
        %v6525 = vmul.f32 %v6032, 0.5
        %v6526 = vmul.f32 %v6034, 0.5
        %v6527 = vmul.f32 %v6289, 0.5
        %v6528 = vmul.f32 %v6291, 0.5
        %v6529 = vmul.f32 %v5524, 0.5
        %v6530 = vmul.f32 %v5526, 0.5
        %v6531 = vmul.f32 %v5781, 0.5
        %v6532 = vmul.f32 %v5783, 0.5
        %v6533 = vmul.f32 %v6038, 0.5
        %v6534 = vmul.f32 %v6040, 0.5
        %v6535 = vmul.f32 %v6295, 0.5
        %v6536 = vmul.f32 %v6297, 0.5
        %v6537 = vmul.f32 %v5530, 0.5
        %v6538 = vmul.f32 %v5532, 0.5
        %v6539 = vmul.f32 %v5787, 0.5
        %v6540 = vmul.f32 %v5789, 0.5
        %v6541 = vmul.f32 %v6044, 0.5
        %v6542 = vmul.f32 %v6046, 0.5
        %v6543 = vmul.f32 %v6301, 0.5
        %v6544 = vmul.f32 %v6303, 0.5
        %v6545 = vmul.f32 %v5536, 0.5
        %v6546 = vmul.f32 %v5538, 0.5
        %v6547 = vmul.f32 %v5793, 0.5
        %v6548 = vmul.f32 %v5795, 0.5
        %v6549 = vmul.f32 %v6050, 0.5
        %v6550 = vmul.f32 %v6052, 0.5
        %v6551 = vmul.f32 %v6307, 0.5
        %v6552 = vmul.f32 %v6309, 0.5
        %v6553 = vmul.f32 %v5542, 0.5
        %v6554 = vmul.f32 %v5544, 0.5
        %v6555 = vmul.f32 %v5799, 0.5
        %v6556 = vmul.f32 %v5801, 0.5
        %v6557 = vmul.f32 %v6056, 0.5
        %v6558 = vmul.f32 %v6058, 0.5
        %v6559 = vmul.f32 %v6313, 0.5
        %v6560 = vmul.f32 %v6315, 0.5
        %v6561 = vmul.f32 %v5548, 0.5
        %v6562 = vmul.f32 %v5550, 0.5
        %v6563 = vmul.f32 %v5805, 0.5
        %v6564 = vmul.f32 %v5807, 0.5
        %v6565 = vmul.f32 %v6062, 0.5
        %v6566 = vmul.f32 %v6064, 0.5
        %v6567 = vmul.f32 %v6319, 0.5
        %v6568 = vmul.f32 %v6321, 0.5
        %v6569 = vmul.f32 %v5554, 0.5
        %v6570 = vmul.f32 %v5556, 0.5
        %v6571 = vmul.f32 %v5811, 0.5
        %v6572 = vmul.f32 %v5813, 0.5
        %v6573 = vmul.f32 %v6068, 0.5
        %v6574 = vmul.f32 %v6070, 0.5
        %v6575 = vmul.f32 %v6325, 0.5
        %v6576 = vmul.f32 %v6327, 0.5
        %v6577 = vmul.f32 %v5560, 0.5
        %v6578 = vmul.f32 %v5562, 0.5
        %v6579 = vmul.f32 %v5817, 0.5
        %v6580 = vmul.f32 %v5819, 0.5
        %v6581 = vmul.f32 %v6074, 0.5
        %v6582 = vmul.f32 %v6076, 0.5
        %v6583 = vmul.f32 %v6331, 0.5
        %v6584 = vmul.f32 %v6333, 0.5
        %v6585 = vmul.f32 %v5566, 0.5
        %v6586 = vmul.f32 %v5568, 0.5
        %v6587 = vmul.f32 %v5823, 0.5
        %v6588 = vmul.f32 %v5825, 0.5
        %v6589 = vmul.f32 %v6080, 0.5
        %v6590 = vmul.f32 %v6082, 0.5
        %v6591 = vmul.f32 %v6337, 0.5
        %v6592 = vmul.f32 %v6339, 0.5
        %v6593 = vmul.f32 %v5572, 0.5
        %v6594 = vmul.f32 %v5574, 0.5
        %v6595 = vmul.f32 %v5829, 0.5
        %v6596 = vmul.f32 %v5831, 0.5
        %v6597 = vmul.f32 %v6086, 0.5
        %v6598 = vmul.f32 %v6088, 0.5
        %v6599 = vmul.f32 %v6343, 0.5
        %v6600 = vmul.f32 %v6345, 0.5
        %v6601 = vmul.f32 %v5578, 0.5
        %v6602 = vmul.f32 %v5580, 0.5
        %v6603 = vmul.f32 %v5835, 0.5
        %v6604 = vmul.f32 %v5837, 0.5
        %v6605 = vmul.f32 %v6092, 0.5
        %v6606 = vmul.f32 %v6094, 0.5
        %v6607 = vmul.f32 %v6349, 0.5
        %v6608 = vmul.f32 %v6351, 0.5
        %v6609 = vmul.f32 %v5392, 0.044715
        %v6610 = vmul.f32 %v5394, 0.044715
        %v6611 = vmul.f32 %v5649, 0.044715
        %v6612 = vmul.f32 %v5651, 0.044715
        %v6613 = vmul.f32 %v5906, 0.044715
        %v6614 = vmul.f32 %v5908, 0.044715
        %v6615 = vmul.f32 %v6163, 0.044715
        %v6616 = vmul.f32 %v6165, 0.044715
        %v6617 = vmul.f32 %v5398, 0.044715
        %v6618 = vmul.f32 %v5400, 0.044715
        %v6619 = vmul.f32 %v5655, 0.044715
        %v6620 = vmul.f32 %v5657, 0.044715
        %v6621 = vmul.f32 %v5912, 0.044715
        %v6622 = vmul.f32 %v5914, 0.044715
        %v6623 = vmul.f32 %v6169, 0.044715
        %v6624 = vmul.f32 %v6171, 0.044715
        %v6625 = vmul.f32 %v5404, 0.044715
        %v6626 = vmul.f32 %v5406, 0.044715
        %v6627 = vmul.f32 %v5661, 0.044715
        %v6628 = vmul.f32 %v5663, 0.044715
        %v6629 = vmul.f32 %v5918, 0.044715
        %v6630 = vmul.f32 %v5920, 0.044715
        %v6631 = vmul.f32 %v6175, 0.044715
        %v6632 = vmul.f32 %v6177, 0.044715
        %v6633 = vmul.f32 %v5410, 0.044715
        %v6634 = vmul.f32 %v5412, 0.044715
        %v6635 = vmul.f32 %v5667, 0.044715
        %v6636 = vmul.f32 %v5669, 0.044715
        %v6637 = vmul.f32 %v5924, 0.044715
        %v6638 = vmul.f32 %v5926, 0.044715
        %v6639 = vmul.f32 %v6181, 0.044715
        %v6640 = vmul.f32 %v6183, 0.044715
        %v6641 = vmul.f32 %v5416, 0.044715
        %v6642 = vmul.f32 %v5418, 0.044715
        %v6643 = vmul.f32 %v5673, 0.044715
        %v6644 = vmul.f32 %v5675, 0.044715
        %v6645 = vmul.f32 %v5930, 0.044715
        %v6646 = vmul.f32 %v5932, 0.044715
        %v6647 = vmul.f32 %v6187, 0.044715
        %v6648 = vmul.f32 %v6189, 0.044715
        %v6649 = vmul.f32 %v5422, 0.044715
        %v6650 = vmul.f32 %v5424, 0.044715
        %v6651 = vmul.f32 %v5679, 0.044715
        %v6652 = vmul.f32 %v5681, 0.044715
        %v6653 = vmul.f32 %v5936, 0.044715
        %v6654 = vmul.f32 %v5938, 0.044715
        %v6655 = vmul.f32 %v6193, 0.044715
        %v6656 = vmul.f32 %v6195, 0.044715
        %v6657 = vmul.f32 %v5428, 0.044715
        %v6658 = vmul.f32 %v5430, 0.044715
        %v6659 = vmul.f32 %v5685, 0.044715
        %v6660 = vmul.f32 %v5687, 0.044715
        %v6661 = vmul.f32 %v5942, 0.044715
        %v6662 = vmul.f32 %v5944, 0.044715
        %v6663 = vmul.f32 %v6199, 0.044715
        %v6664 = vmul.f32 %v6201, 0.044715
        %v6665 = vmul.f32 %v5434, 0.044715
        %v6666 = vmul.f32 %v5436, 0.044715
        %v6667 = vmul.f32 %v5691, 0.044715
        %v6668 = vmul.f32 %v5693, 0.044715
        %v6669 = vmul.f32 %v5948, 0.044715
        %v6670 = vmul.f32 %v5950, 0.044715
        %v6671 = vmul.f32 %v6205, 0.044715
        %v6672 = vmul.f32 %v6207, 0.044715
        %v6673 = vmul.f32 %v5440, 0.044715
        %v6674 = vmul.f32 %v5442, 0.044715
        %v6675 = vmul.f32 %v5697, 0.044715
        %v6676 = vmul.f32 %v5699, 0.044715
        %v6677 = vmul.f32 %v5954, 0.044715
        %v6678 = vmul.f32 %v5956, 0.044715
        %v6679 = vmul.f32 %v6211, 0.044715
        %v6680 = vmul.f32 %v6213, 0.044715
        %v6681 = vmul.f32 %v5446, 0.044715
        %v6682 = vmul.f32 %v5448, 0.044715
        %v6683 = vmul.f32 %v5703, 0.044715
        %v6684 = vmul.f32 %v5705, 0.044715
        %v6685 = vmul.f32 %v5960, 0.044715
        %v6686 = vmul.f32 %v5962, 0.044715
        %v6687 = vmul.f32 %v6217, 0.044715
        %v6688 = vmul.f32 %v6219, 0.044715
        %v6689 = vmul.f32 %v5452, 0.044715
        %v6690 = vmul.f32 %v5454, 0.044715
        %v6691 = vmul.f32 %v5709, 0.044715
        %v6692 = vmul.f32 %v5711, 0.044715
        %v6693 = vmul.f32 %v5966, 0.044715
        %v6694 = vmul.f32 %v5968, 0.044715
        %v6695 = vmul.f32 %v6223, 0.044715
        %v6696 = vmul.f32 %v6225, 0.044715
        %v6697 = vmul.f32 %v5458, 0.044715
        %v6698 = vmul.f32 %v5460, 0.044715
        %v6699 = vmul.f32 %v5715, 0.044715
        %v6700 = vmul.f32 %v5717, 0.044715
        %v6701 = vmul.f32 %v5972, 0.044715
        %v6702 = vmul.f32 %v5974, 0.044715
        %v6703 = vmul.f32 %v6229, 0.044715
        %v6704 = vmul.f32 %v6231, 0.044715
        %v6705 = vmul.f32 %v5464, 0.044715
        %v6706 = vmul.f32 %v5466, 0.044715
        %v6707 = vmul.f32 %v5721, 0.044715
        %v6708 = vmul.f32 %v5723, 0.044715
        %v6709 = vmul.f32 %v5978, 0.044715
        %v6710 = vmul.f32 %v5980, 0.044715
        %v6711 = vmul.f32 %v6235, 0.044715
        %v6712 = vmul.f32 %v6237, 0.044715
        %v6713 = vmul.f32 %v5470, 0.044715
        %v6714 = vmul.f32 %v5472, 0.044715
        %v6715 = vmul.f32 %v5727, 0.044715
        %v6716 = vmul.f32 %v5729, 0.044715
        %v6717 = vmul.f32 %v5984, 0.044715
        %v6718 = vmul.f32 %v5986, 0.044715
        %v6719 = vmul.f32 %v6241, 0.044715
        %v6720 = vmul.f32 %v6243, 0.044715
        %v6721 = vmul.f32 %v5476, 0.044715
        %v6722 = vmul.f32 %v5478, 0.044715
        %v6723 = vmul.f32 %v5733, 0.044715
        %v6724 = vmul.f32 %v5735, 0.044715
        %v6725 = vmul.f32 %v5990, 0.044715
        %v6726 = vmul.f32 %v5992, 0.044715
        %v6727 = vmul.f32 %v6247, 0.044715
        %v6728 = vmul.f32 %v6249, 0.044715
        %v6729 = vmul.f32 %v5482, 0.044715
        %v6730 = vmul.f32 %v5484, 0.044715
        %v6731 = vmul.f32 %v5739, 0.044715
        %v6732 = vmul.f32 %v5741, 0.044715
        %v6733 = vmul.f32 %v5996, 0.044715
        %v6734 = vmul.f32 %v5998, 0.044715
        %v6735 = vmul.f32 %v6253, 0.044715
        %v6736 = vmul.f32 %v6255, 0.044715
        %v6737 = vmul.f32 %v5488, 0.044715
        %v6738 = vmul.f32 %v5490, 0.044715
        %v6739 = vmul.f32 %v5745, 0.044715
        %v6740 = vmul.f32 %v5747, 0.044715
        %v6741 = vmul.f32 %v6002, 0.044715
        %v6742 = vmul.f32 %v6004, 0.044715
        %v6743 = vmul.f32 %v6259, 0.044715
        %v6744 = vmul.f32 %v6261, 0.044715
        %v6745 = vmul.f32 %v5494, 0.044715
        %v6746 = vmul.f32 %v5496, 0.044715
        %v6747 = vmul.f32 %v5751, 0.044715
        %v6748 = vmul.f32 %v5753, 0.044715
        %v6749 = vmul.f32 %v6008, 0.044715
        %v6750 = vmul.f32 %v6010, 0.044715
        %v6751 = vmul.f32 %v6265, 0.044715
        %v6752 = vmul.f32 %v6267, 0.044715
        %v6753 = vmul.f32 %v5500, 0.044715
        %v6754 = vmul.f32 %v5502, 0.044715
        %v6755 = vmul.f32 %v5757, 0.044715
        %v6756 = vmul.f32 %v5759, 0.044715
        %v6757 = vmul.f32 %v6014, 0.044715
        %v6758 = vmul.f32 %v6016, 0.044715
        %v6759 = vmul.f32 %v6271, 0.044715
        %v6760 = vmul.f32 %v6273, 0.044715
        %v6761 = vmul.f32 %v5506, 0.044715
        %v6762 = vmul.f32 %v5508, 0.044715
        %v6763 = vmul.f32 %v5763, 0.044715
        %v6764 = vmul.f32 %v5765, 0.044715
        %v6765 = vmul.f32 %v6020, 0.044715
        %v6766 = vmul.f32 %v6022, 0.044715
        %v6767 = vmul.f32 %v6277, 0.044715
        %v6768 = vmul.f32 %v6279, 0.044715
        %v6769 = vmul.f32 %v5512, 0.044715
        %v6770 = vmul.f32 %v5514, 0.044715
        %v6771 = vmul.f32 %v5769, 0.044715
        %v6772 = vmul.f32 %v5771, 0.044715
        %v6773 = vmul.f32 %v6026, 0.044715
        %v6774 = vmul.f32 %v6028, 0.044715
        %v6775 = vmul.f32 %v6283, 0.044715
        %v6776 = vmul.f32 %v6285, 0.044715
        %v6777 = vmul.f32 %v5518, 0.044715
        %v6778 = vmul.f32 %v5520, 0.044715
        %v6779 = vmul.f32 %v5775, 0.044715
        %v6780 = vmul.f32 %v5777, 0.044715
        %v6781 = vmul.f32 %v6032, 0.044715
        %v6782 = vmul.f32 %v6034, 0.044715
        %v6783 = vmul.f32 %v6289, 0.044715
        %v6784 = vmul.f32 %v6291, 0.044715
        %v6785 = vmul.f32 %v5524, 0.044715
        %v6786 = vmul.f32 %v5526, 0.044715
        %v6787 = vmul.f32 %v5781, 0.044715
        %v6788 = vmul.f32 %v5783, 0.044715
        %v6789 = vmul.f32 %v6038, 0.044715
        %v6790 = vmul.f32 %v6040, 0.044715
        %v6791 = vmul.f32 %v6295, 0.044715
        %v6792 = vmul.f32 %v6297, 0.044715
        %v6793 = vmul.f32 %v5530, 0.044715
        %v6794 = vmul.f32 %v5532, 0.044715
        %v6795 = vmul.f32 %v5787, 0.044715
        %v6796 = vmul.f32 %v5789, 0.044715
        %v6797 = vmul.f32 %v6044, 0.044715
        %v6798 = vmul.f32 %v6046, 0.044715
        %v6799 = vmul.f32 %v6301, 0.044715
        %v6800 = vmul.f32 %v6303, 0.044715
        %v6801 = vmul.f32 %v5536, 0.044715
        %v6802 = vmul.f32 %v5538, 0.044715
        %v6803 = vmul.f32 %v5793, 0.044715
        %v6804 = vmul.f32 %v5795, 0.044715
        %v6805 = vmul.f32 %v6050, 0.044715
        %v6806 = vmul.f32 %v6052, 0.044715
        %v6807 = vmul.f32 %v6307, 0.044715
        %v6808 = vmul.f32 %v6309, 0.044715
        %v6809 = vmul.f32 %v5542, 0.044715
        %v6810 = vmul.f32 %v5544, 0.044715
        %v6811 = vmul.f32 %v5799, 0.044715
        %v6812 = vmul.f32 %v5801, 0.044715
        %v6813 = vmul.f32 %v6056, 0.044715
        %v6814 = vmul.f32 %v6058, 0.044715
        %v6815 = vmul.f32 %v6313, 0.044715
        %v6816 = vmul.f32 %v6315, 0.044715
        %v6817 = vmul.f32 %v5548, 0.044715
        %v6818 = vmul.f32 %v5550, 0.044715
        %v6819 = vmul.f32 %v5805, 0.044715
        %v6820 = vmul.f32 %v5807, 0.044715
        %v6821 = vmul.f32 %v6062, 0.044715
        %v6822 = vmul.f32 %v6064, 0.044715
        %v6823 = vmul.f32 %v6319, 0.044715
        %v6824 = vmul.f32 %v6321, 0.044715
        %v6825 = vmul.f32 %v5554, 0.044715
        %v6826 = vmul.f32 %v5556, 0.044715
        %v6827 = vmul.f32 %v5811, 0.044715
        %v6828 = vmul.f32 %v5813, 0.044715
        %v6829 = vmul.f32 %v6068, 0.044715
        %v6830 = vmul.f32 %v6070, 0.044715
        %v6831 = vmul.f32 %v6325, 0.044715
        %v6832 = vmul.f32 %v6327, 0.044715
        %v6833 = vmul.f32 %v5560, 0.044715
        %v6834 = vmul.f32 %v5562, 0.044715
        %v6835 = vmul.f32 %v5817, 0.044715
        %v6836 = vmul.f32 %v5819, 0.044715
        %v6837 = vmul.f32 %v6074, 0.044715
        %v6838 = vmul.f32 %v6076, 0.044715
        %v6839 = vmul.f32 %v6331, 0.044715
        %v6840 = vmul.f32 %v6333, 0.044715
        %v6841 = vmul.f32 %v5566, 0.044715
        %v6842 = vmul.f32 %v5568, 0.044715
        %v6843 = vmul.f32 %v5823, 0.044715
        %v6844 = vmul.f32 %v5825, 0.044715
        %v6845 = vmul.f32 %v6080, 0.044715
        %v6846 = vmul.f32 %v6082, 0.044715
        %v6847 = vmul.f32 %v6337, 0.044715
        %v6848 = vmul.f32 %v6339, 0.044715
        %v6849 = vmul.f32 %v5572, 0.044715
        %v6850 = vmul.f32 %v5574, 0.044715
        %v6851 = vmul.f32 %v5829, 0.044715
        %v6852 = vmul.f32 %v5831, 0.044715
        %v6853 = vmul.f32 %v6086, 0.044715
        %v6854 = vmul.f32 %v6088, 0.044715
        %v6855 = vmul.f32 %v6343, 0.044715
        %v6856 = vmul.f32 %v6345, 0.044715
        %v6857 = vmul.f32 %v5578, 0.044715
        %v6858 = vmul.f32 %v5580, 0.044715
        %v6859 = vmul.f32 %v5835, 0.044715
        %v6860 = vmul.f32 %v5837, 0.044715
        %v6861 = vmul.f32 %v6092, 0.044715
        %v6862 = vmul.f32 %v6094, 0.044715
        %v6863 = vmul.f32 %v6349, 0.044715
        %v6864 = vmul.f32 %v6351, 0.044715
        %v6865 = vmul.f32 %v6609, %v5392
        %v6866 = vmul.f32 %v6610, %v5394
        %v6867 = vmul.f32 %v6611, %v5649
        %v6868 = vmul.f32 %v6612, %v5651
        %v6869 = vmul.f32 %v6613, %v5906
        %v6870 = vmul.f32 %v6614, %v5908
        %v6871 = vmul.f32 %v6615, %v6163
        %v6872 = vmul.f32 %v6616, %v6165
        %v6873 = vmul.f32 %v6617, %v5398
        %v6874 = vmul.f32 %v6618, %v5400
        %v6875 = vmul.f32 %v6619, %v5655
        %v6876 = vmul.f32 %v6620, %v5657
        %v6877 = vmul.f32 %v6621, %v5912
        %v6878 = vmul.f32 %v6622, %v5914
        %v6879 = vmul.f32 %v6623, %v6169
        %v6880 = vmul.f32 %v6624, %v6171
        %v6881 = vmul.f32 %v6625, %v5404
        %v6882 = vmul.f32 %v6626, %v5406
        %v6883 = vmul.f32 %v6627, %v5661
        %v6884 = vmul.f32 %v6628, %v5663
        %v6885 = vmul.f32 %v6629, %v5918
        %v6886 = vmul.f32 %v6630, %v5920
        %v6887 = vmul.f32 %v6631, %v6175
        %v6888 = vmul.f32 %v6632, %v6177
        %v6889 = vmul.f32 %v6633, %v5410
        %v6890 = vmul.f32 %v6634, %v5412
        %v6891 = vmul.f32 %v6635, %v5667
        %v6892 = vmul.f32 %v6636, %v5669
        %v6893 = vmul.f32 %v6637, %v5924
        %v6894 = vmul.f32 %v6638, %v5926
        %v6895 = vmul.f32 %v6639, %v6181
        %v6896 = vmul.f32 %v6640, %v6183
        %v6897 = vmul.f32 %v6641, %v5416
        %v6898 = vmul.f32 %v6642, %v5418
        %v6899 = vmul.f32 %v6643, %v5673
        %v6900 = vmul.f32 %v6644, %v5675
        %v6901 = vmul.f32 %v6645, %v5930
        %v6902 = vmul.f32 %v6646, %v5932
        %v6903 = vmul.f32 %v6647, %v6187
        %v6904 = vmul.f32 %v6648, %v6189
        %v6905 = vmul.f32 %v6649, %v5422
        %v6906 = vmul.f32 %v6650, %v5424
        %v6907 = vmul.f32 %v6651, %v5679
        %v6908 = vmul.f32 %v6652, %v5681
        %v6909 = vmul.f32 %v6653, %v5936
        %v6910 = vmul.f32 %v6654, %v5938
        %v6911 = vmul.f32 %v6655, %v6193
        %v6912 = vmul.f32 %v6656, %v6195
        %v6913 = vmul.f32 %v6657, %v5428
        %v6914 = vmul.f32 %v6658, %v5430
        %v6915 = vmul.f32 %v6659, %v5685
        %v6916 = vmul.f32 %v6660, %v5687
        %v6917 = vmul.f32 %v6661, %v5942
        %v6918 = vmul.f32 %v6662, %v5944
        %v6919 = vmul.f32 %v6663, %v6199
        %v6920 = vmul.f32 %v6664, %v6201
        %v6921 = vmul.f32 %v6665, %v5434
        %v6922 = vmul.f32 %v6666, %v5436
        %v6923 = vmul.f32 %v6667, %v5691
        %v6924 = vmul.f32 %v6668, %v5693
        %v6925 = vmul.f32 %v6669, %v5948
        %v6926 = vmul.f32 %v6670, %v5950
        %v6927 = vmul.f32 %v6671, %v6205
        %v6928 = vmul.f32 %v6672, %v6207
        %v6929 = vmul.f32 %v6673, %v5440
        %v6930 = vmul.f32 %v6674, %v5442
        %v6931 = vmul.f32 %v6675, %v5697
        %v6932 = vmul.f32 %v6676, %v5699
        %v6933 = vmul.f32 %v6677, %v5954
        %v6934 = vmul.f32 %v6678, %v5956
        %v6935 = vmul.f32 %v6679, %v6211
        %v6936 = vmul.f32 %v6680, %v6213
        %v6937 = vmul.f32 %v6681, %v5446
        %v6938 = vmul.f32 %v6682, %v5448
        %v6939 = vmul.f32 %v6683, %v5703
        %v6940 = vmul.f32 %v6684, %v5705
        %v6941 = vmul.f32 %v6685, %v5960
        %v6942 = vmul.f32 %v6686, %v5962
        %v6943 = vmul.f32 %v6687, %v6217
        %v6944 = vmul.f32 %v6688, %v6219
        %v6945 = vmul.f32 %v6689, %v5452
        %v6946 = vmul.f32 %v6690, %v5454
        %v6947 = vmul.f32 %v6691, %v5709
        %v6948 = vmul.f32 %v6692, %v5711
        %v6949 = vmul.f32 %v6693, %v5966
        %v6950 = vmul.f32 %v6694, %v5968
        %v6951 = vmul.f32 %v6695, %v6223
        %v6952 = vmul.f32 %v6696, %v6225
        %v6953 = vmul.f32 %v6697, %v5458
        %v6954 = vmul.f32 %v6698, %v5460
        %v6955 = vmul.f32 %v6699, %v5715
        %v6956 = vmul.f32 %v6700, %v5717
        %v6957 = vmul.f32 %v6701, %v5972
        %v6958 = vmul.f32 %v6702, %v5974
        %v6959 = vmul.f32 %v6703, %v6229
        %v6960 = vmul.f32 %v6704, %v6231
        %v6961 = vmul.f32 %v6705, %v5464
        %v6962 = vmul.f32 %v6706, %v5466
        %v6963 = vmul.f32 %v6707, %v5721
        %v6964 = vmul.f32 %v6708, %v5723
        %v6965 = vmul.f32 %v6709, %v5978
        %v6966 = vmul.f32 %v6710, %v5980
        %v6967 = vmul.f32 %v6711, %v6235
        %v6968 = vmul.f32 %v6712, %v6237
        %v6969 = vmul.f32 %v6713, %v5470
        %v6970 = vmul.f32 %v6714, %v5472
        %v6971 = vmul.f32 %v6715, %v5727
        %v6972 = vmul.f32 %v6716, %v5729
        %v6973 = vmul.f32 %v6717, %v5984
        %v6974 = vmul.f32 %v6718, %v5986
        %v6975 = vmul.f32 %v6719, %v6241
        %v6976 = vmul.f32 %v6720, %v6243
        %v6977 = vmul.f32 %v6721, %v5476
        %v6978 = vmul.f32 %v6722, %v5478
        %v6979 = vmul.f32 %v6723, %v5733
        %v6980 = vmul.f32 %v6724, %v5735
        %v6981 = vmul.f32 %v6725, %v5990
        %v6982 = vmul.f32 %v6726, %v5992
        %v6983 = vmul.f32 %v6727, %v6247
        %v6984 = vmul.f32 %v6728, %v6249
        %v6985 = vmul.f32 %v6729, %v5482
        %v6986 = vmul.f32 %v6730, %v5484
        %v6987 = vmul.f32 %v6731, %v5739
        %v6988 = vmul.f32 %v6732, %v5741
        %v6989 = vmul.f32 %v6733, %v5996
        %v6990 = vmul.f32 %v6734, %v5998
        %v6991 = vmul.f32 %v6735, %v6253
        %v6992 = vmul.f32 %v6736, %v6255
        %v6993 = vmul.f32 %v6737, %v5488
        %v6994 = vmul.f32 %v6738, %v5490
        %v6995 = vmul.f32 %v6739, %v5745
        %v6996 = vmul.f32 %v6740, %v5747
        %v6997 = vmul.f32 %v6741, %v6002
        %v6998 = vmul.f32 %v6742, %v6004
        %v6999 = vmul.f32 %v6743, %v6259
        %v7000 = vmul.f32 %v6744, %v6261
        %v7001 = vmul.f32 %v6745, %v5494
        %v7002 = vmul.f32 %v6746, %v5496
        %v7003 = vmul.f32 %v6747, %v5751
        %v7004 = vmul.f32 %v6748, %v5753
        %v7005 = vmul.f32 %v6749, %v6008
        %v7006 = vmul.f32 %v6750, %v6010
        %v7007 = vmul.f32 %v6751, %v6265
        %v7008 = vmul.f32 %v6752, %v6267
        %v7009 = vmul.f32 %v6753, %v5500
        %v7010 = vmul.f32 %v6754, %v5502
        %v7011 = vmul.f32 %v6755, %v5757
        %v7012 = vmul.f32 %v6756, %v5759
        %v7013 = vmul.f32 %v6757, %v6014
        %v7014 = vmul.f32 %v6758, %v6016
        %v7015 = vmul.f32 %v6759, %v6271
        %v7016 = vmul.f32 %v6760, %v6273
        %v7017 = vmul.f32 %v6761, %v5506
        %v7018 = vmul.f32 %v6762, %v5508
        %v7019 = vmul.f32 %v6763, %v5763
        %v7020 = vmul.f32 %v6764, %v5765
        %v7021 = vmul.f32 %v6765, %v6020
        %v7022 = vmul.f32 %v6766, %v6022
        %v7023 = vmul.f32 %v6767, %v6277
        %v7024 = vmul.f32 %v6768, %v6279
        %v7025 = vmul.f32 %v6769, %v5512
        %v7026 = vmul.f32 %v6770, %v5514
        %v7027 = vmul.f32 %v6771, %v5769
        %v7028 = vmul.f32 %v6772, %v5771
        %v7029 = vmul.f32 %v6773, %v6026
        %v7030 = vmul.f32 %v6774, %v6028
        %v7031 = vmul.f32 %v6775, %v6283
        %v7032 = vmul.f32 %v6776, %v6285
        %v7033 = vmul.f32 %v6777, %v5518
        %v7034 = vmul.f32 %v6778, %v5520
        %v7035 = vmul.f32 %v6779, %v5775
        %v7036 = vmul.f32 %v6780, %v5777
        %v7037 = vmul.f32 %v6781, %v6032
        %v7038 = vmul.f32 %v6782, %v6034
        %v7039 = vmul.f32 %v6783, %v6289
        %v7040 = vmul.f32 %v6784, %v6291
        %v7041 = vmul.f32 %v6785, %v5524
        %v7042 = vmul.f32 %v6786, %v5526
        %v7043 = vmul.f32 %v6787, %v5781
        %v7044 = vmul.f32 %v6788, %v5783
        %v7045 = vmul.f32 %v6789, %v6038
        %v7046 = vmul.f32 %v6790, %v6040
        %v7047 = vmul.f32 %v6791, %v6295
        %v7048 = vmul.f32 %v6792, %v6297
        %v7049 = vmul.f32 %v6793, %v5530
        %v7050 = vmul.f32 %v6794, %v5532
        %v7051 = vmul.f32 %v6795, %v5787
        %v7052 = vmul.f32 %v6796, %v5789
        %v7053 = vmul.f32 %v6797, %v6044
        %v7054 = vmul.f32 %v6798, %v6046
        %v7055 = vmul.f32 %v6799, %v6301
        %v7056 = vmul.f32 %v6800, %v6303
        %v7057 = vmul.f32 %v6801, %v5536
        %v7058 = vmul.f32 %v6802, %v5538
        %v7059 = vmul.f32 %v6803, %v5793
        %v7060 = vmul.f32 %v6804, %v5795
        %v7061 = vmul.f32 %v6805, %v6050
        %v7062 = vmul.f32 %v6806, %v6052
        %v7063 = vmul.f32 %v6807, %v6307
        %v7064 = vmul.f32 %v6808, %v6309
        %v7065 = vmul.f32 %v6809, %v5542
        %v7066 = vmul.f32 %v6810, %v5544
        %v7067 = vmul.f32 %v6811, %v5799
        %v7068 = vmul.f32 %v6812, %v5801
        %v7069 = vmul.f32 %v6813, %v6056
        %v7070 = vmul.f32 %v6814, %v6058
        %v7071 = vmul.f32 %v6815, %v6313
        %v7072 = vmul.f32 %v6816, %v6315
        %v7073 = vmul.f32 %v6817, %v5548
        %v7074 = vmul.f32 %v6818, %v5550
        %v7075 = vmul.f32 %v6819, %v5805
        %v7076 = vmul.f32 %v6820, %v5807
        %v7077 = vmul.f32 %v6821, %v6062
        %v7078 = vmul.f32 %v6822, %v6064
        %v7079 = vmul.f32 %v6823, %v6319
        %v7080 = vmul.f32 %v6824, %v6321
        %v7081 = vmul.f32 %v6825, %v5554
        %v7082 = vmul.f32 %v6826, %v5556
        %v7083 = vmul.f32 %v6827, %v5811
        %v7084 = vmul.f32 %v6828, %v5813
        %v7085 = vmul.f32 %v6829, %v6068
        %v7086 = vmul.f32 %v6830, %v6070
        %v7087 = vmul.f32 %v6831, %v6325
        %v7088 = vmul.f32 %v6832, %v6327
        %v7089 = vmul.f32 %v6833, %v5560
        %v7090 = vmul.f32 %v6834, %v5562
        %v7091 = vmul.f32 %v6835, %v5817
        %v7092 = vmul.f32 %v6836, %v5819
        %v7093 = vmul.f32 %v6837, %v6074
        %v7094 = vmul.f32 %v6838, %v6076
        %v7095 = vmul.f32 %v6839, %v6331
        %v7096 = vmul.f32 %v6840, %v6333
        %v7097 = vmul.f32 %v6841, %v5566
        %v7098 = vmul.f32 %v6842, %v5568
        %v7099 = vmul.f32 %v6843, %v5823
        %v7100 = vmul.f32 %v6844, %v5825
        %v7101 = vmul.f32 %v6845, %v6080
        %v7102 = vmul.f32 %v6846, %v6082
        %v7103 = vmul.f32 %v6847, %v6337
        %v7104 = vmul.f32 %v6848, %v6339
        %v7105 = vmul.f32 %v6849, %v5572
        %v7106 = vmul.f32 %v6850, %v5574
        %v7107 = vmul.f32 %v6851, %v5829
        %v7108 = vmul.f32 %v6852, %v5831
        %v7109 = vmul.f32 %v6853, %v6086
        %v7110 = vmul.f32 %v6854, %v6088
        %v7111 = vmul.f32 %v6855, %v6343
        %v7112 = vmul.f32 %v6856, %v6345
        %v7113 = vmul.f32 %v6857, %v5578
        %v7114 = vmul.f32 %v6858, %v5580
        %v7115 = vmul.f32 %v6859, %v5835
        %v7116 = vmul.f32 %v6860, %v5837
        %v7117 = vmul.f32 %v6861, %v6092
        %v7118 = vmul.f32 %v6862, %v6094
        %v7119 = vmul.f32 %v6863, %v6349
        %v7120 = vmul.f32 %v6864, %v6351
        %v7121 = vmul.f32 %v6865, %v5392
        %v7122 = vmul.f32 %v6866, %v5394
        %v7123 = vmul.f32 %v6867, %v5649
        %v7124 = vmul.f32 %v6868, %v5651
        %v7125 = vmul.f32 %v6869, %v5906
        %v7126 = vmul.f32 %v6870, %v5908
        %v7127 = vmul.f32 %v6871, %v6163
        %v7128 = vmul.f32 %v6872, %v6165
        %v7129 = vmul.f32 %v6873, %v5398
        %v7130 = vmul.f32 %v6874, %v5400
        %v7131 = vmul.f32 %v6875, %v5655
        %v7132 = vmul.f32 %v6876, %v5657
        %v7133 = vmul.f32 %v6877, %v5912
        %v7134 = vmul.f32 %v6878, %v5914
        %v7135 = vmul.f32 %v6879, %v6169
        %v7136 = vmul.f32 %v6880, %v6171
        %v7137 = vmul.f32 %v6881, %v5404
        %v7138 = vmul.f32 %v6882, %v5406
        %v7139 = vmul.f32 %v6883, %v5661
        %v7140 = vmul.f32 %v6884, %v5663
        %v7141 = vmul.f32 %v6885, %v5918
        %v7142 = vmul.f32 %v6886, %v5920
        %v7143 = vmul.f32 %v6887, %v6175
        %v7144 = vmul.f32 %v6888, %v6177
        %v7145 = vmul.f32 %v6889, %v5410
        %v7146 = vmul.f32 %v6890, %v5412
        %v7147 = vmul.f32 %v6891, %v5667
        %v7148 = vmul.f32 %v6892, %v5669
        %v7149 = vmul.f32 %v6893, %v5924
        %v7150 = vmul.f32 %v6894, %v5926
        %v7151 = vmul.f32 %v6895, %v6181
        %v7152 = vmul.f32 %v6896, %v6183
        %v7153 = vmul.f32 %v6897, %v5416
        %v7154 = vmul.f32 %v6898, %v5418
        %v7155 = vmul.f32 %v6899, %v5673
        %v7156 = vmul.f32 %v6900, %v5675
        %v7157 = vmul.f32 %v6901, %v5930
        %v7158 = vmul.f32 %v6902, %v5932
        %v7159 = vmul.f32 %v6903, %v6187
        %v7160 = vmul.f32 %v6904, %v6189
        %v7161 = vmul.f32 %v6905, %v5422
        %v7162 = vmul.f32 %v6906, %v5424
        %v7163 = vmul.f32 %v6907, %v5679
        %v7164 = vmul.f32 %v6908, %v5681
        %v7165 = vmul.f32 %v6909, %v5936
        %v7166 = vmul.f32 %v6910, %v5938
        %v7167 = vmul.f32 %v6911, %v6193
        %v7168 = vmul.f32 %v6912, %v6195
        %v7169 = vmul.f32 %v6913, %v5428
        %v7170 = vmul.f32 %v6914, %v5430
        %v7171 = vmul.f32 %v6915, %v5685
        %v7172 = vmul.f32 %v6916, %v5687
        %v7173 = vmul.f32 %v6917, %v5942
        %v7174 = vmul.f32 %v6918, %v5944
        %v7175 = vmul.f32 %v6919, %v6199
        %v7176 = vmul.f32 %v6920, %v6201
        %v7177 = vmul.f32 %v6921, %v5434
        %v7178 = vmul.f32 %v6922, %v5436
        %v7179 = vmul.f32 %v6923, %v5691
        %v7180 = vmul.f32 %v6924, %v5693
        %v7181 = vmul.f32 %v6925, %v5948
        %v7182 = vmul.f32 %v6926, %v5950
        %v7183 = vmul.f32 %v6927, %v6205
        %v7184 = vmul.f32 %v6928, %v6207
        %v7185 = vmul.f32 %v6929, %v5440
        %v7186 = vmul.f32 %v6930, %v5442
        %v7187 = vmul.f32 %v6931, %v5697
        %v7188 = vmul.f32 %v6932, %v5699
        %v7189 = vmul.f32 %v6933, %v5954
        %v7190 = vmul.f32 %v6934, %v5956
        %v7191 = vmul.f32 %v6935, %v6211
        %v7192 = vmul.f32 %v6936, %v6213
        %v7193 = vmul.f32 %v6937, %v5446
        %v7194 = vmul.f32 %v6938, %v5448
        %v7195 = vmul.f32 %v6939, %v5703
        %v7196 = vmul.f32 %v6940, %v5705
        %v7197 = vmul.f32 %v6941, %v5960
        %v7198 = vmul.f32 %v6942, %v5962
        %v7199 = vmul.f32 %v6943, %v6217
        %v7200 = vmul.f32 %v6944, %v6219
        %v7201 = vmul.f32 %v6945, %v5452
        %v7202 = vmul.f32 %v6946, %v5454
        %v7203 = vmul.f32 %v6947, %v5709
        %v7204 = vmul.f32 %v6948, %v5711
        %v7205 = vmul.f32 %v6949, %v5966
        %v7206 = vmul.f32 %v6950, %v5968
        %v7207 = vmul.f32 %v6951, %v6223
        %v7208 = vmul.f32 %v6952, %v6225
        %v7209 = vmul.f32 %v6953, %v5458
        %v7210 = vmul.f32 %v6954, %v5460
        %v7211 = vmul.f32 %v6955, %v5715
        %v7212 = vmul.f32 %v6956, %v5717
        %v7213 = vmul.f32 %v6957, %v5972
        %v7214 = vmul.f32 %v6958, %v5974
        %v7215 = vmul.f32 %v6959, %v6229
        %v7216 = vmul.f32 %v6960, %v6231
        %v7217 = vmul.f32 %v6961, %v5464
        %v7218 = vmul.f32 %v6962, %v5466
        %v7219 = vmul.f32 %v6963, %v5721
        %v7220 = vmul.f32 %v6964, %v5723
        %v7221 = vmul.f32 %v6965, %v5978
        %v7222 = vmul.f32 %v6966, %v5980
        %v7223 = vmul.f32 %v6967, %v6235
        %v7224 = vmul.f32 %v6968, %v6237
        %v7225 = vmul.f32 %v6969, %v5470
        %v7226 = vmul.f32 %v6970, %v5472
        %v7227 = vmul.f32 %v6971, %v5727
        %v7228 = vmul.f32 %v6972, %v5729
        %v7229 = vmul.f32 %v6973, %v5984
        %v7230 = vmul.f32 %v6974, %v5986
        %v7231 = vmul.f32 %v6975, %v6241
        %v7232 = vmul.f32 %v6976, %v6243
        %v7233 = vmul.f32 %v6977, %v5476
        %v7234 = vmul.f32 %v6978, %v5478
        %v7235 = vmul.f32 %v6979, %v5733
        %v7236 = vmul.f32 %v6980, %v5735
        %v7237 = vmul.f32 %v6981, %v5990
        %v7238 = vmul.f32 %v6982, %v5992
        %v7239 = vmul.f32 %v6983, %v6247
        %v7240 = vmul.f32 %v6984, %v6249
        %v7241 = vmul.f32 %v6985, %v5482
        %v7242 = vmul.f32 %v6986, %v5484
        %v7243 = vmul.f32 %v6987, %v5739
        %v7244 = vmul.f32 %v6988, %v5741
        %v7245 = vmul.f32 %v6989, %v5996
        %v7246 = vmul.f32 %v6990, %v5998
        %v7247 = vmul.f32 %v6991, %v6253
        %v7248 = vmul.f32 %v6992, %v6255
        %v7249 = vmul.f32 %v6993, %v5488
        %v7250 = vmul.f32 %v6994, %v5490
        %v7251 = vmul.f32 %v6995, %v5745
        %v7252 = vmul.f32 %v6996, %v5747
        %v7253 = vmul.f32 %v6997, %v6002
        %v7254 = vmul.f32 %v6998, %v6004
        %v7255 = vmul.f32 %v6999, %v6259
        %v7256 = vmul.f32 %v7000, %v6261
        %v7257 = vmul.f32 %v7001, %v5494
        %v7258 = vmul.f32 %v7002, %v5496
        %v7259 = vmul.f32 %v7003, %v5751
        %v7260 = vmul.f32 %v7004, %v5753
        %v7261 = vmul.f32 %v7005, %v6008
        %v7262 = vmul.f32 %v7006, %v6010
        %v7263 = vmul.f32 %v7007, %v6265
        %v7264 = vmul.f32 %v7008, %v6267
        %v7265 = vmul.f32 %v7009, %v5500
        %v7266 = vmul.f32 %v7010, %v5502
        %v7267 = vmul.f32 %v7011, %v5757
        %v7268 = vmul.f32 %v7012, %v5759
        %v7269 = vmul.f32 %v7013, %v6014
        %v7270 = vmul.f32 %v7014, %v6016
        %v7271 = vmul.f32 %v7015, %v6271
        %v7272 = vmul.f32 %v7016, %v6273
        %v7273 = vmul.f32 %v7017, %v5506
        %v7274 = vmul.f32 %v7018, %v5508
        %v7275 = vmul.f32 %v7019, %v5763
        %v7276 = vmul.f32 %v7020, %v5765
        %v7277 = vmul.f32 %v7021, %v6020
        %v7278 = vmul.f32 %v7022, %v6022
        %v7279 = vmul.f32 %v7023, %v6277
        %v7280 = vmul.f32 %v7024, %v6279
        %v7281 = vmul.f32 %v7025, %v5512
        %v7282 = vmul.f32 %v7026, %v5514
        %v7283 = vmul.f32 %v7027, %v5769
        %v7284 = vmul.f32 %v7028, %v5771
        %v7285 = vmul.f32 %v7029, %v6026
        %v7286 = vmul.f32 %v7030, %v6028
        %v7287 = vmul.f32 %v7031, %v6283
        %v7288 = vmul.f32 %v7032, %v6285
        %v7289 = vmul.f32 %v7033, %v5518
        %v7290 = vmul.f32 %v7034, %v5520
        %v7291 = vmul.f32 %v7035, %v5775
        %v7292 = vmul.f32 %v7036, %v5777
        %v7293 = vmul.f32 %v7037, %v6032
        %v7294 = vmul.f32 %v7038, %v6034
        %v7295 = vmul.f32 %v7039, %v6289
        %v7296 = vmul.f32 %v7040, %v6291
        %v7297 = vmul.f32 %v7041, %v5524
        %v7298 = vmul.f32 %v7042, %v5526
        %v7299 = vmul.f32 %v7043, %v5781
        %v7300 = vmul.f32 %v7044, %v5783
        %v7301 = vmul.f32 %v7045, %v6038
        %v7302 = vmul.f32 %v7046, %v6040
        %v7303 = vmul.f32 %v7047, %v6295
        %v7304 = vmul.f32 %v7048, %v6297
        %v7305 = vmul.f32 %v7049, %v5530
        %v7306 = vmul.f32 %v7050, %v5532
        %v7307 = vmul.f32 %v7051, %v5787
        %v7308 = vmul.f32 %v7052, %v5789
        %v7309 = vmul.f32 %v7053, %v6044
        %v7310 = vmul.f32 %v7054, %v6046
        %v7311 = vmul.f32 %v7055, %v6301
        %v7312 = vmul.f32 %v7056, %v6303
        %v7313 = vmul.f32 %v7057, %v5536
        %v7314 = vmul.f32 %v7058, %v5538
        %v7315 = vmul.f32 %v7059, %v5793
        %v7316 = vmul.f32 %v7060, %v5795
        %v7317 = vmul.f32 %v7061, %v6050
        %v7318 = vmul.f32 %v7062, %v6052
        %v7319 = vmul.f32 %v7063, %v6307
        %v7320 = vmul.f32 %v7064, %v6309
        %v7321 = vmul.f32 %v7065, %v5542
        %v7322 = vmul.f32 %v7066, %v5544
        %v7323 = vmul.f32 %v7067, %v5799
        %v7324 = vmul.f32 %v7068, %v5801
        %v7325 = vmul.f32 %v7069, %v6056
        %v7326 = vmul.f32 %v7070, %v6058
        %v7327 = vmul.f32 %v7071, %v6313
        %v7328 = vmul.f32 %v7072, %v6315
        %v7329 = vmul.f32 %v7073, %v5548
        %v7330 = vmul.f32 %v7074, %v5550
        %v7331 = vmul.f32 %v7075, %v5805
        %v7332 = vmul.f32 %v7076, %v5807
        %v7333 = vmul.f32 %v7077, %v6062
        %v7334 = vmul.f32 %v7078, %v6064
        %v7335 = vmul.f32 %v7079, %v6319
        %v7336 = vmul.f32 %v7080, %v6321
        %v7337 = vmul.f32 %v7081, %v5554
        %v7338 = vmul.f32 %v7082, %v5556
        %v7339 = vmul.f32 %v7083, %v5811
        %v7340 = vmul.f32 %v7084, %v5813
        %v7341 = vmul.f32 %v7085, %v6068
        %v7342 = vmul.f32 %v7086, %v6070
        %v7343 = vmul.f32 %v7087, %v6325
        %v7344 = vmul.f32 %v7088, %v6327
        %v7345 = vmul.f32 %v7089, %v5560
        %v7346 = vmul.f32 %v7090, %v5562
        %v7347 = vmul.f32 %v7091, %v5817
        %v7348 = vmul.f32 %v7092, %v5819
        %v7349 = vmul.f32 %v7093, %v6074
        %v7350 = vmul.f32 %v7094, %v6076
        %v7351 = vmul.f32 %v7095, %v6331
        %v7352 = vmul.f32 %v7096, %v6333
        %v7353 = vmul.f32 %v7097, %v5566
        %v7354 = vmul.f32 %v7098, %v5568
        %v7355 = vmul.f32 %v7099, %v5823
        %v7356 = vmul.f32 %v7100, %v5825
        %v7357 = vmul.f32 %v7101, %v6080
        %v7358 = vmul.f32 %v7102, %v6082
        %v7359 = vmul.f32 %v7103, %v6337
        %v7360 = vmul.f32 %v7104, %v6339
        %v7361 = vmul.f32 %v7105, %v5572
        %v7362 = vmul.f32 %v7106, %v5574
        %v7363 = vmul.f32 %v7107, %v5829
        %v7364 = vmul.f32 %v7108, %v5831
        %v7365 = vmul.f32 %v7109, %v6086
        %v7366 = vmul.f32 %v7110, %v6088
        %v7367 = vmul.f32 %v7111, %v6343
        %v7368 = vmul.f32 %v7112, %v6345
        %v7369 = vmul.f32 %v7113, %v5578
        %v7370 = vmul.f32 %v7114, %v5580
        %v7371 = vmul.f32 %v7115, %v5835
        %v7372 = vmul.f32 %v7116, %v5837
        %v7373 = vmul.f32 %v7117, %v6092
        %v7374 = vmul.f32 %v7118, %v6094
        %v7375 = vmul.f32 %v7119, %v6349
        %v7376 = vmul.f32 %v7120, %v6351
        %v7377 = vadd.f32 %v5392, %v7121
        %v7378 = vadd.f32 %v5394, %v7122
        %v7379 = vadd.f32 %v5649, %v7123
        %v7380 = vadd.f32 %v5651, %v7124
        %v7381 = vadd.f32 %v5906, %v7125
        %v7382 = vadd.f32 %v5908, %v7126
        %v7383 = vadd.f32 %v6163, %v7127
        %v7384 = vadd.f32 %v6165, %v7128
        %v7385 = vadd.f32 %v5398, %v7129
        %v7386 = vadd.f32 %v5400, %v7130
        %v7387 = vadd.f32 %v5655, %v7131
        %v7388 = vadd.f32 %v5657, %v7132
        %v7389 = vadd.f32 %v5912, %v7133
        %v7390 = vadd.f32 %v5914, %v7134
        %v7391 = vadd.f32 %v6169, %v7135
        %v7392 = vadd.f32 %v6171, %v7136
        %v7393 = vadd.f32 %v5404, %v7137
        %v7394 = vadd.f32 %v5406, %v7138
        %v7395 = vadd.f32 %v5661, %v7139
        %v7396 = vadd.f32 %v5663, %v7140
        %v7397 = vadd.f32 %v5918, %v7141
        %v7398 = vadd.f32 %v5920, %v7142
        %v7399 = vadd.f32 %v6175, %v7143
        %v7400 = vadd.f32 %v6177, %v7144
        %v7401 = vadd.f32 %v5410, %v7145
        %v7402 = vadd.f32 %v5412, %v7146
        %v7403 = vadd.f32 %v5667, %v7147
        %v7404 = vadd.f32 %v5669, %v7148
        %v7405 = vadd.f32 %v5924, %v7149
        %v7406 = vadd.f32 %v5926, %v7150
        %v7407 = vadd.f32 %v6181, %v7151
        %v7408 = vadd.f32 %v6183, %v7152
        %v7409 = vadd.f32 %v5416, %v7153
        %v7410 = vadd.f32 %v5418, %v7154
        %v7411 = vadd.f32 %v5673, %v7155
        %v7412 = vadd.f32 %v5675, %v7156
        %v7413 = vadd.f32 %v5930, %v7157
        %v7414 = vadd.f32 %v5932, %v7158
        %v7415 = vadd.f32 %v6187, %v7159
        %v7416 = vadd.f32 %v6189, %v7160
        %v7417 = vadd.f32 %v5422, %v7161
        %v7418 = vadd.f32 %v5424, %v7162
        %v7419 = vadd.f32 %v5679, %v7163
        %v7420 = vadd.f32 %v5681, %v7164
        %v7421 = vadd.f32 %v5936, %v7165
        %v7422 = vadd.f32 %v5938, %v7166
        %v7423 = vadd.f32 %v6193, %v7167
        %v7424 = vadd.f32 %v6195, %v7168
        %v7425 = vadd.f32 %v5428, %v7169
        %v7426 = vadd.f32 %v5430, %v7170
        %v7427 = vadd.f32 %v5685, %v7171
        %v7428 = vadd.f32 %v5687, %v7172
        %v7429 = vadd.f32 %v5942, %v7173
        %v7430 = vadd.f32 %v5944, %v7174
        %v7431 = vadd.f32 %v6199, %v7175
        %v7432 = vadd.f32 %v6201, %v7176
        %v7433 = vadd.f32 %v5434, %v7177
        %v7434 = vadd.f32 %v5436, %v7178
        %v7435 = vadd.f32 %v5691, %v7179
        %v7436 = vadd.f32 %v5693, %v7180
        %v7437 = vadd.f32 %v5948, %v7181
        %v7438 = vadd.f32 %v5950, %v7182
        %v7439 = vadd.f32 %v6205, %v7183
        %v7440 = vadd.f32 %v6207, %v7184
        %v7441 = vadd.f32 %v5440, %v7185
        %v7442 = vadd.f32 %v5442, %v7186
        %v7443 = vadd.f32 %v5697, %v7187
        %v7444 = vadd.f32 %v5699, %v7188
        %v7445 = vadd.f32 %v5954, %v7189
        %v7446 = vadd.f32 %v5956, %v7190
        %v7447 = vadd.f32 %v6211, %v7191
        %v7448 = vadd.f32 %v6213, %v7192
        %v7449 = vadd.f32 %v5446, %v7193
        %v7450 = vadd.f32 %v5448, %v7194
        %v7451 = vadd.f32 %v5703, %v7195
        %v7452 = vadd.f32 %v5705, %v7196
        %v7453 = vadd.f32 %v5960, %v7197
        %v7454 = vadd.f32 %v5962, %v7198
        %v7455 = vadd.f32 %v6217, %v7199
        %v7456 = vadd.f32 %v6219, %v7200
        %v7457 = vadd.f32 %v5452, %v7201
        %v7458 = vadd.f32 %v5454, %v7202
        %v7459 = vadd.f32 %v5709, %v7203
        %v7460 = vadd.f32 %v5711, %v7204
        %v7461 = vadd.f32 %v5966, %v7205
        %v7462 = vadd.f32 %v5968, %v7206
        %v7463 = vadd.f32 %v6223, %v7207
        %v7464 = vadd.f32 %v6225, %v7208
        %v7465 = vadd.f32 %v5458, %v7209
        %v7466 = vadd.f32 %v5460, %v7210
        %v7467 = vadd.f32 %v5715, %v7211
        %v7468 = vadd.f32 %v5717, %v7212
        %v7469 = vadd.f32 %v5972, %v7213
        %v7470 = vadd.f32 %v5974, %v7214
        %v7471 = vadd.f32 %v6229, %v7215
        %v7472 = vadd.f32 %v6231, %v7216
        %v7473 = vadd.f32 %v5464, %v7217
        %v7474 = vadd.f32 %v5466, %v7218
        %v7475 = vadd.f32 %v5721, %v7219
        %v7476 = vadd.f32 %v5723, %v7220
        %v7477 = vadd.f32 %v5978, %v7221
        %v7478 = vadd.f32 %v5980, %v7222
        %v7479 = vadd.f32 %v6235, %v7223
        %v7480 = vadd.f32 %v6237, %v7224
        %v7481 = vadd.f32 %v5470, %v7225
        %v7482 = vadd.f32 %v5472, %v7226
        %v7483 = vadd.f32 %v5727, %v7227
        %v7484 = vadd.f32 %v5729, %v7228
        %v7485 = vadd.f32 %v5984, %v7229
        %v7486 = vadd.f32 %v5986, %v7230
        %v7487 = vadd.f32 %v6241, %v7231
        %v7488 = vadd.f32 %v6243, %v7232
        %v7489 = vadd.f32 %v5476, %v7233
        %v7490 = vadd.f32 %v5478, %v7234
        %v7491 = vadd.f32 %v5733, %v7235
        %v7492 = vadd.f32 %v5735, %v7236
        %v7493 = vadd.f32 %v5990, %v7237
        %v7494 = vadd.f32 %v5992, %v7238
        %v7495 = vadd.f32 %v6247, %v7239
        %v7496 = vadd.f32 %v6249, %v7240
        %v7497 = vadd.f32 %v5482, %v7241
        %v7498 = vadd.f32 %v5484, %v7242
        %v7499 = vadd.f32 %v5739, %v7243
        %v7500 = vadd.f32 %v5741, %v7244
        %v7501 = vadd.f32 %v5996, %v7245
        %v7502 = vadd.f32 %v5998, %v7246
        %v7503 = vadd.f32 %v6253, %v7247
        %v7504 = vadd.f32 %v6255, %v7248
        %v7505 = vadd.f32 %v5488, %v7249
        %v7506 = vadd.f32 %v5490, %v7250
        %v7507 = vadd.f32 %v5745, %v7251
        %v7508 = vadd.f32 %v5747, %v7252
        %v7509 = vadd.f32 %v6002, %v7253
        %v7510 = vadd.f32 %v6004, %v7254
        %v7511 = vadd.f32 %v6259, %v7255
        %v7512 = vadd.f32 %v6261, %v7256
        %v7513 = vadd.f32 %v5494, %v7257
        %v7514 = vadd.f32 %v5496, %v7258
        %v7515 = vadd.f32 %v5751, %v7259
        %v7516 = vadd.f32 %v5753, %v7260
        %v7517 = vadd.f32 %v6008, %v7261
        %v7518 = vadd.f32 %v6010, %v7262
        %v7519 = vadd.f32 %v6265, %v7263
        %v7520 = vadd.f32 %v6267, %v7264
        %v7521 = vadd.f32 %v5500, %v7265
        %v7522 = vadd.f32 %v5502, %v7266
        %v7523 = vadd.f32 %v5757, %v7267
        %v7524 = vadd.f32 %v5759, %v7268
        %v7525 = vadd.f32 %v6014, %v7269
        %v7526 = vadd.f32 %v6016, %v7270
        %v7527 = vadd.f32 %v6271, %v7271
        %v7528 = vadd.f32 %v6273, %v7272
        %v7529 = vadd.f32 %v5506, %v7273
        %v7530 = vadd.f32 %v5508, %v7274
        %v7531 = vadd.f32 %v5763, %v7275
        %v7532 = vadd.f32 %v5765, %v7276
        %v7533 = vadd.f32 %v6020, %v7277
        %v7534 = vadd.f32 %v6022, %v7278
        %v7535 = vadd.f32 %v6277, %v7279
        %v7536 = vadd.f32 %v6279, %v7280
        %v7537 = vadd.f32 %v5512, %v7281
        %v7538 = vadd.f32 %v5514, %v7282
        %v7539 = vadd.f32 %v5769, %v7283
        %v7540 = vadd.f32 %v5771, %v7284
        %v7541 = vadd.f32 %v6026, %v7285
        %v7542 = vadd.f32 %v6028, %v7286
        %v7543 = vadd.f32 %v6283, %v7287
        %v7544 = vadd.f32 %v6285, %v7288
        %v7545 = vadd.f32 %v5518, %v7289
        %v7546 = vadd.f32 %v5520, %v7290
        %v7547 = vadd.f32 %v5775, %v7291
        %v7548 = vadd.f32 %v5777, %v7292
        %v7549 = vadd.f32 %v6032, %v7293
        %v7550 = vadd.f32 %v6034, %v7294
        %v7551 = vadd.f32 %v6289, %v7295
        %v7552 = vadd.f32 %v6291, %v7296
        %v7553 = vadd.f32 %v5524, %v7297
        %v7554 = vadd.f32 %v5526, %v7298
        %v7555 = vadd.f32 %v5781, %v7299
        %v7556 = vadd.f32 %v5783, %v7300
        %v7557 = vadd.f32 %v6038, %v7301
        %v7558 = vadd.f32 %v6040, %v7302
        %v7559 = vadd.f32 %v6295, %v7303
        %v7560 = vadd.f32 %v6297, %v7304
        %v7561 = vadd.f32 %v5530, %v7305
        %v7562 = vadd.f32 %v5532, %v7306
        %v7563 = vadd.f32 %v5787, %v7307
        %v7564 = vadd.f32 %v5789, %v7308
        %v7565 = vadd.f32 %v6044, %v7309
        %v7566 = vadd.f32 %v6046, %v7310
        %v7567 = vadd.f32 %v6301, %v7311
        %v7568 = vadd.f32 %v6303, %v7312
        %v7569 = vadd.f32 %v5536, %v7313
        %v7570 = vadd.f32 %v5538, %v7314
        %v7571 = vadd.f32 %v5793, %v7315
        %v7572 = vadd.f32 %v5795, %v7316
        %v7573 = vadd.f32 %v6050, %v7317
        %v7574 = vadd.f32 %v6052, %v7318
        %v7575 = vadd.f32 %v6307, %v7319
        %v7576 = vadd.f32 %v6309, %v7320
        %v7577 = vadd.f32 %v5542, %v7321
        %v7578 = vadd.f32 %v5544, %v7322
        %v7579 = vadd.f32 %v5799, %v7323
        %v7580 = vadd.f32 %v5801, %v7324
        %v7581 = vadd.f32 %v6056, %v7325
        %v7582 = vadd.f32 %v6058, %v7326
        %v7583 = vadd.f32 %v6313, %v7327
        %v7584 = vadd.f32 %v6315, %v7328
        %v7585 = vadd.f32 %v5548, %v7329
        %v7586 = vadd.f32 %v5550, %v7330
        %v7587 = vadd.f32 %v5805, %v7331
        %v7588 = vadd.f32 %v5807, %v7332
        %v7589 = vadd.f32 %v6062, %v7333
        %v7590 = vadd.f32 %v6064, %v7334
        %v7591 = vadd.f32 %v6319, %v7335
        %v7592 = vadd.f32 %v6321, %v7336
        %v7593 = vadd.f32 %v5554, %v7337
        %v7594 = vadd.f32 %v5556, %v7338
        %v7595 = vadd.f32 %v5811, %v7339
        %v7596 = vadd.f32 %v5813, %v7340
        %v7597 = vadd.f32 %v6068, %v7341
        %v7598 = vadd.f32 %v6070, %v7342
        %v7599 = vadd.f32 %v6325, %v7343
        %v7600 = vadd.f32 %v6327, %v7344
        %v7601 = vadd.f32 %v5560, %v7345
        %v7602 = vadd.f32 %v5562, %v7346
        %v7603 = vadd.f32 %v5817, %v7347
        %v7604 = vadd.f32 %v5819, %v7348
        %v7605 = vadd.f32 %v6074, %v7349
        %v7606 = vadd.f32 %v6076, %v7350
        %v7607 = vadd.f32 %v6331, %v7351
        %v7608 = vadd.f32 %v6333, %v7352
        %v7609 = vadd.f32 %v5566, %v7353
        %v7610 = vadd.f32 %v5568, %v7354
        %v7611 = vadd.f32 %v5823, %v7355
        %v7612 = vadd.f32 %v5825, %v7356
        %v7613 = vadd.f32 %v6080, %v7357
        %v7614 = vadd.f32 %v6082, %v7358
        %v7615 = vadd.f32 %v6337, %v7359
        %v7616 = vadd.f32 %v6339, %v7360
        %v7617 = vadd.f32 %v5572, %v7361
        %v7618 = vadd.f32 %v5574, %v7362
        %v7619 = vadd.f32 %v5829, %v7363
        %v7620 = vadd.f32 %v5831, %v7364
        %v7621 = vadd.f32 %v6086, %v7365
        %v7622 = vadd.f32 %v6088, %v7366
        %v7623 = vadd.f32 %v6343, %v7367
        %v7624 = vadd.f32 %v6345, %v7368
        %v7625 = vadd.f32 %v5578, %v7369
        %v7626 = vadd.f32 %v5580, %v7370
        %v7627 = vadd.f32 %v5835, %v7371
        %v7628 = vadd.f32 %v5837, %v7372
        %v7629 = vadd.f32 %v6092, %v7373
        %v7630 = vadd.f32 %v6094, %v7374
        %v7631 = vadd.f32 %v6349, %v7375
        %v7632 = vadd.f32 %v6351, %v7376
        %v7633 = vmul.f32 %v7377, 0.7978846
        %v7634 = vmul.f32 %v7378, 0.7978846
        %v7635 = vmul.f32 %v7379, 0.7978846
        %v7636 = vmul.f32 %v7380, 0.7978846
        %v7637 = vmul.f32 %v7381, 0.7978846
        %v7638 = vmul.f32 %v7382, 0.7978846
        %v7639 = vmul.f32 %v7383, 0.7978846
        %v7640 = vmul.f32 %v7384, 0.7978846
        %v7641 = vmul.f32 %v7385, 0.7978846
        %v7642 = vmul.f32 %v7386, 0.7978846
        %v7643 = vmul.f32 %v7387, 0.7978846
        %v7644 = vmul.f32 %v7388, 0.7978846
        %v7645 = vmul.f32 %v7389, 0.7978846
        %v7646 = vmul.f32 %v7390, 0.7978846
        %v7647 = vmul.f32 %v7391, 0.7978846
        %v7648 = vmul.f32 %v7392, 0.7978846
        %v7649 = vmul.f32 %v7393, 0.7978846
        %v7650 = vmul.f32 %v7394, 0.7978846
        %v7651 = vmul.f32 %v7395, 0.7978846
        %v7652 = vmul.f32 %v7396, 0.7978846
        %v7653 = vmul.f32 %v7397, 0.7978846
        %v7654 = vmul.f32 %v7398, 0.7978846
        %v7655 = vmul.f32 %v7399, 0.7978846
        %v7656 = vmul.f32 %v7400, 0.7978846
        %v7657 = vmul.f32 %v7401, 0.7978846
        %v7658 = vmul.f32 %v7402, 0.7978846
        %v7659 = vmul.f32 %v7403, 0.7978846
        %v7660 = vmul.f32 %v7404, 0.7978846
        %v7661 = vmul.f32 %v7405, 0.7978846
        %v7662 = vmul.f32 %v7406, 0.7978846
        %v7663 = vmul.f32 %v7407, 0.7978846
        %v7664 = vmul.f32 %v7408, 0.7978846
        %v7665 = vmul.f32 %v7409, 0.7978846
        %v7666 = vmul.f32 %v7410, 0.7978846
        %v7667 = vmul.f32 %v7411, 0.7978846
        %v7668 = vmul.f32 %v7412, 0.7978846
        %v7669 = vmul.f32 %v7413, 0.7978846
        %v7670 = vmul.f32 %v7414, 0.7978846
        %v7671 = vmul.f32 %v7415, 0.7978846
        %v7672 = vmul.f32 %v7416, 0.7978846
        %v7673 = vmul.f32 %v7417, 0.7978846
        %v7674 = vmul.f32 %v7418, 0.7978846
        %v7675 = vmul.f32 %v7419, 0.7978846
        %v7676 = vmul.f32 %v7420, 0.7978846
        %v7677 = vmul.f32 %v7421, 0.7978846
        %v7678 = vmul.f32 %v7422, 0.7978846
        %v7679 = vmul.f32 %v7423, 0.7978846
        %v7680 = vmul.f32 %v7424, 0.7978846
        %v7681 = vmul.f32 %v7425, 0.7978846
        %v7682 = vmul.f32 %v7426, 0.7978846
        %v7683 = vmul.f32 %v7427, 0.7978846
        %v7684 = vmul.f32 %v7428, 0.7978846
        %v7685 = vmul.f32 %v7429, 0.7978846
        %v7686 = vmul.f32 %v7430, 0.7978846
        %v7687 = vmul.f32 %v7431, 0.7978846
        %v7688 = vmul.f32 %v7432, 0.7978846
        %v7689 = vmul.f32 %v7433, 0.7978846
        %v7690 = vmul.f32 %v7434, 0.7978846
        %v7691 = vmul.f32 %v7435, 0.7978846
        %v7692 = vmul.f32 %v7436, 0.7978846
        %v7693 = vmul.f32 %v7437, 0.7978846
        %v7694 = vmul.f32 %v7438, 0.7978846
        %v7695 = vmul.f32 %v7439, 0.7978846
        %v7696 = vmul.f32 %v7440, 0.7978846
        %v7697 = vmul.f32 %v7441, 0.7978846
        %v7698 = vmul.f32 %v7442, 0.7978846
        %v7699 = vmul.f32 %v7443, 0.7978846
        %v7700 = vmul.f32 %v7444, 0.7978846
        %v7701 = vmul.f32 %v7445, 0.7978846
        %v7702 = vmul.f32 %v7446, 0.7978846
        %v7703 = vmul.f32 %v7447, 0.7978846
        %v7704 = vmul.f32 %v7448, 0.7978846
        %v7705 = vmul.f32 %v7449, 0.7978846
        %v7706 = vmul.f32 %v7450, 0.7978846
        %v7707 = vmul.f32 %v7451, 0.7978846
        %v7708 = vmul.f32 %v7452, 0.7978846
        %v7709 = vmul.f32 %v7453, 0.7978846
        %v7710 = vmul.f32 %v7454, 0.7978846
        %v7711 = vmul.f32 %v7455, 0.7978846
        %v7712 = vmul.f32 %v7456, 0.7978846
        %v7713 = vmul.f32 %v7457, 0.7978846
        %v7714 = vmul.f32 %v7458, 0.7978846
        %v7715 = vmul.f32 %v7459, 0.7978846
        %v7716 = vmul.f32 %v7460, 0.7978846
        %v7717 = vmul.f32 %v7461, 0.7978846
        %v7718 = vmul.f32 %v7462, 0.7978846
        %v7719 = vmul.f32 %v7463, 0.7978846
        %v7720 = vmul.f32 %v7464, 0.7978846
        %v7721 = vmul.f32 %v7465, 0.7978846
        %v7722 = vmul.f32 %v7466, 0.7978846
        %v7723 = vmul.f32 %v7467, 0.7978846
        %v7724 = vmul.f32 %v7468, 0.7978846
        %v7725 = vmul.f32 %v7469, 0.7978846
        %v7726 = vmul.f32 %v7470, 0.7978846
        %v7727 = vmul.f32 %v7471, 0.7978846
        %v7728 = vmul.f32 %v7472, 0.7978846
        %v7729 = vmul.f32 %v7473, 0.7978846
        %v7730 = vmul.f32 %v7474, 0.7978846
        %v7731 = vmul.f32 %v7475, 0.7978846
        %v7732 = vmul.f32 %v7476, 0.7978846
        %v7733 = vmul.f32 %v7477, 0.7978846
        %v7734 = vmul.f32 %v7478, 0.7978846
        %v7735 = vmul.f32 %v7479, 0.7978846
        %v7736 = vmul.f32 %v7480, 0.7978846
        %v7737 = vmul.f32 %v7481, 0.7978846
        %v7738 = vmul.f32 %v7482, 0.7978846
        %v7739 = vmul.f32 %v7483, 0.7978846
        %v7740 = vmul.f32 %v7484, 0.7978846
        %v7741 = vmul.f32 %v7485, 0.7978846
        %v7742 = vmul.f32 %v7486, 0.7978846
        %v7743 = vmul.f32 %v7487, 0.7978846
        %v7744 = vmul.f32 %v7488, 0.7978846
        %v7745 = vmul.f32 %v7489, 0.7978846
        %v7746 = vmul.f32 %v7490, 0.7978846
        %v7747 = vmul.f32 %v7491, 0.7978846
        %v7748 = vmul.f32 %v7492, 0.7978846
        %v7749 = vmul.f32 %v7493, 0.7978846
        %v7750 = vmul.f32 %v7494, 0.7978846
        %v7751 = vmul.f32 %v7495, 0.7978846
        %v7752 = vmul.f32 %v7496, 0.7978846
        %v7753 = vmul.f32 %v7497, 0.7978846
        %v7754 = vmul.f32 %v7498, 0.7978846
        %v7755 = vmul.f32 %v7499, 0.7978846
        %v7756 = vmul.f32 %v7500, 0.7978846
        %v7757 = vmul.f32 %v7501, 0.7978846
        %v7758 = vmul.f32 %v7502, 0.7978846
        %v7759 = vmul.f32 %v7503, 0.7978846
        %v7760 = vmul.f32 %v7504, 0.7978846
        %v7761 = vmul.f32 %v7505, 0.7978846
        %v7762 = vmul.f32 %v7506, 0.7978846
        %v7763 = vmul.f32 %v7507, 0.7978846
        %v7764 = vmul.f32 %v7508, 0.7978846
        %v7765 = vmul.f32 %v7509, 0.7978846
        %v7766 = vmul.f32 %v7510, 0.7978846
        %v7767 = vmul.f32 %v7511, 0.7978846
        %v7768 = vmul.f32 %v7512, 0.7978846
        %v7769 = vmul.f32 %v7513, 0.7978846
        %v7770 = vmul.f32 %v7514, 0.7978846
        %v7771 = vmul.f32 %v7515, 0.7978846
        %v7772 = vmul.f32 %v7516, 0.7978846
        %v7773 = vmul.f32 %v7517, 0.7978846
        %v7774 = vmul.f32 %v7518, 0.7978846
        %v7775 = vmul.f32 %v7519, 0.7978846
        %v7776 = vmul.f32 %v7520, 0.7978846
        %v7777 = vmul.f32 %v7521, 0.7978846
        %v7778 = vmul.f32 %v7522, 0.7978846
        %v7779 = vmul.f32 %v7523, 0.7978846
        %v7780 = vmul.f32 %v7524, 0.7978846
        %v7781 = vmul.f32 %v7525, 0.7978846
        %v7782 = vmul.f32 %v7526, 0.7978846
        %v7783 = vmul.f32 %v7527, 0.7978846
        %v7784 = vmul.f32 %v7528, 0.7978846
        %v7785 = vmul.f32 %v7529, 0.7978846
        %v7786 = vmul.f32 %v7530, 0.7978846
        %v7787 = vmul.f32 %v7531, 0.7978846
        %v7788 = vmul.f32 %v7532, 0.7978846
        %v7789 = vmul.f32 %v7533, 0.7978846
        %v7790 = vmul.f32 %v7534, 0.7978846
        %v7791 = vmul.f32 %v7535, 0.7978846
        %v7792 = vmul.f32 %v7536, 0.7978846
        %v7793 = vmul.f32 %v7537, 0.7978846
        %v7794 = vmul.f32 %v7538, 0.7978846
        %v7795 = vmul.f32 %v7539, 0.7978846
        %v7796 = vmul.f32 %v7540, 0.7978846
        %v7797 = vmul.f32 %v7541, 0.7978846
        %v7798 = vmul.f32 %v7542, 0.7978846
        %v7799 = vmul.f32 %v7543, 0.7978846
        %v7800 = vmul.f32 %v7544, 0.7978846
        %v7801 = vmul.f32 %v7545, 0.7978846
        %v7802 = vmul.f32 %v7546, 0.7978846
        %v7803 = vmul.f32 %v7547, 0.7978846
        %v7804 = vmul.f32 %v7548, 0.7978846
        %v7805 = vmul.f32 %v7549, 0.7978846
        %v7806 = vmul.f32 %v7550, 0.7978846
        %v7807 = vmul.f32 %v7551, 0.7978846
        %v7808 = vmul.f32 %v7552, 0.7978846
        %v7809 = vmul.f32 %v7553, 0.7978846
        %v7810 = vmul.f32 %v7554, 0.7978846
        %v7811 = vmul.f32 %v7555, 0.7978846
        %v7812 = vmul.f32 %v7556, 0.7978846
        %v7813 = vmul.f32 %v7557, 0.7978846
        %v7814 = vmul.f32 %v7558, 0.7978846
        %v7815 = vmul.f32 %v7559, 0.7978846
        %v7816 = vmul.f32 %v7560, 0.7978846
        %v7817 = vmul.f32 %v7561, 0.7978846
        %v7818 = vmul.f32 %v7562, 0.7978846
        %v7819 = vmul.f32 %v7563, 0.7978846
        %v7820 = vmul.f32 %v7564, 0.7978846
        %v7821 = vmul.f32 %v7565, 0.7978846
        %v7822 = vmul.f32 %v7566, 0.7978846
        %v7823 = vmul.f32 %v7567, 0.7978846
        %v7824 = vmul.f32 %v7568, 0.7978846
        %v7825 = vmul.f32 %v7569, 0.7978846
        %v7826 = vmul.f32 %v7570, 0.7978846
        %v7827 = vmul.f32 %v7571, 0.7978846
        %v7828 = vmul.f32 %v7572, 0.7978846
        %v7829 = vmul.f32 %v7573, 0.7978846
        %v7830 = vmul.f32 %v7574, 0.7978846
        %v7831 = vmul.f32 %v7575, 0.7978846
        %v7832 = vmul.f32 %v7576, 0.7978846
        %v7833 = vmul.f32 %v7577, 0.7978846
        %v7834 = vmul.f32 %v7578, 0.7978846
        %v7835 = vmul.f32 %v7579, 0.7978846
        %v7836 = vmul.f32 %v7580, 0.7978846
        %v7837 = vmul.f32 %v7581, 0.7978846
        %v7838 = vmul.f32 %v7582, 0.7978846
        %v7839 = vmul.f32 %v7583, 0.7978846
        %v7840 = vmul.f32 %v7584, 0.7978846
        %v7841 = vmul.f32 %v7585, 0.7978846
        %v7842 = vmul.f32 %v7586, 0.7978846
        %v7843 = vmul.f32 %v7587, 0.7978846
        %v7844 = vmul.f32 %v7588, 0.7978846
        %v7845 = vmul.f32 %v7589, 0.7978846
        %v7846 = vmul.f32 %v7590, 0.7978846
        %v7847 = vmul.f32 %v7591, 0.7978846
        %v7848 = vmul.f32 %v7592, 0.7978846
        %v7849 = vmul.f32 %v7593, 0.7978846
        %v7850 = vmul.f32 %v7594, 0.7978846
        %v7851 = vmul.f32 %v7595, 0.7978846
        %v7852 = vmul.f32 %v7596, 0.7978846
        %v7853 = vmul.f32 %v7597, 0.7978846
        %v7854 = vmul.f32 %v7598, 0.7978846
        %v7855 = vmul.f32 %v7599, 0.7978846
        %v7856 = vmul.f32 %v7600, 0.7978846
        %v7857 = vmul.f32 %v7601, 0.7978846
        %v7858 = vmul.f32 %v7602, 0.7978846
        %v7859 = vmul.f32 %v7603, 0.7978846
        %v7860 = vmul.f32 %v7604, 0.7978846
        %v7861 = vmul.f32 %v7605, 0.7978846
        %v7862 = vmul.f32 %v7606, 0.7978846
        %v7863 = vmul.f32 %v7607, 0.7978846
        %v7864 = vmul.f32 %v7608, 0.7978846
        %v7865 = vmul.f32 %v7609, 0.7978846
        %v7866 = vmul.f32 %v7610, 0.7978846
        %v7867 = vmul.f32 %v7611, 0.7978846
        %v7868 = vmul.f32 %v7612, 0.7978846
        %v7869 = vmul.f32 %v7613, 0.7978846
        %v7870 = vmul.f32 %v7614, 0.7978846
        %v7871 = vmul.f32 %v7615, 0.7978846
        %v7872 = vmul.f32 %v7616, 0.7978846
        %v7873 = vmul.f32 %v7617, 0.7978846
        %v7874 = vmul.f32 %v7618, 0.7978846
        %v7875 = vmul.f32 %v7619, 0.7978846
        %v7876 = vmul.f32 %v7620, 0.7978846
        %v7877 = vmul.f32 %v7621, 0.7978846
        %v7878 = vmul.f32 %v7622, 0.7978846
        %v7879 = vmul.f32 %v7623, 0.7978846
        %v7880 = vmul.f32 %v7624, 0.7978846
        %v7881 = vmul.f32 %v7625, 0.7978846
        %v7882 = vmul.f32 %v7626, 0.7978846
        %v7883 = vmul.f32 %v7627, 0.7978846
        %v7884 = vmul.f32 %v7628, 0.7978846
        %v7885 = vmul.f32 %v7629, 0.7978846
        %v7886 = vmul.f32 %v7630, 0.7978846
        %v7887 = vmul.f32 %v7631, 0.7978846
        %v7888 = vmul.f32 %v7632, 0.7978846
        %v7889 = vtanh.pop %v7633
        %v7890 = vtanh.pop %v7634
        %v7891 = vtanh.pop %v7635
        %v7892 = vtanh.pop %v7636
        %v7893 = vtanh.pop %v7637
        %v7894 = vtanh.pop %v7638
        %v7895 = vtanh.pop %v7639
        %v7896 = vtanh.pop %v7640
        %v7897 = vtanh.pop %v7641
        %v7898 = vtanh.pop %v7642
        %v7899 = vtanh.pop %v7643
        %v7900 = vtanh.pop %v7644
        %v7901 = vtanh.pop %v7645
        %v7902 = vtanh.pop %v7646
        %v7903 = vtanh.pop %v7647
        %v7904 = vtanh.pop %v7648
        %v7905 = vtanh.pop %v7649
        %v7906 = vtanh.pop %v7650
        %v7907 = vtanh.pop %v7651
        %v7908 = vtanh.pop %v7652
        %v7909 = vtanh.pop %v7653
        %v7910 = vtanh.pop %v7654
        %v7911 = vtanh.pop %v7655
        %v7912 = vtanh.pop %v7656
        %v7913 = vtanh.pop %v7657
        %v7914 = vtanh.pop %v7658
        %v7915 = vtanh.pop %v7659
        %v7916 = vtanh.pop %v7660
        %v7917 = vtanh.pop %v7661
        %v7918 = vtanh.pop %v7662
        %v7919 = vtanh.pop %v7663
        %v7920 = vtanh.pop %v7664
        %v7921 = vtanh.pop %v7665
        %v7922 = vtanh.pop %v7666
        %v7923 = vtanh.pop %v7667
        %v7924 = vtanh.pop %v7668
        %v7925 = vtanh.pop %v7669
        %v7926 = vtanh.pop %v7670
        %v7927 = vtanh.pop %v7671
        %v7928 = vtanh.pop %v7672
        %v7929 = vtanh.pop %v7673
        %v7930 = vtanh.pop %v7674
        %v7931 = vtanh.pop %v7675
        %v7932 = vtanh.pop %v7676
        %v7933 = vtanh.pop %v7677
        %v7934 = vtanh.pop %v7678
        %v7935 = vtanh.pop %v7679
        %v7936 = vtanh.pop %v7680
        %v7937 = vtanh.pop %v7681
        %v7938 = vtanh.pop %v7682
        %v7939 = vtanh.pop %v7683
        %v7940 = vtanh.pop %v7684
        %v7941 = vtanh.pop %v7685
        %v7942 = vtanh.pop %v7686
        %v7943 = vtanh.pop %v7687
        %v7944 = vtanh.pop %v7688
        %v7945 = vtanh.pop %v7689
        %v7946 = vtanh.pop %v7690
        %v7947 = vtanh.pop %v7691
        %v7948 = vtanh.pop %v7692
        %v7949 = vtanh.pop %v7693
        %v7950 = vtanh.pop %v7694
        %v7951 = vtanh.pop %v7695
        %v7952 = vtanh.pop %v7696
        %v7953 = vtanh.pop %v7697
        %v7954 = vtanh.pop %v7698
        %v7955 = vtanh.pop %v7699
        %v7956 = vtanh.pop %v7700
        %v7957 = vtanh.pop %v7701
        %v7958 = vtanh.pop %v7702
        %v7959 = vtanh.pop %v7703
        %v7960 = vtanh.pop %v7704
        %v7961 = vtanh.pop %v7705
        %v7962 = vtanh.pop %v7706
        %v7963 = vtanh.pop %v7707
        %v7964 = vtanh.pop %v7708
        %v7965 = vtanh.pop %v7709
        %v7966 = vtanh.pop %v7710
        %v7967 = vtanh.pop %v7711
        %v7968 = vtanh.pop %v7712
        %v7969 = vtanh.pop %v7713
        %v7970 = vtanh.pop %v7714
        %v7971 = vtanh.pop %v7715
        %v7972 = vtanh.pop %v7716
        %v7973 = vtanh.pop %v7717
        %v7974 = vtanh.pop %v7718
        %v7975 = vtanh.pop %v7719
        %v7976 = vtanh.pop %v7720
        %v7977 = vtanh.pop %v7721
        %v7978 = vtanh.pop %v7722
        %v7979 = vtanh.pop %v7723
        %v7980 = vtanh.pop %v7724
        %v7981 = vtanh.pop %v7725
        %v7982 = vtanh.pop %v7726
        %v7983 = vtanh.pop %v7727
        %v7984 = vtanh.pop %v7728
        %v7985 = vtanh.pop %v7729
        %v7986 = vtanh.pop %v7730
        %v7987 = vtanh.pop %v7731
        %v7988 = vtanh.pop %v7732
        %v7989 = vtanh.pop %v7733
        %v7990 = vtanh.pop %v7734
        %v7991 = vtanh.pop %v7735
        %v7992 = vtanh.pop %v7736
        %v7993 = vtanh.pop %v7737
        %v7994 = vtanh.pop %v7738
        %v7995 = vtanh.pop %v7739
        %v7996 = vtanh.pop %v7740
        %v7997 = vtanh.pop %v7741
        %v7998 = vtanh.pop %v7742
        %v7999 = vtanh.pop %v7743
        %v8000 = vtanh.pop %v7744
        %v8001 = vtanh.pop %v7745
        %v8002 = vtanh.pop %v7746
        %v8003 = vtanh.pop %v7747
        %v8004 = vtanh.pop %v7748
        %v8005 = vtanh.pop %v7749
        %v8006 = vtanh.pop %v7750
        %v8007 = vtanh.pop %v7751
        %v8008 = vtanh.pop %v7752
        %v8009 = vtanh.pop %v7753
        %v8010 = vtanh.pop %v7754
        %v8011 = vtanh.pop %v7755
        %v8012 = vtanh.pop %v7756
        %v8013 = vtanh.pop %v7757
        %v8014 = vtanh.pop %v7758
        %v8015 = vtanh.pop %v7759
        %v8016 = vtanh.pop %v7760
        %v8017 = vtanh.pop %v7761
        %v8018 = vtanh.pop %v7762
        %v8019 = vtanh.pop %v7763
        %v8020 = vtanh.pop %v7764
        %v8021 = vtanh.pop %v7765
        %v8022 = vtanh.pop %v7766
        %v8023 = vtanh.pop %v7767
        %v8024 = vtanh.pop %v7768
        %v8025 = vtanh.pop %v7769
        %v8026 = vtanh.pop %v7770
        %v8027 = vtanh.pop %v7771
        %v8028 = vtanh.pop %v7772
        %v8029 = vtanh.pop %v7773
        %v8030 = vtanh.pop %v7774
        %v8031 = vtanh.pop %v7775
        %v8032 = vtanh.pop %v7776
        %v8033 = vtanh.pop %v7777
        %v8034 = vtanh.pop %v7778
        %v8035 = vtanh.pop %v7779
        %v8036 = vtanh.pop %v7780
        %v8037 = vtanh.pop %v7781
        %v8038 = vtanh.pop %v7782
        %v8039 = vtanh.pop %v7783
        %v8040 = vtanh.pop %v7784
        %v8041 = vtanh.pop %v7785
        %v8042 = vtanh.pop %v7786
        %v8043 = vtanh.pop %v7787
        %v8044 = vtanh.pop %v7788
        %v8045 = vtanh.pop %v7789
        %v8046 = vtanh.pop %v7790
        %v8047 = vtanh.pop %v7791
        %v8048 = vtanh.pop %v7792
        %v8049 = vtanh.pop %v7793
        %v8050 = vtanh.pop %v7794
        %v8051 = vtanh.pop %v7795
        %v8052 = vtanh.pop %v7796
        %v8053 = vtanh.pop %v7797
        %v8054 = vtanh.pop %v7798
        %v8055 = vtanh.pop %v7799
        %v8056 = vtanh.pop %v7800
        %v8057 = vtanh.pop %v7801
        %v8058 = vtanh.pop %v7802
        %v8059 = vtanh.pop %v7803
        %v8060 = vtanh.pop %v7804
        %v8061 = vtanh.pop %v7805
        %v8062 = vtanh.pop %v7806
        %v8063 = vtanh.pop %v7807
        %v8064 = vtanh.pop %v7808
        %v8065 = vtanh.pop %v7809
        %v8066 = vtanh.pop %v7810
        %v8067 = vtanh.pop %v7811
        %v8068 = vtanh.pop %v7812
        %v8069 = vtanh.pop %v7813
        %v8070 = vtanh.pop %v7814
        %v8071 = vtanh.pop %v7815
        %v8072 = vtanh.pop %v7816
        %v8073 = vtanh.pop %v7817
        %v8074 = vtanh.pop %v7818
        %v8075 = vtanh.pop %v7819
        %v8076 = vtanh.pop %v7820
        %v8077 = vtanh.pop %v7821
        %v8078 = vtanh.pop %v7822
        %v8079 = vtanh.pop %v7823
        %v8080 = vtanh.pop %v7824
        %v8081 = vtanh.pop %v7825
        %v8082 = vtanh.pop %v7826
        %v8083 = vtanh.pop %v7827
        %v8084 = vtanh.pop %v7828
        %v8085 = vtanh.pop %v7829
        %v8086 = vtanh.pop %v7830
        %v8087 = vtanh.pop %v7831
        %v8088 = vtanh.pop %v7832
        %v8089 = vtanh.pop %v7833
        %v8090 = vtanh.pop %v7834
        %v8091 = vtanh.pop %v7835
        %v8092 = vtanh.pop %v7836
        %v8093 = vtanh.pop %v7837
        %v8094 = vtanh.pop %v7838
        %v8095 = vtanh.pop %v7839
        %v8096 = vtanh.pop %v7840
        %v8097 = vtanh.pop %v7841
        %v8098 = vtanh.pop %v7842
        %v8099 = vtanh.pop %v7843
        %v8100 = vtanh.pop %v7844
        %v8101 = vtanh.pop %v7845
        %v8102 = vtanh.pop %v7846
        %v8103 = vtanh.pop %v7847
        %v8104 = vtanh.pop %v7848
        %v8105 = vtanh.pop %v7849
        %v8106 = vtanh.pop %v7850
        %v8107 = vtanh.pop %v7851
        %v8108 = vtanh.pop %v7852
        %v8109 = vtanh.pop %v7853
        %v8110 = vtanh.pop %v7854
        %v8111 = vtanh.pop %v7855
        %v8112 = vtanh.pop %v7856
        %v8113 = vtanh.pop %v7857
        %v8114 = vtanh.pop %v7858
        %v8115 = vtanh.pop %v7859
        %v8116 = vtanh.pop %v7860
        %v8117 = vtanh.pop %v7861
        %v8118 = vtanh.pop %v7862
        %v8119 = vtanh.pop %v7863
        %v8120 = vtanh.pop %v7864
        %v8121 = vtanh.pop %v7865
        %v8122 = vtanh.pop %v7866
        %v8123 = vtanh.pop %v7867
        %v8124 = vtanh.pop %v7868
        %v8125 = vtanh.pop %v7869
        %v8126 = vtanh.pop %v7870
        %v8127 = vtanh.pop %v7871
        %v8128 = vtanh.pop %v7872
        %v8129 = vtanh.pop %v7873
        %v8130 = vtanh.pop %v7874
        %v8131 = vtanh.pop %v7875
        %v8132 = vtanh.pop %v7876
        %v8133 = vtanh.pop %v7877
        %v8134 = vtanh.pop %v7878
        %v8135 = vtanh.pop %v7879
        %v8136 = vtanh.pop %v7880
        %v8137 = vtanh.pop %v7881
        %v8138 = vtanh.pop %v7882
        %v8139 = vtanh.pop %v7883
        %v8140 = vtanh.pop %v7884
        %v8141 = vtanh.pop %v7885
        %v8142 = vtanh.pop %v7886
        %v8143 = vtanh.pop %v7887
        %v8144 = vtanh.pop %v7888
        %v8145 = vadd.f32 %v7889, 1.0
        %v8146 = vadd.f32 %v7890, 1.0
        %v8147 = vadd.f32 %v7891, 1.0
        %v8148 = vadd.f32 %v7892, 1.0
        %v8149 = vadd.f32 %v7893, 1.0
        %v8150 = vadd.f32 %v7894, 1.0
        %v8151 = vadd.f32 %v7895, 1.0
        %v8152 = vadd.f32 %v7896, 1.0
        %v8153 = vadd.f32 %v7897, 1.0
        %v8154 = vadd.f32 %v7898, 1.0
        %v8155 = vadd.f32 %v7899, 1.0
        %v8156 = vadd.f32 %v7900, 1.0
        %v8157 = vadd.f32 %v7901, 1.0
        %v8158 = vadd.f32 %v7902, 1.0
        %v8159 = vadd.f32 %v7903, 1.0
        %v8160 = vadd.f32 %v7904, 1.0
        %v8161 = vadd.f32 %v7905, 1.0
        %v8162 = vadd.f32 %v7906, 1.0
        %v8163 = vadd.f32 %v7907, 1.0
        %v8164 = vadd.f32 %v7908, 1.0
        %v8165 = vadd.f32 %v7909, 1.0
        %v8166 = vadd.f32 %v7910, 1.0
        %v8167 = vadd.f32 %v7911, 1.0
        %v8168 = vadd.f32 %v7912, 1.0
        %v8169 = vadd.f32 %v7913, 1.0
        %v8170 = vadd.f32 %v7914, 1.0
        %v8171 = vadd.f32 %v7915, 1.0
        %v8172 = vadd.f32 %v7916, 1.0
        %v8173 = vadd.f32 %v7917, 1.0
        %v8174 = vadd.f32 %v7918, 1.0
        %v8175 = vadd.f32 %v7919, 1.0
        %v8176 = vadd.f32 %v7920, 1.0
        %v8177 = vadd.f32 %v7921, 1.0
        %v8178 = vadd.f32 %v7922, 1.0
        %v8179 = vadd.f32 %v7923, 1.0
        %v8180 = vadd.f32 %v7924, 1.0
        %v8181 = vadd.f32 %v7925, 1.0
        %v8182 = vadd.f32 %v7926, 1.0
        %v8183 = vadd.f32 %v7927, 1.0
        %v8184 = vadd.f32 %v7928, 1.0
        %v8185 = vadd.f32 %v7929, 1.0
        %v8186 = vadd.f32 %v7930, 1.0
        %v8187 = vadd.f32 %v7931, 1.0
        %v8188 = vadd.f32 %v7932, 1.0
        %v8189 = vadd.f32 %v7933, 1.0
        %v8190 = vadd.f32 %v7934, 1.0
        %v8191 = vadd.f32 %v7935, 1.0
        %v8192 = vadd.f32 %v7936, 1.0
        %v8193 = vadd.f32 %v7937, 1.0
        %v8194 = vadd.f32 %v7938, 1.0
        %v8195 = vadd.f32 %v7939, 1.0
        %v8196 = vadd.f32 %v7940, 1.0
        %v8197 = vadd.f32 %v7941, 1.0
        %v8198 = vadd.f32 %v7942, 1.0
        %v8199 = vadd.f32 %v7943, 1.0
        %v8200 = vadd.f32 %v7944, 1.0
        %v8201 = vadd.f32 %v7945, 1.0
        %v8202 = vadd.f32 %v7946, 1.0
        %v8203 = vadd.f32 %v7947, 1.0
        %v8204 = vadd.f32 %v7948, 1.0
        %v8205 = vadd.f32 %v7949, 1.0
        %v8206 = vadd.f32 %v7950, 1.0
        %v8207 = vadd.f32 %v7951, 1.0
        %v8208 = vadd.f32 %v7952, 1.0
        %v8209 = vadd.f32 %v7953, 1.0
        %v8210 = vadd.f32 %v7954, 1.0
        %v8211 = vadd.f32 %v7955, 1.0
        %v8212 = vadd.f32 %v7956, 1.0
        %v8213 = vadd.f32 %v7957, 1.0
        %v8214 = vadd.f32 %v7958, 1.0
        %v8215 = vadd.f32 %v7959, 1.0
        %v8216 = vadd.f32 %v7960, 1.0
        %v8217 = vadd.f32 %v7961, 1.0
        %v8218 = vadd.f32 %v7962, 1.0
        %v8219 = vadd.f32 %v7963, 1.0
        %v8220 = vadd.f32 %v7964, 1.0
        %v8221 = vadd.f32 %v7965, 1.0
        %v8222 = vadd.f32 %v7966, 1.0
        %v8223 = vadd.f32 %v7967, 1.0
        %v8224 = vadd.f32 %v7968, 1.0
        %v8225 = vadd.f32 %v7969, 1.0
        %v8226 = vadd.f32 %v7970, 1.0
        %v8227 = vadd.f32 %v7971, 1.0
        %v8228 = vadd.f32 %v7972, 1.0
        %v8229 = vadd.f32 %v7973, 1.0
        %v8230 = vadd.f32 %v7974, 1.0
        %v8231 = vadd.f32 %v7975, 1.0
        %v8232 = vadd.f32 %v7976, 1.0
        %v8233 = vadd.f32 %v7977, 1.0
        %v8234 = vadd.f32 %v7978, 1.0
        %v8235 = vadd.f32 %v7979, 1.0
        %v8236 = vadd.f32 %v7980, 1.0
        %v8237 = vadd.f32 %v7981, 1.0
        %v8238 = vadd.f32 %v7982, 1.0
        %v8239 = vadd.f32 %v7983, 1.0
        %v8240 = vadd.f32 %v7984, 1.0
        %v8241 = vadd.f32 %v7985, 1.0
        %v8242 = vadd.f32 %v7986, 1.0
        %v8243 = vadd.f32 %v7987, 1.0
        %v8244 = vadd.f32 %v7988, 1.0
        %v8245 = vadd.f32 %v7989, 1.0
        %v8246 = vadd.f32 %v7990, 1.0
        %v8247 = vadd.f32 %v7991, 1.0
        %v8248 = vadd.f32 %v7992, 1.0
        %v8249 = vadd.f32 %v7993, 1.0
        %v8250 = vadd.f32 %v7994, 1.0
        %v8251 = vadd.f32 %v7995, 1.0
        %v8252 = vadd.f32 %v7996, 1.0
        %v8253 = vadd.f32 %v7997, 1.0
        %v8254 = vadd.f32 %v7998, 1.0
        %v8255 = vadd.f32 %v7999, 1.0
        %v8256 = vadd.f32 %v8000, 1.0
        %v8257 = vadd.f32 %v8001, 1.0
        %v8258 = vadd.f32 %v8002, 1.0
        %v8259 = vadd.f32 %v8003, 1.0
        %v8260 = vadd.f32 %v8004, 1.0
        %v8261 = vadd.f32 %v8005, 1.0
        %v8262 = vadd.f32 %v8006, 1.0
        %v8263 = vadd.f32 %v8007, 1.0
        %v8264 = vadd.f32 %v8008, 1.0
        %v8265 = vadd.f32 %v8009, 1.0
        %v8266 = vadd.f32 %v8010, 1.0
        %v8267 = vadd.f32 %v8011, 1.0
        %v8268 = vadd.f32 %v8012, 1.0
        %v8269 = vadd.f32 %v8013, 1.0
        %v8270 = vadd.f32 %v8014, 1.0
        %v8271 = vadd.f32 %v8015, 1.0
        %v8272 = vadd.f32 %v8016, 1.0
        %v8273 = vadd.f32 %v8017, 1.0
        %v8274 = vadd.f32 %v8018, 1.0
        %v8275 = vadd.f32 %v8019, 1.0
        %v8276 = vadd.f32 %v8020, 1.0
        %v8277 = vadd.f32 %v8021, 1.0
        %v8278 = vadd.f32 %v8022, 1.0
        %v8279 = vadd.f32 %v8023, 1.0
        %v8280 = vadd.f32 %v8024, 1.0
        %v8281 = vadd.f32 %v8025, 1.0
        %v8282 = vadd.f32 %v8026, 1.0
        %v8283 = vadd.f32 %v8027, 1.0
        %v8284 = vadd.f32 %v8028, 1.0
        %v8285 = vadd.f32 %v8029, 1.0
        %v8286 = vadd.f32 %v8030, 1.0
        %v8287 = vadd.f32 %v8031, 1.0
        %v8288 = vadd.f32 %v8032, 1.0
        %v8289 = vadd.f32 %v8033, 1.0
        %v8290 = vadd.f32 %v8034, 1.0
        %v8291 = vadd.f32 %v8035, 1.0
        %v8292 = vadd.f32 %v8036, 1.0
        %v8293 = vadd.f32 %v8037, 1.0
        %v8294 = vadd.f32 %v8038, 1.0
        %v8295 = vadd.f32 %v8039, 1.0
        %v8296 = vadd.f32 %v8040, 1.0
        %v8297 = vadd.f32 %v8041, 1.0
        %v8298 = vadd.f32 %v8042, 1.0
        %v8299 = vadd.f32 %v8043, 1.0
        %v8300 = vadd.f32 %v8044, 1.0
        %v8301 = vadd.f32 %v8045, 1.0
        %v8302 = vadd.f32 %v8046, 1.0
        %v8303 = vadd.f32 %v8047, 1.0
        %v8304 = vadd.f32 %v8048, 1.0
        %v8305 = vadd.f32 %v8049, 1.0
        %v8306 = vadd.f32 %v8050, 1.0
        %v8307 = vadd.f32 %v8051, 1.0
        %v8308 = vadd.f32 %v8052, 1.0
        %v8309 = vadd.f32 %v8053, 1.0
        %v8310 = vadd.f32 %v8054, 1.0
        %v8311 = vadd.f32 %v8055, 1.0
        %v8312 = vadd.f32 %v8056, 1.0
        %v8313 = vadd.f32 %v8057, 1.0
        %v8314 = vadd.f32 %v8058, 1.0
        %v8315 = vadd.f32 %v8059, 1.0
        %v8316 = vadd.f32 %v8060, 1.0
        %v8317 = vadd.f32 %v8061, 1.0
        %v8318 = vadd.f32 %v8062, 1.0
        %v8319 = vadd.f32 %v8063, 1.0
        %v8320 = vadd.f32 %v8064, 1.0
        %v8321 = vadd.f32 %v8065, 1.0
        %v8322 = vadd.f32 %v8066, 1.0
        %v8323 = vadd.f32 %v8067, 1.0
        %v8324 = vadd.f32 %v8068, 1.0
        %v8325 = vadd.f32 %v8069, 1.0
        %v8326 = vadd.f32 %v8070, 1.0
        %v8327 = vadd.f32 %v8071, 1.0
        %v8328 = vadd.f32 %v8072, 1.0
        %v8329 = vadd.f32 %v8073, 1.0
        %v8330 = vadd.f32 %v8074, 1.0
        %v8331 = vadd.f32 %v8075, 1.0
        %v8332 = vadd.f32 %v8076, 1.0
        %v8333 = vadd.f32 %v8077, 1.0
        %v8334 = vadd.f32 %v8078, 1.0
        %v8335 = vadd.f32 %v8079, 1.0
        %v8336 = vadd.f32 %v8080, 1.0
        %v8337 = vadd.f32 %v8081, 1.0
        %v8338 = vadd.f32 %v8082, 1.0
        %v8339 = vadd.f32 %v8083, 1.0
        %v8340 = vadd.f32 %v8084, 1.0
        %v8341 = vadd.f32 %v8085, 1.0
        %v8342 = vadd.f32 %v8086, 1.0
        %v8343 = vadd.f32 %v8087, 1.0
        %v8344 = vadd.f32 %v8088, 1.0
        %v8345 = vadd.f32 %v8089, 1.0
        %v8346 = vadd.f32 %v8090, 1.0
        %v8347 = vadd.f32 %v8091, 1.0
        %v8348 = vadd.f32 %v8092, 1.0
        %v8349 = vadd.f32 %v8093, 1.0
        %v8350 = vadd.f32 %v8094, 1.0
        %v8351 = vadd.f32 %v8095, 1.0
        %v8352 = vadd.f32 %v8096, 1.0
        %v8353 = vadd.f32 %v8097, 1.0
        %v8354 = vadd.f32 %v8098, 1.0
        %v8355 = vadd.f32 %v8099, 1.0
        %v8356 = vadd.f32 %v8100, 1.0
        %v8357 = vadd.f32 %v8101, 1.0
        %v8358 = vadd.f32 %v8102, 1.0
        %v8359 = vadd.f32 %v8103, 1.0
        %v8360 = vadd.f32 %v8104, 1.0
        %v8361 = vadd.f32 %v8105, 1.0
        %v8362 = vadd.f32 %v8106, 1.0
        %v8363 = vadd.f32 %v8107, 1.0
        %v8364 = vadd.f32 %v8108, 1.0
        %v8365 = vadd.f32 %v8109, 1.0
        %v8366 = vadd.f32 %v8110, 1.0
        %v8367 = vadd.f32 %v8111, 1.0
        %v8368 = vadd.f32 %v8112, 1.0
        %v8369 = vadd.f32 %v8113, 1.0
        %v8370 = vadd.f32 %v8114, 1.0
        %v8371 = vadd.f32 %v8115, 1.0
        %v8372 = vadd.f32 %v8116, 1.0
        %v8373 = vadd.f32 %v8117, 1.0
        %v8374 = vadd.f32 %v8118, 1.0
        %v8375 = vadd.f32 %v8119, 1.0
        %v8376 = vadd.f32 %v8120, 1.0
        %v8377 = vadd.f32 %v8121, 1.0
        %v8378 = vadd.f32 %v8122, 1.0
        %v8379 = vadd.f32 %v8123, 1.0
        %v8380 = vadd.f32 %v8124, 1.0
        %v8381 = vadd.f32 %v8125, 1.0
        %v8382 = vadd.f32 %v8126, 1.0
        %v8383 = vadd.f32 %v8127, 1.0
        %v8384 = vadd.f32 %v8128, 1.0
        %v8385 = vadd.f32 %v8129, 1.0
        %v8386 = vadd.f32 %v8130, 1.0
        %v8387 = vadd.f32 %v8131, 1.0
        %v8388 = vadd.f32 %v8132, 1.0
        %v8389 = vadd.f32 %v8133, 1.0
        %v8390 = vadd.f32 %v8134, 1.0
        %v8391 = vadd.f32 %v8135, 1.0
        %v8392 = vadd.f32 %v8136, 1.0
        %v8393 = vadd.f32 %v8137, 1.0
        %v8394 = vadd.f32 %v8138, 1.0
        %v8395 = vadd.f32 %v8139, 1.0
        %v8396 = vadd.f32 %v8140, 1.0
        %v8397 = vadd.f32 %v8141, 1.0
        %v8398 = vadd.f32 %v8142, 1.0
        %v8399 = vadd.f32 %v8143, 1.0
        %v8400 = vadd.f32 %v8144, 1.0
        %v8401 = vmul.f32 %v6353, %v8145
        %v8402 = vmul.f32 %v6354, %v8146
        %v8403 = vmul.f32 %v6355, %v8147
        %v8404 = vmul.f32 %v6356, %v8148
        %v8405 = vmul.f32 %v6357, %v8149
        %v8406 = vmul.f32 %v6358, %v8150
        %v8407 = vmul.f32 %v6359, %v8151
        %v8408 = vmul.f32 %v6360, %v8152
        %v8409 = vmul.f32 %v6361, %v8153
        %v8410 = vmul.f32 %v6362, %v8154
        %v8411 = vmul.f32 %v6363, %v8155
        %v8412 = vmul.f32 %v6364, %v8156
        %v8413 = vmul.f32 %v6365, %v8157
        %v8414 = vmul.f32 %v6366, %v8158
        %v8415 = vmul.f32 %v6367, %v8159
        %v8416 = vmul.f32 %v6368, %v8160
        %v8417 = vmul.f32 %v6369, %v8161
        %v8418 = vmul.f32 %v6370, %v8162
        %v8419 = vmul.f32 %v6371, %v8163
        %v8420 = vmul.f32 %v6372, %v8164
        %v8421 = vmul.f32 %v6373, %v8165
        %v8422 = vmul.f32 %v6374, %v8166
        %v8423 = vmul.f32 %v6375, %v8167
        %v8424 = vmul.f32 %v6376, %v8168
        %v8425 = vmul.f32 %v6377, %v8169
        %v8426 = vmul.f32 %v6378, %v8170
        %v8427 = vmul.f32 %v6379, %v8171
        %v8428 = vmul.f32 %v6380, %v8172
        %v8429 = vmul.f32 %v6381, %v8173
        %v8430 = vmul.f32 %v6382, %v8174
        %v8431 = vmul.f32 %v6383, %v8175
        %v8432 = vmul.f32 %v6384, %v8176
        %v8433 = vmul.f32 %v6385, %v8177
        %v8434 = vmul.f32 %v6386, %v8178
        %v8435 = vmul.f32 %v6387, %v8179
        %v8436 = vmul.f32 %v6388, %v8180
        %v8437 = vmul.f32 %v6389, %v8181
        %v8438 = vmul.f32 %v6390, %v8182
        %v8439 = vmul.f32 %v6391, %v8183
        %v8440 = vmul.f32 %v6392, %v8184
        %v8441 = vmul.f32 %v6393, %v8185
        %v8442 = vmul.f32 %v6394, %v8186
        %v8443 = vmul.f32 %v6395, %v8187
        %v8444 = vmul.f32 %v6396, %v8188
        %v8445 = vmul.f32 %v6397, %v8189
        %v8446 = vmul.f32 %v6398, %v8190
        %v8447 = vmul.f32 %v6399, %v8191
        %v8448 = vmul.f32 %v6400, %v8192
        %v8449 = vmul.f32 %v6401, %v8193
        %v8450 = vmul.f32 %v6402, %v8194
        %v8451 = vmul.f32 %v6403, %v8195
        %v8452 = vmul.f32 %v6404, %v8196
        %v8453 = vmul.f32 %v6405, %v8197
        %v8454 = vmul.f32 %v6406, %v8198
        %v8455 = vmul.f32 %v6407, %v8199
        %v8456 = vmul.f32 %v6408, %v8200
        %v8457 = vmul.f32 %v6409, %v8201
        %v8458 = vmul.f32 %v6410, %v8202
        %v8459 = vmul.f32 %v6411, %v8203
        %v8460 = vmul.f32 %v6412, %v8204
        %v8461 = vmul.f32 %v6413, %v8205
        %v8462 = vmul.f32 %v6414, %v8206
        %v8463 = vmul.f32 %v6415, %v8207
        %v8464 = vmul.f32 %v6416, %v8208
        %v8465 = vmul.f32 %v6417, %v8209
        %v8466 = vmul.f32 %v6418, %v8210
        %v8467 = vmul.f32 %v6419, %v8211
        %v8468 = vmul.f32 %v6420, %v8212
        %v8469 = vmul.f32 %v6421, %v8213
        %v8470 = vmul.f32 %v6422, %v8214
        %v8471 = vmul.f32 %v6423, %v8215
        %v8472 = vmul.f32 %v6424, %v8216
        %v8473 = vmul.f32 %v6425, %v8217
        %v8474 = vmul.f32 %v6426, %v8218
        %v8475 = vmul.f32 %v6427, %v8219
        %v8476 = vmul.f32 %v6428, %v8220
        %v8477 = vmul.f32 %v6429, %v8221
        %v8478 = vmul.f32 %v6430, %v8222
        %v8479 = vmul.f32 %v6431, %v8223
        %v8480 = vmul.f32 %v6432, %v8224
        %v8481 = vmul.f32 %v6433, %v8225
        %v8482 = vmul.f32 %v6434, %v8226
        %v8483 = vmul.f32 %v6435, %v8227
        %v8484 = vmul.f32 %v6436, %v8228
        %v8485 = vmul.f32 %v6437, %v8229
        %v8486 = vmul.f32 %v6438, %v8230
        %v8487 = vmul.f32 %v6439, %v8231
        %v8488 = vmul.f32 %v6440, %v8232
        %v8489 = vmul.f32 %v6441, %v8233
        %v8490 = vmul.f32 %v6442, %v8234
        %v8491 = vmul.f32 %v6443, %v8235
        %v8492 = vmul.f32 %v6444, %v8236
        %v8493 = vmul.f32 %v6445, %v8237
        %v8494 = vmul.f32 %v6446, %v8238
        %v8495 = vmul.f32 %v6447, %v8239
        %v8496 = vmul.f32 %v6448, %v8240
        %v8497 = vmul.f32 %v6449, %v8241
        %v8498 = vmul.f32 %v6450, %v8242
        %v8499 = vmul.f32 %v6451, %v8243
        %v8500 = vmul.f32 %v6452, %v8244
        %v8501 = vmul.f32 %v6453, %v8245
        %v8502 = vmul.f32 %v6454, %v8246
        %v8503 = vmul.f32 %v6455, %v8247
        %v8504 = vmul.f32 %v6456, %v8248
        %v8505 = vmul.f32 %v6457, %v8249
        %v8506 = vmul.f32 %v6458, %v8250
        %v8507 = vmul.f32 %v6459, %v8251
        %v8508 = vmul.f32 %v6460, %v8252
        %v8509 = vmul.f32 %v6461, %v8253
        %v8510 = vmul.f32 %v6462, %v8254
        %v8511 = vmul.f32 %v6463, %v8255
        %v8512 = vmul.f32 %v6464, %v8256
        %v8513 = vmul.f32 %v6465, %v8257
        %v8514 = vmul.f32 %v6466, %v8258
        %v8515 = vmul.f32 %v6467, %v8259
        %v8516 = vmul.f32 %v6468, %v8260
        %v8517 = vmul.f32 %v6469, %v8261
        %v8518 = vmul.f32 %v6470, %v8262
        %v8519 = vmul.f32 %v6471, %v8263
        %v8520 = vmul.f32 %v6472, %v8264
        %v8521 = vmul.f32 %v6473, %v8265
        %v8522 = vmul.f32 %v6474, %v8266
        %v8523 = vmul.f32 %v6475, %v8267
        %v8524 = vmul.f32 %v6476, %v8268
        %v8525 = vmul.f32 %v6477, %v8269
        %v8526 = vmul.f32 %v6478, %v8270
        %v8527 = vmul.f32 %v6479, %v8271
        %v8528 = vmul.f32 %v6480, %v8272
        %v8529 = vmul.f32 %v6481, %v8273
        %v8530 = vmul.f32 %v6482, %v8274
        %v8531 = vmul.f32 %v6483, %v8275
        %v8532 = vmul.f32 %v6484, %v8276
        %v8533 = vmul.f32 %v6485, %v8277
        %v8534 = vmul.f32 %v6486, %v8278
        %v8535 = vmul.f32 %v6487, %v8279
        %v8536 = vmul.f32 %v6488, %v8280
        %v8537 = vmul.f32 %v6489, %v8281
        %v8538 = vmul.f32 %v6490, %v8282
        %v8539 = vmul.f32 %v6491, %v8283
        %v8540 = vmul.f32 %v6492, %v8284
        %v8541 = vmul.f32 %v6493, %v8285
        %v8542 = vmul.f32 %v6494, %v8286
        %v8543 = vmul.f32 %v6495, %v8287
        %v8544 = vmul.f32 %v6496, %v8288
        %v8545 = vmul.f32 %v6497, %v8289
        %v8546 = vmul.f32 %v6498, %v8290
        %v8547 = vmul.f32 %v6499, %v8291
        %v8548 = vmul.f32 %v6500, %v8292
        %v8549 = vmul.f32 %v6501, %v8293
        %v8550 = vmul.f32 %v6502, %v8294
        %v8551 = vmul.f32 %v6503, %v8295
        %v8552 = vmul.f32 %v6504, %v8296
        %v8553 = vmul.f32 %v6505, %v8297
        %v8554 = vmul.f32 %v6506, %v8298
        %v8555 = vmul.f32 %v6507, %v8299
        %v8556 = vmul.f32 %v6508, %v8300
        %v8557 = vmul.f32 %v6509, %v8301
        %v8558 = vmul.f32 %v6510, %v8302
        %v8559 = vmul.f32 %v6511, %v8303
        %v8560 = vmul.f32 %v6512, %v8304
        %v8561 = vmul.f32 %v6513, %v8305
        %v8562 = vmul.f32 %v6514, %v8306
        %v8563 = vmul.f32 %v6515, %v8307
        %v8564 = vmul.f32 %v6516, %v8308
        %v8565 = vmul.f32 %v6517, %v8309
        %v8566 = vmul.f32 %v6518, %v8310
        %v8567 = vmul.f32 %v6519, %v8311
        %v8568 = vmul.f32 %v6520, %v8312
        %v8569 = vmul.f32 %v6521, %v8313
        %v8570 = vmul.f32 %v6522, %v8314
        %v8571 = vmul.f32 %v6523, %v8315
        %v8572 = vmul.f32 %v6524, %v8316
        %v8573 = vmul.f32 %v6525, %v8317
        %v8574 = vmul.f32 %v6526, %v8318
        %v8575 = vmul.f32 %v6527, %v8319
        %v8576 = vmul.f32 %v6528, %v8320
        %v8577 = vmul.f32 %v6529, %v8321
        %v8578 = vmul.f32 %v6530, %v8322
        %v8579 = vmul.f32 %v6531, %v8323
        %v8580 = vmul.f32 %v6532, %v8324
        %v8581 = vmul.f32 %v6533, %v8325
        %v8582 = vmul.f32 %v6534, %v8326
        %v8583 = vmul.f32 %v6535, %v8327
        %v8584 = vmul.f32 %v6536, %v8328
        %v8585 = vmul.f32 %v6537, %v8329
        %v8586 = vmul.f32 %v6538, %v8330
        %v8587 = vmul.f32 %v6539, %v8331
        %v8588 = vmul.f32 %v6540, %v8332
        %v8589 = vmul.f32 %v6541, %v8333
        %v8590 = vmul.f32 %v6542, %v8334
        %v8591 = vmul.f32 %v6543, %v8335
        %v8592 = vmul.f32 %v6544, %v8336
        %v8593 = vmul.f32 %v6545, %v8337
        %v8594 = vmul.f32 %v6546, %v8338
        %v8595 = vmul.f32 %v6547, %v8339
        %v8596 = vmul.f32 %v6548, %v8340
        %v8597 = vmul.f32 %v6549, %v8341
        %v8598 = vmul.f32 %v6550, %v8342
        %v8599 = vmul.f32 %v6551, %v8343
        %v8600 = vmul.f32 %v6552, %v8344
        %v8601 = vmul.f32 %v6553, %v8345
        %v8602 = vmul.f32 %v6554, %v8346
        %v8603 = vmul.f32 %v6555, %v8347
        %v8604 = vmul.f32 %v6556, %v8348
        %v8605 = vmul.f32 %v6557, %v8349
        %v8606 = vmul.f32 %v6558, %v8350
        %v8607 = vmul.f32 %v6559, %v8351
        %v8608 = vmul.f32 %v6560, %v8352
        %v8609 = vmul.f32 %v6561, %v8353
        %v8610 = vmul.f32 %v6562, %v8354
        %v8611 = vmul.f32 %v6563, %v8355
        %v8612 = vmul.f32 %v6564, %v8356
        %v8613 = vmul.f32 %v6565, %v8357
        %v8614 = vmul.f32 %v6566, %v8358
        %v8615 = vmul.f32 %v6567, %v8359
        %v8616 = vmul.f32 %v6568, %v8360
        %v8617 = vmul.f32 %v6569, %v8361
        %v8618 = vmul.f32 %v6570, %v8362
        %v8619 = vmul.f32 %v6571, %v8363
        %v8620 = vmul.f32 %v6572, %v8364
        %v8621 = vmul.f32 %v6573, %v8365
        %v8622 = vmul.f32 %v6574, %v8366
        %v8623 = vmul.f32 %v6575, %v8367
        %v8624 = vmul.f32 %v6576, %v8368
        %v8625 = vmul.f32 %v6577, %v8369
        %v8626 = vmul.f32 %v6578, %v8370
        %v8627 = vmul.f32 %v6579, %v8371
        %v8628 = vmul.f32 %v6580, %v8372
        %v8629 = vmul.f32 %v6581, %v8373
        %v8630 = vmul.f32 %v6582, %v8374
        %v8631 = vmul.f32 %v6583, %v8375
        %v8632 = vmul.f32 %v6584, %v8376
        %v8633 = vmul.f32 %v6585, %v8377
        %v8634 = vmul.f32 %v6586, %v8378
        %v8635 = vmul.f32 %v6587, %v8379
        %v8636 = vmul.f32 %v6588, %v8380
        %v8637 = vmul.f32 %v6589, %v8381
        %v8638 = vmul.f32 %v6590, %v8382
        %v8639 = vmul.f32 %v6591, %v8383
        %v8640 = vmul.f32 %v6592, %v8384
        %v8641 = vmul.f32 %v6593, %v8385
        %v8642 = vmul.f32 %v6594, %v8386
        %v8643 = vmul.f32 %v6595, %v8387
        %v8644 = vmul.f32 %v6596, %v8388
        %v8645 = vmul.f32 %v6597, %v8389
        %v8646 = vmul.f32 %v6598, %v8390
        %v8647 = vmul.f32 %v6599, %v8391
        %v8648 = vmul.f32 %v6600, %v8392
        %v8649 = vmul.f32 %v6601, %v8393
        %v8650 = vmul.f32 %v6602, %v8394
        %v8651 = vmul.f32 %v6603, %v8395
        %v8652 = vmul.f32 %v6604, %v8396
        %v8653 = vmul.f32 %v6605, %v8397
        %v8654 = vmul.f32 %v6606, %v8398
        %v8655 = vmul.f32 %v6607, %v8399
        %v8656 = vmul.f32 %v6608, %v8400
        %v8657 = vld [vmem:[#allocation10] sm:$0xff]
        %v8658 = vld [vmem:[#allocation10 + $0x8] sm:$0xff]
        %v8659 = vld [vmem:[#allocation10 + $0x10] sm:$0xff]
        %v8660 = vld [vmem:[#allocation10 + $0x18] sm:$0xff]
        %v8661 = vld [vmem:[#allocation10 + $0x20] sm:$0xff]
        %v8662 = vld [vmem:[#allocation10 + $0x28] sm:$0xff]
        %v8663 = vld [vmem:[#allocation10 + $0x30] sm:$0xff]
        %v8664 = vld [vmem:[#allocation10 + $0x38] sm:$0xff]
        %v8665 = vld [vmem:[#allocation10 + $0x40] sm:$0xff]
        %v8666 = vld [vmem:[#allocation10 + $0x48] sm:$0xff]
        %v8667 = vld [vmem:[#allocation10 + $0x50] sm:$0xff]
        %v8668 = vld [vmem:[#allocation10 + $0x58] sm:$0xff]
        %v8669 = vld [vmem:[#allocation10 + $0x60] sm:$0xff]
        %v8670 = vld [vmem:[#allocation10 + $0x68] sm:$0xff]
        %v8671 = vld [vmem:[#allocation10 + $0x70] sm:$0xff]
        %v8672 = vld [vmem:[#allocation10 + $0x78] sm:$0xff]
        %v8673 = vld [vmem:[#allocation10 + $0x80] sm:$0xff]
        %v8674 = vld [vmem:[#allocation10 + $0x88] sm:$0xff]
        %v8675 = vld [vmem:[#allocation10 + $0x90] sm:$0xff]
        %v8676 = vld [vmem:[#allocation10 + $0x98] sm:$0xff]
        %v8677 = vld [vmem:[#allocation10 + $0xa0] sm:$0xff]
        %v8678 = vld [vmem:[#allocation10 + $0xa8] sm:$0xff]
        %v8679 = vld [vmem:[#allocation10 + $0xb0] sm:$0xff]
        %v8680 = vld [vmem:[#allocation10 + $0xb8] sm:$0xff]
        %v8681 = vld [vmem:[#allocation10 + $0xc0] sm:$0xff]
        %v8682 = vld [vmem:[#allocation10 + $0xc8] sm:$0xff]
        %v8683 = vld [vmem:[#allocation10 + $0xd0] sm:$0xff]
        %v8684 = vld [vmem:[#allocation10 + $0xd8] sm:$0xff]
        %v8685 = vld [vmem:[#allocation10 + $0xe0] sm:$0xff]
        %v8686 = vld [vmem:[#allocation10 + $0xe8] sm:$0xff]
        %v8687 = vld [vmem:[#allocation10 + $0xf0] sm:$0xff]
        %v8688 = vld [vmem:[#allocation10 + $0xf8] sm:$0xff]
        %v8689 = vld [vmem:[#allocation10 + $0x100] sm:$0xff]
        %v8690 = vld [vmem:[#allocation10 + $0x108] sm:$0xff]
        %v8691 = vld [vmem:[#allocation10 + $0x110] sm:$0xff]
        %v8692 = vld [vmem:[#allocation10 + $0x118] sm:$0xff]
        %v8693 = vld [vmem:[#allocation10 + $0x120] sm:$0xff]
        %v8694 = vld [vmem:[#allocation10 + $0x128] sm:$0xff]
        %v8695 = vld [vmem:[#allocation10 + $0x130] sm:$0xff]
        %v8696 = vld [vmem:[#allocation10 + $0x138] sm:$0xff]
        %v8697 = vld [vmem:[#allocation10 + $0x140] sm:$0xff]
        %v8698 = vld [vmem:[#allocation10 + $0x148] sm:$0xff]
        %v8699 = vld [vmem:[#allocation10 + $0x150] sm:$0xff]
        %v8700 = vld [vmem:[#allocation10 + $0x158] sm:$0xff]
        %v8701 = vld [vmem:[#allocation10 + $0x160] sm:$0xff]
        %v8702 = vld [vmem:[#allocation10 + $0x168] sm:$0xff]
        %v8703 = vld [vmem:[#allocation10 + $0x170] sm:$0xff]
        %v8704 = vld [vmem:[#allocation10 + $0x178] sm:$0xff]
        %v8705 = vld [vmem:[#allocation10 + $0x180] sm:$0xff]
        %v8706 = vld [vmem:[#allocation10 + $0x188] sm:$0xff]
        %v8707 = vld [vmem:[#allocation10 + $0x190] sm:$0xff]
        %v8708 = vld [vmem:[#allocation10 + $0x198] sm:$0xff]
        %v8709 = vld [vmem:[#allocation10 + $0x1a0] sm:$0xff]
        %v8710 = vld [vmem:[#allocation10 + $0x1a8] sm:$0xff]
        %v8711 = vld [vmem:[#allocation10 + $0x1b0] sm:$0xff]
        %v8712 = vld [vmem:[#allocation10 + $0x1b8] sm:$0xff]
        %v8713 = vld [vmem:[#allocation10 + $0x1c0] sm:$0xff]
        %v8714 = vld [vmem:[#allocation10 + $0x1c8] sm:$0xff]
        %v8715 = vld [vmem:[#allocation10 + $0x1d0] sm:$0xff]
        %v8716 = vld [vmem:[#allocation10 + $0x1d8] sm:$0xff]
        %v8717 = vld [vmem:[#allocation10 + $0x1e0] sm:$0xff]
        %v8718 = vld [vmem:[#allocation10 + $0x1e8] sm:$0xff]
        %v8719 = vld [vmem:[#allocation10 + $0x1f0] sm:$0xff]
        %v8720 = vld [vmem:[#allocation10 + $0x1f8] sm:$0xff]
        %v8721 = vld [vmem:[#allocation10 + $0x200] sm:$0xff]
        %v8722 = vld [vmem:[#allocation10 + $0x208] sm:$0xff]
        %v8723 = vld [vmem:[#allocation10 + $0x210] sm:$0xff]
        %v8724 = vld [vmem:[#allocation10 + $0x218] sm:$0xff]
        %v8725 = vld [vmem:[#allocation10 + $0x220] sm:$0xff]
        %v8726 = vld [vmem:[#allocation10 + $0x228] sm:$0xff]
        %v8727 = vld [vmem:[#allocation10 + $0x230] sm:$0xff]
        %v8728 = vld [vmem:[#allocation10 + $0x238] sm:$0xff]
        %v8729 = vld [vmem:[#allocation10 + $0x240] sm:$0xff]
        %v8730 = vld [vmem:[#allocation10 + $0x248] sm:$0xff]
        %v8731 = vld [vmem:[#allocation10 + $0x250] sm:$0xff]
        %v8732 = vld [vmem:[#allocation10 + $0x258] sm:$0xff]
        %v8733 = vld [vmem:[#allocation10 + $0x260] sm:$0xff]
        %v8734 = vld [vmem:[#allocation10 + $0x268] sm:$0xff]
        %v8735 = vld [vmem:[#allocation10 + $0x270] sm:$0xff]
        %v8736 = vld [vmem:[#allocation10 + $0x278] sm:$0xff]
        %v8737 = vld [vmem:[#allocation10 + $0x280] sm:$0xff]
        %v8738 = vld [vmem:[#allocation10 + $0x288] sm:$0xff]
        %v8739 = vld [vmem:[#allocation10 + $0x290] sm:$0xff]
        %v8740 = vld [vmem:[#allocation10 + $0x298] sm:$0xff]
        %v8741 = vld [vmem:[#allocation10 + $0x2a0] sm:$0xff]
        %v8742 = vld [vmem:[#allocation10 + $0x2a8] sm:$0xff]
        %v8743 = vld [vmem:[#allocation10 + $0x2b0] sm:$0xff]
        %v8744 = vld [vmem:[#allocation10 + $0x2b8] sm:$0xff]
        %v8745 = vld [vmem:[#allocation10 + $0x2c0] sm:$0xff]
        %v8746 = vld [vmem:[#allocation10 + $0x2c8] sm:$0xff]
        %v8747 = vld [vmem:[#allocation10 + $0x2d0] sm:$0xff]
        %v8748 = vld [vmem:[#allocation10 + $0x2d8] sm:$0xff]
        %v8749 = vld [vmem:[#allocation10 + $0x2e0] sm:$0xff]
        %v8750 = vld [vmem:[#allocation10 + $0x2e8] sm:$0xff]
        %v8751 = vld [vmem:[#allocation10 + $0x2f0] sm:$0xff]
        %v8752 = vld [vmem:[#allocation10 + $0x2f8] sm:$0xff]
        %v8753 = vld [vmem:[#allocation10 + $0x300] sm:$0xff]
        %v8754 = vld [vmem:[#allocation10 + $0x308] sm:$0xff]
        %v8755 = vld [vmem:[#allocation10 + $0x310] sm:$0xff]
        %v8756 = vld [vmem:[#allocation10 + $0x318] sm:$0xff]
        %v8757 = vld [vmem:[#allocation10 + $0x320] sm:$0xff]
        %v8758 = vld [vmem:[#allocation10 + $0x328] sm:$0xff]
        %v8759 = vld [vmem:[#allocation10 + $0x330] sm:$0xff]
        %v8760 = vld [vmem:[#allocation10 + $0x338] sm:$0xff]
        %v8761 = vld [vmem:[#allocation10 + $0x340] sm:$0xff]
        %v8762 = vld [vmem:[#allocation10 + $0x348] sm:$0xff]
        %v8763 = vld [vmem:[#allocation10 + $0x350] sm:$0xff]
        %v8764 = vld [vmem:[#allocation10 + $0x358] sm:$0xff]
        %v8765 = vld [vmem:[#allocation10 + $0x360] sm:$0xff]
        %v8766 = vld [vmem:[#allocation10 + $0x368] sm:$0xff]
        %v8767 = vld [vmem:[#allocation10 + $0x370] sm:$0xff]
        %v8768 = vld [vmem:[#allocation10 + $0x378] sm:$0xff]
        %v8769 = vld [vmem:[#allocation10 + $0x380] sm:$0xff]
        %v8770 = vld [vmem:[#allocation10 + $0x388] sm:$0xff]
        %v8771 = vld [vmem:[#allocation10 + $0x390] sm:$0xff]
        %v8772 = vld [vmem:[#allocation10 + $0x398] sm:$0xff]
        %v8773 = vld [vmem:[#allocation10 + $0x3a0] sm:$0xff]
        %v8774 = vld [vmem:[#allocation10 + $0x3a8] sm:$0xff]
        %v8775 = vld [vmem:[#allocation10 + $0x3b0] sm:$0xff]
        %v8776 = vld [vmem:[#allocation10 + $0x3b8] sm:$0xff]
        %v8777 = vld [vmem:[#allocation10 + $0x3c0] sm:$0xff]
        %v8778 = vld [vmem:[#allocation10 + $0x3c8] sm:$0xff]
        %v8779 = vld [vmem:[#allocation10 + $0x3d0] sm:$0xff]
        %v8780 = vld [vmem:[#allocation10 + $0x3d8] sm:$0xff]
        %v8781 = vld [vmem:[#allocation10 + $0x3e0] sm:$0xff]
        %v8782 = vld [vmem:[#allocation10 + $0x3e8] sm:$0xff]
        %v8783 = vld [vmem:[#allocation10 + $0x3f0] sm:$0xff]
        %v8784 = vld [vmem:[#allocation10 + $0x3f8] sm:$0xff]
        %v8785 = vld [vmem:[#allocation10 + $0x400] sm:$0xff]
        %v8786 = vld [vmem:[#allocation10 + $0x408] sm:$0xff]
        %v8787 = vld [vmem:[#allocation10 + $0x410] sm:$0xff]
        %v8788 = vld [vmem:[#allocation10 + $0x418] sm:$0xff]
        %v8789 = vld [vmem:[#allocation10 + $0x420] sm:$0xff]
        %v8790 = vld [vmem:[#allocation10 + $0x428] sm:$0xff]
        %v8791 = vld [vmem:[#allocation10 + $0x430] sm:$0xff]
        %v8792 = vld [vmem:[#allocation10 + $0x438] sm:$0xff]
        %v8793 = vld [vmem:[#allocation10 + $0x440] sm:$0xff]
        %v8794 = vld [vmem:[#allocation10 + $0x448] sm:$0xff]
        %v8795 = vld [vmem:[#allocation10 + $0x450] sm:$0xff]
        %v8796 = vld [vmem:[#allocation10 + $0x458] sm:$0xff]
        %v8797 = vld [vmem:[#allocation10 + $0x460] sm:$0xff]
        %v8798 = vld [vmem:[#allocation10 + $0x468] sm:$0xff]
        %v8799 = vld [vmem:[#allocation10 + $0x470] sm:$0xff]
        %v8800 = vld [vmem:[#allocation10 + $0x478] sm:$0xff]
        %v8801 = vld [vmem:[#allocation10 + $0x480] sm:$0xff]
        %v8802 = vld [vmem:[#allocation10 + $0x488] sm:$0xff]
        %v8803 = vld [vmem:[#allocation10 + $0x490] sm:$0xff]
        %v8804 = vld [vmem:[#allocation10 + $0x498] sm:$0xff]
        %v8805 = vld [vmem:[#allocation10 + $0x4a0] sm:$0xff]
        %v8806 = vld [vmem:[#allocation10 + $0x4a8] sm:$0xff]
        %v8807 = vld [vmem:[#allocation10 + $0x4b0] sm:$0xff]
        %v8808 = vld [vmem:[#allocation10 + $0x4b8] sm:$0xff]
        %v8809 = vld [vmem:[#allocation10 + $0x4c0] sm:$0xff]
        %v8810 = vld [vmem:[#allocation10 + $0x4c8] sm:$0xff]
        %v8811 = vld [vmem:[#allocation10 + $0x4d0] sm:$0xff]
        %v8812 = vld [vmem:[#allocation10 + $0x4d8] sm:$0xff]
        %v8813 = vld [vmem:[#allocation10 + $0x4e0] sm:$0xff]
        %v8814 = vld [vmem:[#allocation10 + $0x4e8] sm:$0xff]
        %v8815 = vld [vmem:[#allocation10 + $0x4f0] sm:$0xff]
        %v8816 = vld [vmem:[#allocation10 + $0x4f8] sm:$0xff]
        %v8817 = vld [vmem:[#allocation10 + $0x500] sm:$0xff]
        %v8818 = vld [vmem:[#allocation10 + $0x508] sm:$0xff]
        %v8819 = vld [vmem:[#allocation10 + $0x510] sm:$0xff]
        %v8820 = vld [vmem:[#allocation10 + $0x518] sm:$0xff]
        %v8821 = vld [vmem:[#allocation10 + $0x520] sm:$0xff]
        %v8822 = vld [vmem:[#allocation10 + $0x528] sm:$0xff]
        %v8823 = vld [vmem:[#allocation10 + $0x530] sm:$0xff]
        %v8824 = vld [vmem:[#allocation10 + $0x538] sm:$0xff]
        %v8825 = vld [vmem:[#allocation10 + $0x540] sm:$0xff]
        %v8826 = vld [vmem:[#allocation10 + $0x548] sm:$0xff]
        %v8827 = vld [vmem:[#allocation10 + $0x550] sm:$0xff]
        %v8828 = vld [vmem:[#allocation10 + $0x558] sm:$0xff]
        %v8829 = vld [vmem:[#allocation10 + $0x560] sm:$0xff]
        %v8830 = vld [vmem:[#allocation10 + $0x568] sm:$0xff]
        %v8831 = vld [vmem:[#allocation10 + $0x570] sm:$0xff]
        %v8832 = vld [vmem:[#allocation10 + $0x578] sm:$0xff]
        %v8833 = vld [vmem:[#allocation10 + $0x580] sm:$0xff]
        %v8834 = vld [vmem:[#allocation10 + $0x588] sm:$0xff]
        %v8835 = vld [vmem:[#allocation10 + $0x590] sm:$0xff]
        %v8836 = vld [vmem:[#allocation10 + $0x598] sm:$0xff]
        %v8837 = vld [vmem:[#allocation10 + $0x5a0] sm:$0xff]
        %v8838 = vld [vmem:[#allocation10 + $0x5a8] sm:$0xff]
        %v8839 = vld [vmem:[#allocation10 + $0x5b0] sm:$0xff]
        %v8840 = vld [vmem:[#allocation10 + $0x5b8] sm:$0xff]
        %v8841 = vld [vmem:[#allocation10 + $0x5c0] sm:$0xff]
        %v8842 = vld [vmem:[#allocation10 + $0x5c8] sm:$0xff]
        %v8843 = vld [vmem:[#allocation10 + $0x5d0] sm:$0xff]
        %v8844 = vld [vmem:[#allocation10 + $0x5d8] sm:$0xff]
        %v8845 = vld [vmem:[#allocation10 + $0x5e0] sm:$0xff]
        %v8846 = vld [vmem:[#allocation10 + $0x5e8] sm:$0xff]
        %v8847 = vld [vmem:[#allocation10 + $0x5f0] sm:$0xff]
        %v8848 = vld [vmem:[#allocation10 + $0x5f8] sm:$0xff]
        %v8849 = vld [vmem:[#allocation10 + $0x600] sm:$0xff]
        %v8850 = vld [vmem:[#allocation10 + $0x608] sm:$0xff]
        %v8851 = vld [vmem:[#allocation10 + $0x610] sm:$0xff]
        %v8852 = vld [vmem:[#allocation10 + $0x618] sm:$0xff]
        %v8853 = vld [vmem:[#allocation10 + $0x620] sm:$0xff]
        %v8854 = vld [vmem:[#allocation10 + $0x628] sm:$0xff]
        %v8855 = vld [vmem:[#allocation10 + $0x630] sm:$0xff]
        %v8856 = vld [vmem:[#allocation10 + $0x638] sm:$0xff]
        %v8857 = vld [vmem:[#allocation10 + $0x640] sm:$0xff]
        %v8858 = vld [vmem:[#allocation10 + $0x648] sm:$0xff]
        %v8859 = vld [vmem:[#allocation10 + $0x650] sm:$0xff]
        %v8860 = vld [vmem:[#allocation10 + $0x658] sm:$0xff]
        %v8861 = vld [vmem:[#allocation10 + $0x660] sm:$0xff]
        %v8862 = vld [vmem:[#allocation10 + $0x668] sm:$0xff]
        %v8863 = vld [vmem:[#allocation10 + $0x670] sm:$0xff]
        %v8864 = vld [vmem:[#allocation10 + $0x678] sm:$0xff]
        %v8865 = vld [vmem:[#allocation10 + $0x680] sm:$0xff]
        %v8866 = vld [vmem:[#allocation10 + $0x688] sm:$0xff]
        %v8867 = vld [vmem:[#allocation10 + $0x690] sm:$0xff]
        %v8868 = vld [vmem:[#allocation10 + $0x698] sm:$0xff]
        %v8869 = vld [vmem:[#allocation10 + $0x6a0] sm:$0xff]
        %v8870 = vld [vmem:[#allocation10 + $0x6a8] sm:$0xff]
        %v8871 = vld [vmem:[#allocation10 + $0x6b0] sm:$0xff]
        %v8872 = vld [vmem:[#allocation10 + $0x6b8] sm:$0xff]
        %v8873 = vld [vmem:[#allocation10 + $0x6c0] sm:$0xff]
        %v8874 = vld [vmem:[#allocation10 + $0x6c8] sm:$0xff]
        %v8875 = vld [vmem:[#allocation10 + $0x6d0] sm:$0xff]
        %v8876 = vld [vmem:[#allocation10 + $0x6d8] sm:$0xff]
        %v8877 = vld [vmem:[#allocation10 + $0x6e0] sm:$0xff]
        %v8878 = vld [vmem:[#allocation10 + $0x6e8] sm:$0xff]
        %v8879 = vld [vmem:[#allocation10 + $0x6f0] sm:$0xff]
        %v8880 = vld [vmem:[#allocation10 + $0x6f8] sm:$0xff]
        %v8881 = vld [vmem:[#allocation10 + $0x700] sm:$0xff]
        %v8882 = vld [vmem:[#allocation10 + $0x708] sm:$0xff]
        %v8883 = vld [vmem:[#allocation10 + $0x710] sm:$0xff]
        %v8884 = vld [vmem:[#allocation10 + $0x718] sm:$0xff]
        %v8885 = vld [vmem:[#allocation10 + $0x720] sm:$0xff]
        %v8886 = vld [vmem:[#allocation10 + $0x728] sm:$0xff]
        %v8887 = vld [vmem:[#allocation10 + $0x730] sm:$0xff]
        %v8888 = vld [vmem:[#allocation10 + $0x738] sm:$0xff]
        %v8889 = vld [vmem:[#allocation10 + $0x740] sm:$0xff]
        %v8890 = vld [vmem:[#allocation10 + $0x748] sm:$0xff]
        %v8891 = vld [vmem:[#allocation10 + $0x750] sm:$0xff]
        %v8892 = vld [vmem:[#allocation10 + $0x758] sm:$0xff]
        %v8893 = vld [vmem:[#allocation10 + $0x760] sm:$0xff]
        %v8894 = vld [vmem:[#allocation10 + $0x768] sm:$0xff]
        %v8895 = vld [vmem:[#allocation10 + $0x770] sm:$0xff]
        %v8896 = vld [vmem:[#allocation10 + $0x778] sm:$0xff]
        %v8897 = vld [vmem:[#allocation10 + $0x780] sm:$0xff]
        %v8898 = vld [vmem:[#allocation10 + $0x788] sm:$0xff]
        %v8899 = vld [vmem:[#allocation10 + $0x790] sm:$0xff]
        %v8900 = vld [vmem:[#allocation10 + $0x798] sm:$0xff]
        %v8901 = vld [vmem:[#allocation10 + $0x7a0] sm:$0xff]
        %v8902 = vld [vmem:[#allocation10 + $0x7a8] sm:$0xff]
        %v8903 = vld [vmem:[#allocation10 + $0x7b0] sm:$0xff]
        %v8904 = vld [vmem:[#allocation10 + $0x7b8] sm:$0xff]
        %v8905 = vld [vmem:[#allocation10 + $0x7c0] sm:$0xff]
        %v8906 = vld [vmem:[#allocation10 + $0x7c8] sm:$0xff]
        %v8907 = vld [vmem:[#allocation10 + $0x7d0] sm:$0xff]
        %v8908 = vld [vmem:[#allocation10 + $0x7d8] sm:$0xff]
        %v8909 = vld [vmem:[#allocation10 + $0x7e0] sm:$0xff]
        %v8910 = vld [vmem:[#allocation10 + $0x7e8] sm:$0xff]
        %v8911 = vld [vmem:[#allocation10 + $0x7f0] sm:$0xff]
        %v8912 = vld [vmem:[#allocation10 + $0x7f8] sm:$0xff]
        %v8914 = vlaneseq
        %v8915 = vshrl.u32 %v8914, 7
        %v8916 = vsub.s32 0, %v8915
        %v8917 = vrot.slane %v405, %v8916
        %v8918 = vlaneseq
        %v8919 = vshrl.u32 %v8918, 7
        %v8920 = vsub.s32 1, %v8919
        %v8921 = vrot.slane %v405, %v8920
        %8924 = vmatprep.subr.mxu0 %v8658
        %8925 = vmatpush1.msra.mxu0 %v8657
        %8926 = vmatprep.subr.mxu0 %v8660
        %8927 = vmatpush1.msra.mxu0 %v8659
        %8928 = vmatprep.subr.mxu0 %v8662
        %8929 = vmatpush1.msra.mxu0 %v8661
        %8930 = vmatprep.subr.mxu0 %v8664
        %8931 = vmatpush1.msra.mxu0 %v8663
        %8932 = vmatprep.subr.mxu0 %v8666
        %8933 = vmatpush1.msra.mxu0 %v8665
        %8934 = vmatprep.subr.mxu0 %v8668
        %8935 = vmatpush1.msra.mxu0 %v8667
        %8936 = vmatprep.subr.mxu0 %v8670
        %8937 = vmatpush1.msra.mxu0 %v8669
        %8938 = vmatprep.subr.mxu0 %v8672
        %8939 = vmatpush1.msra.mxu0 %v8671
        %8940 = vmatprep.subr.mxu0 %v8674
        %8941 = vmatpush1.msra.mxu0 %v8673
        %8942 = vmatprep.subr.mxu0 %v8676
        %8943 = vmatpush1.msra.mxu0 %v8675
        %8944 = vmatprep.subr.mxu0 %v8678
        %8945 = vmatpush1.msra.mxu0 %v8677
        %8946 = vmatprep.subr.mxu0 %v8680
        %8947 = vmatpush1.msra.mxu0 %v8679
        %8948 = vmatprep.subr.mxu0 %v8682
        %8949 = vmatpush1.msra.mxu0 %v8681
        %8950 = vmatprep.subr.mxu0 %v8684
        %8951 = vmatpush1.msra.mxu0 %v8683
        %8952 = vmatprep.subr.mxu0 %v8686
        %8953 = vmatpush1.msra.mxu0 %v8685
        %8954 = vmatprep.subr.mxu0 %v8688
        %8955 = vmatpush1.msra.mxu0 %v8687
        %8956 = vmatprep.subr.mxu0 %v8690
        %8957 = vmatpush1.msra.mxu0 %v8689
        %8958 = vmatprep.subr.mxu0 %v8692
        %8959 = vmatpush1.msra.mxu0 %v8691
        %8960 = vmatprep.subr.mxu0 %v8694
        %8961 = vmatpush1.msra.mxu0 %v8693
        %8962 = vmatprep.subr.mxu0 %v8696
        %8963 = vmatpush1.msra.mxu0 %v8695
        %8964 = vmatprep.subr.mxu0 %v8698
        %8965 = vmatpush1.msra.mxu0 %v8697
        %8966 = vmatprep.subr.mxu0 %v8700
        %8967 = vmatpush1.msra.mxu0 %v8699
        %8968 = vmatprep.subr.mxu0 %v8702
        %8969 = vmatpush1.msra.mxu0 %v8701
        %8970 = vmatprep.subr.mxu0 %v8704
        %8971 = vmatpush1.msra.mxu0 %v8703
        %8972 = vmatprep.subr.mxu0 %v8706
        %8973 = vmatpush1.msra.mxu0 %v8705
        %8974 = vmatprep.subr.mxu0 %v8708
        %8975 = vmatpush1.msra.mxu0 %v8707
        %8976 = vmatprep.subr.mxu0 %v8710
        %8977 = vmatpush1.msra.mxu0 %v8709
        %8978 = vmatprep.subr.mxu0 %v8712
        %8979 = vmatpush1.msra.mxu0 %v8711
        %8980 = vmatprep.subr.mxu0 %v8714
        %8981 = vmatpush1.msra.mxu0 %v8713
        %8982 = vmatprep.subr.mxu0 %v8716
        %8983 = vmatpush1.msra.mxu0 %v8715
        %8984 = vmatprep.subr.mxu0 %v8718
        %8985 = vmatpush1.msra.mxu0 %v8717
        %8986 = vmatprep.subr.mxu0 %v8720
        %8987 = vmatpush1.msra.mxu0 %v8719
        %8988 = vmatprep.mubr.f32.mxu0 %v8402
        %8989 = vmatmul.mubr.f32.gmra.mrb[0].mxu0 %v8401
        %v8990 = vpop.f32.mrb[0].mxu0
        %v8991 = vadd.f32 %v8917, %v8990
        %v8992 = vpop.f32.mrb[0].mxu0
        %v8993 = vadd.f32 %v8921, %v8992
        %8994 = vmatprep.mubr.f32.mxu0 %v8410
        %8995 = vmatmul.mubr.f32.gmra.mrb[0].mxu0 %v8409
        %v8996 = vpop.f32.mrb[0].mxu0
        %v8997 = vadd.f32 %v8917, %v8996
        %v8998 = vpop.f32.mrb[0].mxu0
        %v8999 = vadd.f32 %v8921, %v8998
        %9000 = vmatprep.mubr.f32.mxu0 %v8418
        %9001 = vmatmul.mubr.f32.gmra.mrb[0].mxu0 %v8417
        %v9002 = vpop.f32.mrb[0].mxu0
        %v9003 = vadd.f32 %v8917, %v9002
        %v9004 = vpop.f32.mrb[0].mxu0
        %v9005 = vadd.f32 %v8921, %v9004
        %9006 = vmatprep.mubr.f32.mxu0 %v8426
        %9007 = vmatmul.mubr.f32.gmra.mrb[0].mxu0 %v8425
        %v9008 = vpop.f32.mrb[0].mxu0
        %v9009 = vadd.f32 %v8917, %v9008
        %v9010 = vpop.f32.mrb[0].mxu0
        %v9011 = vadd.f32 %v8921, %v9010
        %9012 = vmatprep.mubr.f32.mxu0 %v8434
        %9013 = vmatmul.mubr.f32.gmra.mrb[0].mxu0 %v8433
        %v9014 = vpop.f32.mrb[0].mxu0
        %v9015 = vadd.f32 %v8917, %v9014
        %v9016 = vpop.f32.mrb[0].mxu0
        %v9017 = vadd.f32 %v8921, %v9016
        %9018 = vmatprep.mubr.f32.mxu0 %v8442
        %9019 = vmatmul.mubr.f32.gmra.mrb[0].mxu0 %v8441
        %v9020 = vpop.f32.mrb[0].mxu0
        %v9021 = vadd.f32 %v8917, %v9020
        %v9022 = vpop.f32.mrb[0].mxu0
        %v9023 = vadd.f32 %v8921, %v9022
        %9024 = vmatprep.mubr.f32.mxu0 %v8450
        %9025 = vmatmul.mubr.f32.gmra.mrb[0].mxu0 %v8449
        %v9026 = vpop.f32.mrb[0].mxu0
        %v9027 = vadd.f32 %v8917, %v9026
        %v9028 = vpop.f32.mrb[0].mxu0
        %v9029 = vadd.f32 %v8921, %v9028
        %9030 = vmatprep.mubr.f32.mxu0 %v8458
        %9031 = vmatmul.mubr.f32.gmra.mrb[0].mxu0 %v8457
        %v9032 = vpop.f32.mrb[0].mxu0
        %v9033 = vadd.f32 %v8917, %v9032
        %v9034 = vpop.f32.mrb[0].mxu0
        %v9035 = vadd.f32 %v8921, %v9034
        %9036 = vmatprep.mubr.f32.mxu0 %v8466
        %9037 = vmatmul.mubr.f32.gmra.mrb[0].mxu0 %v8465
        %v9038 = vpop.f32.mrb[0].mxu0
        %v9039 = vadd.f32 %v8917, %v9038
        %v9040 = vpop.f32.mrb[0].mxu0
        %v9041 = vadd.f32 %v8921, %v9040
        %9042 = vmatprep.mubr.f32.mxu0 %v8474
        %9043 = vmatmul.mubr.f32.gmra.mrb[0].mxu0 %v8473
        %v9044 = vpop.f32.mrb[0].mxu0
        %v9045 = vadd.f32 %v8917, %v9044
        %v9046 = vpop.f32.mrb[0].mxu0
        %v9047 = vadd.f32 %v8921, %v9046
        %9048 = vmatprep.mubr.f32.mxu0 %v8482
        %9049 = vmatmul.mubr.f32.gmra.mrb[0].mxu0 %v8481
        %v9050 = vpop.f32.mrb[0].mxu0
        %v9051 = vadd.f32 %v8917, %v9050
        %v9052 = vpop.f32.mrb[0].mxu0
        %v9053 = vadd.f32 %v8921, %v9052
        %9054 = vmatprep.mubr.f32.mxu0 %v8490
        %9055 = vmatmul.mubr.f32.gmra.mrb[0].mxu0 %v8489
        %v9056 = vpop.f32.mrb[0].mxu0
        %v9057 = vadd.f32 %v8917, %v9056
        %v9058 = vpop.f32.mrb[0].mxu0
        %v9059 = vadd.f32 %v8921, %v9058
        %9060 = vmatprep.mubr.f32.mxu0 %v8498
        %9061 = vmatmul.mubr.f32.gmra.mrb[0].mxu0 %v8497
        %v9062 = vpop.f32.mrb[0].mxu0
        %v9063 = vadd.f32 %v8917, %v9062
        %v9064 = vpop.f32.mrb[0].mxu0
        %v9065 = vadd.f32 %v8921, %v9064
        %9066 = vmatprep.mubr.f32.mxu0 %v8506
        %9067 = vmatmul.mubr.f32.gmra.mrb[0].mxu0 %v8505
        %v9068 = vpop.f32.mrb[0].mxu0
        %v9069 = vadd.f32 %v8917, %v9068
        %v9070 = vpop.f32.mrb[0].mxu0
        %v9071 = vadd.f32 %v8921, %v9070
        %9072 = vmatprep.mubr.f32.mxu0 %v8514
        %9073 = vmatmul.mubr.f32.gmra.mrb[0].mxu0 %v8513
        %v9074 = vpop.f32.mrb[0].mxu0
        %v9075 = vadd.f32 %v8917, %v9074
        %v9076 = vpop.f32.mrb[0].mxu0
        %v9077 = vadd.f32 %v8921, %v9076
        %9078 = vmatprep.mubr.f32.mxu0 %v8522
        %9079 = vmatmul.mubr.f32.gmra.mrb[0].mxu0 %v8521
        %v9080 = vpop.f32.mrb[0].mxu0
        %v9081 = vadd.f32 %v8917, %v9080
        %v9082 = vpop.f32.mrb[0].mxu0
        %v9083 = vadd.f32 %v8921, %v9082
        %9084 = vmatprep.mubr.f32.mxu0 %v8530
        %9085 = vmatmul.mubr.f32.gmra.mrb[0].mxu0 %v8529
        %v9086 = vpop.f32.mrb[0].mxu0
        %v9087 = vadd.f32 %v8917, %v9086
        %v9088 = vpop.f32.mrb[0].mxu0
        %v9089 = vadd.f32 %v8921, %v9088
        %9090 = vmatprep.mubr.f32.mxu0 %v8538
        %9091 = vmatmul.mubr.f32.gmra.mrb[0].mxu0 %v8537
        %v9092 = vpop.f32.mrb[0].mxu0
        %v9093 = vadd.f32 %v8917, %v9092
        %v9094 = vpop.f32.mrb[0].mxu0
        %v9095 = vadd.f32 %v8921, %v9094
        %9096 = vmatprep.mubr.f32.mxu0 %v8546
        %9097 = vmatmul.mubr.f32.gmra.mrb[0].mxu0 %v8545
        %v9098 = vpop.f32.mrb[0].mxu0
        %v9099 = vadd.f32 %v8917, %v9098
        %v9100 = vpop.f32.mrb[0].mxu0
        %v9101 = vadd.f32 %v8921, %v9100
        %9102 = vmatprep.mubr.f32.mxu0 %v8554
        %9103 = vmatmul.mubr.f32.gmra.mrb[0].mxu0 %v8553
        %v9104 = vpop.f32.mrb[0].mxu0
        %v9105 = vadd.f32 %v8917, %v9104
        %v9106 = vpop.f32.mrb[0].mxu0
        %v9107 = vadd.f32 %v8921, %v9106
        %9108 = vmatprep.mubr.f32.mxu0 %v8562
        %9109 = vmatmul.mubr.f32.gmra.mrb[0].mxu0 %v8561
        %v9110 = vpop.f32.mrb[0].mxu0
        %v9111 = vadd.f32 %v8917, %v9110
        %v9112 = vpop.f32.mrb[0].mxu0
        %v9113 = vadd.f32 %v8921, %v9112
        %9114 = vmatprep.mubr.f32.mxu0 %v8570
        %9115 = vmatmul.mubr.f32.gmra.mrb[0].mxu0 %v8569
        %v9116 = vpop.f32.mrb[0].mxu0
        %v9117 = vadd.f32 %v8917, %v9116
        %v9118 = vpop.f32.mrb[0].mxu0
        %v9119 = vadd.f32 %v8921, %v9118
        %9120 = vmatprep.mubr.f32.mxu0 %v8578
        %9121 = vmatmul.mubr.f32.gmra.mrb[0].mxu0 %v8577
        %v9122 = vpop.f32.mrb[0].mxu0
        %v9123 = vadd.f32 %v8917, %v9122
        %v9124 = vpop.f32.mrb[0].mxu0
        %v9125 = vadd.f32 %v8921, %v9124
        %9126 = vmatprep.mubr.f32.mxu0 %v8586
        %9127 = vmatmul.mubr.f32.gmra.mrb[0].mxu0 %v8585
        %v9128 = vpop.f32.mrb[0].mxu0
        %v9129 = vadd.f32 %v8917, %v9128
        %v9130 = vpop.f32.mrb[0].mxu0
        %v9131 = vadd.f32 %v8921, %v9130
        %9132 = vmatprep.mubr.f32.mxu0 %v8594
        %9133 = vmatmul.mubr.f32.gmra.mrb[0].mxu0 %v8593
        %v9134 = vpop.f32.mrb[0].mxu0
        %v9135 = vadd.f32 %v8917, %v9134
        %v9136 = vpop.f32.mrb[0].mxu0
        %v9137 = vadd.f32 %v8921, %v9136
        %9138 = vmatprep.mubr.f32.mxu0 %v8602
        %9139 = vmatmul.mubr.f32.gmra.mrb[0].mxu0 %v8601
        %v9140 = vpop.f32.mrb[0].mxu0
        %v9141 = vadd.f32 %v8917, %v9140
        %v9142 = vpop.f32.mrb[0].mxu0
        %v9143 = vadd.f32 %v8921, %v9142
        %9144 = vmatprep.mubr.f32.mxu0 %v8610
        %9145 = vmatmul.mubr.f32.gmra.mrb[0].mxu0 %v8609
        %v9146 = vpop.f32.mrb[0].mxu0
        %v9147 = vadd.f32 %v8917, %v9146
        %v9148 = vpop.f32.mrb[0].mxu0
        %v9149 = vadd.f32 %v8921, %v9148
        %9150 = vmatprep.mubr.f32.mxu0 %v8618
        %9151 = vmatmul.mubr.f32.gmra.mrb[0].mxu0 %v8617
        %v9152 = vpop.f32.mrb[0].mxu0
        %v9153 = vadd.f32 %v8917, %v9152
        %v9154 = vpop.f32.mrb[0].mxu0
        %v9155 = vadd.f32 %v8921, %v9154
        %9156 = vmatprep.mubr.f32.mxu0 %v8626
        %9157 = vmatmul.mubr.f32.gmra.mrb[0].mxu0 %v8625
        %v9158 = vpop.f32.mrb[0].mxu0
        %v9159 = vadd.f32 %v8917, %v9158
        %v9160 = vpop.f32.mrb[0].mxu0
        %v9161 = vadd.f32 %v8921, %v9160
        %9162 = vmatprep.mubr.f32.mxu0 %v8634
        %9163 = vmatmul.mubr.f32.gmra.mrb[0].mxu0 %v8633
        %v9164 = vpop.f32.mrb[0].mxu0
        %v9165 = vadd.f32 %v8917, %v9164
        %v9166 = vpop.f32.mrb[0].mxu0
        %v9167 = vadd.f32 %v8921, %v9166
        %9168 = vmatprep.mubr.f32.mxu0 %v8642
        %9169 = vmatmul.mubr.f32.gmra.mrb[0].mxu0 %v8641
        %v9170 = vpop.f32.mrb[0].mxu0
        %v9171 = vadd.f32 %v8917, %v9170
        %v9172 = vpop.f32.mrb[0].mxu0
        %v9173 = vadd.f32 %v8921, %v9172
        %9174 = vmatprep.mubr.f32.mxu0 %v8650
        %9175 = vmatmul.mubr.f32.gmra.mrb[0].mxu0 %v8649
        %v9176 = vpop.f32.mrb[0].mxu0
        %v9177 = vadd.f32 %v8917, %v9176
        %v9178 = vpop.f32.mrb[0].mxu0
        %v9179 = vadd.f32 %v8921, %v9178
        %9180 = vdwg.mxu0
        %9181 = vmatprep.subr.mxu0 %v8722
        %9182 = vmatpush1.msra.mxu0 %v8721
        %9183 = vmatprep.subr.mxu0 %v8724
        %9184 = vmatpush1.msra.mxu0 %v8723
        %9185 = vmatprep.subr.mxu0 %v8726
        %9186 = vmatpush1.msra.mxu0 %v8725
        %9187 = vmatprep.subr.mxu0 %v8728
        %9188 = vmatpush1.msra.mxu0 %v8727
        %9189 = vmatprep.subr.mxu0 %v8730
        %9190 = vmatpush1.msra.mxu0 %v8729
        %9191 = vmatprep.subr.mxu0 %v8732
        %9192 = vmatpush1.msra.mxu0 %v8731
        %9193 = vmatprep.subr.mxu0 %v8734
        %9194 = vmatpush1.msra.mxu0 %v8733
        %9195 = vmatprep.subr.mxu0 %v8736
        %9196 = vmatpush1.msra.mxu0 %v8735
        %9197 = vmatprep.subr.mxu0 %v8738
        %9198 = vmatpush1.msra.mxu0 %v8737
        %9199 = vmatprep.subr.mxu0 %v8740
        %9200 = vmatpush1.msra.mxu0 %v8739
        %9201 = vmatprep.subr.mxu0 %v8742
        %9202 = vmatpush1.msra.mxu0 %v8741
        %9203 = vmatprep.subr.mxu0 %v8744
        %9204 = vmatpush1.msra.mxu0 %v8743
        %9205 = vmatprep.subr.mxu0 %v8746
        %9206 = vmatpush1.msra.mxu0 %v8745
        %9207 = vmatprep.subr.mxu0 %v8748
        %9208 = vmatpush1.msra.mxu0 %v8747
        %9209 = vmatprep.subr.mxu0 %v8750
        %9210 = vmatpush1.msra.mxu0 %v8749
        %9211 = vmatprep.subr.mxu0 %v8752
        %9212 = vmatpush1.msra.mxu0 %v8751
        %9213 = vmatprep.subr.mxu0 %v8754
        %9214 = vmatpush1.msra.mxu0 %v8753
        %9215 = vmatprep.subr.mxu0 %v8756
        %9216 = vmatpush1.msra.mxu0 %v8755
        %9217 = vmatprep.subr.mxu0 %v8758
        %9218 = vmatpush1.msra.mxu0 %v8757
        %9219 = vmatprep.subr.mxu0 %v8760
        %9220 = vmatpush1.msra.mxu0 %v8759
        %9221 = vmatprep.subr.mxu0 %v8762
        %9222 = vmatpush1.msra.mxu0 %v8761
        %9223 = vmatprep.subr.mxu0 %v8764
        %9224 = vmatpush1.msra.mxu0 %v8763
        %9225 = vmatprep.subr.mxu0 %v8766
        %9226 = vmatpush1.msra.mxu0 %v8765
        %9227 = vmatprep.subr.mxu0 %v8768
        %9228 = vmatpush1.msra.mxu0 %v8767
        %9229 = vmatprep.subr.mxu0 %v8770
        %9230 = vmatpush1.msra.mxu0 %v8769
        %9231 = vmatprep.subr.mxu0 %v8772
        %9232 = vmatpush1.msra.mxu0 %v8771
        %9233 = vmatprep.subr.mxu0 %v8774
        %9234 = vmatpush1.msra.mxu0 %v8773
        %9235 = vmatprep.subr.mxu0 %v8776
        %9236 = vmatpush1.msra.mxu0 %v8775
        %9237 = vmatprep.subr.mxu0 %v8778
        %9238 = vmatpush1.msra.mxu0 %v8777
        %9239 = vmatprep.subr.mxu0 %v8780
        %9240 = vmatpush1.msra.mxu0 %v8779
        %9241 = vmatprep.subr.mxu0 %v8782
        %9242 = vmatpush1.msra.mxu0 %v8781
        %9243 = vmatprep.subr.mxu0 %v8784
        %9244 = vmatpush1.msra.mxu0 %v8783
        %9245 = vmatprep.mubr.f32.mxu0 %v8404
        %9246 = vmatmul.mubr.f32.gmra.mrb[0].mxu0 %v8403
        %v9247 = vpop.f32.mrb[0].mxu0
        %v9248 = vadd.f32 %v8991, %v9247
        %v9249 = vpop.f32.mrb[0].mxu0
        %v9250 = vadd.f32 %v8993, %v9249
        %9251 = vmatprep.mubr.f32.mxu0 %v8412
        %9252 = vmatmul.mubr.f32.gmra.mrb[0].mxu0 %v8411
        %v9253 = vpop.f32.mrb[0].mxu0
        %v9254 = vadd.f32 %v8997, %v9253
        %v9255 = vpop.f32.mrb[0].mxu0
        %v9256 = vadd.f32 %v8999, %v9255
        %9257 = vmatprep.mubr.f32.mxu0 %v8420
        %9258 = vmatmul.mubr.f32.gmra.mrb[0].mxu0 %v8419
        %v9259 = vpop.f32.mrb[0].mxu0
        %v9260 = vadd.f32 %v9003, %v9259
        %v9261 = vpop.f32.mrb[0].mxu0
        %v9262 = vadd.f32 %v9005, %v9261
        %9263 = vmatprep.mubr.f32.mxu0 %v8428
        %9264 = vmatmul.mubr.f32.gmra.mrb[0].mxu0 %v8427
        %v9265 = vpop.f32.mrb[0].mxu0
        %v9266 = vadd.f32 %v9009, %v9265
        %v9267 = vpop.f32.mrb[0].mxu0
        %v9268 = vadd.f32 %v9011, %v9267
        %9269 = vmatprep.mubr.f32.mxu0 %v8436
        %9270 = vmatmul.mubr.f32.gmra.mrb[0].mxu0 %v8435
        %v9271 = vpop.f32.mrb[0].mxu0
        %v9272 = vadd.f32 %v9015, %v9271
        %v9273 = vpop.f32.mrb[0].mxu0
        %v9274 = vadd.f32 %v9017, %v9273
        %9275 = vmatprep.mubr.f32.mxu0 %v8444
        %9276 = vmatmul.mubr.f32.gmra.mrb[0].mxu0 %v8443
        %v9277 = vpop.f32.mrb[0].mxu0
        %v9278 = vadd.f32 %v9021, %v9277
        %v9279 = vpop.f32.mrb[0].mxu0
        %v9280 = vadd.f32 %v9023, %v9279
        %9281 = vmatprep.mubr.f32.mxu0 %v8452
        %9282 = vmatmul.mubr.f32.gmra.mrb[0].mxu0 %v8451
        %v9283 = vpop.f32.mrb[0].mxu0
        %v9284 = vadd.f32 %v9027, %v9283
        %v9285 = vpop.f32.mrb[0].mxu0
        %v9286 = vadd.f32 %v9029, %v9285
        %9287 = vmatprep.mubr.f32.mxu0 %v8460
        %9288 = vmatmul.mubr.f32.gmra.mrb[0].mxu0 %v8459
        %v9289 = vpop.f32.mrb[0].mxu0
        %v9290 = vadd.f32 %v9033, %v9289
        %v9291 = vpop.f32.mrb[0].mxu0
        %v9292 = vadd.f32 %v9035, %v9291
        %9293 = vmatprep.mubr.f32.mxu0 %v8468
        %9294 = vmatmul.mubr.f32.gmra.mrb[0].mxu0 %v8467
        %v9295 = vpop.f32.mrb[0].mxu0
        %v9296 = vadd.f32 %v9039, %v9295
        %v9297 = vpop.f32.mrb[0].mxu0
        %v9298 = vadd.f32 %v9041, %v9297
        %9299 = vmatprep.mubr.f32.mxu0 %v8476
        %9300 = vmatmul.mubr.f32.gmra.mrb[0].mxu0 %v8475
        %v9301 = vpop.f32.mrb[0].mxu0
        %v9302 = vadd.f32 %v9045, %v9301
        %v9303 = vpop.f32.mrb[0].mxu0
        %v9304 = vadd.f32 %v9047, %v9303
        %9305 = vmatprep.mubr.f32.mxu0 %v8484
        %9306 = vmatmul.mubr.f32.gmra.mrb[0].mxu0 %v8483
        %v9307 = vpop.f32.mrb[0].mxu0
        %v9308 = vadd.f32 %v9051, %v9307
        %v9309 = vpop.f32.mrb[0].mxu0
        %v9310 = vadd.f32 %v9053, %v9309
        %9311 = vmatprep.mubr.f32.mxu0 %v8492
        %9312 = vmatmul.mubr.f32.gmra.mrb[0].mxu0 %v8491
        %v9313 = vpop.f32.mrb[0].mxu0
        %v9314 = vadd.f32 %v9057, %v9313
        %v9315 = vpop.f32.mrb[0].mxu0
        %v9316 = vadd.f32 %v9059, %v9315
        %9317 = vmatprep.mubr.f32.mxu0 %v8500
        %9318 = vmatmul.mubr.f32.gmra.mrb[0].mxu0 %v8499
        %v9319 = vpop.f32.mrb[0].mxu0
        %v9320 = vadd.f32 %v9063, %v9319
        %v9321 = vpop.f32.mrb[0].mxu0
        %v9322 = vadd.f32 %v9065, %v9321
        %9323 = vmatprep.mubr.f32.mxu0 %v8508
        %9324 = vmatmul.mubr.f32.gmra.mrb[0].mxu0 %v8507
        %v9325 = vpop.f32.mrb[0].mxu0
        %v9326 = vadd.f32 %v9069, %v9325
        %v9327 = vpop.f32.mrb[0].mxu0
        %v9328 = vadd.f32 %v9071, %v9327
        %9329 = vmatprep.mubr.f32.mxu0 %v8516
        %9330 = vmatmul.mubr.f32.gmra.mrb[0].mxu0 %v8515
        %v9331 = vpop.f32.mrb[0].mxu0
        %v9332 = vadd.f32 %v9075, %v9331
        %v9333 = vpop.f32.mrb[0].mxu0
        %v9334 = vadd.f32 %v9077, %v9333
        %9335 = vmatprep.mubr.f32.mxu0 %v8524
        %9336 = vmatmul.mubr.f32.gmra.mrb[0].mxu0 %v8523
        %v9337 = vpop.f32.mrb[0].mxu0
        %v9338 = vadd.f32 %v9081, %v9337
        %v9339 = vpop.f32.mrb[0].mxu0
        %v9340 = vadd.f32 %v9083, %v9339
        %9341 = vmatprep.mubr.f32.mxu0 %v8532
        %9342 = vmatmul.mubr.f32.gmra.mrb[0].mxu0 %v8531
        %v9343 = vpop.f32.mrb[0].mxu0
        %v9344 = vadd.f32 %v9087, %v9343
        %v9345 = vpop.f32.mrb[0].mxu0
        %v9346 = vadd.f32 %v9089, %v9345
        %9347 = vmatprep.mubr.f32.mxu0 %v8540
        %9348 = vmatmul.mubr.f32.gmra.mrb[0].mxu0 %v8539
        %v9349 = vpop.f32.mrb[0].mxu0
        %v9350 = vadd.f32 %v9093, %v9349
        %v9351 = vpop.f32.mrb[0].mxu0
        %v9352 = vadd.f32 %v9095, %v9351
        %9353 = vmatprep.mubr.f32.mxu0 %v8548
        %9354 = vmatmul.mubr.f32.gmra.mrb[0].mxu0 %v8547
        %v9355 = vpop.f32.mrb[0].mxu0
        %v9356 = vadd.f32 %v9099, %v9355
        %v9357 = vpop.f32.mrb[0].mxu0
        %v9358 = vadd.f32 %v9101, %v9357
        %9359 = vmatprep.mubr.f32.mxu0 %v8556
        %9360 = vmatmul.mubr.f32.gmra.mrb[0].mxu0 %v8555
        %v9361 = vpop.f32.mrb[0].mxu0
        %v9362 = vadd.f32 %v9105, %v9361
        %v9363 = vpop.f32.mrb[0].mxu0
        %v9364 = vadd.f32 %v9107, %v9363
        %9365 = vmatprep.mubr.f32.mxu0 %v8564
        %9366 = vmatmul.mubr.f32.gmra.mrb[0].mxu0 %v8563
        %v9367 = vpop.f32.mrb[0].mxu0
        %v9368 = vadd.f32 %v9111, %v9367
        %v9369 = vpop.f32.mrb[0].mxu0
        %v9370 = vadd.f32 %v9113, %v9369
        %9371 = vmatprep.mubr.f32.mxu0 %v8572
        %9372 = vmatmul.mubr.f32.gmra.mrb[0].mxu0 %v8571
        %v9373 = vpop.f32.mrb[0].mxu0
        %v9374 = vadd.f32 %v9117, %v9373
        %v9375 = vpop.f32.mrb[0].mxu0
        %v9376 = vadd.f32 %v9119, %v9375
        %9377 = vmatprep.mubr.f32.mxu0 %v8580
        %9378 = vmatmul.mubr.f32.gmra.mrb[0].mxu0 %v8579
        %v9379 = vpop.f32.mrb[0].mxu0
        %v9380 = vadd.f32 %v9123, %v9379
        %v9381 = vpop.f32.mrb[0].mxu0
        %v9382 = vadd.f32 %v9125, %v9381
        %9383 = vmatprep.mubr.f32.mxu0 %v8588
        %9384 = vmatmul.mubr.f32.gmra.mrb[0].mxu0 %v8587
        %v9385 = vpop.f32.mrb[0].mxu0
        %v9386 = vadd.f32 %v9129, %v9385
        %v9387 = vpop.f32.mrb[0].mxu0
        %v9388 = vadd.f32 %v9131, %v9387
        %9389 = vmatprep.mubr.f32.mxu0 %v8596
        %9390 = vmatmul.mubr.f32.gmra.mrb[0].mxu0 %v8595
        %v9391 = vpop.f32.mrb[0].mxu0
        %v9392 = vadd.f32 %v9135, %v9391
        %v9393 = vpop.f32.mrb[0].mxu0
        %v9394 = vadd.f32 %v9137, %v9393
        %9395 = vmatprep.mubr.f32.mxu0 %v8604
        %9396 = vmatmul.mubr.f32.gmra.mrb[0].mxu0 %v8603
        %v9397 = vpop.f32.mrb[0].mxu0
        %v9398 = vadd.f32 %v9141, %v9397
        %v9399 = vpop.f32.mrb[0].mxu0
        %v9400 = vadd.f32 %v9143, %v9399
        %9401 = vmatprep.mubr.f32.mxu0 %v8612
        %9402 = vmatmul.mubr.f32.gmra.mrb[0].mxu0 %v8611
        %v9403 = vpop.f32.mrb[0].mxu0
        %v9404 = vadd.f32 %v9147, %v9403
        %v9405 = vpop.f32.mrb[0].mxu0
        %v9406 = vadd.f32 %v9149, %v9405
        %9407 = vmatprep.mubr.f32.mxu0 %v8620
        %9408 = vmatmul.mubr.f32.gmra.mrb[0].mxu0 %v8619
        %v9409 = vpop.f32.mrb[0].mxu0
        %v9410 = vadd.f32 %v9153, %v9409
        %v9411 = vpop.f32.mrb[0].mxu0
        %v9412 = vadd.f32 %v9155, %v9411
        %9413 = vmatprep.mubr.f32.mxu0 %v8628
        %9414 = vmatmul.mubr.f32.gmra.mrb[0].mxu0 %v8627
        %v9415 = vpop.f32.mrb[0].mxu0
        %v9416 = vadd.f32 %v9159, %v9415
        %v9417 = vpop.f32.mrb[0].mxu0
        %v9418 = vadd.f32 %v9161, %v9417
        %9419 = vmatprep.mubr.f32.mxu0 %v8636
        %9420 = vmatmul.mubr.f32.gmra.mrb[0].mxu0 %v8635
        %v9421 = vpop.f32.mrb[0].mxu0
        %v9422 = vadd.f32 %v9165, %v9421
        %v9423 = vpop.f32.mrb[0].mxu0
        %v9424 = vadd.f32 %v9167, %v9423
        %9425 = vmatprep.mubr.f32.mxu0 %v8644
        %9426 = vmatmul.mubr.f32.gmra.mrb[0].mxu0 %v8643
        %v9427 = vpop.f32.mrb[0].mxu0
        %v9428 = vadd.f32 %v9171, %v9427
        %v9429 = vpop.f32.mrb[0].mxu0
        %v9430 = vadd.f32 %v9173, %v9429
        %9431 = vmatprep.mubr.f32.mxu0 %v8652
        %9432 = vmatmul.mubr.f32.gmra.mrb[0].mxu0 %v8651
        %v9433 = vpop.f32.mrb[0].mxu0
        %v9434 = vadd.f32 %v9177, %v9433
        %v9435 = vpop.f32.mrb[0].mxu0
        %v9436 = vadd.f32 %v9179, %v9435
        %9437 = vdwg.mxu0
        %9438 = vmatprep.subr.mxu0 %v8786
        %9439 = vmatpush1.msra.mxu0 %v8785
        %9440 = vmatprep.subr.mxu0 %v8788
        %9441 = vmatpush1.msra.mxu0 %v8787
        %9442 = vmatprep.subr.mxu0 %v8790
        %9443 = vmatpush1.msra.mxu0 %v8789
        %9444 = vmatprep.subr.mxu0 %v8792
        %9445 = vmatpush1.msra.mxu0 %v8791
        %9446 = vmatprep.subr.mxu0 %v8794
        %9447 = vmatpush1.msra.mxu0 %v8793
        %9448 = vmatprep.subr.mxu0 %v8796
        %9449 = vmatpush1.msra.mxu0 %v8795
        %9450 = vmatprep.subr.mxu0 %v8798
        %9451 = vmatpush1.msra.mxu0 %v8797
        %9452 = vmatprep.subr.mxu0 %v8800
        %9453 = vmatpush1.msra.mxu0 %v8799
        %9454 = vmatprep.subr.mxu0 %v8802
        %9455 = vmatpush1.msra.mxu0 %v8801
        %9456 = vmatprep.subr.mxu0 %v8804
        %9457 = vmatpush1.msra.mxu0 %v8803
        %9458 = vmatprep.subr.mxu0 %v8806
        %9459 = vmatpush1.msra.mxu0 %v8805
        %9460 = vmatprep.subr.mxu0 %v8808
        %9461 = vmatpush1.msra.mxu0 %v8807
        %9462 = vmatprep.subr.mxu0 %v8810
        %9463 = vmatpush1.msra.mxu0 %v8809
        %9464 = vmatprep.subr.mxu0 %v8812
        %9465 = vmatpush1.msra.mxu0 %v8811
        %9466 = vmatprep.subr.mxu0 %v8814
        %9467 = vmatpush1.msra.mxu0 %v8813
        %9468 = vmatprep.subr.mxu0 %v8816
        %9469 = vmatpush1.msra.mxu0 %v8815
        %9470 = vmatprep.subr.mxu0 %v8818
        %9471 = vmatpush1.msra.mxu0 %v8817
        %9472 = vmatprep.subr.mxu0 %v8820
        %9473 = vmatpush1.msra.mxu0 %v8819
        %9474 = vmatprep.subr.mxu0 %v8822
        %9475 = vmatpush1.msra.mxu0 %v8821
        %9476 = vmatprep.subr.mxu0 %v8824
        %9477 = vmatpush1.msra.mxu0 %v8823
        %9478 = vmatprep.subr.mxu0 %v8826
        %9479 = vmatpush1.msra.mxu0 %v8825
        %9480 = vmatprep.subr.mxu0 %v8828
        %9481 = vmatpush1.msra.mxu0 %v8827
        %9482 = vmatprep.subr.mxu0 %v8830
        %9483 = vmatpush1.msra.mxu0 %v8829
        %9484 = vmatprep.subr.mxu0 %v8832
        %9485 = vmatpush1.msra.mxu0 %v8831
        %9486 = vmatprep.subr.mxu0 %v8834
        %9487 = vmatpush1.msra.mxu0 %v8833
        %9488 = vmatprep.subr.mxu0 %v8836
        %9489 = vmatpush1.msra.mxu0 %v8835
        %9490 = vmatprep.subr.mxu0 %v8838
        %9491 = vmatpush1.msra.mxu0 %v8837
        %9492 = vmatprep.subr.mxu0 %v8840
        %9493 = vmatpush1.msra.mxu0 %v8839
        %9494 = vmatprep.subr.mxu0 %v8842
        %9495 = vmatpush1.msra.mxu0 %v8841
        %9496 = vmatprep.subr.mxu0 %v8844
        %9497 = vmatpush1.msra.mxu0 %v8843
        %9498 = vmatprep.subr.mxu0 %v8846
        %9499 = vmatpush1.msra.mxu0 %v8845
        %9500 = vmatprep.subr.mxu0 %v8848
        %9501 = vmatpush1.msra.mxu0 %v8847
        %9502 = vmatprep.mubr.f32.mxu0 %v8406
        %9503 = vmatmul.mubr.f32.gmra.mrb[0].mxu0 %v8405
        %v9504 = vpop.f32.mrb[0].mxu0
        %v9505 = vadd.f32 %v9248, %v9504
        %v9506 = vpop.f32.mrb[0].mxu0
        %v9507 = vadd.f32 %v9250, %v9506
        %9508 = vmatprep.mubr.f32.mxu0 %v8414
        %9509 = vmatmul.mubr.f32.gmra.mrb[0].mxu0 %v8413
        %v9510 = vpop.f32.mrb[0].mxu0
        %v9511 = vadd.f32 %v9254, %v9510
        %v9512 = vpop.f32.mrb[0].mxu0
        %v9513 = vadd.f32 %v9256, %v9512
        %9514 = vmatprep.mubr.f32.mxu0 %v8422
        %9515 = vmatmul.mubr.f32.gmra.mrb[0].mxu0 %v8421
        %v9516 = vpop.f32.mrb[0].mxu0
        %v9517 = vadd.f32 %v9260, %v9516
        %v9518 = vpop.f32.mrb[0].mxu0
        %v9519 = vadd.f32 %v9262, %v9518
        %9520 = vmatprep.mubr.f32.mxu0 %v8430
        %9521 = vmatmul.mubr.f32.gmra.mrb[0].mxu0 %v8429
        %v9522 = vpop.f32.mrb[0].mxu0
        %v9523 = vadd.f32 %v9266, %v9522
        %v9524 = vpop.f32.mrb[0].mxu0
        %v9525 = vadd.f32 %v9268, %v9524
        %9526 = vmatprep.mubr.f32.mxu0 %v8438
        %9527 = vmatmul.mubr.f32.gmra.mrb[0].mxu0 %v8437
        %v9528 = vpop.f32.mrb[0].mxu0
        %v9529 = vadd.f32 %v9272, %v9528
        %v9530 = vpop.f32.mrb[0].mxu0
        %v9531 = vadd.f32 %v9274, %v9530
        %9532 = vmatprep.mubr.f32.mxu0 %v8446
        %9533 = vmatmul.mubr.f32.gmra.mrb[0].mxu0 %v8445
        %v9534 = vpop.f32.mrb[0].mxu0
        %v9535 = vadd.f32 %v9278, %v9534
        %v9536 = vpop.f32.mrb[0].mxu0
        %v9537 = vadd.f32 %v9280, %v9536
        %9538 = vmatprep.mubr.f32.mxu0 %v8454
        %9539 = vmatmul.mubr.f32.gmra.mrb[0].mxu0 %v8453
        %v9540 = vpop.f32.mrb[0].mxu0
        %v9541 = vadd.f32 %v9284, %v9540
        %v9542 = vpop.f32.mrb[0].mxu0
        %v9543 = vadd.f32 %v9286, %v9542
        %9544 = vmatprep.mubr.f32.mxu0 %v8462
        %9545 = vmatmul.mubr.f32.gmra.mrb[0].mxu0 %v8461
        %v9546 = vpop.f32.mrb[0].mxu0
        %v9547 = vadd.f32 %v9290, %v9546
        %v9548 = vpop.f32.mrb[0].mxu0
        %v9549 = vadd.f32 %v9292, %v9548
        %9550 = vmatprep.mubr.f32.mxu0 %v8470
        %9551 = vmatmul.mubr.f32.gmra.mrb[0].mxu0 %v8469
        %v9552 = vpop.f32.mrb[0].mxu0
        %v9553 = vadd.f32 %v9296, %v9552
        %v9554 = vpop.f32.mrb[0].mxu0
        %v9555 = vadd.f32 %v9298, %v9554
        %9556 = vmatprep.mubr.f32.mxu0 %v8478
        %9557 = vmatmul.mubr.f32.gmra.mrb[0].mxu0 %v8477
        %v9558 = vpop.f32.mrb[0].mxu0
        %v9559 = vadd.f32 %v9302, %v9558
        %v9560 = vpop.f32.mrb[0].mxu0
        %v9561 = vadd.f32 %v9304, %v9560
        %9562 = vmatprep.mubr.f32.mxu0 %v8486
        %9563 = vmatmul.mubr.f32.gmra.mrb[0].mxu0 %v8485
        %v9564 = vpop.f32.mrb[0].mxu0
        %v9565 = vadd.f32 %v9308, %v9564
        %v9566 = vpop.f32.mrb[0].mxu0
        %v9567 = vadd.f32 %v9310, %v9566
        %9568 = vmatprep.mubr.f32.mxu0 %v8494
        %9569 = vmatmul.mubr.f32.gmra.mrb[0].mxu0 %v8493
        %v9570 = vpop.f32.mrb[0].mxu0
        %v9571 = vadd.f32 %v9314, %v9570
        %v9572 = vpop.f32.mrb[0].mxu0
        %v9573 = vadd.f32 %v9316, %v9572
        %9574 = vmatprep.mubr.f32.mxu0 %v8502
        %9575 = vmatmul.mubr.f32.gmra.mrb[0].mxu0 %v8501
        %v9576 = vpop.f32.mrb[0].mxu0
        %v9577 = vadd.f32 %v9320, %v9576
        %v9578 = vpop.f32.mrb[0].mxu0
        %v9579 = vadd.f32 %v9322, %v9578
        %9580 = vmatprep.mubr.f32.mxu0 %v8510
        %9581 = vmatmul.mubr.f32.gmra.mrb[0].mxu0 %v8509
        %v9582 = vpop.f32.mrb[0].mxu0
        %v9583 = vadd.f32 %v9326, %v9582
        %v9584 = vpop.f32.mrb[0].mxu0
        %v9585 = vadd.f32 %v9328, %v9584
        %9586 = vmatprep.mubr.f32.mxu0 %v8518
        %9587 = vmatmul.mubr.f32.gmra.mrb[0].mxu0 %v8517
        %v9588 = vpop.f32.mrb[0].mxu0
        %v9589 = vadd.f32 %v9332, %v9588
        %v9590 = vpop.f32.mrb[0].mxu0
        %v9591 = vadd.f32 %v9334, %v9590
        %9592 = vmatprep.mubr.f32.mxu0 %v8526
        %9593 = vmatmul.mubr.f32.gmra.mrb[0].mxu0 %v8525
        %v9594 = vpop.f32.mrb[0].mxu0
        %v9595 = vadd.f32 %v9338, %v9594
        %v9596 = vpop.f32.mrb[0].mxu0
        %v9597 = vadd.f32 %v9340, %v9596
        %9598 = vmatprep.mubr.f32.mxu0 %v8534
        %9599 = vmatmul.mubr.f32.gmra.mrb[0].mxu0 %v8533
        %v9600 = vpop.f32.mrb[0].mxu0
        %v9601 = vadd.f32 %v9344, %v9600
        %v9602 = vpop.f32.mrb[0].mxu0
        %v9603 = vadd.f32 %v9346, %v9602
        %9604 = vmatprep.mubr.f32.mxu0 %v8542
        %9605 = vmatmul.mubr.f32.gmra.mrb[0].mxu0 %v8541
        %v9606 = vpop.f32.mrb[0].mxu0
        %v9607 = vadd.f32 %v9350, %v9606
        %v9608 = vpop.f32.mrb[0].mxu0
        %v9609 = vadd.f32 %v9352, %v9608
        %9610 = vmatprep.mubr.f32.mxu0 %v8550
        %9611 = vmatmul.mubr.f32.gmra.mrb[0].mxu0 %v8549
        %v9612 = vpop.f32.mrb[0].mxu0
        %v9613 = vadd.f32 %v9356, %v9612
        %v9614 = vpop.f32.mrb[0].mxu0
        %v9615 = vadd.f32 %v9358, %v9614
        %9616 = vmatprep.mubr.f32.mxu0 %v8558
        %9617 = vmatmul.mubr.f32.gmra.mrb[0].mxu0 %v8557
        %v9618 = vpop.f32.mrb[0].mxu0
        %v9619 = vadd.f32 %v9362, %v9618
        %v9620 = vpop.f32.mrb[0].mxu0
        %v9621 = vadd.f32 %v9364, %v9620
        %9622 = vmatprep.mubr.f32.mxu0 %v8566
        %9623 = vmatmul.mubr.f32.gmra.mrb[0].mxu0 %v8565
        %v9624 = vpop.f32.mrb[0].mxu0
        %v9625 = vadd.f32 %v9368, %v9624
        %v9626 = vpop.f32.mrb[0].mxu0
        %v9627 = vadd.f32 %v9370, %v9626
        %9628 = vmatprep.mubr.f32.mxu0 %v8574
        %9629 = vmatmul.mubr.f32.gmra.mrb[0].mxu0 %v8573
        %v9630 = vpop.f32.mrb[0].mxu0
        %v9631 = vadd.f32 %v9374, %v9630
        %v9632 = vpop.f32.mrb[0].mxu0
        %v9633 = vadd.f32 %v9376, %v9632
        %9634 = vmatprep.mubr.f32.mxu0 %v8582
        %9635 = vmatmul.mubr.f32.gmra.mrb[0].mxu0 %v8581
        %v9636 = vpop.f32.mrb[0].mxu0
        %v9637 = vadd.f32 %v9380, %v9636
        %v9638 = vpop.f32.mrb[0].mxu0
        %v9639 = vadd.f32 %v9382, %v9638
        %9640 = vmatprep.mubr.f32.mxu0 %v8590
        %9641 = vmatmul.mubr.f32.gmra.mrb[0].mxu0 %v8589
        %v9642 = vpop.f32.mrb[0].mxu0
        %v9643 = vadd.f32 %v9386, %v9642
        %v9644 = vpop.f32.mrb[0].mxu0
        %v9645 = vadd.f32 %v9388, %v9644
        %9646 = vmatprep.mubr.f32.mxu0 %v8598
        %9647 = vmatmul.mubr.f32.gmra.mrb[0].mxu0 %v8597
        %v9648 = vpop.f32.mrb[0].mxu0
        %v9649 = vadd.f32 %v9392, %v9648
        %v9650 = vpop.f32.mrb[0].mxu0
        %v9651 = vadd.f32 %v9394, %v9650
        %9652 = vmatprep.mubr.f32.mxu0 %v8606
        %9653 = vmatmul.mubr.f32.gmra.mrb[0].mxu0 %v8605
        %v9654 = vpop.f32.mrb[0].mxu0
        %v9655 = vadd.f32 %v9398, %v9654
        %v9656 = vpop.f32.mrb[0].mxu0
        %v9657 = vadd.f32 %v9400, %v9656
        %9658 = vmatprep.mubr.f32.mxu0 %v8614
        %9659 = vmatmul.mubr.f32.gmra.mrb[0].mxu0 %v8613
        %v9660 = vpop.f32.mrb[0].mxu0
        %v9661 = vadd.f32 %v9404, %v9660
        %v9662 = vpop.f32.mrb[0].mxu0
        %v9663 = vadd.f32 %v9406, %v9662
        %9664 = vmatprep.mubr.f32.mxu0 %v8622
        %9665 = vmatmul.mubr.f32.gmra.mrb[0].mxu0 %v8621
        %v9666 = vpop.f32.mrb[0].mxu0
        %v9667 = vadd.f32 %v9410, %v9666
        %v9668 = vpop.f32.mrb[0].mxu0
        %v9669 = vadd.f32 %v9412, %v9668
        %9670 = vmatprep.mubr.f32.mxu0 %v8630
        %9671 = vmatmul.mubr.f32.gmra.mrb[0].mxu0 %v8629
        %v9672 = vpop.f32.mrb[0].mxu0
        %v9673 = vadd.f32 %v9416, %v9672
        %v9674 = vpop.f32.mrb[0].mxu0
        %v9675 = vadd.f32 %v9418, %v9674
        %9676 = vmatprep.mubr.f32.mxu0 %v8638
        %9677 = vmatmul.mubr.f32.gmra.mrb[0].mxu0 %v8637
        %v9678 = vpop.f32.mrb[0].mxu0
        %v9679 = vadd.f32 %v9422, %v9678
        %v9680 = vpop.f32.mrb[0].mxu0
        %v9681 = vadd.f32 %v9424, %v9680
        %9682 = vmatprep.mubr.f32.mxu0 %v8646
        %9683 = vmatmul.mubr.f32.gmra.mrb[0].mxu0 %v8645
        %v9684 = vpop.f32.mrb[0].mxu0
        %v9685 = vadd.f32 %v9428, %v9684
        %v9686 = vpop.f32.mrb[0].mxu0
        %v9687 = vadd.f32 %v9430, %v9686
        %9688 = vmatprep.mubr.f32.mxu0 %v8654
        %9689 = vmatmul.mubr.f32.gmra.mrb[0].mxu0 %v8653
        %v9690 = vpop.f32.mrb[0].mxu0
        %v9691 = vadd.f32 %v9434, %v9690
        %v9692 = vpop.f32.mrb[0].mxu0
        %v9693 = vadd.f32 %v9436, %v9692
        %9694 = vdwg.mxu0
        %9695 = vmatprep.subr.mxu0 %v8850
        %9696 = vmatpush1.msra.mxu0 %v8849
        %9697 = vmatprep.subr.mxu0 %v8852
        %9698 = vmatpush1.msra.mxu0 %v8851
        %9699 = vmatprep.subr.mxu0 %v8854
        %9700 = vmatpush1.msra.mxu0 %v8853
        %9701 = vmatprep.subr.mxu0 %v8856
        %9702 = vmatpush1.msra.mxu0 %v8855
        %9703 = vmatprep.subr.mxu0 %v8858
        %9704 = vmatpush1.msra.mxu0 %v8857
        %9705 = vmatprep.subr.mxu0 %v8860
        %9706 = vmatpush1.msra.mxu0 %v8859
        %9707 = vmatprep.subr.mxu0 %v8862
        %9708 = vmatpush1.msra.mxu0 %v8861
        %9709 = vmatprep.subr.mxu0 %v8864
        %9710 = vmatpush1.msra.mxu0 %v8863
        %9711 = vmatprep.subr.mxu0 %v8866
        %9712 = vmatpush1.msra.mxu0 %v8865
        %9713 = vmatprep.subr.mxu0 %v8868
        %9714 = vmatpush1.msra.mxu0 %v8867
        %9715 = vmatprep.subr.mxu0 %v8870
        %9716 = vmatpush1.msra.mxu0 %v8869
        %9717 = vmatprep.subr.mxu0 %v8872
        %9718 = vmatpush1.msra.mxu0 %v8871
        %9719 = vmatprep.subr.mxu0 %v8874
        %9720 = vmatpush1.msra.mxu0 %v8873
        %9721 = vmatprep.subr.mxu0 %v8876
        %9722 = vmatpush1.msra.mxu0 %v8875
        %9723 = vmatprep.subr.mxu0 %v8878
        %9724 = vmatpush1.msra.mxu0 %v8877
        %9725 = vmatprep.subr.mxu0 %v8880
        %9726 = vmatpush1.msra.mxu0 %v8879
        %9727 = vmatprep.subr.mxu0 %v8882
        %9728 = vmatpush1.msra.mxu0 %v8881
        %9729 = vmatprep.subr.mxu0 %v8884
        %9730 = vmatpush1.msra.mxu0 %v8883
        %9731 = vmatprep.subr.mxu0 %v8886
        %9732 = vmatpush1.msra.mxu0 %v8885
        %9733 = vmatprep.subr.mxu0 %v8888
        %9734 = vmatpush1.msra.mxu0 %v8887
        %9735 = vmatprep.subr.mxu0 %v8890
        %9736 = vmatpush1.msra.mxu0 %v8889
        %9737 = vmatprep.subr.mxu0 %v8892
        %9738 = vmatpush1.msra.mxu0 %v8891
        %9739 = vmatprep.subr.mxu0 %v8894
        %9740 = vmatpush1.msra.mxu0 %v8893
        %9741 = vmatprep.subr.mxu0 %v8896
        %9742 = vmatpush1.msra.mxu0 %v8895
        %9743 = vmatprep.subr.mxu0 %v8898
        %9744 = vmatpush1.msra.mxu0 %v8897
        %9745 = vmatprep.subr.mxu0 %v8900
        %9746 = vmatpush1.msra.mxu0 %v8899
        %9747 = vmatprep.subr.mxu0 %v8902
        %9748 = vmatpush1.msra.mxu0 %v8901
        %9749 = vmatprep.subr.mxu0 %v8904
        %9750 = vmatpush1.msra.mxu0 %v8903
        %9751 = vmatprep.subr.mxu0 %v8906
        %9752 = vmatpush1.msra.mxu0 %v8905
        %9753 = vmatprep.subr.mxu0 %v8908
        %9754 = vmatpush1.msra.mxu0 %v8907
        %9755 = vmatprep.subr.mxu0 %v8910
        %9756 = vmatpush1.msra.mxu0 %v8909
        %9757 = vmatprep.subr.mxu0 %v8912
        %9758 = vmatpush1.msra.mxu0 %v8911
        %9759 = vmatprep.mubr.f32.mxu0 %v8408
        %9760 = vmatmul.mubr.f32.gmra.mrb[0].mxu0 %v8407
        %v9761 = vpop.f32.mrb[0].mxu0
        %v9762 = vadd.f32 %v9505, %v9761
        %v9763 = vpop.f32.mrb[0].mxu0
        %v9764 = vadd.f32 %v9507, %v9763
        %9765 = vmatprep.mubr.f32.mxu0 %v8416
        %9766 = vmatmul.mubr.f32.gmra.mrb[0].mxu0 %v8415
        %v9767 = vpop.f32.mrb[0].mxu0
        %v9768 = vadd.f32 %v9511, %v9767
        %v9769 = vpop.f32.mrb[0].mxu0
        %v9770 = vadd.f32 %v9513, %v9769
        %9771 = vmatprep.mubr.f32.mxu0 %v8424
        %9772 = vmatmul.mubr.f32.gmra.mrb[0].mxu0 %v8423
        %v9773 = vpop.f32.mrb[0].mxu0
        %v9774 = vadd.f32 %v9517, %v9773
        %v9775 = vpop.f32.mrb[0].mxu0
        %v9776 = vadd.f32 %v9519, %v9775
        %9777 = vmatprep.mubr.f32.mxu0 %v8432
        %9778 = vmatmul.mubr.f32.gmra.mrb[0].mxu0 %v8431
        %v9779 = vpop.f32.mrb[0].mxu0
        %v9780 = vadd.f32 %v9523, %v9779
        %v9781 = vpop.f32.mrb[0].mxu0
        %v9782 = vadd.f32 %v9525, %v9781
        %9783 = vmatprep.mubr.f32.mxu0 %v8440
        %9784 = vmatmul.mubr.f32.gmra.mrb[0].mxu0 %v8439
        %v9785 = vpop.f32.mrb[0].mxu0
        %v9786 = vadd.f32 %v9529, %v9785
        %v9787 = vpop.f32.mrb[0].mxu0
        %v9788 = vadd.f32 %v9531, %v9787
        %9789 = vmatprep.mubr.f32.mxu0 %v8448
        %9790 = vmatmul.mubr.f32.gmra.mrb[0].mxu0 %v8447
        %v9791 = vpop.f32.mrb[0].mxu0
        %v9792 = vadd.f32 %v9535, %v9791
        %v9793 = vpop.f32.mrb[0].mxu0
        %v9794 = vadd.f32 %v9537, %v9793
        %9795 = vmatprep.mubr.f32.mxu0 %v8456
        %9796 = vmatmul.mubr.f32.gmra.mrb[0].mxu0 %v8455
        %v9797 = vpop.f32.mrb[0].mxu0
        %v9798 = vadd.f32 %v9541, %v9797
        %v9799 = vpop.f32.mrb[0].mxu0
        %v9800 = vadd.f32 %v9543, %v9799
        %9801 = vmatprep.mubr.f32.mxu0 %v8464
        %9802 = vmatmul.mubr.f32.gmra.mrb[0].mxu0 %v8463
        %v9803 = vpop.f32.mrb[0].mxu0
        %v9804 = vadd.f32 %v9547, %v9803
        %v9805 = vpop.f32.mrb[0].mxu0
        %v9806 = vadd.f32 %v9549, %v9805
        %9807 = vmatprep.mubr.f32.mxu0 %v8472
        %9808 = vmatmul.mubr.f32.gmra.mrb[0].mxu0 %v8471
        %v9809 = vpop.f32.mrb[0].mxu0
        %v9810 = vadd.f32 %v9553, %v9809
        %v9811 = vpop.f32.mrb[0].mxu0
        %v9812 = vadd.f32 %v9555, %v9811
        %9813 = vmatprep.mubr.f32.mxu0 %v8480
        %9814 = vmatmul.mubr.f32.gmra.mrb[0].mxu0 %v8479
        %v9815 = vpop.f32.mrb[0].mxu0
        %v9816 = vadd.f32 %v9559, %v9815
        %v9817 = vpop.f32.mrb[0].mxu0
        %v9818 = vadd.f32 %v9561, %v9817
        %9819 = vmatprep.mubr.f32.mxu0 %v8488
        %9820 = vmatmul.mubr.f32.gmra.mrb[0].mxu0 %v8487
        %v9821 = vpop.f32.mrb[0].mxu0
        %v9822 = vadd.f32 %v9565, %v9821
        %v9823 = vpop.f32.mrb[0].mxu0
        %v9824 = vadd.f32 %v9567, %v9823
        %9825 = vmatprep.mubr.f32.mxu0 %v8496
        %9826 = vmatmul.mubr.f32.gmra.mrb[0].mxu0 %v8495
        %v9827 = vpop.f32.mrb[0].mxu0
        %v9828 = vadd.f32 %v9571, %v9827
        %v9829 = vpop.f32.mrb[0].mxu0
        %v9830 = vadd.f32 %v9573, %v9829
        %9831 = vmatprep.mubr.f32.mxu0 %v8504
        %9832 = vmatmul.mubr.f32.gmra.mrb[0].mxu0 %v8503
        %v9833 = vpop.f32.mrb[0].mxu0
        %v9834 = vadd.f32 %v9577, %v9833
        %v9835 = vpop.f32.mrb[0].mxu0
        %v9836 = vadd.f32 %v9579, %v9835
        %9837 = vmatprep.mubr.f32.mxu0 %v8512
        %9838 = vmatmul.mubr.f32.gmra.mrb[0].mxu0 %v8511
        %v9839 = vpop.f32.mrb[0].mxu0
        %v9840 = vadd.f32 %v9583, %v9839
        %v9841 = vpop.f32.mrb[0].mxu0
        %v9842 = vadd.f32 %v9585, %v9841
        %9843 = vmatprep.mubr.f32.mxu0 %v8520
        %9844 = vmatmul.mubr.f32.gmra.mrb[0].mxu0 %v8519
        %v9845 = vpop.f32.mrb[0].mxu0
        %v9846 = vadd.f32 %v9589, %v9845
        %v9847 = vpop.f32.mrb[0].mxu0
        %v9848 = vadd.f32 %v9591, %v9847
        %9849 = vmatprep.mubr.f32.mxu0 %v8528
        %9850 = vmatmul.mubr.f32.gmra.mrb[0].mxu0 %v8527
        %v9851 = vpop.f32.mrb[0].mxu0
        %v9852 = vadd.f32 %v9595, %v9851
        %v9853 = vpop.f32.mrb[0].mxu0
        %v9854 = vadd.f32 %v9597, %v9853
        %9855 = vmatprep.mubr.f32.mxu0 %v8536
        %9856 = vmatmul.mubr.f32.gmra.mrb[0].mxu0 %v8535
        %v9857 = vpop.f32.mrb[0].mxu0
        %v9858 = vadd.f32 %v9601, %v9857
        %v9859 = vpop.f32.mrb[0].mxu0
        %v9860 = vadd.f32 %v9603, %v9859
        %9861 = vmatprep.mubr.f32.mxu0 %v8544
        %9862 = vmatmul.mubr.f32.gmra.mrb[0].mxu0 %v8543
        %v9863 = vpop.f32.mrb[0].mxu0
        %v9864 = vadd.f32 %v9607, %v9863
        %v9865 = vpop.f32.mrb[0].mxu0
        %v9866 = vadd.f32 %v9609, %v9865
        %9867 = vmatprep.mubr.f32.mxu0 %v8552
        %9868 = vmatmul.mubr.f32.gmra.mrb[0].mxu0 %v8551
        %v9869 = vpop.f32.mrb[0].mxu0
        %v9870 = vadd.f32 %v9613, %v9869
        %v9871 = vpop.f32.mrb[0].mxu0
        %v9872 = vadd.f32 %v9615, %v9871
        %9873 = vmatprep.mubr.f32.mxu0 %v8560
        %9874 = vmatmul.mubr.f32.gmra.mrb[0].mxu0 %v8559
        %v9875 = vpop.f32.mrb[0].mxu0
        %v9876 = vadd.f32 %v9619, %v9875
        %v9877 = vpop.f32.mrb[0].mxu0
        %v9878 = vadd.f32 %v9621, %v9877
        %9879 = vmatprep.mubr.f32.mxu0 %v8568
        %9880 = vmatmul.mubr.f32.gmra.mrb[0].mxu0 %v8567
        %v9881 = vpop.f32.mrb[0].mxu0
        %v9882 = vadd.f32 %v9625, %v9881
        %v9883 = vpop.f32.mrb[0].mxu0
        %v9884 = vadd.f32 %v9627, %v9883
        %9885 = vmatprep.mubr.f32.mxu0 %v8576
        %9886 = vmatmul.mubr.f32.gmra.mrb[0].mxu0 %v8575
        %v9887 = vpop.f32.mrb[0].mxu0
        %v9888 = vadd.f32 %v9631, %v9887
        %v9889 = vpop.f32.mrb[0].mxu0
        %v9890 = vadd.f32 %v9633, %v9889
        %9891 = vmatprep.mubr.f32.mxu0 %v8584
        %9892 = vmatmul.mubr.f32.gmra.mrb[0].mxu0 %v8583
        %v9893 = vpop.f32.mrb[0].mxu0
        %v9894 = vadd.f32 %v9637, %v9893
        %v9895 = vpop.f32.mrb[0].mxu0
        %v9896 = vadd.f32 %v9639, %v9895
        %9897 = vmatprep.mubr.f32.mxu0 %v8592
        %9898 = vmatmul.mubr.f32.gmra.mrb[0].mxu0 %v8591
        %v9899 = vpop.f32.mrb[0].mxu0
        %v9900 = vadd.f32 %v9643, %v9899
        %v9901 = vpop.f32.mrb[0].mxu0
        %v9902 = vadd.f32 %v9645, %v9901
        %9903 = vmatprep.mubr.f32.mxu0 %v8600
        %9904 = vmatmul.mubr.f32.gmra.mrb[0].mxu0 %v8599
        %v9905 = vpop.f32.mrb[0].mxu0
        %v9906 = vadd.f32 %v9649, %v9905
        %v9907 = vpop.f32.mrb[0].mxu0
        %v9908 = vadd.f32 %v9651, %v9907
        %9909 = vmatprep.mubr.f32.mxu0 %v8608
        %9910 = vmatmul.mubr.f32.gmra.mrb[0].mxu0 %v8607
        %v9911 = vpop.f32.mrb[0].mxu0
        %v9912 = vadd.f32 %v9655, %v9911
        %v9913 = vpop.f32.mrb[0].mxu0
        %v9914 = vadd.f32 %v9657, %v9913
        %9915 = vmatprep.mubr.f32.mxu0 %v8616
        %9916 = vmatmul.mubr.f32.gmra.mrb[0].mxu0 %v8615
        %v9917 = vpop.f32.mrb[0].mxu0
        %v9918 = vadd.f32 %v9661, %v9917
        %v9919 = vpop.f32.mrb[0].mxu0
        %v9920 = vadd.f32 %v9663, %v9919
        %9921 = vmatprep.mubr.f32.mxu0 %v8624
        %9922 = vmatmul.mubr.f32.gmra.mrb[0].mxu0 %v8623
        %v9923 = vpop.f32.mrb[0].mxu0
        %v9924 = vadd.f32 %v9667, %v9923
        %v9925 = vpop.f32.mrb[0].mxu0
        %v9926 = vadd.f32 %v9669, %v9925
        %9927 = vmatprep.mubr.f32.mxu0 %v8632
        %9928 = vmatmul.mubr.f32.gmra.mrb[0].mxu0 %v8631
        %v9929 = vpop.f32.mrb[0].mxu0
        %v9930 = vadd.f32 %v9673, %v9929
        %v9931 = vpop.f32.mrb[0].mxu0
        %v9932 = vadd.f32 %v9675, %v9931
        %9933 = vmatprep.mubr.f32.mxu0 %v8640
        %9934 = vmatmul.mubr.f32.gmra.mrb[0].mxu0 %v8639
        %v9935 = vpop.f32.mrb[0].mxu0
        %v9936 = vadd.f32 %v9679, %v9935
        %v9937 = vpop.f32.mrb[0].mxu0
        %v9938 = vadd.f32 %v9681, %v9937
        %9939 = vmatprep.mubr.f32.mxu0 %v8648
        %9940 = vmatmul.mubr.f32.gmra.mrb[0].mxu0 %v8647
        %v9941 = vpop.f32.mrb[0].mxu0
        %v9942 = vadd.f32 %v9685, %v9941
        %v9943 = vpop.f32.mrb[0].mxu0
        %v9944 = vadd.f32 %v9687, %v9943
        %9945 = vmatprep.mubr.f32.mxu0 %v8656
        %9946 = vmatmul.mubr.f32.gmra.mrb[0].mxu0 %v8655
        %v9947 = vpop.f32.mrb[0].mxu0
        %v9948 = vadd.f32 %v9691, %v9947
        %v9949 = vpop.f32.mrb[0].mxu0
        %v9950 = vadd.f32 %v9693, %v9949
        %9951 = vdwg.mxu0
        %v9952 = vadd.f32 %v4302, %v9762
        %v9953 = vadd.f32 %v4303, %v9764
        %v9954 = vadd.f32 %v4304, %v9768
        %v9955 = vadd.f32 %v4305, %v9770
        %v9956 = vadd.f32 %v4306, %v9774
        %v9957 = vadd.f32 %v4307, %v9776
        %v9958 = vadd.f32 %v4308, %v9780
        %v9959 = vadd.f32 %v4309, %v9782
        %v9960 = vadd.f32 %v4310, %v9786
        %v9961 = vadd.f32 %v4311, %v9788
        %v9962 = vadd.f32 %v4312, %v9792
        %v9963 = vadd.f32 %v4313, %v9794
        %v9964 = vadd.f32 %v4314, %v9798
        %v9965 = vadd.f32 %v4315, %v9800
        %v9966 = vadd.f32 %v4316, %v9804
        %v9967 = vadd.f32 %v4317, %v9806
        %v9968 = vadd.f32 %v4318, %v9810
        %v9969 = vadd.f32 %v4319, %v9812
        %v9970 = vadd.f32 %v4320, %v9816
        %v9971 = vadd.f32 %v4321, %v9818
        %v9972 = vadd.f32 %v4322, %v9822
        %v9973 = vadd.f32 %v4323, %v9824
        %v9974 = vadd.f32 %v4324, %v9828
        %v9975 = vadd.f32 %v4325, %v9830
        %v9976 = vadd.f32 %v4326, %v9834
        %v9977 = vadd.f32 %v4327, %v9836
        %v9978 = vadd.f32 %v4328, %v9840
        %v9979 = vadd.f32 %v4329, %v9842
        %v9980 = vadd.f32 %v4330, %v9846
        %v9981 = vadd.f32 %v4331, %v9848
        %v9982 = vadd.f32 %v4332, %v9852
        %v9983 = vadd.f32 %v4333, %v9854
        %v9984 = vadd.f32 %v4334, %v9858
        %v9985 = vadd.f32 %v4335, %v9860
        %v9986 = vadd.f32 %v4336, %v9864
        %v9987 = vadd.f32 %v4337, %v9866
        %v9988 = vadd.f32 %v4338, %v9870
        %v9989 = vadd.f32 %v4339, %v9872
        %v9990 = vadd.f32 %v4340, %v9876
        %v9991 = vadd.f32 %v4341, %v9878
        %v9992 = vadd.f32 %v4342, %v9882
        %v9993 = vadd.f32 %v4343, %v9884
        %v9994 = vadd.f32 %v4344, %v9888
        %v9995 = vadd.f32 %v4345, %v9890
        %v9996 = vadd.f32 %v4346, %v9894
        %v9997 = vadd.f32 %v4347, %v9896
        %v9998 = vadd.f32 %v4348, %v9900
        %v9999 = vadd.f32 %v4349, %v9902
        %v10000 = vadd.f32 %v4350, %v9906
        %v10001 = vadd.f32 %v4351, %v9908
        %v10002 = vadd.f32 %v4352, %v9912
        %v10003 = vadd.f32 %v4353, %v9914
        %v10004 = vadd.f32 %v4354, %v9918
        %v10005 = vadd.f32 %v4355, %v9920
        %v10006 = vadd.f32 %v4356, %v9924
        %v10007 = vadd.f32 %v4357, %v9926
        %v10008 = vadd.f32 %v4358, %v9930
        %v10009 = vadd.f32 %v4359, %v9932
        %v10010 = vadd.f32 %v4360, %v9936
        %v10011 = vadd.f32 %v4361, %v9938
        %v10012 = vadd.f32 %v4362, %v9942
        %v10013 = vadd.f32 %v4363, %v9944
        %v10014 = vadd.f32 %v4364, %v9948
        %v10015 = vadd.f32 %v4365, %v9950
        %10016 = vst [vmem:[%s328] sm:$0xff] %v9952
        %10017 = vst [vmem:[%s328 + $0x8] sm:$0xff] %v9953
        %10018 = vst [vmem:[%s328 + $0x10] sm:$0xff] %v9954
        %10019 = vst [vmem:[%s328 + $0x18] sm:$0xff] %v9955
        %10020 = vst [vmem:[%s328 + $0x20] sm:$0xff] %v9956
        %10021 = vst [vmem:[%s328 + $0x28] sm:$0xff] %v9957
        %10022 = vst [vmem:[%s328 + $0x30] sm:$0xff] %v9958
        %10023 = vst [vmem:[%s328 + $0x38] sm:$0xff] %v9959
        %10024 = vst [vmem:[%s328 + $0x40] sm:$0xff] %v9960
        %10025 = vst [vmem:[%s328 + $0x48] sm:$0xff] %v9961
        %10026 = vst [vmem:[%s328 + $0x50] sm:$0xff] %v9962
        %10027 = vst [vmem:[%s328 + $0x58] sm:$0xff] %v9963
        %10028 = vst [vmem:[%s328 + $0x60] sm:$0xff] %v9964
        %10029 = vst [vmem:[%s328 + $0x68] sm:$0xff] %v9965
        %10030 = vst [vmem:[%s328 + $0x70] sm:$0xff] %v9966
        %10031 = vst [vmem:[%s328 + $0x78] sm:$0xff] %v9967
        %10032 = vst [vmem:[%s328 + $0x80] sm:$0xff] %v9968
        %10033 = vst [vmem:[%s328 + $0x88] sm:$0xff] %v9969
        %10034 = vst [vmem:[%s328 + $0x90] sm:$0xff] %v9970
        %10035 = vst [vmem:[%s328 + $0x98] sm:$0xff] %v9971
        %10036 = vst [vmem:[%s328 + $0xa0] sm:$0xff] %v9972
        %10037 = vst [vmem:[%s328 + $0xa8] sm:$0xff] %v9973
        %10038 = vst [vmem:[%s328 + $0xb0] sm:$0xff] %v9974
        %10039 = vst [vmem:[%s328 + $0xb8] sm:$0xff] %v9975
        %10040 = vst [vmem:[%s328 + $0xc0] sm:$0xff] %v9976
        %10041 = vst [vmem:[%s328 + $0xc8] sm:$0xff] %v9977
        %10042 = vst [vmem:[%s328 + $0xd0] sm:$0xff] %v9978
        %10043 = vst [vmem:[%s328 + $0xd8] sm:$0xff] %v9979
        %10044 = vst [vmem:[%s328 + $0xe0] sm:$0xff] %v9980
        %10045 = vst [vmem:[%s328 + $0xe8] sm:$0xff] %v9981
        %10046 = vst [vmem:[%s328 + $0xf0] sm:$0xff] %v9982
        %10047 = vst [vmem:[%s328 + $0xf8] sm:$0xff] %v9983
        %10048 = vst [vmem:[%s328 + $0x100] sm:$0xff] %v9984
        %10049 = vst [vmem:[%s328 + $0x108] sm:$0xff] %v9985
        %10050 = vst [vmem:[%s328 + $0x110] sm:$0xff] %v9986
        %10051 = vst [vmem:[%s328 + $0x118] sm:$0xff] %v9987
        %10052 = vst [vmem:[%s328 + $0x120] sm:$0xff] %v9988
        %10053 = vst [vmem:[%s328 + $0x128] sm:$0xff] %v9989
        %10054 = vst [vmem:[%s328 + $0x130] sm:$0xff] %v9990
        %10055 = vst [vmem:[%s328 + $0x138] sm:$0xff] %v9991
        %10056 = vst [vmem:[%s328 + $0x140] sm:$0xff] %v9992
        %10057 = vst [vmem:[%s328 + $0x148] sm:$0xff] %v9993
        %10058 = vst [vmem:[%s328 + $0x150] sm:$0xff] %v9994
        %10059 = vst [vmem:[%s328 + $0x158] sm:$0xff] %v9995
        %10060 = vst [vmem:[%s328 + $0x160] sm:$0xff] %v9996
        %10061 = vst [vmem:[%s328 + $0x168] sm:$0xff] %v9997
        %10062 = vst [vmem:[%s328 + $0x170] sm:$0xff] %v9998
        %10063 = vst [vmem:[%s328 + $0x178] sm:$0xff] %v9999
        %10064 = vst [vmem:[%s328 + $0x180] sm:$0xff] %v10000
        %10065 = vst [vmem:[%s328 + $0x188] sm:$0xff] %v10001
        %10066 = vst [vmem:[%s328 + $0x190] sm:$0xff] %v10002
        %10067 = vst [vmem:[%s328 + $0x198] sm:$0xff] %v10003
        %10068 = vst [vmem:[%s328 + $0x1a0] sm:$0xff] %v10004
        %10069 = vst [vmem:[%s328 + $0x1a8] sm:$0xff] %v10005
        %10070 = vst [vmem:[%s328 + $0x1b0] sm:$0xff] %v10006
        %10071 = vst [vmem:[%s328 + $0x1b8] sm:$0xff] %v10007
        %10072 = vst [vmem:[%s328 + $0x1c0] sm:$0xff] %v10008
        %10073 = vst [vmem:[%s328 + $0x1c8] sm:$0xff] %v10009
        %10074 = vst [vmem:[%s328 + $0x1d0] sm:$0xff] %v10010
        %10075 = vst [vmem:[%s328 + $0x1d8] sm:$0xff] %v10011
        %10076 = vst [vmem:[%s328 + $0x1e0] sm:$0xff] %v10012
        %10077 = vst [vmem:[%s328 + $0x1e8] sm:$0xff] %v10013
        %10078 = vst [vmem:[%s328 + $0x1f0] sm:$0xff] %v10014
        %10079 = vst [vmem:[%s328 + $0x1f8] sm:$0xff] %v10015
        %s10080 = sand.u32 %s164, 1
        %s10081 = scalar_lea.sflag [#allocation4], %s10080
        %s10082 = sand.u32 %s164, 1
        %s10083 = smul.addr %s10082, 512
        %s10084 = scalar_lea.vmem [#allocation11], %s10083
        // Predicated region
        $region65: #{block_forward.1} parent=43 // pred_check
          %p10085 = pneg %p174
        $region66: #{block_forward.1} parent=43 // pred_check_branch
          %10087 = sbr.rel (%p10085) target = $region68
        $region67: #{block_forward.1} parent=43 // pred_region
          %s10088 = smul.u32 32, %s25
          %s10090 = ssub.s32 8192, 8192
          %10091 = vsyncadd %s10081, %s10090
          %s10092 = smul.addr %s10088, 2
          %s10093 = smul.addr %s10092, 128
          %s10094 = scalar_lea.hbm %s6, %s10093
          %s10095 = sshll.u32 %s10084, 4
          %s10096 = int_to_ptr.vmem [resolvable:$true] %s10095
          %10101 = dma.vmem_to_hbm [thread:$0]  %s10096, 8192, %s10094, %s10081, 256, 256, 16
        $region68: #{block_forward.1} parent=43 // pred_fallthru
          _
      $region44: #{block_forward.1} parent=5 // pred_fallthru
        _
      %p10102 = scmp.le.s32.totalorder 2, %s20
      // Predicated region
      $region69: #{block_forward.1} parent=5 // pred_check
        %p10103 = pneg %p10102
      $region70: #{block_forward.1} parent=5 // pred_check_branch
        %10105 = sbr.rel (%p10103) target = $region72
      $region71: #{block_forward.1} parent=5 // pred_region
        %s10106 = ssub.s32 %s20, 2
        // Predicated region
        $region73: #{block_forward.1} parent=71 // pred_check
          %p10107 = pneg %p180
        $region74: #{block_forward.1} parent=71 // pred_check_branch
          %10109 = sbr.rel (%p10107) target = $region76
        $region75: #{block_forward.1} parent=71 // pred_region
          %s10110 = sand.u32 %s165, 1
          %s10111 = scalar_lea.sflag [#allocation4], %s10110
          %s10112 = sand.u32 %s165, 1
          %s10113 = smul.addr %s10112, 512
          %s10114 = scalar_lea.vmem [#allocation11], %s10113
          %10115 = dma.done %s10111, 8192
        $region76: #{block_forward.1} parent=71 // pred_fallthru
          _
      $region72: #{block_forward.1} parent=5 // pred_fallthru
        _
    $region6: #{block_forward.1} parent=1 // loop_footer
      %s24 = sadd.s32 1, %s20
    $region7: #{block_forward.1} parent=1 // loop_footer_branch
      %19 = sbr.rel target = $region3
    $region8: #{block_forward.1} parent=1 // loop_exit
      _
    %10116 = vsyncpa [#allocation3], 1
    %s10117 = scalar_lea.sflag [#allocation3], 1
    %10118 = vsyncpa %s10117, 1
    %10119 = vsyncpa [#allocation6], 1
    %10120 = vsyncpa [#allocation9], 1
    %10121 = vsyncpa [#allocation4], 1
    %s10122 = scalar_lea.sflag [#allocation4], 1
    %10123 = vsyncpa %s10122, 1

</llo_original>
